<compile_context>
chip_gen: v6e
topology: v6e:2x2x1
jax: 0.10.0
libtpu: 0.0.40
codegen_flags: <defaults>
</compile_context>

<pallas_src>
import functools

import jax
import jax.numpy as jnp
from jax.experimental import pallas as pl
from jax.experimental.pallas import tpu as pltpu

# ----------------------------- configuration -------------------------------
BATCH = 2
EMB = 128          # embedding_size   (768 in the reference)
NF = 128           # num_filters      (768 in the reference)
SEQ = 32           # max_seq_len      (128 in the reference)
T_IN_FEA = 64      # t_in_fea
KSIZE = 8
BN_EPS = 1e-5
TILE_N = 128       # C_out tile width (use 256 on v6e/v7x at reference scale)
FC3_PAD = 128      # lane-dense padding of the 2-wide final output


# ------------------------------ Pallas kernels ------------------------------
def conv_relu_bn_kernel(x_ref, w_ref, b_ref, scale_ref, shift_ref, o_ref,
                        col_ref, *, batch, l_in, l_out, k_taps, c_in,
                        fuse_maxpool):
    """im2col Conv1d + bias + ReLU + folded BatchNorm for one C_out tile.

    x_ref     : (B*L_in, C_in)       bf16, channel-last, batch folded into rows
    w_ref     : (K*C_in, TILE_N)     bf16 weight tile
    b/scale/shift_ref : (1, TILE_N)  f32
    o_ref     : (B*L_out, TILE_N) bf16, or (B, TILE_N) bf16 if fuse_maxpool
    col_ref   : VMEM scratch (B*L_out, K*C_in) bf16 — the im2col slab
    """
    # Build the im2col slab ONCE; later C_out tiles reuse it (grid axis is
    # sequential / "arbitrary" for exactly this reason).
    @pl.when(pl.program_id(0) == 0)
    def _():
        for b in range(batch):                     # static, small
            for k in range(k_taps):                # static, K=8
                col_ref[b * l_out:(b + 1) * l_out,
                        k * c_in:(k + 1) * c_in] = (
                    x_ref[b * l_in + k: b * l_in + k + l_out, :])

    # One deep-K MXU matmul: (B*L_out, K*C_in) @ (K*C_in, TILE_N), f32 acc.
    acc = jnp.dot(col_ref[...], w_ref[...],
                  preferred_element_type=jnp.float32)
    y = jnp.maximum(acc + b_ref[...], 0.0)         # conv bias + ReLU (before BN)
    y = y * scale_ref[...] + shift_ref[...]        # folded BatchNorm, f32 epilogue

    if fuse_maxpool:
        # Global max over the time axis, fused into the conv epilogue.
        rows = [jnp.max(y[b * l_out:(b + 1) * l_out, :], axis=0, keepdims=True)
                for b in range(batch)]
        o_ref[...] = jnp.concatenate(rows, axis=0).astype(o_ref.dtype)
    else:
        o_ref[...] = y.astype(o_ref.dtype)


def mlp_head_kernel(xd_ref, xt_ref,
                    fcd_w_ref, fcd_b_ref,
                    fct_w_ref, fct_b_ref,
                    fc1_wa_ref, fc1_wb_ref, fc1_b_ref,
                    fc2_w_ref, fc2_b_ref,
                    fc3_w_ref, fc3_b_ref,
                    o_ref):
    """Fused fcD / fcT / concat / fc1 / fc2 / fc3 head (single pallas_call).

    The concat is realized by splitting fc1's weight: x1 = xd@Wa + xt@Wb.
    The final output is padded to FC3_PAD lanes for a lane-dense store.
    """
    f32 = jnp.float32
    bf16 = jnp.bfloat16

    hd = jnp.dot(xd_ref[...], fcd_w_ref[...], preferred_element_type=f32)
    hd = jnp.maximum(hd + fcd_b_ref[...], 0.0)                    # relu(fcD)

    ht = jnp.dot(xt_ref[...].astype(bf16), fct_w_ref[...],
                 preferred_element_type=f32)
    ht = jnp.maximum(ht + fct_b_ref[...], 0.0)                    # relu(fcT)

    h1 = (jnp.dot(hd.astype(bf16), fc1_wa_ref[...], preferred_element_type=f32)
          + jnp.dot(ht.astype(bf16), fc1_wb_ref[...], preferred_element_type=f32)
          + fc1_b_ref[...])
    h1 = jnp.maximum(h1, 0.0)                                     # relu(fc1)
    # dropout: eval-mode identity

    h2 = jnp.dot(h1.astype(bf16), fc2_w_ref[...], preferred_element_type=f32)
    h2 = jnp.maximum(h2 + fc2_b_ref[...], 0.0)                    # relu(fc2)
    # dropout: eval-mode identity

    out = jnp.dot(h2.astype(bf16), fc3_w_ref[...], preferred_element_type=f32)
    o_ref[...] = (out + fc3_b_ref[...]).astype(o_ref.dtype)       # fc3 (padded)


# ------------------------------ wrappers ------------------------------------
def conv1d_relu_bn(x2d, w2d, b, scale, shift, *, batch, l_in, k,
                   fuse_maxpool=False, tile_n=TILE_N):
    """x2d: (B*L_in, C_in) bf16; w2d: (K*C_in, C_out) bf16."""
    kcin, c_out = w2d.shape
    c_in = kcin // k
    l_out = l_in - k + 1
    assert c_out % tile_n == 0
    n_tiles = c_out // tile_n

    if fuse_maxpool:
        out_shape = jax.ShapeDtypeStruct((batch, c_out), jnp.bfloat16)
        out_spec = pl.BlockSpec((batch, tile_n), lambda j: (0, j))
    else:
        out_shape = jax.ShapeDtypeStruct((batch * l_out, c_out), jnp.bfloat16)
        out_spec = pl.BlockSpec((batch * l_out, tile_n), lambda j: (0, j))

    kernel = functools.partial(
        conv_relu_bn_kernel, batch=batch, l_in=l_in, l_out=l_out,
        k_taps=k, c_in=c_in, fuse_maxpool=fuse_maxpool)

    return pl.pallas_call(
        kernel,
        out_shape=out_shape,
        grid=(n_tiles,),
        in_specs=[
            pl.BlockSpec((batch * l_in, c_in), lambda j: (0, 0)),  # x (resident)
            pl.BlockSpec((kcin, tile_n), lambda j: (0, j)),        # weight tile
            pl.BlockSpec((1, tile_n), lambda j: (0, j)),           # conv bias
            pl.BlockSpec((1, tile_n), lambda j: (0, j)),           # bn scale
            pl.BlockSpec((1, tile_n), lambda j: (0, j)),           # bn shift
        ],
        out_specs=out_spec,
        scratch_shapes=[pltpu.VMEM((batch * l_out, kcin), jnp.bfloat16)],
        compiler_params=pltpu.CompilerParams(
            # Sequential over C_out tiles: the im2col slab is built once at
            # program_id==0 and reused by later tiles (scratch persists).
            dimension_semantics=("arbitrary",),
            vmem_limit_bytes=32 * 1024 * 1024,
        ),
    )(x2d, w2d, b, scale, shift)


def mlp_head(xd, xt, p):
    batch = xd.shape[0]
    return pl.pallas_call(
        mlp_head_kernel,
        out_shape=jax.ShapeDtypeStruct((batch, FC3_PAD), jnp.float32),
    )(xd, xt,
      p["fcD_w"], p["fcD_b"],
      p["fcT_w"], p["fcT_b"],
      p["fc1_wa"], p["fc1_wb"], p["fc1_b"],
      p["fc2_w"], p["fc2_b"],
      p["fc3_w"], p["fc3_b"])


# --------------------------- parameter construction -------------------------
def _dense_init(key, d_in, d_out):
    kw, kb = jax.random.split(key)
    w = jax.random.normal(kw, (d_in, d_out), jnp.float32) / jnp.sqrt(d_in)
    b = 0.01 * jax.random.normal(kb, (1, d_out), jnp.float32)
    return w.astype(jnp.bfloat16), b


def _conv_init(key, c_in, c_out, k):
    kw, kb = jax.random.split(key)
    # kernel layout (K, C_in, C_out) -> reshaped to (K*C_in, C_out) for im2col.
    w = jax.random.normal(kw, (k, c_in, c_out), jnp.float32) / jnp.sqrt(c_in * k)
    b = 0.01 * jax.random.normal(kb, (1, c_out), jnp.float32)
    return w.reshape(k * c_in, c_out).astype(jnp.bfloat16), b


def _bn_init(key, c):
    kg, kb, km, kv = jax.random.split(key, 4)
    gamma = 1.0 + 0.01 * jax.random.normal(kg, (1, c), jnp.float32)
    beta = 0.01 * jax.random.normal(kb, (1, c), jnp.float32)
    mean = 0.01 * jax.random.normal(km, (1, c), jnp.float32)
    var = 1.0 + 0.01 * jax.random.normal(kv, (1, c), jnp.float32) ** 2
    scale = gamma / jnp.sqrt(var + BN_EPS)
    shift = beta - mean * scale
    return scale, shift


def make_params(key):
    keys = jax.random.split(key, 10)
    p = {}
    p["conv1_w"], p["conv1_b"] = _conv_init(keys[0], EMB, NF, KSIZE)
    p["bn1_scale"], p["bn1_shift"] = _bn_init(keys[1], NF)
    p["conv2_w"], p["conv2_b"] = _conv_init(keys[2], NF, NF * 2, KSIZE)
    p["bn2_scale"], p["bn2_shift"] = _bn_init(keys[3], NF * 2)
    p["conv3_w"], p["conv3_b"] = _conv_init(keys[4], NF * 2, NF * 3, KSIZE)
    p["bn3_scale"], p["bn3_shift"] = _bn_init(keys[5], NF * 3)
    p["fcD_w"], p["fcD_b"] = _dense_init(keys[6], NF * 3, NF * 3)
    p["fcT_w"], p["fcT_b"] = _dense_init(keys[7], T_IN_FEA, NF * 3)
    fc1_w, p["fc1_b"] = _dense_init(keys[8], NF * 3 * 2, 200)
    p["fc1_wa"], p["fc1_wb"] = fc1_w[:NF * 3], fc1_w[NF * 3:]   # concat split
    k9a, k9b = jax.random.split(keys[9])
    p["fc2_w"], p["fc2_b"] = _dense_init(k9a, 200, 10)
    fc3_w, fc3_b = _dense_init(k9b, 10, 2)
    # Pad the 2-wide final layer to FC3_PAD lanes for a lane-dense store.
    p["fc3_w"] = jnp.zeros((10, FC3_PAD), jnp.bfloat16).at[:, :2].set(fc3_w)
    p["fc3_b"] = jnp.zeros((1, FC3_PAD), jnp.float32).at[:, :2].set(fc3_b)
    return p


# ------------------------------- forward pass --------------------------------
@jax.jit
def rbm_tans_dti_forward(params, fea):
    batch = fea.shape[0]
    drug_dim = SEQ * EMB
    # [B, L*C] -> [B*L, C] channel-last slab (equivalent to the reference's
    # reshape + permute feeding Conv1d); cast to bf16 for the MXU.
    xd = fea[:, :drug_dim].reshape(batch * SEQ, EMB).astype(jnp.bfloat16)
    xt = fea[:, drug_dim:]                                   # [B, t_in_fea]

    h = conv1d_relu_bn(xd, params["conv1_w"], params["conv1_b"],
                       params["bn1_scale"], params["bn1_shift"],
                       batch=batch, l_in=SEQ, k=KSIZE)
    h = conv1d_relu_bn(h, params["conv2_w"], params["conv2_b"],
                       params["bn2_scale"], params["bn2_shift"],
                       batch=batch, l_in=SEQ - (KSIZE - 1), k=KSIZE)
    # MaxPool1d(kernel_size = max_seq_len - 3*7) == global max over time here
    # (kernel_size equals L_out after three k=8 convs); fused into conv3.
    embed_xd = conv1d_relu_bn(h, params["conv3_w"], params["conv3_b"],
                              params["bn3_scale"], params["bn3_shift"],
                              batch=batch, l_in=SEQ - 2 * (KSIZE - 1), k=KSIZE,
                              fuse_maxpool=True)             # [B, 3*NF] bf16

    # Fused fcD / fcT / concat / fc1 / dropout / fc2 / dropout / fc3.
    out_pad = mlp_head(embed_xd, xt, params)                 # [B, FC3_PAD]
    return out_pad[:, :2]                                    # [B, 2]


# ---------------------------------- main -------------------------------------
if __name__ == "__main__":
    root = jax.random.PRNGKey(0)
    k_params, k_data = jax.random.split(root)

    params = make_params(k_params)
    fea = jax.random.normal(k_data, (BATCH, SEQ * EMB + T_IN_FEA), jnp.float32)

    out = rbm_tans_dti_forward(params, fea)
    out = jax.block_until_ready(out)

    assert out.shape == (BATCH, 2), out.shape
    assert bool(jnp.all(jnp.isfinite(out)))
    print("KERNEL_OK")
</pallas_src>

<mosaic_0001>
module attributes {stable_mosaic.version = 11 : i64} {
  func.func @conv_relu_bn_kernel(%arg0: i32, %arg1: memref<50x128xbf16, #tpu.memory_space<vmem>>, %arg2: memref<1024x128xbf16, #tpu.memory_space<vmem>>, %arg3: memref<1x128xf32, #tpu.memory_space<vmem>>, %arg4: memref<1x128xf32, #tpu.memory_space<vmem>>, %arg5: memref<1x128xf32, #tpu.memory_space<vmem>>, %arg6: memref<36x128xbf16, #tpu.memory_space<vmem>>, %arg7: memref<36x1024xbf16, #tpu.memory_space<vmem>>) attributes {dimension_semantics = [#tpu.dimension_semantics<arbitrary>], iteration_bounds = array<i64: 2>, scalar_prefetch = 0 : i64, scratch_operands = 1 : i64, tpu.core_type = #tpu.core_type<tc>, window_params = [{pipeline_mode = #tpu.pipeline_mode<synchronous>, transform_indices = @transform_0, window_bounds = array<i64: 50, 128>}, {transform_indices = @transform_1, window_bounds = array<i64: 1024, 128>}, {transform_indices = @transform_2, window_bounds = array<i64: 1, 128>}, {transform_indices = @transform_3, window_bounds = array<i64: 1, 128>}, {transform_indices = @transform_4, window_bounds = array<i64: 1, 128>}, {transform_indices = @transform_5, window_bounds = array<i64: 36, 128>}]} {
    %c0_i32 = arith.constant 0 : i32
    %0 = arith.cmpi eq, %arg0, %c0_i32 : i32
    %1 = arith.extui %0 : i1 to i32
    %c0_i32_0 = arith.constant 0 : i32
    %2 = arith.cmpi ne, %1, %c0_i32_0 : i32
    scf.if %2 {
      %c0_13 = arith.constant 0 : index
      %c0_14 = arith.constant 0 : index
      %19 = vector.load %arg1[%c0_13, %c0_14] : memref<50x128xbf16, #tpu.memory_space<vmem>>, vector<18x128xbf16>
      %c0_15 = arith.constant 0 : index
      %c0_16 = arith.constant 0 : index
      %20 = vector.load %arg7[%c0_15, %c0_16] : memref<36x1024xbf16, #tpu.memory_space<vmem>>, vector<18x128xbf16>
      tpu.vector_store %arg7[%c0_15, %c0_16], %19 {strides = array<i32>} : memref<36x1024xbf16, #tpu.memory_space<vmem>>, vector<18x128xbf16>,
      %c1 = arith.constant 1 : index
      %c0_17 = arith.constant 0 : index
      %21 = vector.load %arg1[%c1, %c0_17] : memref<50x128xbf16, #tpu.memory_space<vmem>>, vector<18x128xbf16>
      %c0_18 = arith.constant 0 : index
      %c128 = arith.constant 128 : index
      %22 = vector.load %arg7[%c0_18, %c128] : memref<36x1024xbf16, #tpu.memory_space<vmem>>, vector<18x128xbf16>
      tpu.vector_store %arg7[%c0_18, %c128], %21 {strides = array<i32>} : memref<36x1024xbf16, #tpu.memory_space<vmem>>, vector<18x128xbf16>,
      %c2 = arith.constant 2 : index
      %c0_19 = arith.constant 0 : index
      %23 = vector.load %arg1[%c2, %c0_19] : memref<50x128xbf16, #tpu.memory_space<vmem>>, vector<18x128xbf16>
      %c0_20 = arith.constant 0 : index
      %c256 = arith.constant 256 : index
      %24 = vector.load %arg7[%c0_20, %c256] : memref<36x1024xbf16, #tpu.memory_space<vmem>>, vector<18x128xbf16>
      tpu.vector_store %arg7[%c0_20, %c256], %23 {strides = array<i32>} : memref<36x1024xbf16, #tpu.memory_space<vmem>>, vector<18x128xbf16>,
      %c3 = arith.constant 3 : index
      %c0_21 = arith.constant 0 : index
      %25 = vector.load %arg1[%c3, %c0_21] : memref<50x128xbf16, #tpu.memory_space<vmem>>, vector<18x128xbf16>
      %c0_22 = arith.constant 0 : index
      %c384 = arith.constant 384 : index
      %26 = vector.load %arg7[%c0_22, %c384] : memref<36x1024xbf16, #tpu.memory_space<vmem>>, vector<18x128xbf16>
      tpu.vector_store %arg7[%c0_22, %c384], %25 {strides = array<i32>} : memref<36x1024xbf16, #tpu.memory_space<vmem>>, vector<18x128xbf16>,
      %c4 = arith.constant 4 : index
      %c0_23 = arith.constant 0 : index
      %27 = vector.load %arg1[%c4, %c0_23] : memref<50x128xbf16, #tpu.memory_space<vmem>>, vector<18x128xbf16>
      %c0_24 = arith.constant 0 : index
      %c512 = arith.constant 512 : index
      %28 = vector.load %arg7[%c0_24, %c512] : memref<36x1024xbf16, #tpu.memory_space<vmem>>, vector<18x128xbf16>
      tpu.vector_store %arg7[%c0_24, %c512], %27 {strides = array<i32>} : memref<36x1024xbf16, #tpu.memory_space<vmem>>, vector<18x128xbf16>,
      %c5 = arith.constant 5 : index
      %c0_25 = arith.constant 0 : index
      %29 = vector.load %arg1[%c5, %c0_25] : memref<50x128xbf16, #tpu.memory_space<vmem>>, vector<18x128xbf16>
      %c0_26 = arith.constant 0 : index
      %c640 = arith.constant 640 : index
      %30 = vector.load %arg7[%c0_26, %c640] : memref<36x1024xbf16, #tpu.memory_space<vmem>>, vector<18x128xbf16>
      tpu.vector_store %arg7[%c0_26, %c640], %29 {strides = array<i32>} : memref<36x1024xbf16, #tpu.memory_space<vmem>>, vector<18x128xbf16>,
      %c6 = arith.constant 6 : index
      %c0_27 = arith.constant 0 : index
      %31 = vector.load %arg1[%c6, %c0_27] : memref<50x128xbf16, #tpu.memory_space<vmem>>, vector<18x128xbf16>
      %c0_28 = arith.constant 0 : index
      %c768 = arith.constant 768 : index
      %32 = vector.load %arg7[%c0_28, %c768] : memref<36x1024xbf16, #tpu.memory_space<vmem>>, vector<18x128xbf16>
      tpu.vector_store %arg7[%c0_28, %c768], %31 {strides = array<i32>} : memref<36x1024xbf16, #tpu.memory_space<vmem>>, vector<18x128xbf16>,
      %c7 = arith.constant 7 : index
      %c0_29 = arith.constant 0 : index
      %33 = vector.load %arg1[%c7, %c0_29] : memref<50x128xbf16, #tpu.memory_space<vmem>>, vector<18x128xbf16>
      %c0_30 = arith.constant 0 : index
      %c896 = arith.constant 896 : index
      %34 = vector.load %arg7[%c0_30, %c896] : memref<36x1024xbf16, #tpu.memory_space<vmem>>, vector<18x128xbf16>
      tpu.vector_store %arg7[%c0_30, %c896], %33 {strides = array<i32>} : memref<36x1024xbf16, #tpu.memory_space<vmem>>, vector<18x128xbf16>,
      %c25 = arith.constant 25 : index
      %c0_31 = arith.constant 0 : index
      %35 = vector.load %arg1[%c25, %c0_31] : memref<50x128xbf16, #tpu.memory_space<vmem>>, vector<18x128xbf16>
      %c18 = arith.constant 18 : index
      %c0_32 = arith.constant 0 : index
      %36 = vector.load %arg7[%c18, %c0_32] : memref<36x1024xbf16, #tpu.memory_space<vmem>>, vector<18x128xbf16>
      tpu.vector_store %arg7[%c18, %c0_32], %35 {strides = array<i32>} : memref<36x1024xbf16, #tpu.memory_space<vmem>>, vector<18x128xbf16>,
      %c26 = arith.constant 26 : index
      %c0_33 = arith.constant 0 : index
      %37 = vector.load %arg1[%c26, %c0_33] : memref<50x128xbf16, #tpu.memory_space<vmem>>, vector<18x128xbf16>
      %c18_34 = arith.constant 18 : index
      %c128_35 = arith.constant 128 : index
      %38 = vector.load %arg7[%c18_34, %c128_35] : memref<36x1024xbf16, #tpu.memory_space<vmem>>, vector<18x128xbf16>
      tpu.vector_store %arg7[%c18_34, %c128_35], %37 {strides = array<i32>} : memref<36x1024xbf16, #tpu.memory_space<vmem>>, vector<18x128xbf16>,
      %c27 = arith.constant 27 : index
      %c0_36 = arith.constant 0 : index
      %39 = vector.load %arg1[%c27, %c0_36] : memref<50x128xbf16, #tpu.memory_space<vmem>>, vector<18x128xbf16>
      %c18_37 = arith.constant 18 : index
      %c256_38 = arith.constant 256 : index
      %40 = vector.load %arg7[%c18_37, %c256_38] : memref<36x1024xbf16, #tpu.memory_space<vmem>>, vector<18x128xbf16>
      tpu.vector_store %arg7[%c18_37, %c256_38], %39 {strides = array<i32>} : memref<36x1024xbf16, #tpu.memory_space<vmem>>, vector<18x128xbf16>,
      %c28 = arith.constant 28 : index
      %c0_39 = arith.constant 0 : index
      %41 = vector.load %arg1[%c28, %c0_39] : memref<50x128xbf16, #tpu.memory_space<vmem>>, vector<18x128xbf16>
      %c18_40 = arith.constant 18 : index
      %c384_41 = arith.constant 384 : index
      %42 = vector.load %arg7[%c18_40, %c384_41] : memref<36x1024xbf16, #tpu.memory_space<vmem>>, vector<18x128xbf16>
      tpu.vector_store %arg7[%c18_40, %c384_41], %41 {strides = array<i32>} : memref<36x1024xbf16, #tpu.memory_space<vmem>>, vector<18x128xbf16>,
      %c29 = arith.constant 29 : index
      %c0_42 = arith.constant 0 : index
      %43 = vector.load %arg1[%c29, %c0_42] : memref<50x128xbf16, #tpu.memory_space<vmem>>, vector<18x128xbf16>
      %c18_43 = arith.constant 18 : index
      %c512_44 = arith.constant 512 : index
      %44 = vector.load %arg7[%c18_43, %c512_44] : memref<36x1024xbf16, #tpu.memory_space<vmem>>, vector<18x128xbf16>
      tpu.vector_store %arg7[%c18_43, %c512_44], %43 {strides = array<i32>} : memref<36x1024xbf16, #tpu.memory_space<vmem>>, vector<18x128xbf16>,
      %c30 = arith.constant 30 : index
      %c0_45 = arith.constant 0 : index
      %45 = vector.load %arg1[%c30, %c0_45] : memref<50x128xbf16, #tpu.memory_space<vmem>>, vector<18x128xbf16>
      %c18_46 = arith.constant 18 : index
      %c640_47 = arith.constant 640 : index
      %46 = vector.load %arg7[%c18_46, %c640_47] : memref<36x1024xbf16, #tpu.memory_space<vmem>>, vector<18x128xbf16>
      tpu.vector_store %arg7[%c18_46, %c640_47], %45 {strides = array<i32>} : memref<36x1024xbf16, #tpu.memory_space<vmem>>, vector<18x128xbf16>,
      %c31 = arith.constant 31 : index
      %c0_48 = arith.constant 0 : index
      %47 = vector.load %arg1[%c31, %c0_48] : memref<50x128xbf16, #tpu.memory_space<vmem>>, vector<18x128xbf16>
      %c18_49 = arith.constant 18 : index
      %c768_50 = arith.constant 768 : index
      %48 = vector.load %arg7[%c18_49, %c768_50] : memref<36x1024xbf16, #tpu.memory_space<vmem>>, vector<18x128xbf16>
      tpu.vector_store %arg7[%c18_49, %c768_50], %47 {strides = array<i32>} : memref<36x1024xbf16, #tpu.memory_space<vmem>>, vector<18x128xbf16>,
      %c32 = arith.constant 32 : index
      %c0_51 = arith.constant 0 : index
      %49 = vector.load %arg1[%c32, %c0_51] : memref<50x128xbf16, #tpu.memory_space<vmem>>, vector<18x128xbf16>
      %c18_52 = arith.constant 18 : index
      %c896_53 = arith.constant 896 : index
      %50 = vector.load %arg7[%c18_52, %c896_53] : memref<36x1024xbf16, #tpu.memory_space<vmem>>, vector<18x128xbf16>
      tpu.vector_store %arg7[%c18_52, %c896_53], %49 {strides = array<i32>} : memref<36x1024xbf16, #tpu.memory_space<vmem>>, vector<18x128xbf16>,
    } else {
    }
    %c0 = arith.constant 0 : index
    %c0_1 = arith.constant 0 : index
    %3 = vector.load %arg7[%c0, %c0_1] : memref<36x1024xbf16, #tpu.memory_space<vmem>>, vector<36x1024xbf16>
    %c0_2 = arith.constant 0 : index
    %c0_3 = arith.constant 0 : index
    %4 = vector.load %arg2[%c0_2, %c0_3] : memref<1024x128xbf16, #tpu.memory_space<vmem>>, vector<1024x128xbf16>
    %cst = arith.constant dense<0.000000e+00> : vector<36x128xf32>
    %5 = tpu.matmul %3, %4, %cst {dimension_numbers = #tpu.dot_dimension_numbers<[1], [0], [0], [1], [0, 0, 1, 1], [], []>} : vector<36x1024xbf16>, vector<1024x128xbf16>, vector<36x128xf32> -> vector<36x128xf32>
    %c0_4 = arith.constant 0 : index
    %c0_5 = arith.constant 0 : index
    %6 = vector.load %arg3[%c0_4, %c0_5] : memref<1x128xf32, #tpu.memory_space<vmem>>, vector<1x128xf32>
    %7 = vector.broadcast %6 : vector<1x128xf32> to vector<36x128xf32>
    %8 = arith.addf %5, %7 : vector<36x128xf32>
    %cst_6 = arith.constant 0.000000e+00 : f32
    %9 = vector.broadcast %cst_6 : f32 to vector<36x128xf32>
    %10 = arith.maximumf %8, %9 : vector<36x128xf32>
    %c0_7 = arith.constant 0 : index
    %c0_8 = arith.constant 0 : index
    %11 = vector.load %arg4[%c0_7, %c0_8] : memref<1x128xf32, #tpu.memory_space<vmem>>, vector<1x128xf32>
    %12 = vector.broadcast %11 : vector<1x128xf32> to vector<36x128xf32>
    %13 = arith.mulf %10, %12 : vector<36x128xf32>
    %c0_9 = arith.constant 0 : index
    %c0_10 = arith.constant 0 : index
    %14 = vector.load %arg5[%c0_9, %c0_10] : memref<1x128xf32, #tpu.memory_space<vmem>>, vector<1x128xf32>
    %15 = vector.broadcast %14 : vector<1x128xf32> to vector<36x128xf32>
    %16 = arith.addf %13, %15 : vector<36x128xf32>
    %17 = arith.truncf %16 : vector<36x128xf32> to vector<36x128xbf16>
    %c0_11 = arith.constant 0 : index
    %c0_12 = arith.constant 0 : index
    %18 = vector.load %arg6[%c0_11, %c0_12] : memref<36x128xbf16, #tpu.memory_space<vmem>>, vector<36x128xbf16>
    tpu.vector_store %arg6[%c0_11, %c0_12], %17 {strides = array<i32>} : memref<36x128xbf16, #tpu.memory_space<vmem>>, vector<36x128xbf16>,
    return
  }
  func.func @transform_0(%arg0: i32) -> (i32, i32) {
    %c0_i32 = arith.constant 0 : i32
    %c0_i32_0 = arith.constant 0 : i32
    %c0_i32_1 = arith.constant 0 : i32
    return %c0_i32, %c0_i32_0 : i32, i32
  }
  func.func @transform_1(%arg0: i32) -> (i32, i32) {
    %c0_i32 = arith.constant 0 : i32
    %c0_i32_0 = arith.constant 0 : i32
    return %c0_i32, %arg0 : i32, i32
  }
  func.func @transform_2(%arg0: i32) -> (i32, i32) {
    %c0_i32 = arith.constant 0 : i32
    %c0_i32_0 = arith.constant 0 : i32
    return %c0_i32, %arg0 : i32, i32
  }
  func.func @transform_3(%arg0: i32) -> (i32, i32) {
    %c0_i32 = arith.constant 0 : i32
    %c0_i32_0 = arith.constant 0 : i32
    return %c0_i32, %arg0 : i32, i32
  }
  func.func @transform_4(%arg0: i32) -> (i32, i32) {
    %c0_i32 = arith.constant 0 : i32
    %c0_i32_0 = arith.constant 0 : i32
    return %c0_i32, %arg0 : i32, i32
  }
  func.func @transform_5(%arg0: i32) -> (i32, i32) {
    %c0_i32 = arith.constant 0 : i32
    %c0_i32_0 = arith.constant 0 : i32
    return %c0_i32, %arg0 : i32, i32
  }
}

module attributes {stable_mosaic.version = 11 : i64} {
  func.func @conv_relu_bn_kernel(%arg0: i32, %arg1: memref<36x256xbf16, #tpu.memory_space<vmem>>, %arg2: memref<2048x128xbf16, #tpu.memory_space<vmem>>, %arg3: memref<1x128xf32, #tpu.memory_space<vmem>>, %arg4: memref<1x128xf32, #tpu.memory_space<vmem>>, %arg5: memref<1x128xf32, #tpu.memory_space<vmem>>, %arg6: memref<2x128xbf16, #tpu.memory_space<vmem>>, %arg7: memref<22x2048xbf16, #tpu.memory_space<vmem>>) attributes {dimension_semantics = [#tpu.dimension_semantics<arbitrary>], iteration_bounds = array<i64: 3>, scalar_prefetch = 0 : i64, scratch_operands = 1 : i64, tpu.core_type = #tpu.core_type<tc>, window_params = [{pipeline_mode = #tpu.pipeline_mode<synchronous>, transform_indices = @transform_0, window_bounds = array<i64: 36, 256>}, {transform_indices = @transform_1, window_bounds = array<i64: 2048, 128>}, {transform_indices = @transform_2, window_bounds = array<i64: 1, 128>}, {transform_indices = @transform_3, window_bounds = array<i64: 1, 128>}, {transform_indices = @transform_4, window_bounds = array<i64: 1, 128>}, {transform_indices = @transform_5, window_bounds = array<i64: 2, 128>}]} {
    %c0_i32 = arith.constant 0 : i32
    %0 = arith.cmpi eq, %arg0, %c0_i32 : i32
    %1 = arith.extui %0 : i1 to i32
    %c0_i32_0 = arith.constant 0 : i32
    %2 = arith.cmpi ne, %1, %c0_i32_0 : i32
    scf.if %2 {
      %c0_15 = arith.constant 0 : index
      %c0_16 = arith.constant 0 : index
      %26 = vector.load %arg1[%c0_15, %c0_16] : memref<36x256xbf16, #tpu.memory_space<vmem>>, vector<11x256xbf16>
      %c0_17 = arith.constant 0 : index
      %c0_18 = arith.constant 0 : index
      %27 = vector.load %arg7[%c0_17, %c0_18] : memref<22x2048xbf16, #tpu.memory_space<vmem>>, vector<11x256xbf16>
      tpu.vector_store %arg7[%c0_17, %c0_18], %26 {strides = array<i32>} : memref<22x2048xbf16, #tpu.memory_space<vmem>>, vector<11x256xbf16>,
      %c1 = arith.constant 1 : index
      %c0_19 = arith.constant 0 : index
      %28 = vector.load %arg1[%c1, %c0_19] : memref<36x256xbf16, #tpu.memory_space<vmem>>, vector<11x256xbf16>
      %c0_20 = arith.constant 0 : index
      %c256 = arith.constant 256 : index
      %29 = vector.load %arg7[%c0_20, %c256] : memref<22x2048xbf16, #tpu.memory_space<vmem>>, vector<11x256xbf16>
      tpu.vector_store %arg7[%c0_20, %c256], %28 {strides = array<i32>} : memref<22x2048xbf16, #tpu.memory_space<vmem>>, vector<11x256xbf16>,
      %c2 = arith.constant 2 : index
      %c0_21 = arith.constant 0 : index
      %30 = vector.load %arg1[%c2, %c0_21] : memref<36x256xbf16, #tpu.memory_space<vmem>>, vector<11x256xbf16>
      %c0_22 = arith.constant 0 : index
      %c512 = arith.constant 512 : index
      %31 = vector.load %arg7[%c0_22, %c512] : memref<22x2048xbf16, #tpu.memory_space<vmem>>, vector<11x256xbf16>
      tpu.vector_store %arg7[%c0_22, %c512], %30 {strides = array<i32>} : memref<22x2048xbf16, #tpu.memory_space<vmem>>, vector<11x256xbf16>,
      %c3 = arith.constant 3 : index
      %c0_23 = arith.constant 0 : index
      %32 = vector.load %arg1[%c3, %c0_23] : memref<36x256xbf16, #tpu.memory_space<vmem>>, vector<11x256xbf16>
      %c0_24 = arith.constant 0 : index
      %c768 = arith.constant 768 : index
      %33 = vector.load %arg7[%c0_24, %c768] : memref<22x2048xbf16, #tpu.memory_space<vmem>>, vector<11x256xbf16>
      tpu.vector_store %arg7[%c0_24, %c768], %32 {strides = array<i32>} : memref<22x2048xbf16, #tpu.memory_space<vmem>>, vector<11x256xbf16>,
      %c4 = arith.constant 4 : index
      %c0_25 = arith.constant 0 : index
      %34 = vector.load %arg1[%c4, %c0_25] : memref<36x256xbf16, #tpu.memory_space<vmem>>, vector<11x256xbf16>
      %c0_26 = arith.constant 0 : index
      %c1024 = arith.constant 1024 : index
      %35 = vector.load %arg7[%c0_26, %c1024] : memref<22x2048xbf16, #tpu.memory_space<vmem>>, vector<11x256xbf16>
      tpu.vector_store %arg7[%c0_26, %c1024], %34 {strides = array<i32>} : memref<22x2048xbf16, #tpu.memory_space<vmem>>, vector<11x256xbf16>,
      %c5 = arith.constant 5 : index
      %c0_27 = arith.constant 0 : index
      %36 = vector.load %arg1[%c5, %c0_27] : memref<36x256xbf16, #tpu.memory_space<vmem>>, vector<11x256xbf16>
      %c0_28 = arith.constant 0 : index
      %c1280 = arith.constant 1280 : index
      %37 = vector.load %arg7[%c0_28, %c1280] : memref<22x2048xbf16, #tpu.memory_space<vmem>>, vector<11x256xbf16>
      tpu.vector_store %arg7[%c0_28, %c1280], %36 {strides = array<i32>} : memref<22x2048xbf16, #tpu.memory_space<vmem>>, vector<11x256xbf16>,
      %c6 = arith.constant 6 : index
      %c0_29 = arith.constant 0 : index
      %38 = vector.load %arg1[%c6, %c0_29] : memref<36x256xbf16, #tpu.memory_space<vmem>>, vector<11x256xbf16>
      %c0_30 = arith.constant 0 : index
      %c1536 = arith.constant 1536 : index
      %39 = vector.load %arg7[%c0_30, %c1536] : memref<22x2048xbf16, #tpu.memory_space<vmem>>, vector<11x256xbf16>
      tpu.vector_store %arg7[%c0_30, %c1536], %38 {strides = array<i32>} : memref<22x2048xbf16, #tpu.memory_space<vmem>>, vector<11x256xbf16>,
      %c7 = arith.constant 7 : index
      %c0_31 = arith.constant 0 : index
      %40 = vector.load %arg1[%c7, %c0_31] : memref<36x256xbf16, #tpu.memory_space<vmem>>, vector<11x256xbf16>
      %c0_32 = arith.constant 0 : index
      %c1792 = arith.constant 1792 : index
      %41 = vector.load %arg7[%c0_32, %c1792] : memref<22x2048xbf16, #tpu.memory_space<vmem>>, vector<11x256xbf16>
      tpu.vector_store %arg7[%c0_32, %c1792], %40 {strides = array<i32>} : memref<22x2048xbf16, #tpu.memory_space<vmem>>, vector<11x256xbf16>,
      %c18 = arith.constant 18 : index
      %c0_33 = arith.constant 0 : index
      %42 = vector.load %arg1[%c18, %c0_33] : memref<36x256xbf16, #tpu.memory_space<vmem>>, vector<11x256xbf16>
      %c11 = arith.constant 11 : index
      %c0_34 = arith.constant 0 : index
      %43 = vector.load %arg7[%c11, %c0_34] : memref<22x2048xbf16, #tpu.memory_space<vmem>>, vector<11x256xbf16>
      tpu.vector_store %arg7[%c11, %c0_34], %42 {strides = array<i32>} : memref<22x2048xbf16, #tpu.memory_space<vmem>>, vector<11x256xbf16>,
      %c19 = arith.constant 19 : index
      %c0_35 = arith.constant 0 : index
      %44 = vector.load %arg1[%c19, %c0_35] : memref<36x256xbf16, #tpu.memory_space<vmem>>, vector<11x256xbf16>
      %c11_36 = arith.constant 11 : index
      %c256_37 = arith.constant 256 : index
      %45 = vector.load %arg7[%c11_36, %c256_37] : memref<22x2048xbf16, #tpu.memory_space<vmem>>, vector<11x256xbf16>
      tpu.vector_store %arg7[%c11_36, %c256_37], %44 {strides = array<i32>} : memref<22x2048xbf16, #tpu.memory_space<vmem>>, vector<11x256xbf16>,
      %c20 = arith.constant 20 : index
      %c0_38 = arith.constant 0 : index
      %46 = vector.load %arg1[%c20, %c0_38] : memref<36x256xbf16, #tpu.memory_space<vmem>>, vector<11x256xbf16>
      %c11_39 = arith.constant 11 : index
      %c512_40 = arith.constant 512 : index
      %47 = vector.load %arg7[%c11_39, %c512_40] : memref<22x2048xbf16, #tpu.memory_space<vmem>>, vector<11x256xbf16>
      tpu.vector_store %arg7[%c11_39, %c512_40], %46 {strides = array<i32>} : memref<22x2048xbf16, #tpu.memory_space<vmem>>, vector<11x256xbf16>,
      %c21 = arith.constant 21 : index
      %c0_41 = arith.constant 0 : index
      %48 = vector.load %arg1[%c21, %c0_41] : memref<36x256xbf16, #tpu.memory_space<vmem>>, vector<11x256xbf16>
      %c11_42 = arith.constant 11 : index
      %c768_43 = arith.constant 768 : index
      %49 = vector.load %arg7[%c11_42, %c768_43] : memref<22x2048xbf16, #tpu.memory_space<vmem>>, vector<11x256xbf16>
      tpu.vector_store %arg7[%c11_42, %c768_43], %48 {strides = array<i32>} : memref<22x2048xbf16, #tpu.memory_space<vmem>>, vector<11x256xbf16>,
      %c22 = arith.constant 22 : index
      %c0_44 = arith.constant 0 : index
      %50 = vector.load %arg1[%c22, %c0_44] : memref<36x256xbf16, #tpu.memory_space<vmem>>, vector<11x256xbf16>
      %c11_45 = arith.constant 11 : index
      %c1024_46 = arith.constant 1024 : index
      %51 = vector.load %arg7[%c11_45, %c1024_46] : memref<22x2048xbf16, #tpu.memory_space<vmem>>, vector<11x256xbf16>
      tpu.vector_store %arg7[%c11_45, %c1024_46], %50 {strides = array<i32>} : memref<22x2048xbf16, #tpu.memory_space<vmem>>, vector<11x256xbf16>,
      %c23 = arith.constant 23 : index
      %c0_47 = arith.constant 0 : index
      %52 = vector.load %arg1[%c23, %c0_47] : memref<36x256xbf16, #tpu.memory_space<vmem>>, vector<11x256xbf16>
      %c11_48 = arith.constant 11 : index
      %c1280_49 = arith.constant 1280 : index
      %53 = vector.load %arg7[%c11_48, %c1280_49] : memref<22x2048xbf16, #tpu.memory_space<vmem>>, vector<11x256xbf16>
      tpu.vector_store %arg7[%c11_48, %c1280_49], %52 {strides = array<i32>} : memref<22x2048xbf16, #tpu.memory_space<vmem>>, vector<11x256xbf16>,
      %c24 = arith.constant 24 : index
      %c0_50 = arith.constant 0 : index
      %54 = vector.load %arg1[%c24, %c0_50] : memref<36x256xbf16, #tpu.memory_space<vmem>>, vector<11x256xbf16>
      %c11_51 = arith.constant 11 : index
      %c1536_52 = arith.constant 1536 : index
      %55 = vector.load %arg7[%c11_51, %c1536_52] : memref<22x2048xbf16, #tpu.memory_space<vmem>>, vector<11x256xbf16>
      tpu.vector_store %arg7[%c11_51, %c1536_52], %54 {strides = array<i32>} : memref<22x2048xbf16, #tpu.memory_space<vmem>>, vector<11x256xbf16>,
      %c25 = arith.constant 25 : index
      %c0_53 = arith.constant 0 : index
      %56 = vector.load %arg1[%c25, %c0_53] : memref<36x256xbf16, #tpu.memory_space<vmem>>, vector<11x256xbf16>
      %c11_54 = arith.constant 11 : index
      %c1792_55 = arith.constant 1792 : index
      %57 = vector.load %arg7[%c11_54, %c1792_55] : memref<22x2048xbf16, #tpu.memory_space<vmem>>, vector<11x256xbf16>
      tpu.vector_store %arg7[%c11_54, %c1792_55], %56 {strides = array<i32>} : memref<22x2048xbf16, #tpu.memory_space<vmem>>, vector<11x256xbf16>,
    } else {
    }
    %c0 = arith.constant 0 : index
    %c0_1 = arith.constant 0 : index
    %3 = vector.load %arg7[%c0, %c0_1] : memref<22x2048xbf16, #tpu.memory_space<vmem>>, vector<22x2048xbf16>
    %c0_2 = arith.constant 0 : index
    %c0_3 = arith.constant 0 : index
    %4 = vector.load %arg2[%c0_2, %c0_3] : memref<2048x128xbf16, #tpu.memory_space<vmem>>, vector<2048x128xbf16>
    %cst = arith.constant dense<0.000000e+00> : vector<22x128xf32>
    %5 = tpu.matmul %3, %4, %cst {dimension_numbers = #tpu.dot_dimension_numbers<[1], [0], [0], [1], [0, 0, 1, 1], [], []>} : vector<22x2048xbf16>, vector<2048x128xbf16>, vector<22x128xf32> -> vector<22x128xf32>
    %c0_4 = arith.constant 0 : index
    %c0_5 = arith.constant 0 : index
    %6 = vector.load %arg3[%c0_4, %c0_5] : memref<1x128xf32, #tpu.memory_space<vmem>>, vector<1x128xf32>
    %7 = vector.broadcast %6 : vector<1x128xf32> to vector<22x128xf32>
    %8 = arith.addf %5, %7 : vector<22x128xf32>
    %cst_6 = arith.constant 0.000000e+00 : f32
    %9 = vector.broadcast %cst_6 : f32 to vector<22x128xf32>
    %10 = arith.maximumf %8, %9 : vector<22x128xf32>
    %c0_7 = arith.constant 0 : index
    %c0_8 = arith.constant 0 : index
    %11 = vector.load %arg4[%c0_7, %c0_8] : memref<1x128xf32, #tpu.memory_space<vmem>>, vector<1x128xf32>
    %12 = vector.broadcast %11 : vector<1x128xf32> to vector<22x128xf32>
    %13 = arith.mulf %10, %12 : vector<22x128xf32>
    %c0_9 = arith.constant 0 : index
    %c0_10 = arith.constant 0 : index
    %14 = vector.load %arg5[%c0_9, %c0_10] : memref<1x128xf32, #tpu.memory_space<vmem>>, vector<1x128xf32>
    %15 = vector.broadcast %14 : vector<1x128xf32> to vector<22x128xf32>
    %16 = arith.addf %13, %15 : vector<22x128xf32>
    %17 = vector.extract_strided_slice %16 {offsets = [0, 0], sizes = [11, 128], strides = [1, 1]} : vector<22x128xf32> to vector<11x128xf32>
    %cst_11 = arith.constant dense<0xFF800000> : vector<128xf32>
    %18 = vector.multi_reduction <maximumf>, %17, %cst_11 [0] : vector<11x128xf32> to vector<128xf32>
    %19 = vector.shape_cast %18 : vector<128xf32> to vector<1x128xf32>
    %20 = vector.extract_strided_slice %16 {offsets = [11, 0], sizes = [11, 128], strides = [1, 1]} : vector<22x128xf32> to vector<11x128xf32>
    %cst_12 = arith.constant dense<0xFF800000> : vector<128xf32>
    %21 = vector.multi_reduction <maximumf>, %20, %cst_12 [0] : vector<11x128xf32> to vector<128xf32>
    %22 = vector.shape_cast %21 : vector<128xf32> to vector<1x128xf32>
    %23 = tpu.concatenate %19, %22 in 0 : vector<1x128xf32>, vector<1x128xf32> -> vector<2x128xf32>
    %24 = arith.truncf %23 : vector<2x128xf32> to vector<2x128xbf16>
    %c0_13 = arith.constant 0 : index
    %c0_14 = arith.constant 0 : index
    %25 = vector.load %arg6[%c0_13, %c0_14] : memref<2x128xbf16, #tpu.memory_space<vmem>>, vector<2x128xbf16>
    tpu.vector_store %arg6[%c0_13, %c0_14], %24 {strides = array<i32>} : memref<2x128xbf16, #tpu.memory_space<vmem>>, vector<2x128xbf16>,
    return
  }
  func.func @transform_0(%arg0: i32) -> (i32, i32) {
    %c0_i32 = arith.constant 0 : i32
    %c0_i32_0 = arith.constant 0 : i32
    %c0_i32_1 = arith.constant 0 : i32
    return %c0_i32, %c0_i32_0 : i32, i32
  }
  func.func @transform_1(%arg0: i32) -> (i32, i32) {
    %c0_i32 = arith.constant 0 : i32
    %c0_i32_0 = arith.constant 0 : i32
    return %c0_i32, %arg0 : i32, i32
  }
  func.func @transform_2(%arg0: i32) -> (i32, i32) {
    %c0_i32 = arith.constant 0 : i32
    %c0_i32_0 = arith.constant 0 : i32
    return %c0_i32, %arg0 : i32, i32
  }
  func.func @transform_3(%arg0: i32) -> (i32, i32) {
    %c0_i32 = arith.constant 0 : i32
    %c0_i32_0 = arith.constant 0 : i32
    return %c0_i32, %arg0 : i32, i32
  }
  func.func @transform_4(%arg0: i32) -> (i32, i32) {
    %c0_i32 = arith.constant 0 : i32
    %c0_i32_0 = arith.constant 0 : i32
    return %c0_i32, %arg0 : i32, i32
  }
  func.func @transform_5(%arg0: i32) -> (i32, i32) {
    %c0_i32 = arith.constant 0 : i32
    %c0_i32_0 = arith.constant 0 : i32
    return %c0_i32, %arg0 : i32, i32
  }
}

module attributes {stable_mosaic.version = 11 : i64} {
  func.func @conv_relu_bn_kernel(%arg0: i32, %arg1: memref<64x128xbf16, #tpu.memory_space<vmem>>, %arg2: memref<1024x128xbf16, #tpu.memory_space<vmem>>, %arg3: memref<1x128xf32, #tpu.memory_space<vmem>>, %arg4: memref<1x128xf32, #tpu.memory_space<vmem>>, %arg5: memref<1x128xf32, #tpu.memory_space<vmem>>, %arg6: memref<50x128xbf16, #tpu.memory_space<vmem>>, %arg7: memref<50x1024xbf16, #tpu.memory_space<vmem>>) attributes {dimension_semantics = [#tpu.dimension_semantics<arbitrary>], iteration_bounds = array<i64: 1>, scalar_prefetch = 0 : i64, scratch_operands = 1 : i64, tpu.core_type = #tpu.core_type<tc>, window_params = [{pipeline_mode = #tpu.pipeline_mode<synchronous>, transform_indices = @transform_0, window_bounds = array<i64: 64, 128>}, {transform_indices = @transform_1, window_bounds = array<i64: 1024, 128>}, {transform_indices = @transform_2, window_bounds = array<i64: 1, 128>}, {transform_indices = @transform_3, window_bounds = array<i64: 1, 128>}, {transform_indices = @transform_4, window_bounds = array<i64: 1, 128>}, {transform_indices = @transform_5, window_bounds = array<i64: 50, 128>}]} {
    %c0_i32 = arith.constant 0 : i32
    %0 = arith.cmpi eq, %arg0, %c0_i32 : i32
    %1 = arith.extui %0 : i1 to i32
    %c0_i32_0 = arith.constant 0 : i32
    %2 = arith.cmpi ne, %1, %c0_i32_0 : i32
    scf.if %2 {
      %c0_13 = arith.constant 0 : index
      %c0_14 = arith.constant 0 : index
      %19 = vector.load %arg1[%c0_13, %c0_14] : memref<64x128xbf16, #tpu.memory_space<vmem>>, vector<25x128xbf16>
      %c0_15 = arith.constant 0 : index
      %c0_16 = arith.constant 0 : index
      %20 = vector.load %arg7[%c0_15, %c0_16] : memref<50x1024xbf16, #tpu.memory_space<vmem>>, vector<25x128xbf16>
      tpu.vector_store %arg7[%c0_15, %c0_16], %19 {strides = array<i32>} : memref<50x1024xbf16, #tpu.memory_space<vmem>>, vector<25x128xbf16>,
      %c1 = arith.constant 1 : index
      %c0_17 = arith.constant 0 : index
      %21 = vector.load %arg1[%c1, %c0_17] : memref<64x128xbf16, #tpu.memory_space<vmem>>, vector<25x128xbf16>
      %c0_18 = arith.constant 0 : index
      %c128 = arith.constant 128 : index
      %22 = vector.load %arg7[%c0_18, %c128] : memref<50x1024xbf16, #tpu.memory_space<vmem>>, vector<25x128xbf16>
      tpu.vector_store %arg7[%c0_18, %c128], %21 {strides = array<i32>} : memref<50x1024xbf16, #tpu.memory_space<vmem>>, vector<25x128xbf16>,
      %c2 = arith.constant 2 : index
      %c0_19 = arith.constant 0 : index
      %23 = vector.load %arg1[%c2, %c0_19] : memref<64x128xbf16, #tpu.memory_space<vmem>>, vector<25x128xbf16>
      %c0_20 = arith.constant 0 : index
      %c256 = arith.constant 256 : index
      %24 = vector.load %arg7[%c0_20, %c256] : memref<50x1024xbf16, #tpu.memory_space<vmem>>, vector<25x128xbf16>
      tpu.vector_store %arg7[%c0_20, %c256], %23 {strides = array<i32>} : memref<50x1024xbf16, #tpu.memory_space<vmem>>, vector<25x128xbf16>,
      %c3 = arith.constant 3 : index
      %c0_21 = arith.constant 0 : index
      %25 = vector.load %arg1[%c3, %c0_21] : memref<64x128xbf16, #tpu.memory_space<vmem>>, vector<25x128xbf16>
      %c0_22 = arith.constant 0 : index
      %c384 = arith.constant 384 : index
      %26 = vector.load %arg7[%c0_22, %c384] : memref<50x1024xbf16, #tpu.memory_space<vmem>>, vector<25x128xbf16>
      tpu.vector_store %arg7[%c0_22, %c384], %25 {strides = array<i32>} : memref<50x1024xbf16, #tpu.memory_space<vmem>>, vector<25x128xbf16>,
      %c4 = arith.constant 4 : index
      %c0_23 = arith.constant 0 : index
      %27 = vector.load %arg1[%c4, %c0_23] : memref<64x128xbf16, #tpu.memory_space<vmem>>, vector<25x128xbf16>
      %c0_24 = arith.constant 0 : index
      %c512 = arith.constant 512 : index
      %28 = vector.load %arg7[%c0_24, %c512] : memref<50x1024xbf16, #tpu.memory_space<vmem>>, vector<25x128xbf16>
      tpu.vector_store %arg7[%c0_24, %c512], %27 {strides = array<i32>} : memref<50x1024xbf16, #tpu.memory_space<vmem>>, vector<25x128xbf16>,
      %c5 = arith.constant 5 : index
      %c0_25 = arith.constant 0 : index
      %29 = vector.load %arg1[%c5, %c0_25] : memref<64x128xbf16, #tpu.memory_space<vmem>>, vector<25x128xbf16>
      %c0_26 = arith.constant 0 : index
      %c640 = arith.constant 640 : index
      %30 = vector.load %arg7[%c0_26, %c640] : memref<50x1024xbf16, #tpu.memory_space<vmem>>, vector<25x128xbf16>
      tpu.vector_store %arg7[%c0_26, %c640], %29 {strides = array<i32>} : memref<50x1024xbf16, #tpu.memory_space<vmem>>, vector<25x128xbf16>,
      %c6 = arith.constant 6 : index
      %c0_27 = arith.constant 0 : index
      %31 = vector.load %arg1[%c6, %c0_27] : memref<64x128xbf16, #tpu.memory_space<vmem>>, vector<25x128xbf16>
      %c0_28 = arith.constant 0 : index
      %c768 = arith.constant 768 : index
      %32 = vector.load %arg7[%c0_28, %c768] : memref<50x1024xbf16, #tpu.memory_space<vmem>>, vector<25x128xbf16>
      tpu.vector_store %arg7[%c0_28, %c768], %31 {strides = array<i32>} : memref<50x1024xbf16, #tpu.memory_space<vmem>>, vector<25x128xbf16>,
      %c7 = arith.constant 7 : index
      %c0_29 = arith.constant 0 : index
      %33 = vector.load %arg1[%c7, %c0_29] : memref<64x128xbf16, #tpu.memory_space<vmem>>, vector<25x128xbf16>
      %c0_30 = arith.constant 0 : index
      %c896 = arith.constant 896 : index
      %34 = vector.load %arg7[%c0_30, %c896] : memref<50x1024xbf16, #tpu.memory_space<vmem>>, vector<25x128xbf16>
      tpu.vector_store %arg7[%c0_30, %c896], %33 {strides = array<i32>} : memref<50x1024xbf16, #tpu.memory_space<vmem>>, vector<25x128xbf16>,
      %c32 = arith.constant 32 : index
      %c0_31 = arith.constant 0 : index
      %35 = vector.load %arg1[%c32, %c0_31] : memref<64x128xbf16, #tpu.memory_space<vmem>>, vector<25x128xbf16>
      %c25 = arith.constant 25 : index
      %c0_32 = arith.constant 0 : index
      %36 = vector.load %arg7[%c25, %c0_32] : memref<50x1024xbf16, #tpu.memory_space<vmem>>, vector<25x128xbf16>
      tpu.vector_store %arg7[%c25, %c0_32], %35 {strides = array<i32>} : memref<50x1024xbf16, #tpu.memory_space<vmem>>, vector<25x128xbf16>,
      %c33 = arith.constant 33 : index
      %c0_33 = arith.constant 0 : index
      %37 = vector.load %arg1[%c33, %c0_33] : memref<64x128xbf16, #tpu.memory_space<vmem>>, vector<25x128xbf16>
      %c25_34 = arith.constant 25 : index
      %c128_35 = arith.constant 128 : index
      %38 = vector.load %arg7[%c25_34, %c128_35] : memref<50x1024xbf16, #tpu.memory_space<vmem>>, vector<25x128xbf16>
      tpu.vector_store %arg7[%c25_34, %c128_35], %37 {strides = array<i32>} : memref<50x1024xbf16, #tpu.memory_space<vmem>>, vector<25x128xbf16>,
      %c34 = arith.constant 34 : index
      %c0_36 = arith.constant 0 : index
      %39 = vector.load %arg1[%c34, %c0_36] : memref<64x128xbf16, #tpu.memory_space<vmem>>, vector<25x128xbf16>
      %c25_37 = arith.constant 25 : index
      %c256_38 = arith.constant 256 : index
      %40 = vector.load %arg7[%c25_37, %c256_38] : memref<50x1024xbf16, #tpu.memory_space<vmem>>, vector<25x128xbf16>
      tpu.vector_store %arg7[%c25_37, %c256_38], %39 {strides = array<i32>} : memref<50x1024xbf16, #tpu.memory_space<vmem>>, vector<25x128xbf16>,
      %c35 = arith.constant 35 : index
      %c0_39 = arith.constant 0 : index
      %41 = vector.load %arg1[%c35, %c0_39] : memref<64x128xbf16, #tpu.memory_space<vmem>>, vector<25x128xbf16>
      %c25_40 = arith.constant 25 : index
      %c384_41 = arith.constant 384 : index
      %42 = vector.load %arg7[%c25_40, %c384_41] : memref<50x1024xbf16, #tpu.memory_space<vmem>>, vector<25x128xbf16>
      tpu.vector_store %arg7[%c25_40, %c384_41], %41 {strides = array<i32>} : memref<50x1024xbf16, #tpu.memory_space<vmem>>, vector<25x128xbf16>,
      %c36 = arith.constant 36 : index
      %c0_42 = arith.constant 0 : index
      %43 = vector.load %arg1[%c36, %c0_42] : memref<64x128xbf16, #tpu.memory_space<vmem>>, vector<25x128xbf16>
      %c25_43 = arith.constant 25 : index
      %c512_44 = arith.constant 512 : index
      %44 = vector.load %arg7[%c25_43, %c512_44] : memref<50x1024xbf16, #tpu.memory_space<vmem>>, vector<25x128xbf16>
      tpu.vector_store %arg7[%c25_43, %c512_44], %43 {strides = array<i32>} : memref<50x1024xbf16, #tpu.memory_space<vmem>>, vector<25x128xbf16>,
      %c37 = arith.constant 37 : index
      %c0_45 = arith.constant 0 : index
      %45 = vector.load %arg1[%c37, %c0_45] : memref<64x128xbf16, #tpu.memory_space<vmem>>, vector<25x128xbf16>
      %c25_46 = arith.constant 25 : index
      %c640_47 = arith.constant 640 : index
      %46 = vector.load %arg7[%c25_46, %c640_47] : memref<50x1024xbf16, #tpu.memory_space<vmem>>, vector<25x128xbf16>
      tpu.vector_store %arg7[%c25_46, %c640_47], %45 {strides = array<i32>} : memref<50x1024xbf16, #tpu.memory_space<vmem>>, vector<25x128xbf16>,
      %c38 = arith.constant 38 : index
      %c0_48 = arith.constant 0 : index
      %47 = vector.load %arg1[%c38, %c0_48] : memref<64x128xbf16, #tpu.memory_space<vmem>>, vector<25x128xbf16>
      %c25_49 = arith.constant 25 : index
      %c768_50 = arith.constant 768 : index
      %48 = vector.load %arg7[%c25_49, %c768_50] : memref<50x1024xbf16, #tpu.memory_space<vmem>>, vector<25x128xbf16>
      tpu.vector_store %arg7[%c25_49, %c768_50], %47 {strides = array<i32>} : memref<50x1024xbf16, #tpu.memory_space<vmem>>, vector<25x128xbf16>,
      %c39 = arith.constant 39 : index
      %c0_51 = arith.constant 0 : index
      %49 = vector.load %arg1[%c39, %c0_51] : memref<64x128xbf16, #tpu.memory_space<vmem>>, vector<25x128xbf16>
      %c25_52 = arith.constant 25 : index
      %c896_53 = arith.constant 896 : index
      %50 = vector.load %arg7[%c25_52, %c896_53] : memref<50x1024xbf16, #tpu.memory_space<vmem>>, vector<25x128xbf16>
      tpu.vector_store %arg7[%c25_52, %c896_53], %49 {strides = array<i32>} : memref<50x1024xbf16, #tpu.memory_space<vmem>>, vector<25x128xbf16>,
    } else {
    }
    %c0 = arith.constant 0 : index
    %c0_1 = arith.constant 0 : index
    %3 = vector.load %arg7[%c0, %c0_1] : memref<50x1024xbf16, #tpu.memory_space<vmem>>, vector<50x1024xbf16>
    %c0_2 = arith.constant 0 : index
    %c0_3 = arith.constant 0 : index
    %4 = vector.load %arg2[%c0_2, %c0_3] : memref<1024x128xbf16, #tpu.memory_space<vmem>>, vector<1024x128xbf16>
    %cst = arith.constant dense<0.000000e+00> : vector<50x128xf32>
    %5 = tpu.matmul %3, %4, %cst {dimension_numbers = #tpu.dot_dimension_numbers<[1], [0], [0], [1], [0, 0, 1, 1], [], []>} : vector<50x1024xbf16>, vector<1024x128xbf16>, vector<50x128xf32> -> vector<50x128xf32>
    %c0_4 = arith.constant 0 : index
    %c0_5 = arith.constant 0 : index
    %6 = vector.load %arg3[%c0_4, %c0_5] : memref<1x128xf32, #tpu.memory_space<vmem>>, vector<1x128xf32>
    %7 = vector.broadcast %6 : vector<1x128xf32> to vector<50x128xf32>
    %8 = arith.addf %5, %7 : vector<50x128xf32>
    %cst_6 = arith.constant 0.000000e+00 : f32
    %9 = vector.broadcast %cst_6 : f32 to vector<50x128xf32>
    %10 = arith.maximumf %8, %9 : vector<50x128xf32>
    %c0_7 = arith.constant 0 : index
    %c0_8 = arith.constant 0 : index
    %11 = vector.load %arg4[%c0_7, %c0_8] : memref<1x128xf32, #tpu.memory_space<vmem>>, vector<1x128xf32>
    %12 = vector.broadcast %11 : vector<1x128xf32> to vector<50x128xf32>
    %13 = arith.mulf %10, %12 : vector<50x128xf32>
    %c0_9 = arith.constant 0 : index
    %c0_10 = arith.constant 0 : index
    %14 = vector.load %arg5[%c0_9, %c0_10] : memref<1x128xf32, #tpu.memory_space<vmem>>, vector<1x128xf32>
    %15 = vector.broadcast %14 : vector<1x128xf32> to vector<50x128xf32>
    %16 = arith.addf %13, %15 : vector<50x128xf32>
    %17 = arith.truncf %16 : vector<50x128xf32> to vector<50x128xbf16>
    %c0_11 = arith.constant 0 : index
    %c0_12 = arith.constant 0 : index
    %18 = vector.load %arg6[%c0_11, %c0_12] : memref<50x128xbf16, #tpu.memory_space<vmem>>, vector<50x128xbf16>
    tpu.vector_store %arg6[%c0_11, %c0_12], %17 {strides = array<i32>} : memref<50x128xbf16, #tpu.memory_space<vmem>>, vector<50x128xbf16>,
    return
  }
  func.func @transform_0(%arg0: i32) -> (i32, i32) {
    %c0_i32 = arith.constant 0 : i32
    %c0_i32_0 = arith.constant 0 : i32
    %c0_i32_1 = arith.constant 0 : i32
    return %c0_i32, %c0_i32_0 : i32, i32
  }
  func.func @transform_1(%arg0: i32) -> (i32, i32) {
    %c0_i32 = arith.constant 0 : i32
    %c0_i32_0 = arith.constant 0 : i32
    return %c0_i32, %arg0 : i32, i32
  }
  func.func @transform_2(%arg0: i32) -> (i32, i32) {
    %c0_i32 = arith.constant 0 : i32
    %c0_i32_0 = arith.constant 0 : i32
    return %c0_i32, %arg0 : i32, i32
  }
  func.func @transform_3(%arg0: i32) -> (i32, i32) {
    %c0_i32 = arith.constant 0 : i32
    %c0_i32_0 = arith.constant 0 : i32
    return %c0_i32, %arg0 : i32, i32
  }
  func.func @transform_4(%arg0: i32) -> (i32, i32) {
    %c0_i32 = arith.constant 0 : i32
    %c0_i32_0 = arith.constant 0 : i32
    return %c0_i32, %arg0 : i32, i32
  }
  func.func @transform_5(%arg0: i32) -> (i32, i32) {
    %c0_i32 = arith.constant 0 : i32
    %c0_i32_0 = arith.constant 0 : i32
    return %c0_i32, %arg0 : i32, i32
  }
}

module attributes {stable_mosaic.version = 11 : i64} {
  func.func @mlp_head_kernel(%arg0: memref<2x384xbf16, #tpu.memory_space<vmem>>, %arg1: memref<2x64xf32, #tpu.memory_space<vmem>>, %arg2: memref<384x384xbf16, #tpu.memory_space<vmem>>, %arg3: memref<1x384xf32, #tpu.memory_space<vmem>>, %arg4: memref<64x384xbf16, #tpu.memory_space<vmem>>, %arg5: memref<1x384xf32, #tpu.memory_space<vmem>>, %arg6: memref<384x200xbf16, #tpu.memory_space<vmem>>, %arg7: memref<384x200xbf16, #tpu.memory_space<vmem>>, %arg8: memref<1x200xf32, #tpu.memory_space<vmem>>, %arg9: memref<200x10xbf16, #tpu.memory_space<vmem>>, %arg10: memref<1x10xf32, #tpu.memory_space<vmem>>, %arg11: memref<10x128xbf16, #tpu.memory_space<vmem>>, %arg12: memref<1x128xf32, #tpu.memory_space<vmem>>, %arg13: memref<2x128xf32, #tpu.memory_space<vmem>>) attributes {dimension_semantics = [], scalar_prefetch = 0 : i64, scratch_operands = 0 : i64, tpu.core_type = #tpu.core_type<tc>} {
    %c0 = arith.constant 0 : index
    %c0_0 = arith.constant 0 : index
    %0 = vector.load %arg0[%c0, %c0_0] : memref<2x384xbf16, #tpu.memory_space<vmem>>, vector<2x384xbf16>
    %c0_1 = arith.constant 0 : index
    %c0_2 = arith.constant 0 : index
    %1 = vector.load %arg2[%c0_1, %c0_2] : memref<384x384xbf16, #tpu.memory_space<vmem>>, vector<384x384xbf16>
    %cst = arith.constant dense<0.000000e+00> : vector<2x384xf32>
    %2 = tpu.matmul %0, %1, %cst {dimension_numbers = #tpu.dot_dimension_numbers<[1], [0], [0], [1], [0, 0, 1, 1], [], []>} : vector<2x384xbf16>, vector<384x384xbf16>, vector<2x384xf32> -> vector<2x384xf32>
    %c0_3 = arith.constant 0 : index
    %c0_4 = arith.constant 0 : index
    %3 = vector.load %arg3[%c0_3, %c0_4] : memref<1x384xf32, #tpu.memory_space<vmem>>, vector<1x384xf32>
    %4 = vector.broadcast %3 : vector<1x384xf32> to vector<2x384xf32>
    %5 = arith.addf %2, %4 : vector<2x384xf32>
    %cst_5 = arith.constant 0.000000e+00 : f32
    %6 = vector.broadcast %cst_5 : f32 to vector<2x384xf32>
    %7 = arith.maximumf %5, %6 : vector<2x384xf32>
    %c0_6 = arith.constant 0 : index
    %c0_7 = arith.constant 0 : index
    %8 = vector.load %arg1[%c0_6, %c0_7] : memref<2x64xf32, #tpu.memory_space<vmem>>, vector<2x64xf32>
    %9 = arith.truncf %8 : vector<2x64xf32> to vector<2x64xbf16>
    %c0_8 = arith.constant 0 : index
    %c0_9 = arith.constant 0 : index
    %10 = vector.load %arg4[%c0_8, %c0_9] : memref<64x384xbf16, #tpu.memory_space<vmem>>, vector<64x384xbf16>
    %cst_10 = arith.constant dense<0.000000e+00> : vector<2x384xf32>
    %11 = tpu.matmul %9, %10, %cst_10 {dimension_numbers = #tpu.dot_dimension_numbers<[1], [0], [0], [1], [0, 0, 1, 1], [], []>} : vector<2x64xbf16>, vector<64x384xbf16>, vector<2x384xf32> -> vector<2x384xf32>
    %c0_11 = arith.constant 0 : index
    %c0_12 = arith.constant 0 : index
    %12 = vector.load %arg5[%c0_11, %c0_12] : memref<1x384xf32, #tpu.memory_space<vmem>>, vector<1x384xf32>
    %13 = vector.broadcast %12 : vector<1x384xf32> to vector<2x384xf32>
    %14 = arith.addf %11, %13 : vector<2x384xf32>
    %cst_13 = arith.constant 0.000000e+00 : f32
    %15 = vector.broadcast %cst_13 : f32 to vector<2x384xf32>
    %16 = arith.maximumf %14, %15 : vector<2x384xf32>
    %17 = arith.truncf %7 : vector<2x384xf32> to vector<2x384xbf16>
    %c0_14 = arith.constant 0 : index
    %c0_15 = arith.constant 0 : index
    %18 = vector.load %arg6[%c0_14, %c0_15] : memref<384x200xbf16, #tpu.memory_space<vmem>>, vector<384x200xbf16>
    %cst_16 = arith.constant dense<0.000000e+00> : vector<2x200xf32>
    %19 = tpu.matmul %17, %18, %cst_16 {dimension_numbers = #tpu.dot_dimension_numbers<[1], [0], [0], [1], [0, 0, 1, 1], [], []>} : vector<2x384xbf16>, vector<384x200xbf16>, vector<2x200xf32> -> vector<2x200xf32>
    %20 = arith.truncf %16 : vector<2x384xf32> to vector<2x384xbf16>
    %c0_17 = arith.constant 0 : index
    %c0_18 = arith.constant 0 : index
    %21 = vector.load %arg7[%c0_17, %c0_18] : memref<384x200xbf16, #tpu.memory_space<vmem>>, vector<384x200xbf16>
    %cst_19 = arith.constant dense<0.000000e+00> : vector<2x200xf32>
    %22 = tpu.matmul %20, %21, %cst_19 {dimension_numbers = #tpu.dot_dimension_numbers<[1], [0], [0], [1], [0, 0, 1, 1], [], []>} : vector<2x384xbf16>, vector<384x200xbf16>, vector<2x200xf32> -> vector<2x200xf32>
    %23 = arith.addf %19, %22 : vector<2x200xf32>
    %c0_20 = arith.constant 0 : index
    %c0_21 = arith.constant 0 : index
    %24 = vector.load %arg8[%c0_20, %c0_21] : memref<1x200xf32, #tpu.memory_space<vmem>>, vector<1x200xf32>
    %25 = vector.broadcast %24 : vector<1x200xf32> to vector<2x200xf32>
    %26 = arith.addf %23, %25 : vector<2x200xf32>
    %cst_22 = arith.constant 0.000000e+00 : f32
    %27 = vector.broadcast %cst_22 : f32 to vector<2x200xf32>
    %28 = arith.maximumf %26, %27 : vector<2x200xf32>
    %29 = arith.truncf %28 : vector<2x200xf32> to vector<2x200xbf16>
    %c0_23 = arith.constant 0 : index
    %c0_24 = arith.constant 0 : index
    %30 = vector.load %arg9[%c0_23, %c0_24] : memref<200x10xbf16, #tpu.memory_space<vmem>>, vector<200x10xbf16>
    %cst_25 = arith.constant dense<0.000000e+00> : vector<2x10xf32>
    %31 = tpu.matmul %29, %30, %cst_25 {dimension_numbers = #tpu.dot_dimension_numbers<[1], [0], [0], [1], [0, 0, 1, 1], [], []>} : vector<2x200xbf16>, vector<200x10xbf16>, vector<2x10xf32> -> vector<2x10xf32>
    %c0_26 = arith.constant 0 : index
    %c0_27 = arith.constant 0 : index
    %32 = vector.load %arg10[%c0_26, %c0_27] : memref<1x10xf32, #tpu.memory_space<vmem>>, vector<1x10xf32>
    %33 = vector.broadcast %32 : vector<1x10xf32> to vector<2x10xf32>
    %34 = arith.addf %31, %33 : vector<2x10xf32>
    %cst_28 = arith.constant 0.000000e+00 : f32
    %35 = vector.broadcast %cst_28 : f32 to vector<2x10xf32>
    %36 = arith.maximumf %34, %35 : vector<2x10xf32>
    %37 = arith.truncf %36 : vector<2x10xf32> to vector<2x10xbf16>
    %c0_29 = arith.constant 0 : index
    %c0_30 = arith.constant 0 : index
    %38 = vector.load %arg11[%c0_29, %c0_30] : memref<10x128xbf16, #tpu.memory_space<vmem>>, vector<10x128xbf16>
    %cst_31 = arith.constant dense<0.000000e+00> : vector<2x128xf32>
    %39 = tpu.matmul %37, %38, %cst_31 {dimension_numbers = #tpu.dot_dimension_numbers<[1], [0], [0], [1], [0, 0, 1, 1], [], []>} : vector<2x10xbf16>, vector<10x128xbf16>, vector<2x128xf32> -> vector<2x128xf32>
    %c0_32 = arith.constant 0 : index
    %c0_33 = arith.constant 0 : index
    %40 = vector.load %arg12[%c0_32, %c0_33] : memref<1x128xf32, #tpu.memory_space<vmem>>, vector<1x128xf32>
    %41 = vector.broadcast %40 : vector<1x128xf32> to vector<2x128xf32>
    %42 = arith.addf %39, %41 : vector<2x128xf32>
    %c0_34 = arith.constant 0 : index
    %c0_35 = arith.constant 0 : index
    %43 = vector.load %arg13[%c0_34, %c0_35] : memref<2x128xf32, #tpu.memory_space<vmem>>, vector<2x128xf32>
    tpu.vector_store %arg13[%c0_34, %c0_35], %42 {strides = array<i32>} : memref<2x128xf32, #tpu.memory_space<vmem>>, vector<2x128xf32>,
    return
  }
}

</mosaic_0001>

<llo_original>
// kernel: rbm_tans_dti_forward.5
$region0: #{rbm_tans_dti_forward.5}
  #allocation0 [shape = 'u32[]', space=smem, size = 0x4, offset = 0x4, fixed_abs, tag = 'smem constant byte address 0x4 - core index']
  #allocation1 [shape = 'u32[144,128]{1,0:T(1,128)}', space=vmem, size = 0x12000, scoped, tag = 'internal scratch']
  #allocation2 [shape = 'bf16[36,1024]{1,0:T(8,128)(2,1)}', space=vmem, size = 0x14000, scoped, tag = 'scratch operand']
  %s0 = inlined_call_operand.vmem [shape: bf16[50,128], index: 0, kind: input, shape index: {}]
  %s1 = inlined_call_operand.hbm [shape: bf16[1024,256], index: 1, kind: input, shape index: {}]
  %s2 = inlined_call_operand.hbm [shape: f32[1,256], index: 2, kind: input, shape index: {}]
  %s3 = inlined_call_operand.hbm [shape: f32[1,256], index: 3, kind: input, shape index: {}]
  %s4 = inlined_call_operand.hbm [shape: f32[1,256], index: 4, kind: input, shape index: {}]
  %s5 = inlined_call_operand.vmem [shape: bf16[36,256], index: 5, kind: output, shape index: {}]
  %s6 = sld [smem:[#allocation0]]
  $region110: #{rbm_tans_dti_forward.5} parent=0
    _
  %s8 = ssub.s32 1, %s6
  %s9 = scalar_select 0, %s8, %s6
  $region1: #{rbm_tans_dti_forward.5} parent=0
    #allocation3 [shape = 'u8[524288]{0}', space=vmem, size = 0x80000, scoped, tag = 'input window, operand 1']
    #allocation4 [shape = 's32[2]{0}', space=sflag, size = 0x8, scoped, tag = 'scoped memory for rbm_tans_dti_forward.5']
    #allocation5 [shape = 'u8[1024]{0}', space=vmem, size = 0x400, scoped, tag = 'input window, operand 2']
    #allocation6 [shape = 's32[2]{0}', space=sflag, size = 0x8, scoped, tag = 'scoped memory for rbm_tans_dti_forward.5']
    #allocation7 [shape = 'u8[1024]{0}', space=vmem, size = 0x400, scoped, tag = 'input window, operand 3']
    #allocation8 [shape = 'u8[1024]{0}', space=vmem, size = 0x400, scoped, tag = 'input window, operand 4']
    #allocation9 [shape = 's32[2]{0}', space=sflag, size = 0x8, scoped, tag = 'scoped memory for rbm_tans_dti_forward.5']
    #allocation10 [shape = 'u8[20480]{0}', space=vmem, size = 0x5000, scoped, tag = 'output window, operand 0']
    %10 = vsyncpa [#allocation4], 0
    %s11 = scalar_lea.sflag [#allocation4], 1
    %12 = vsyncpa %s11, 0
    %13 = vsyncpa [#allocation6], 0
    %s14 = scalar_lea.sflag [#allocation6], 1
    %15 = vsyncpa %s14, 0
    %16 = vsyncpa [#allocation9], 0
    %s17 = scalar_lea.sflag [#allocation9], 1
    %18 = vsyncpa %s17, 0
    loop: start=0, step=1, limit=4
    $region2: #{rbm_tans_dti_forward.5} parent=1 // loop_pre_header
      _
    $region3: #{rbm_tans_dti_forward.5} parent=1 // loop_header
      %s20 = sphi 0, %s24
      %p21 = scmp.ge.s32.totalorder %s20, 4
      %s28 = sphi 0, %s28
      %s30 = sphi 0, %s28
      %s31 = sphi 0, %s30
      %s45 = sphi 0, %s31
      %s51 = sphi 0, %s53
      %s54 = sphi 0, %s51
      %s55 = sphi 0, %s54
      %s71 = sphi 0, %s55
      %s77 = sphi 0, %s79
      %s80 = sphi 0, %s77
      %s81 = sphi 0, %s80
      %s97 = sphi 0, %s81
      %s103 = sphi 0, %s105
      %s106 = sphi 0, %s103
      %s107 = sphi 0, %s106
      %s123 = sphi 0, %s107
      %s129 = sphi 0, %s131
      %s132 = sphi 0, %s129
      %s133 = sphi 0, %s132
      %s149 = sphi 0, %s133
      %s155 = sphi 0, %s157
      %s158 = sphi 0, %s155
      %s159 = sphi 0, %s158
      %s175 = sphi 0, %s159
    $region4: #{rbm_tans_dti_forward.5} parent=1 // loop_header_branch
      %23 = sbr.rel (%p21) target = $region8
    $region5: #{rbm_tans_dti_forward.5} parent=1 // loop_body
      %s25 = ssub.s32 %s20, 1
      %s26 = ssub.s32 %s20, 2
      %s27 = sadd.s32 %s20, 1
      %s29 = sadd.s32 %s28, 1
      %p32 = scmp.eq.s32.totalorder %s20, 1
      %p33 = scmp.ne.s32.totalorder %s28, %s30
      %p34 = scmp.eq.s32.totalorder %s20, 0
      %p35 = por %p33, %p34
      %p36 = scmp.ne.s32.totalorder %s28, %s30
      %p37 = scmp.eq.s32.totalorder %s25, 1
      %p38 = por %p36, %p37
      %p39 = scmp.ne.s32.totalorder %s30, %s31
      %p40 = scmp.eq.s32.totalorder %s25, 0
      %p41 = por %p39, %p40
      %p42 = scmp.ne.s32.totalorder %s30, %s31
      %p43 = scmp.eq.s32.totalorder %s26, 1
      %p44 = por %p42, %p43
      %p46 = scmp.ne.s32.totalorder %s31, %s45
      %p47 = scmp.eq.s32.totalorder %s26, 0
      %p48 = por %p46, %p47
      %s49 = ssub.s32 %s20, %s27
      %p50 = scmp.eq.s32.totalorder %s49, 0
      %s52 = sadd.s32 %s51, 1
      %s53 = scalar_select %p50, %s51, %s52
      %p56 = pneg %p50
      %p57 = scmp.eq.s32.totalorder %s20, 1
      %p58 = por %p56, %p57
      %p59 = scmp.ne.s32.totalorder %s51, %s54
      %p60 = scmp.eq.s32.totalorder %s20, 0
      %p61 = por %p59, %p60
      %p62 = scmp.ne.s32.totalorder %s51, %s54
      %p63 = scmp.eq.s32.totalorder %s25, 1
      %p64 = por %p62, %p63
      %p65 = scmp.ne.s32.totalorder %s54, %s55
      %p66 = scmp.eq.s32.totalorder %s25, 0
      %p67 = por %p65, %p66
      %p68 = scmp.ne.s32.totalorder %s54, %s55
      %p69 = scmp.eq.s32.totalorder %s26, 1
      %p70 = por %p68, %p69
      %p72 = scmp.ne.s32.totalorder %s55, %s71
      %p73 = scmp.eq.s32.totalorder %s26, 0
      %p74 = por %p72, %p73
      %s75 = ssub.s32 %s20, %s27
      %p76 = scmp.eq.s32.totalorder %s75, 0
      %s78 = sadd.s32 %s77, 1
      %s79 = scalar_select %p76, %s77, %s78
      %p82 = pneg %p76
      %p83 = scmp.eq.s32.totalorder %s20, 1
      %p84 = por %p82, %p83
      %p85 = scmp.ne.s32.totalorder %s77, %s80
      %p86 = scmp.eq.s32.totalorder %s20, 0
      %p87 = por %p85, %p86
      %p88 = scmp.ne.s32.totalorder %s77, %s80
      %p89 = scmp.eq.s32.totalorder %s25, 1
      %p90 = por %p88, %p89
      %p91 = scmp.ne.s32.totalorder %s80, %s81
      %p92 = scmp.eq.s32.totalorder %s25, 0
      %p93 = por %p91, %p92
      %p94 = scmp.ne.s32.totalorder %s80, %s81
      %p95 = scmp.eq.s32.totalorder %s26, 1
      %p96 = por %p94, %p95
      %p98 = scmp.ne.s32.totalorder %s81, %s97
      %p99 = scmp.eq.s32.totalorder %s26, 0
      %p100 = por %p98, %p99
      %s101 = ssub.s32 %s20, %s27
      %p102 = scmp.eq.s32.totalorder %s101, 0
      %s104 = sadd.s32 %s103, 1
      %s105 = scalar_select %p102, %s103, %s104
      %p108 = pneg %p102
      %p109 = scmp.eq.s32.totalorder %s20, 1
      %p110 = por %p108, %p109
      %p111 = scmp.ne.s32.totalorder %s103, %s106
      %p112 = scmp.eq.s32.totalorder %s20, 0
      %p113 = por %p111, %p112
      %p114 = scmp.ne.s32.totalorder %s103, %s106
      %p115 = scmp.eq.s32.totalorder %s25, 1
      %p116 = por %p114, %p115
      %p117 = scmp.ne.s32.totalorder %s106, %s107
      %p118 = scmp.eq.s32.totalorder %s25, 0
      %p119 = por %p117, %p118
      %p120 = scmp.ne.s32.totalorder %s106, %s107
      %p121 = scmp.eq.s32.totalorder %s26, 1
      %p122 = por %p120, %p121
      %p124 = scmp.ne.s32.totalorder %s107, %s123
      %p125 = scmp.eq.s32.totalorder %s26, 0
      %p126 = por %p124, %p125
      %s127 = ssub.s32 %s20, %s27
      %p128 = scmp.eq.s32.totalorder %s127, 0
      %s130 = sadd.s32 %s129, 1
      %s131 = scalar_select %p128, %s129, %s130
      %p134 = pneg %p128
      %p135 = scmp.eq.s32.totalorder %s20, 1
      %p136 = por %p134, %p135
      %p137 = scmp.ne.s32.totalorder %s129, %s132
      %p138 = scmp.eq.s32.totalorder %s20, 0
      %p139 = por %p137, %p138
      %p140 = scmp.ne.s32.totalorder %s129, %s132
      %p141 = scmp.eq.s32.totalorder %s25, 1
      %p142 = por %p140, %p141
      %p143 = scmp.ne.s32.totalorder %s132, %s133
      %p144 = scmp.eq.s32.totalorder %s25, 0
      %p145 = por %p143, %p144
      %p146 = scmp.ne.s32.totalorder %s132, %s133
      %p147 = scmp.eq.s32.totalorder %s26, 1
      %p148 = por %p146, %p147
      %p150 = scmp.ne.s32.totalorder %s133, %s149
      %p151 = scmp.eq.s32.totalorder %s26, 0
      %p152 = por %p150, %p151
      %s153 = ssub.s32 %s20, %s27
      %p154 = scmp.eq.s32.totalorder %s153, 0
      %s156 = sadd.s32 %s155, 1
      %s157 = scalar_select %p154, %s155, %s156
      %p160 = pneg %p154
      %p161 = scmp.eq.s32.totalorder %s20, 1
      %p162 = por %p160, %p161
      %p163 = scmp.ne.s32.totalorder %s155, %s158
      %p164 = scmp.eq.s32.totalorder %s20, 0
      %p165 = por %p163, %p164
      %p166 = scmp.ne.s32.totalorder %s155, %s158
      %p167 = scmp.eq.s32.totalorder %s25, 1
      %p168 = por %p166, %p167
      %p169 = scmp.ne.s32.totalorder %s158, %s159
      %p170 = scmp.eq.s32.totalorder %s25, 0
      %p171 = por %p169, %p170
      %p172 = scmp.ne.s32.totalorder %s158, %s159
      %p173 = scmp.eq.s32.totalorder %s26, 1
      %p174 = por %p172, %p173
      %p176 = scmp.ne.s32.totalorder %s159, %s175
      %p177 = scmp.eq.s32.totalorder %s26, 0
      %p178 = por %p176, %p177
      %p179 = scmp.le.s32.totalorder 1, %s20
      %p180 = scmp.lt.s32.totalorder %s20, 3
      %p181 = pnand %p179, %p180
      %p182 = pneg %p181
      // Predicated region
      $region9: #{rbm_tans_dti_forward.5} parent=5 // pred_check
        _
      $region10: #{rbm_tans_dti_forward.5} parent=5 // pred_check_branch
        %184 = sbr.rel (%p181) target = $region12
      $region11: #{rbm_tans_dti_forward.5} parent=5 // pred_region
        %s185 = ssub.s32 %s20, 1
        // Predicated region
        $region13: #{rbm_tans_dti_forward.5} parent=11 // pred_check
          %p186 = pneg %p41
        $region14: #{rbm_tans_dti_forward.5} parent=11 // pred_check_branch
          %188 = sbr.rel (%p186) target = $region16
        $region15: #{rbm_tans_dti_forward.5} parent=11 // pred_region
          _
        $region16: #{rbm_tans_dti_forward.5} parent=11 // pred_fallthru
          _
      $region12: #{rbm_tans_dti_forward.5} parent=5 // pred_fallthru
        _
      %p189 = scmp.lt.s32.totalorder %s20, 2
      // Predicated region
      $region17: #{rbm_tans_dti_forward.5} parent=5 // pred_check
        %p190 = pneg %p189
      $region18: #{rbm_tans_dti_forward.5} parent=5 // pred_check_branch
        %192 = sbr.rel (%p190) target = $region20
      $region19: #{rbm_tans_dti_forward.5} parent=5 // pred_region
        // Predicated region
        $region21: #{rbm_tans_dti_forward.5} parent=19 // pred_check
          %p193 = pneg %p61
        $region22: #{rbm_tans_dti_forward.5} parent=19 // pred_check_branch
          %195 = sbr.rel (%p193) target = $region24
        $region23: #{rbm_tans_dti_forward.5} parent=19 // pred_region
          %s196 = sand.u32 %s51, 1
          %s197 = scalar_lea.sflag [#allocation4], %s196
          %s198 = sand.u32 %s51, 1
          %s199 = smul.addr %s198, 512
          %s200 = scalar_lea.vmem [#allocation3], %s199
          %s202 = ssub.s32 8192, 8192
          %203 = vsyncadd %s197, %s202
          %s204 = smul.addr %s20, 64
          %s205 = scalar_lea.hbm %s1, %s204
          %s206 = sshll.u32 %s200, 4
          %s207 = int_to_ptr.vmem [resolvable:$true] %s206
          %212 = dma.hbm_to_vmem [thread:$0]  %s205, 8192, %s207, %s197, 128, 64, 4
        $region24: #{rbm_tans_dti_forward.5} parent=19 // pred_fallthru
          _
        // Predicated region
        $region25: #{rbm_tans_dti_forward.5} parent=19 // pred_check
          %p213 = pneg %p87
        $region26: #{rbm_tans_dti_forward.5} parent=19 // pred_check_branch
          %215 = sbr.rel (%p213) target = $region28
        $region27: #{rbm_tans_dti_forward.5} parent=19 // pred_region
          %s216 = sand.u32 %s20, 1
          %s217 = scalar_lea.sflag [#allocation6], %s216
          %s218 = sand.u32 %s77, 1
          %s219 = scalar_lea.vmem [#allocation5], %s218
          %s221 = ssub.s32 16, 16
          %222 = vsyncadd %s217, %s221
          %s223 = smul.addr %s20, 16
          %s224 = scalar_lea.hbm %s2, %s223
          %s226 = sshll.u32 %s219, 4
          %s227 = int_to_ptr.vmem [resolvable:$true] %s226
          %229 = dma.hbm_to_vmem [thread:$0]  %s224, 16, %s227, %s217
        $region28: #{rbm_tans_dti_forward.5} parent=19 // pred_fallthru
          _
        // Predicated region
        $region29: #{rbm_tans_dti_forward.5} parent=19 // pred_check
          %p230 = pneg %p113
        $region30: #{rbm_tans_dti_forward.5} parent=19 // pred_check_branch
          %232 = sbr.rel (%p230) target = $region32
        $region31: #{rbm_tans_dti_forward.5} parent=19 // pred_region
          %s233 = sand.u32 %s20, 1
          %s234 = scalar_lea.sflag [#allocation6], %s233
          %s235 = sand.u32 %s103, 1
          %s236 = scalar_lea.vmem [#allocation7], %s235
          %s238 = ssub.s32 16, 16
          %239 = vsyncadd %s234, %s238
          %s240 = smul.addr %s20, 16
          %s241 = scalar_lea.hbm %s3, %s240
          %s243 = sshll.u32 %s236, 4
          %s244 = int_to_ptr.vmem [resolvable:$true] %s243
          %246 = dma.hbm_to_vmem [thread:$0]  %s241, 16, %s244, %s234
        $region32: #{rbm_tans_dti_forward.5} parent=19 // pred_fallthru
          _
        // Predicated region
        $region33: #{rbm_tans_dti_forward.5} parent=19 // pred_check
          %p247 = pneg %p139
        $region34: #{rbm_tans_dti_forward.5} parent=19 // pred_check_branch
          %249 = sbr.rel (%p247) target = $region36
        $region35: #{rbm_tans_dti_forward.5} parent=19 // pred_region
          %s250 = sand.u32 %s129, 1
          %s251 = scalar_lea.sflag [#allocation9], %s250
          %s252 = sand.u32 %s129, 1
          %s253 = scalar_lea.vmem [#allocation8], %s252
          %s255 = ssub.s32 16, 16
          %256 = vsyncadd %s251, %s255
          %s257 = smul.addr %s20, 16
          %s258 = scalar_lea.hbm %s4, %s257
          %s260 = sshll.u32 %s253, 4
          %s261 = int_to_ptr.vmem [resolvable:$true] %s260
          %263 = dma.hbm_to_vmem [thread:$0]  %s258, 16, %s261, %s251
        $region36: #{rbm_tans_dti_forward.5} parent=19 // pred_fallthru
          _
      $region20: #{rbm_tans_dti_forward.5} parent=5 // pred_fallthru
        _
      %p264 = scmp.le.s32.totalorder 1, %s20
      %p265 = scmp.lt.s32.totalorder %s20, 3
      %p266 = pnand %p264, %p265
      %p267 = pneg %p266
      // Predicated region
      $region37: #{rbm_tans_dti_forward.5} parent=5 // pred_check
        _
      $region38: #{rbm_tans_dti_forward.5} parent=5 // pred_check_branch
        %269 = sbr.rel (%p266) target = $region40
      $region39: #{rbm_tans_dti_forward.5} parent=5 // pred_region
        %s270 = ssub.s32 %s20, 1
        %s271 = sand.u32 %s54, 1
        %s272 = scalar_lea.sflag [#allocation4], %s271
        %s273 = sand.u32 %s54, 1
        %s274 = smul.addr %s273, 512
        %s275 = scalar_lea.vmem [#allocation3], %s274
        // Predicated region
        $region41: #{rbm_tans_dti_forward.5} parent=39 // pred_check
          %p276 = pneg %p67
        $region42: #{rbm_tans_dti_forward.5} parent=39 // pred_check_branch
          %278 = sbr.rel (%p276) target = $region44
        $region43: #{rbm_tans_dti_forward.5} parent=39 // pred_region
          %279 = dma.done %s272, 8192
        $region44: #{rbm_tans_dti_forward.5} parent=39 // pred_fallthru
          _
        %s280 = sand.u32 %s25, 1
        %s281 = scalar_lea.sflag [#allocation6], %s280
        %s282 = sand.u32 %s80, 1
        %s283 = scalar_lea.vmem [#allocation5], %s282
        // Predicated region
        $region45: #{rbm_tans_dti_forward.5} parent=39 // pred_check
          %p284 = pneg %p93
        $region46: #{rbm_tans_dti_forward.5} parent=39 // pred_check_branch
          %286 = sbr.rel (%p284) target = $region48
        $region47: #{rbm_tans_dti_forward.5} parent=39 // pred_region
          %287 = dma.done %s281, 16
        $region48: #{rbm_tans_dti_forward.5} parent=39 // pred_fallthru
          _
        %s288 = sand.u32 %s25, 1
        %s289 = scalar_lea.sflag [#allocation6], %s288
        %s290 = sand.u32 %s106, 1
        %s291 = scalar_lea.vmem [#allocation7], %s290
        // Predicated region
        $region49: #{rbm_tans_dti_forward.5} parent=39 // pred_check
          %p292 = pneg %p119
        $region50: #{rbm_tans_dti_forward.5} parent=39 // pred_check_branch
          %294 = sbr.rel (%p292) target = $region52
        $region51: #{rbm_tans_dti_forward.5} parent=39 // pred_region
          %295 = dma.done %s289, 16
        $region52: #{rbm_tans_dti_forward.5} parent=39 // pred_fallthru
          _
        %s296 = sand.u32 %s132, 1
        %s297 = scalar_lea.sflag [#allocation9], %s296
        %s298 = sand.u32 %s132, 1
        %s299 = scalar_lea.vmem [#allocation8], %s298
        // Predicated region
        $region53: #{rbm_tans_dti_forward.5} parent=39 // pred_check
          %p300 = pneg %p145
        $region54: #{rbm_tans_dti_forward.5} parent=39 // pred_check_branch
          %302 = sbr.rel (%p300) target = $region56
        $region55: #{rbm_tans_dti_forward.5} parent=39 // pred_region
          %303 = dma.done %s297, 16
        $region56: #{rbm_tans_dti_forward.5} parent=39 // pred_fallthru
          _
        %p304 = pneg %p41
        %p305 = pneg %p38
        %s306 = sand.u32 %s54, 1
        %s307 = scalar_lea.sflag [#allocation4], %s306
        %s308 = sand.u32 %s54, 1
        %s309 = smul.addr %s308, 512
        %s310 = scalar_lea.vmem [#allocation3], %s309
        %p311 = pneg %p67
        %p312 = pneg %p64
        %s313 = sand.u32 %s25, 1
        %s314 = scalar_lea.sflag [#allocation6], %s313
        %s315 = sand.u32 %s80, 1
        %s316 = scalar_lea.vmem [#allocation5], %s315
        %p317 = pneg %p93
        %p318 = pneg %p90
        %s319 = sand.u32 %s25, 1
        %s320 = scalar_lea.sflag [#allocation6], %s319
        %s321 = sand.u32 %s106, 1
        %s322 = scalar_lea.vmem [#allocation7], %s321
        %p323 = pneg %p119
        %p324 = pneg %p116
        %s325 = sand.u32 %s132, 1
        %s326 = scalar_lea.sflag [#allocation9], %s325
        %s327 = sand.u32 %s132, 1
        %s328 = scalar_lea.vmem [#allocation8], %s327
        %p329 = pneg %p145
        %p330 = pneg %p142
        %p331 = pneg %p171
        %p332 = pneg %p168
        %s333 = sand.u32 %s158, 1
        %s334 = sand.u32 %s158, 1
        %s335 = smul.addr %s334, 20
        %s336 = scalar_lea.vmem [#allocation10], %s335
        %p338 = scmp.eq.s32.totalorder %s25, 0
        // Predicated region
        $region57: #{rbm_tans_dti_forward.5} parent=39 // pred_check
          %p339 = pneg %p338
        $region58: #{rbm_tans_dti_forward.5} parent=39 // pred_check_branch
          %341 = sbr.rel (%p339) target = $region60
        $region59: #{rbm_tans_dti_forward.5} parent=39 // pred_region
          %v342 = vld [vmem:[%s0] sm:$0xf]
          %v343 = vld [vmem:[%s0 + $0x4] sm:$0xf]
          %v344 = vld [vmem:[%s0 + $0x8] sm:$0x1]
          %345 = vst [vmem:[#allocation2] sm:$0xf] %v342
          %346 = vst [vmem:[#allocation2 + $0x20] sm:$0xf] %v343
          %347 = vst [vmem:[#allocation2 + $0x40] sm:$0x1] %v344
          %v348 = vld [vmem:[%s0] sm:$0xf]
          %v349 = vld [vmem:[%s0 + $0x4] sm:$0xf]
          %v350 = vld [vmem:[%s0 + $0x8] sm:$0x3]
          %vm351 = vsmask.f32 3328
          %vm352 = vsmask.f32 7440
          %vm353 = vmor %vm351, %vm352
          %v355 = vshrl.u32 %v348, 16
          %v357 = vrot.slane %v355, 4
          %v358 = vshll.u32 %v348, 16
          %v360 = vrot.slane %v358, 5
          %v361 = vor.u32 %v357, %v360
          %v362 = vrot.slane %v361, 4
          %v364 = vshll.u32 %v349, 16
          %v366 = vrot.slane %v364, 5
          %v367 = vsel %vm353, %v362, %v366
          %v368 = vshrl.u32 %v349, 16
          %v370 = vrot.slane %v368, 4
          %v371 = vor.u32 %v370, %v366
          %v372 = vrot.slane %v371, 4
          %v374 = vshll.u32 %v350, 16
          %v376 = vrot.slane %v374, 5
          %v377 = vsel %vm353, %v372, %v376
          %v378 = vshrl.u32 %v350, 16
          %v380 = vrot.slane %v378, 4
          %v381 = vor.u32 %v380, %v376
          %v382 = vrot.slane %v381, 4
          %386 = vst [vmem:[#allocation2 + $0x4] sm:$0xf] %v367
          %387 = vst [vmem:[#allocation2 + $0x24] sm:$0xf] %v377
          %388 = vst [vmem:[#allocation2 + $0x44] sm:$0x1] %v382
          %v389 = vld [vmem:[%s0] sm:$0xe]
          %v390 = vld [vmem:[%s0 + $0x4] sm:$0xf]
          %v391 = vld [vmem:[%s0 + $0x8] sm:$0x3]
          %vm395 = vcmask 1042432
          %vm396 = vcmask 1046532
          %vm397 = vmor %vm395, %vm396
          %v398 = vrot.slane %v389, 5
          %v399 = vrot.slane %v398, 4
          %v400 = vrot.slane %v390, 5
          %v401 = vsel %vm397, %v399, %v400
          %v402 = vrot.slane %v400, 4
          %v403 = vrot.slane %v391, 5
          %v404 = vsel %vm397, %v402, %v403
          %v405 = vrot.slane %v403, 4
          %409 = vst [vmem:[#allocation2 + $0x8] sm:$0xf] %v401
          %410 = vst [vmem:[#allocation2 + $0x28] sm:$0xf] %v404
          %411 = vst [vmem:[#allocation2 + $0x48] sm:$0x1] %v405
          %v412 = vld [vmem:[%s0] sm:$0xe]
          %v413 = vld [vmem:[%s0 + $0x4] sm:$0xf]
          %v414 = vld [vmem:[%s0 + $0x8] sm:$0x7]
          %vm415 = vsmask.f32 2304
          %vm416 = vsmask.f32 6416
          %vm417 = vmor %vm415, %vm416
          %v419 = vshrl.u32 %v412, 16
          %v421 = vrot.slane %v419, 5
          %v422 = vshll.u32 %v412, 16
          %v424 = vrot.slane %v422, 6
          %v425 = vor.u32 %v421, %v424
          %v426 = vrot.slane %v425, 4
          %v428 = vshrl.u32 %v413, 16
          %v430 = vrot.slane %v428, 5
          %v431 = vshll.u32 %v413, 16
          %v433 = vrot.slane %v431, 6
          %v434 = vor.u32 %v430, %v433
          %v435 = vsel %vm417, %v426, %v434
          %v436 = vrot.slane %v434, 4
          %v438 = vshrl.u32 %v414, 16
          %v440 = vrot.slane %v438, 5
          %v441 = vshll.u32 %v414, 16
          %v443 = vrot.slane %v441, 6
          %v444 = vor.u32 %v440, %v443
          %v445 = vsel %vm417, %v436, %v444
          %v446 = vrot.slane %v444, 4
          %450 = vst [vmem:[#allocation2 + $0xc] sm:$0xf] %v435
          %451 = vst [vmem:[#allocation2 + $0x2c] sm:$0xf] %v445
          %452 = vst [vmem:[#allocation2 + $0x4c] sm:$0x1] %v446
          %v453 = vld [vmem:[%s0] sm:$0xc]
          %v454 = vld [vmem:[%s0 + $0x4] sm:$0xf]
          %v455 = vld [vmem:[%s0 + $0x8] sm:$0x7]
          %vm459 = vcmask 1041408
          %vm460 = vcmask 1045508
          %vm461 = vmor %vm459, %vm460
          %v462 = vrot.slane %v453, 6
          %v463 = vrot.slane %v462, 4
          %v464 = vrot.slane %v454, 6
          %v465 = vsel %vm461, %v463, %v464
          %v466 = vrot.slane %v464, 4
          %v467 = vrot.slane %v455, 6
          %v468 = vsel %vm461, %v466, %v467
          %v469 = vrot.slane %v467, 4
          %473 = vst [vmem:[#allocation2 + $0x10] sm:$0xf] %v465
          %474 = vst [vmem:[#allocation2 + $0x30] sm:$0xf] %v468
          %475 = vst [vmem:[#allocation2 + $0x50] sm:$0x1] %v469
          %v476 = vld [vmem:[%s0] sm:$0xc]
          %v477 = vld [vmem:[%s0 + $0x4] sm:$0xf]
          %v478 = vld [vmem:[%s0 + $0x8] sm:$0xf]
          %vm479 = vsmask.f32 1280
          %vm480 = vsmask.f32 5392
          %vm481 = vmor %vm479, %vm480
          %v483 = vshrl.u32 %v476, 16
          %v485 = vrot.slane %v483, 6
          %v486 = vshll.u32 %v476, 16
          %v488 = vrot.slane %v486, 7
          %v489 = vor.u32 %v485, %v488
          %v490 = vrot.slane %v489, 4
          %v492 = vshrl.u32 %v477, 16
          %v494 = vrot.slane %v492, 6
          %v495 = vshll.u32 %v477, 16
          %v497 = vrot.slane %v495, 7
          %v498 = vor.u32 %v494, %v497
          %v499 = vsel %vm481, %v490, %v498
          %v500 = vrot.slane %v498, 4
          %v502 = vshrl.u32 %v478, 16
          %v504 = vrot.slane %v502, 6
          %v505 = vshll.u32 %v478, 16
          %v507 = vrot.slane %v505, 7
          %v508 = vor.u32 %v504, %v507
          %v509 = vsel %vm481, %v500, %v508
          %v510 = vrot.slane %v508, 4
          %514 = vst [vmem:[#allocation2 + $0x14] sm:$0xf] %v499
          %515 = vst [vmem:[#allocation2 + $0x34] sm:$0xf] %v509
          %516 = vst [vmem:[#allocation2 + $0x54] sm:$0x1] %v510
          %v517 = vld [vmem:[%s0] sm:$0x8]
          %v518 = vld [vmem:[%s0 + $0x4] sm:$0xf]
          %v519 = vld [vmem:[%s0 + $0x8] sm:$0xf]
          %vm523 = vcmask 1040384
          %vm524 = vcmask 1044484
          %vm525 = vmor %vm523, %vm524
          %v526 = vrot.slane %v517, 7
          %v527 = vrot.slane %v526, 4
          %v528 = vrot.slane %v518, 7
          %v529 = vsel %vm525, %v527, %v528
          %v530 = vrot.slane %v528, 4
          %v531 = vrot.slane %v519, 7
          %v532 = vsel %vm525, %v530, %v531
          %v533 = vrot.slane %v531, 4
          %537 = vst [vmem:[#allocation2 + $0x18] sm:$0xf] %v529
          %538 = vst [vmem:[#allocation2 + $0x38] sm:$0xf] %v532
          %539 = vst [vmem:[#allocation2 + $0x58] sm:$0x1] %v533
          %v540 = vld [vmem:[%s0] sm:$0x8]
          %v541 = vld [vmem:[%s0 + $0x4] sm:$0xf]
          %v542 = vld [vmem:[%s0 + $0x8] sm:$0xf]
          %v543 = vld [vmem:[%s0 + $0xc] sm:$0x1]
          %vm544 = vsmask.f32 256
          %vm545 = vsmask.f32 4368
          %vm546 = vmor %vm544, %vm545
          %v548 = vshrl.u32 %v540, 16
          %v550 = vrot.slane %v548, 7
          %v551 = vrot.slane %v550, 4
          %v553 = vshrl.u32 %v541, 16
          %v555 = vrot.slane %v553, 7
          %v556 = vshll.u32 %v541, 16
          %v558 = vor.u32 %v555, %v556
          %v559 = vsel %vm546, %v551, %v558
          %v560 = vrot.slane %v555, 4
          %v562 = vshrl.u32 %v542, 16
          %v564 = vrot.slane %v562, 7
          %v565 = vshll.u32 %v542, 16
          %v567 = vor.u32 %v564, %v565
          %v568 = vsel %vm546, %v560, %v567
          %v569 = vrot.slane %v564, 4
          %v571 = vshll.u32 %v543, 16
          %v573 = vsel %vm546, %v569, %v571
          %577 = vst [vmem:[#allocation2 + $0x1c] sm:$0xf] %v559
          %578 = vst [vmem:[#allocation2 + $0x3c] sm:$0xf] %v568
          %579 = vst [vmem:[#allocation2 + $0x5c] sm:$0x1] %v573
          %v580 = vld [vmem:[%s0 + $0xc] sm:$0xf]
          %v581 = vld [vmem:[%s0 + $0x10] sm:$0xf]
          %v582 = vld [vmem:[%s0 + $0x14] sm:$0x3]
          %v584 = vshrl.u32 %v580, 16
          %v586 = vrot.slane %v584, 7
          %v587 = vshll.u32 %v580, 16
          %v589 = vor.u32 %v586, %v587
          %v590 = vrot.slane %v586, 4
          %v592 = vshrl.u32 %v581, 16
          %v594 = vrot.slane %v592, 7
          %v595 = vshll.u32 %v581, 16
          %v597 = vor.u32 %v594, %v595
          %v598 = vsel %vm546, %v590, %v597
          %v599 = vrot.slane %v594, 4
          %v601 = vshrl.u32 %v582, 16
          %v603 = vrot.slane %v601, 7
          %v604 = vshll.u32 %v582, 16
          %v606 = vor.u32 %v603, %v604
          %v607 = vsel %vm546, %v599, %v606
          %611 = vst [vmem:[#allocation2 + $0x40] sm:$0xe] %v589
          %612 = vst [vmem:[#allocation2 + $0x60] sm:$0xf] %v598
          %613 = vst [vmem:[#allocation2 + $0x80] sm:$0x3] %v607
          %v614 = vld [vmem:[%s0 + $0xc] sm:$0xe]
          %v615 = vld [vmem:[%s0 + $0x10] sm:$0xf]
          %v616 = vld [vmem:[%s0 + $0x14] sm:$0x3]
          %617 = vst [vmem:[#allocation2 + $0x44] sm:$0xe] %v614
          %618 = vst [vmem:[#allocation2 + $0x64] sm:$0xf] %v615
          %619 = vst [vmem:[#allocation2 + $0x84] sm:$0x3] %v616
          %v620 = vld [vmem:[%s0 + $0xc] sm:$0xe]
          %v621 = vld [vmem:[%s0 + $0x10] sm:$0xf]
          %v622 = vld [vmem:[%s0 + $0x14] sm:$0x7]
          %v624 = vshrl.u32 %v620, 16
          %v626 = vrot.slane %v624, 4
          %v627 = vshll.u32 %v620, 16
          %v629 = vrot.slane %v627, 5
          %v630 = vor.u32 %v626, %v629
          %v631 = vrot.slane %v630, 4
          %v633 = vshll.u32 %v621, 16
          %v635 = vrot.slane %v633, 5
          %v636 = vsel %vm353, %v631, %v635
          %v637 = vshrl.u32 %v621, 16
          %v639 = vrot.slane %v637, 4
          %v640 = vor.u32 %v639, %v635
          %v641 = vrot.slane %v640, 4
          %v643 = vshll.u32 %v622, 16
          %v645 = vrot.slane %v643, 5
          %v646 = vsel %vm353, %v641, %v645
          %v647 = vshrl.u32 %v622, 16
          %v649 = vrot.slane %v647, 4
          %v650 = vor.u32 %v649, %v645
          %v651 = vrot.slane %v650, 4
          %655 = vst [vmem:[#allocation2 + $0x48] sm:$0xe] %v636
          %656 = vst [vmem:[#allocation2 + $0x68] sm:$0xf] %v646
          %657 = vst [vmem:[#allocation2 + $0x88] sm:$0x3] %v651
          %v658 = vld [vmem:[%s0 + $0xc] sm:$0xc]
          %v659 = vld [vmem:[%s0 + $0x10] sm:$0xf]
          %v660 = vld [vmem:[%s0 + $0x14] sm:$0x7]
          %v664 = vrot.slane %v658, 5
          %v665 = vrot.slane %v664, 4
          %v666 = vrot.slane %v659, 5
          %v667 = vsel %vm397, %v665, %v666
          %v668 = vrot.slane %v666, 4
          %v669 = vrot.slane %v660, 5
          %v670 = vsel %vm397, %v668, %v669
          %v671 = vrot.slane %v669, 4
          %675 = vst [vmem:[#allocation2 + $0x4c] sm:$0xe] %v667
          %676 = vst [vmem:[#allocation2 + $0x6c] sm:$0xf] %v670
          %677 = vst [vmem:[#allocation2 + $0x8c] sm:$0x3] %v671
          %v678 = vld [vmem:[%s0 + $0xc] sm:$0xc]
          %v679 = vld [vmem:[%s0 + $0x10] sm:$0xf]
          %v680 = vld [vmem:[%s0 + $0x14] sm:$0xf]
          %v682 = vshrl.u32 %v678, 16
          %v684 = vrot.slane %v682, 5
          %v685 = vshll.u32 %v678, 16
          %v687 = vrot.slane %v685, 6
          %v688 = vor.u32 %v684, %v687
          %v689 = vrot.slane %v688, 4
          %v691 = vshrl.u32 %v679, 16
          %v693 = vrot.slane %v691, 5
          %v694 = vshll.u32 %v679, 16
          %v696 = vrot.slane %v694, 6
          %v697 = vor.u32 %v693, %v696
          %v698 = vsel %vm417, %v689, %v697
          %v699 = vrot.slane %v697, 4
          %v701 = vshrl.u32 %v680, 16
          %v703 = vrot.slane %v701, 5
          %v704 = vshll.u32 %v680, 16
          %v706 = vrot.slane %v704, 6
          %v707 = vor.u32 %v703, %v706
          %v708 = vsel %vm417, %v699, %v707
          %v709 = vrot.slane %v707, 4
          %713 = vst [vmem:[#allocation2 + $0x50] sm:$0xe] %v698
          %714 = vst [vmem:[#allocation2 + $0x70] sm:$0xf] %v708
          %715 = vst [vmem:[#allocation2 + $0x90] sm:$0x3] %v709
          %v716 = vld [vmem:[%s0 + $0xc] sm:$0x8]
          %v717 = vld [vmem:[%s0 + $0x10] sm:$0xf]
          %v718 = vld [vmem:[%s0 + $0x14] sm:$0xf]
          %v722 = vrot.slane %v716, 6
          %v723 = vrot.slane %v722, 4
          %v724 = vrot.slane %v717, 6
          %v725 = vsel %vm461, %v723, %v724
          %v726 = vrot.slane %v724, 4
          %v727 = vrot.slane %v718, 6
          %v728 = vsel %vm461, %v726, %v727
          %v729 = vrot.slane %v727, 4
          %733 = vst [vmem:[#allocation2 + $0x54] sm:$0xe] %v725
          %734 = vst [vmem:[#allocation2 + $0x74] sm:$0xf] %v728
          %735 = vst [vmem:[#allocation2 + $0x94] sm:$0x3] %v729
          %v736 = vld [vmem:[%s0 + $0xc] sm:$0x8]
          %v737 = vld [vmem:[%s0 + $0x10] sm:$0xf]
          %v738 = vld [vmem:[%s0 + $0x14] sm:$0xf]
          %v739 = vld [vmem:[%s0 + $0x18] sm:$0x1]
          %v741 = vshrl.u32 %v736, 16
          %v743 = vrot.slane %v741, 6
          %v744 = vrot.slane %v743, 4
          %v746 = vshrl.u32 %v737, 16
          %v748 = vrot.slane %v746, 6
          %v749 = vshll.u32 %v737, 16
          %v751 = vrot.slane %v749, 7
          %v752 = vor.u32 %v748, %v751
          %v753 = vsel %vm481, %v744, %v752
          %v754 = vrot.slane %v752, 4
          %v756 = vshrl.u32 %v738, 16
          %v758 = vrot.slane %v756, 6
          %v759 = vshll.u32 %v738, 16
          %v761 = vrot.slane %v759, 7
          %v762 = vor.u32 %v758, %v761
          %v763 = vsel %vm481, %v754, %v762
          %v764 = vrot.slane %v762, 4
          %v766 = vshll.u32 %v739, 16
          %v768 = vrot.slane %v766, 7
          %v769 = vsel %vm481, %v764, %v768
          %773 = vst [vmem:[#allocation2 + $0x58] sm:$0xe] %v753
          %774 = vst [vmem:[#allocation2 + $0x78] sm:$0xf] %v763
          %775 = vst [vmem:[#allocation2 + $0x98] sm:$0x3] %v769
          %v776 = vld [vmem:[%s0 + $0x10] sm:$0xf]
          %v777 = vld [vmem:[%s0 + $0x14] sm:$0xf]
          %v778 = vld [vmem:[%s0 + $0x18] sm:$0x1]
          %v782 = vrot.slane %v776, 7
          %v783 = vrot.slane %v782, 4
          %v784 = vrot.slane %v777, 7
          %v785 = vsel %vm525, %v783, %v784
          %v786 = vrot.slane %v784, 4
          %v787 = vrot.slane %v778, 7
          %v788 = vsel %vm525, %v786, %v787
          %792 = vst [vmem:[#allocation2 + $0x5c] sm:$0xe] %v782
          %793 = vst [vmem:[#allocation2 + $0x7c] sm:$0xf] %v785
          %794 = vst [vmem:[#allocation2 + $0x9c] sm:$0x3] %v788
        $region60: #{rbm_tans_dti_forward.5} parent=39 // pred_fallthru
          _
        %v795 = vld [vmem:[#allocation2] sm:$0xff]
        %v796 = vld [vmem:[#allocation2 + $0x8] sm:$0xff]
        %v797 = vld [vmem:[#allocation2 + $0x10] sm:$0xff]
        %v798 = vld [vmem:[#allocation2 + $0x18] sm:$0xff]
        %v799 = vld [vmem:[#allocation2 + $0x20] sm:$0xff]
        %v800 = vld [vmem:[#allocation2 + $0x28] sm:$0xff]
        %v801 = vld [vmem:[#allocation2 + $0x30] sm:$0xff]
        %v802 = vld [vmem:[#allocation2 + $0x38] sm:$0xff]
        %v803 = vld [vmem:[#allocation2 + $0x40] sm:$0xff]
        %v804 = vld [vmem:[#allocation2 + $0x48] sm:$0xff]
        %v805 = vld [vmem:[#allocation2 + $0x50] sm:$0xff]
        %v806 = vld [vmem:[#allocation2 + $0x58] sm:$0xff]
        %v807 = vld [vmem:[#allocation2 + $0x60] sm:$0xff]
        %v808 = vld [vmem:[#allocation2 + $0x68] sm:$0xff]
        %v809 = vld [vmem:[#allocation2 + $0x70] sm:$0xff]
        %v810 = vld [vmem:[#allocation2 + $0x78] sm:$0xff]
        %v811 = vld [vmem:[#allocation2 + $0x80] sm:$0x33]
        %v812 = vld [vmem:[#allocation2 + $0x88] sm:$0x33]
        %v813 = vld [vmem:[#allocation2 + $0x90] sm:$0x33]
        %v814 = vld [vmem:[#allocation2 + $0x98] sm:$0x33]
        %v815 = vld [vmem:[%s275] sm:$0xf]
        %v816 = vld [vmem:[%s275 + $0x4] sm:$0xf]
        %v817 = vld [vmem:[%s275 + $0x8] sm:$0xf]
        %v818 = vld [vmem:[%s275 + $0xc] sm:$0xf]
        %v819 = vld [vmem:[%s275 + $0x10] sm:$0xf]
        %v820 = vld [vmem:[%s275 + $0x14] sm:$0xf]
        %v821 = vld [vmem:[%s275 + $0x18] sm:$0xf]
        %v822 = vld [vmem:[%s275 + $0x1c] sm:$0xf]
        %v823 = vld [vmem:[%s275 + $0x20] sm:$0xf]
        %v824 = vld [vmem:[%s275 + $0x24] sm:$0xf]
        %v825 = vld [vmem:[%s275 + $0x28] sm:$0xf]
        %v826 = vld [vmem:[%s275 + $0x2c] sm:$0xf]
        %v827 = vld [vmem:[%s275 + $0x30] sm:$0xf]
        %v828 = vld [vmem:[%s275 + $0x34] sm:$0xf]
        %v829 = vld [vmem:[%s275 + $0x38] sm:$0xf]
        %v830 = vld [vmem:[%s275 + $0x3c] sm:$0xf]
        %v831 = vld [vmem:[%s275 + $0x40] sm:$0xf]
        %v832 = vld [vmem:[%s275 + $0x44] sm:$0xf]
        %v833 = vld [vmem:[%s275 + $0x48] sm:$0xf]
        %v834 = vld [vmem:[%s275 + $0x4c] sm:$0xf]
        %v835 = vld [vmem:[%s275 + $0x50] sm:$0xf]
        %v836 = vld [vmem:[%s275 + $0x54] sm:$0xf]
        %v837 = vld [vmem:[%s275 + $0x58] sm:$0xf]
        %v838 = vld [vmem:[%s275 + $0x5c] sm:$0xf]
        %v839 = vld [vmem:[%s275 + $0x60] sm:$0xf]
        %v840 = vld [vmem:[%s275 + $0x64] sm:$0xf]
        %v841 = vld [vmem:[%s275 + $0x68] sm:$0xf]
        %v842 = vld [vmem:[%s275 + $0x6c] sm:$0xf]
        %v843 = vld [vmem:[%s275 + $0x70] sm:$0xf]
        %v844 = vld [vmem:[%s275 + $0x74] sm:$0xf]
        %v845 = vld [vmem:[%s275 + $0x78] sm:$0xf]
        %v846 = vld [vmem:[%s275 + $0x7c] sm:$0xf]
        %v847 = vld [vmem:[%s275 + $0x80] sm:$0xf]
        %v848 = vld [vmem:[%s275 + $0x84] sm:$0xf]
        %v849 = vld [vmem:[%s275 + $0x88] sm:$0xf]
        %v850 = vld [vmem:[%s275 + $0x8c] sm:$0xf]
        %v851 = vld [vmem:[%s275 + $0x90] sm:$0xf]
        %v852 = vld [vmem:[%s275 + $0x94] sm:$0xf]
        %v853 = vld [vmem:[%s275 + $0x98] sm:$0xf]
        %v854 = vld [vmem:[%s275 + $0x9c] sm:$0xf]
        %v855 = vld [vmem:[%s275 + $0xa0] sm:$0xf]
        %v856 = vld [vmem:[%s275 + $0xa4] sm:$0xf]
        %v857 = vld [vmem:[%s275 + $0xa8] sm:$0xf]
        %v858 = vld [vmem:[%s275 + $0xac] sm:$0xf]
        %v859 = vld [vmem:[%s275 + $0xb0] sm:$0xf]
        %v860 = vld [vmem:[%s275 + $0xb4] sm:$0xf]
        %v861 = vld [vmem:[%s275 + $0xb8] sm:$0xf]
        %v862 = vld [vmem:[%s275 + $0xbc] sm:$0xf]
        %v863 = vld [vmem:[%s275 + $0xc0] sm:$0xf]
        %v864 = vld [vmem:[%s275 + $0xc4] sm:$0xf]
        %v865 = vld [vmem:[%s275 + $0xc8] sm:$0xf]
        %v866 = vld [vmem:[%s275 + $0xcc] sm:$0xf]
        %v867 = vld [vmem:[%s275 + $0xd0] sm:$0xf]
        %v868 = vld [vmem:[%s275 + $0xd4] sm:$0xf]
        %v869 = vld [vmem:[%s275 + $0xd8] sm:$0xf]
        %v870 = vld [vmem:[%s275 + $0xdc] sm:$0xf]
        %v871 = vld [vmem:[%s275 + $0xe0] sm:$0xf]
        %v872 = vld [vmem:[%s275 + $0xe4] sm:$0xf]
        %v873 = vld [vmem:[%s275 + $0xe8] sm:$0xf]
        %v874 = vld [vmem:[%s275 + $0xec] sm:$0xf]
        %v875 = vld [vmem:[%s275 + $0xf0] sm:$0xf]
        %v876 = vld [vmem:[%s275 + $0xf4] sm:$0xf]
        %v877 = vld [vmem:[%s275 + $0xf8] sm:$0xf]
        %v878 = vld [vmem:[%s275 + $0xfc] sm:$0xf]
        %v879 = vld [vmem:[%s275 + $0x100] sm:$0xf]
        %v880 = vld [vmem:[%s275 + $0x104] sm:$0xf]
        %v881 = vld [vmem:[%s275 + $0x108] sm:$0xf]
        %v882 = vld [vmem:[%s275 + $0x10c] sm:$0xf]
        %v883 = vld [vmem:[%s275 + $0x110] sm:$0xf]
        %v884 = vld [vmem:[%s275 + $0x114] sm:$0xf]
        %v885 = vld [vmem:[%s275 + $0x118] sm:$0xf]
        %v886 = vld [vmem:[%s275 + $0x11c] sm:$0xf]
        %v887 = vld [vmem:[%s275 + $0x120] sm:$0xf]
        %v888 = vld [vmem:[%s275 + $0x124] sm:$0xf]
        %v889 = vld [vmem:[%s275 + $0x128] sm:$0xf]
        %v890 = vld [vmem:[%s275 + $0x12c] sm:$0xf]
        %v891 = vld [vmem:[%s275 + $0x130] sm:$0xf]
        %v892 = vld [vmem:[%s275 + $0x134] sm:$0xf]
        %v893 = vld [vmem:[%s275 + $0x138] sm:$0xf]
        %v894 = vld [vmem:[%s275 + $0x13c] sm:$0xf]
        %v895 = vld [vmem:[%s275 + $0x140] sm:$0xf]
        %v896 = vld [vmem:[%s275 + $0x144] sm:$0xf]
        %v897 = vld [vmem:[%s275 + $0x148] sm:$0xf]
        %v898 = vld [vmem:[%s275 + $0x14c] sm:$0xf]
        %v899 = vld [vmem:[%s275 + $0x150] sm:$0xf]
        %v900 = vld [vmem:[%s275 + $0x154] sm:$0xf]
        %v901 = vld [vmem:[%s275 + $0x158] sm:$0xf]
        %v902 = vld [vmem:[%s275 + $0x15c] sm:$0xf]
        %v903 = vld [vmem:[%s275 + $0x160] sm:$0xf]
        %v904 = vld [vmem:[%s275 + $0x164] sm:$0xf]
        %v905 = vld [vmem:[%s275 + $0x168] sm:$0xf]
        %v906 = vld [vmem:[%s275 + $0x16c] sm:$0xf]
        %v907 = vld [vmem:[%s275 + $0x170] sm:$0xf]
        %v908 = vld [vmem:[%s275 + $0x174] sm:$0xf]
        %v909 = vld [vmem:[%s275 + $0x178] sm:$0xf]
        %v910 = vld [vmem:[%s275 + $0x17c] sm:$0xf]
        %v911 = vld [vmem:[%s275 + $0x180] sm:$0xf]
        %v912 = vld [vmem:[%s275 + $0x184] sm:$0xf]
        %v913 = vld [vmem:[%s275 + $0x188] sm:$0xf]
        %v914 = vld [vmem:[%s275 + $0x18c] sm:$0xf]
        %v915 = vld [vmem:[%s275 + $0x190] sm:$0xf]
        %v916 = vld [vmem:[%s275 + $0x194] sm:$0xf]
        %v917 = vld [vmem:[%s275 + $0x198] sm:$0xf]
        %v918 = vld [vmem:[%s275 + $0x19c] sm:$0xf]
        %v919 = vld [vmem:[%s275 + $0x1a0] sm:$0xf]
        %v920 = vld [vmem:[%s275 + $0x1a4] sm:$0xf]
        %v921 = vld [vmem:[%s275 + $0x1a8] sm:$0xf]
        %v922 = vld [vmem:[%s275 + $0x1ac] sm:$0xf]
        %v923 = vld [vmem:[%s275 + $0x1b0] sm:$0xf]
        %v924 = vld [vmem:[%s275 + $0x1b4] sm:$0xf]
        %v925 = vld [vmem:[%s275 + $0x1b8] sm:$0xf]
        %v926 = vld [vmem:[%s275 + $0x1bc] sm:$0xf]
        %v927 = vld [vmem:[%s275 + $0x1c0] sm:$0xf]
        %v928 = vld [vmem:[%s275 + $0x1c4] sm:$0xf]
        %v929 = vld [vmem:[%s275 + $0x1c8] sm:$0xf]
        %v930 = vld [vmem:[%s275 + $0x1cc] sm:$0xf]
        %v931 = vld [vmem:[%s275 + $0x1d0] sm:$0xf]
        %v932 = vld [vmem:[%s275 + $0x1d4] sm:$0xf]
        %v933 = vld [vmem:[%s275 + $0x1d8] sm:$0xf]
        %v934 = vld [vmem:[%s275 + $0x1dc] sm:$0xf]
        %v935 = vld [vmem:[%s275 + $0x1e0] sm:$0xf]
        %v936 = vld [vmem:[%s275 + $0x1e4] sm:$0xf]
        %v937 = vld [vmem:[%s275 + $0x1e8] sm:$0xf]
        %v938 = vld [vmem:[%s275 + $0x1ec] sm:$0xf]
        %v939 = vld [vmem:[%s275 + $0x1f0] sm:$0xf]
        %v940 = vld [vmem:[%s275 + $0x1f4] sm:$0xf]
        %v941 = vld [vmem:[%s275 + $0x1f8] sm:$0xf]
        %v942 = vld [vmem:[%s275 + $0x1fc] sm:$0xf]
        %v943 = vld [vmem:[%s283] sm:$0x1]
        %v945 = vlaneseq
        %v946 = vshrl.u32 %v945, 7
        %v947 = vsub.s32 0, %v946
        %v948 = vrot.slane %v943, %v947
        %v970 = vunpack.c.l.b16 %v795
        %v971 = vunpack.c.h.b16 %v795
        %v972 = vunpack.c.l.b16 %v796
        %v973 = vunpack.c.h.b16 %v796
        %v974 = vunpack.c.l.b16 %v797
        %v975 = vunpack.c.h.b16 %v797
        %v976 = vunpack.c.l.b16 %v798
        %v977 = vunpack.c.h.b16 %v798
        %v978 = vunpack.c.l.b16 %v799
        %v979 = vunpack.c.h.b16 %v799
        %v980 = vunpack.c.l.b16 %v800
        %v981 = vunpack.c.h.b16 %v800
        %v982 = vunpack.c.l.b16 %v801
        %v983 = vunpack.c.h.b16 %v801
        %v984 = vunpack.c.l.b16 %v802
        %v985 = vunpack.c.h.b16 %v802
        %v986 = vunpack.c.l.b16 %v803
        %v987 = vunpack.c.h.b16 %v803
        %v988 = vunpack.c.l.b16 %v804
        %v989 = vunpack.c.h.b16 %v804
        %v990 = vunpack.c.l.b16 %v805
        %v991 = vunpack.c.h.b16 %v805
        %v992 = vunpack.c.l.b16 %v806
        %v993 = vunpack.c.h.b16 %v806
        %v994 = vunpack.c.l.b16 %v807
        %v995 = vunpack.c.h.b16 %v807
        %v996 = vunpack.c.l.b16 %v808
        %v997 = vunpack.c.h.b16 %v808
        %v998 = vunpack.c.l.b16 %v809
        %v999 = vunpack.c.h.b16 %v809
        %v1000 = vunpack.c.l.b16 %v810
        %v1001 = vunpack.c.h.b16 %v810
        %v1002 = vunpack.c.l.b16 %v811
        %v1003 = vunpack.c.h.b16 %v811
        %v1004 = vunpack.c.l.b16 %v812
        %v1005 = vunpack.c.h.b16 %v812
        %v1006 = vunpack.c.l.b16 %v813
        %v1007 = vunpack.c.h.b16 %v813
        %v1008 = vunpack.c.l.b16 %v814
        %v1009 = vunpack.c.h.b16 %v814
        %v1010 = vpack.c.b16 %v978, %v970
        %v1011 = vpack.c.b16 %v979, %v971
        %v1012 = vpack.c.b16 %v980, %v972
        %v1013 = vpack.c.b16 %v981, %v973
        %v1014 = vpack.c.b16 %v982, %v974
        %v1015 = vpack.c.b16 %v983, %v975
        %v1016 = vpack.c.b16 %v984, %v976
        %v1017 = vpack.c.b16 %v985, %v977
        %v1018 = vpack.c.b16 %v994, %v986
        %v1019 = vpack.c.b16 %v995, %v987
        %v1020 = vpack.c.b16 %v996, %v988
        %v1021 = vpack.c.b16 %v997, %v989
        %v1022 = vpack.c.b16 %v998, %v990
        %v1023 = vpack.c.b16 %v999, %v991
        %v1024 = vpack.c.b16 %v1000, %v992
        %v1025 = vpack.c.b16 %v1001, %v993
        %v1026 = vpack.c.b16 %v1002, %v1002
        %v1027 = vpack.c.b16 %v1003, %v1003
        %v1028 = vpack.c.b16 %v1004, %v1004
        %v1029 = vpack.c.b16 %v1005, %v1005
        %v1030 = vpack.c.b16 %v1006, %v1006
        %v1031 = vpack.c.b16 %v1007, %v1007
        %v1032 = vpack.c.b16 %v1008, %v1008
        %v1033 = vpack.c.b16 %v1009, %v1009
        %v1186 = vunpack.c.l.b16 %v815
        %v1187 = vunpack.c.l.b16 %v816
        %v1188 = vunpack.c.l.b16 %v817
        %v1189 = vunpack.c.l.b16 %v818
        %v1190 = vunpack.c.l.b16 %v819
        %v1191 = vunpack.c.l.b16 %v820
        %v1192 = vunpack.c.l.b16 %v821
        %v1193 = vunpack.c.l.b16 %v822
        %v1194 = vunpack.c.l.b16 %v823
        %v1195 = vunpack.c.l.b16 %v824
        %v1196 = vunpack.c.l.b16 %v825
        %v1197 = vunpack.c.l.b16 %v826
        %v1198 = vunpack.c.l.b16 %v827
        %v1199 = vunpack.c.l.b16 %v828
        %v1200 = vunpack.c.l.b16 %v829
        %v1201 = vunpack.c.l.b16 %v830
        %v1202 = vunpack.c.l.b16 %v831
        %v1203 = vunpack.c.l.b16 %v832
        %v1204 = vunpack.c.l.b16 %v833
        %v1205 = vunpack.c.l.b16 %v834
        %v1206 = vunpack.c.l.b16 %v835
        %v1207 = vunpack.c.l.b16 %v836
        %v1208 = vunpack.c.l.b16 %v837
        %v1209 = vunpack.c.l.b16 %v838
        %v1210 = vunpack.c.l.b16 %v839
        %v1211 = vunpack.c.l.b16 %v840
        %v1212 = vunpack.c.l.b16 %v841
        %v1213 = vunpack.c.l.b16 %v842
        %v1214 = vunpack.c.l.b16 %v843
        %v1215 = vunpack.c.l.b16 %v844
        %v1216 = vunpack.c.l.b16 %v845
        %v1217 = vunpack.c.l.b16 %v846
        %v1218 = vunpack.c.l.b16 %v847
        %v1219 = vunpack.c.l.b16 %v848
        %v1220 = vunpack.c.l.b16 %v849
        %v1221 = vunpack.c.l.b16 %v850
        %v1222 = vunpack.c.l.b16 %v851
        %v1223 = vunpack.c.l.b16 %v852
        %v1224 = vunpack.c.l.b16 %v853
        %v1225 = vunpack.c.l.b16 %v854
        %v1226 = vunpack.c.l.b16 %v855
        %v1227 = vunpack.c.l.b16 %v856
        %v1228 = vunpack.c.l.b16 %v857
        %v1229 = vunpack.c.l.b16 %v858
        %v1230 = vunpack.c.l.b16 %v859
        %v1231 = vunpack.c.l.b16 %v860
        %v1232 = vunpack.c.l.b16 %v861
        %v1233 = vunpack.c.l.b16 %v862
        %v1234 = vunpack.c.l.b16 %v863
        %v1235 = vunpack.c.l.b16 %v864
        %v1236 = vunpack.c.l.b16 %v865
        %v1237 = vunpack.c.l.b16 %v866
        %v1238 = vunpack.c.l.b16 %v867
        %v1239 = vunpack.c.l.b16 %v868
        %v1240 = vunpack.c.l.b16 %v869
        %v1241 = vunpack.c.l.b16 %v870
        %v1242 = vunpack.c.l.b16 %v871
        %v1243 = vunpack.c.l.b16 %v872
        %v1244 = vunpack.c.l.b16 %v873
        %v1245 = vunpack.c.l.b16 %v874
        %v1246 = vunpack.c.l.b16 %v875
        %v1247 = vunpack.c.l.b16 %v876
        %v1248 = vunpack.c.l.b16 %v877
        %v1249 = vunpack.c.l.b16 %v878
        %v1250 = vunpack.c.l.b16 %v879
        %v1251 = vunpack.c.l.b16 %v880
        %v1252 = vunpack.c.l.b16 %v881
        %v1253 = vunpack.c.l.b16 %v882
        %v1254 = vunpack.c.l.b16 %v883
        %v1255 = vunpack.c.l.b16 %v884
        %v1256 = vunpack.c.l.b16 %v885
        %v1257 = vunpack.c.l.b16 %v886
        %v1258 = vunpack.c.l.b16 %v887
        %v1259 = vunpack.c.l.b16 %v888
        %v1260 = vunpack.c.l.b16 %v889
        %v1261 = vunpack.c.l.b16 %v890
        %v1262 = vunpack.c.l.b16 %v891
        %v1263 = vunpack.c.l.b16 %v892
        %v1264 = vunpack.c.l.b16 %v893
        %v1265 = vunpack.c.l.b16 %v894
        %v1266 = vunpack.c.l.b16 %v895
        %v1267 = vunpack.c.l.b16 %v896
        %v1268 = vunpack.c.l.b16 %v897
        %v1269 = vunpack.c.l.b16 %v898
        %v1270 = vunpack.c.l.b16 %v899
        %v1271 = vunpack.c.l.b16 %v900
        %v1272 = vunpack.c.l.b16 %v901
        %v1273 = vunpack.c.l.b16 %v902
        %v1274 = vunpack.c.l.b16 %v903
        %v1275 = vunpack.c.l.b16 %v904
        %v1276 = vunpack.c.l.b16 %v905
        %v1277 = vunpack.c.l.b16 %v906
        %v1278 = vunpack.c.l.b16 %v907
        %v1279 = vunpack.c.l.b16 %v908
        %v1280 = vunpack.c.l.b16 %v909
        %v1281 = vunpack.c.l.b16 %v910
        %v1282 = vunpack.c.l.b16 %v911
        %v1283 = vunpack.c.l.b16 %v912
        %v1284 = vunpack.c.l.b16 %v913
        %v1285 = vunpack.c.l.b16 %v914
        %v1286 = vunpack.c.l.b16 %v915
        %v1287 = vunpack.c.l.b16 %v916
        %v1288 = vunpack.c.l.b16 %v917
        %v1289 = vunpack.c.l.b16 %v918
        %v1290 = vunpack.c.l.b16 %v919
        %v1291 = vunpack.c.l.b16 %v920
        %v1292 = vunpack.c.l.b16 %v921
        %v1293 = vunpack.c.l.b16 %v922
        %v1294 = vunpack.c.l.b16 %v923
        %v1295 = vunpack.c.l.b16 %v924
        %v1296 = vunpack.c.l.b16 %v925
        %v1297 = vunpack.c.l.b16 %v926
        %v1298 = vunpack.c.l.b16 %v927
        %v1299 = vunpack.c.l.b16 %v928
        %v1300 = vunpack.c.l.b16 %v929
        %v1301 = vunpack.c.l.b16 %v930
        %v1302 = vunpack.c.l.b16 %v931
        %v1303 = vunpack.c.l.b16 %v932
        %v1304 = vunpack.c.l.b16 %v933
        %v1305 = vunpack.c.l.b16 %v934
        %v1306 = vunpack.c.l.b16 %v935
        %v1307 = vunpack.c.l.b16 %v936
        %v1308 = vunpack.c.l.b16 %v937
        %v1309 = vunpack.c.l.b16 %v938
        %v1310 = vunpack.c.l.b16 %v939
        %v1311 = vunpack.c.l.b16 %v940
        %v1312 = vunpack.c.l.b16 %v941
        %v1313 = vunpack.c.l.b16 %v942
        %v1314 = vpack.c.b16 %v1187, %v1186
        %v1315 = vpack.c.b16 %v1189, %v1188
        %v1316 = vpack.c.b16 %v1191, %v1190
        %v1317 = vpack.c.b16 %v1193, %v1192
        %v1318 = vpack.c.b16 %v1195, %v1194
        %v1319 = vpack.c.b16 %v1197, %v1196
        %v1320 = vpack.c.b16 %v1199, %v1198
        %v1321 = vpack.c.b16 %v1201, %v1200
        %v1322 = vpack.c.b16 %v1203, %v1202
        %v1323 = vpack.c.b16 %v1205, %v1204
        %v1324 = vpack.c.b16 %v1207, %v1206
        %v1325 = vpack.c.b16 %v1209, %v1208
        %v1326 = vpack.c.b16 %v1211, %v1210
        %v1327 = vpack.c.b16 %v1213, %v1212
        %v1328 = vpack.c.b16 %v1215, %v1214
        %v1329 = vpack.c.b16 %v1217, %v1216
        %v1330 = vpack.c.b16 %v1219, %v1218
        %v1331 = vpack.c.b16 %v1221, %v1220
        %v1332 = vpack.c.b16 %v1223, %v1222
        %v1333 = vpack.c.b16 %v1225, %v1224
        %v1334 = vpack.c.b16 %v1227, %v1226
        %v1335 = vpack.c.b16 %v1229, %v1228
        %v1336 = vpack.c.b16 %v1231, %v1230
        %v1337 = vpack.c.b16 %v1233, %v1232
        %v1338 = vpack.c.b16 %v1235, %v1234
        %v1339 = vpack.c.b16 %v1237, %v1236
        %v1340 = vpack.c.b16 %v1239, %v1238
        %v1341 = vpack.c.b16 %v1241, %v1240
        %v1342 = vpack.c.b16 %v1243, %v1242
        %v1343 = vpack.c.b16 %v1245, %v1244
        %v1344 = vpack.c.b16 %v1247, %v1246
        %v1345 = vpack.c.b16 %v1249, %v1248
        %v1346 = vpack.c.b16 %v1251, %v1250
        %v1347 = vpack.c.b16 %v1253, %v1252
        %v1348 = vpack.c.b16 %v1255, %v1254
        %v1349 = vpack.c.b16 %v1257, %v1256
        %v1350 = vpack.c.b16 %v1259, %v1258
        %v1351 = vpack.c.b16 %v1261, %v1260
        %v1352 = vpack.c.b16 %v1263, %v1262
        %v1353 = vpack.c.b16 %v1265, %v1264
        %v1354 = vpack.c.b16 %v1267, %v1266
        %v1355 = vpack.c.b16 %v1269, %v1268
        %v1356 = vpack.c.b16 %v1271, %v1270
        %v1357 = vpack.c.b16 %v1273, %v1272
        %v1358 = vpack.c.b16 %v1275, %v1274
        %v1359 = vpack.c.b16 %v1277, %v1276
        %v1360 = vpack.c.b16 %v1279, %v1278
        %v1361 = vpack.c.b16 %v1281, %v1280
        %v1362 = vpack.c.b16 %v1283, %v1282
        %v1363 = vpack.c.b16 %v1285, %v1284
        %v1364 = vpack.c.b16 %v1287, %v1286
        %v1365 = vpack.c.b16 %v1289, %v1288
        %v1366 = vpack.c.b16 %v1291, %v1290
        %v1367 = vpack.c.b16 %v1293, %v1292
        %v1368 = vpack.c.b16 %v1295, %v1294
        %v1369 = vpack.c.b16 %v1297, %v1296
        %v1370 = vpack.c.b16 %v1299, %v1298
        %v1371 = vpack.c.b16 %v1301, %v1300
        %v1372 = vpack.c.b16 %v1303, %v1302
        %v1373 = vpack.c.b16 %v1305, %v1304
        %v1374 = vpack.c.b16 %v1307, %v1306
        %v1375 = vpack.c.b16 %v1309, %v1308
        %v1376 = vpack.c.b16 %v1311, %v1310
        %v1377 = vpack.c.b16 %v1313, %v1312
        %1442 = vmatprep.subr.bf16.mxu0 0
        %1443 = vmatpush1.bf16.msra.mxu0 %v1321
        %1444 = vmatprep.subr.bf16.mxu0 0
        %1445 = vmatpush1.bf16.msra.mxu0 %v1320
        %1446 = vmatprep.subr.bf16.mxu0 0
        %1447 = vmatpush1.bf16.msra.mxu0 %v1319
        %1448 = vmatprep.subr.bf16.mxu0 0
        %1449 = vmatpush1.bf16.msra.mxu0 %v1318
        %1450 = vmatprep.subr.bf16.mxu0 0
        %1451 = vmatpush1.bf16.msra.mxu0 %v1317
        %1452 = vmatprep.subr.bf16.mxu0 0
        %1453 = vmatpush1.bf16.msra.mxu0 %v1316
        %1454 = vmatprep.subr.bf16.mxu0 0
        %1455 = vmatpush1.bf16.msra.mxu0 %v1315
        %1456 = vmatprep.subr.bf16.mxu0 0
        %1457 = vmatpush1.bf16.msra.mxu0 %v1314
        %1458 = vmatprep.subr.bf16.mxu0 0
        %1459 = vmatpush2.bf16.msra.mxu0 %v1329
        %1460 = vmatprep.subr.bf16.mxu0 0
        %1461 = vmatpush2.bf16.msra.mxu0 %v1328
        %1462 = vmatprep.subr.bf16.mxu0 0
        %1463 = vmatpush2.bf16.msra.mxu0 %v1327
        %1464 = vmatprep.subr.bf16.mxu0 0
        %1465 = vmatpush2.bf16.msra.mxu0 %v1326
        %1466 = vmatprep.subr.bf16.mxu0 0
        %1467 = vmatpush2.bf16.msra.mxu0 %v1325
        %1468 = vmatprep.subr.bf16.mxu0 0
        %1469 = vmatpush2.bf16.msra.mxu0 %v1324
        %1470 = vmatprep.subr.bf16.mxu0 0
        %1471 = vmatpush2.bf16.msra.mxu0 %v1323
        %1472 = vmatprep.subr.bf16.mxu0 0
        %1473 = vmatpush2.bf16.msra.mxu0 %v1322
        %1474 = vmatprep.mubr.bf16.mxu0 %v1011
        %1475 = vmatmul.mubr.bf16.gmra.mxu0 %v1010
        %v1476 = vpop.f32.mrf.mxu0
        %v1477 = vadd.f32 %v948, %v1476
        %v1478 = vpop.f32.mrf.mxu0
        %v1479 = vpop.f32.mrf.mxu0
        %v1480 = vadd.f32 %v948, %v1479
        %v1481 = vpop.f32.mrf.mxu0
        %1482 = vmatprep.mubr.bf16.mxu0 %v1019
        %1483 = vmatmul.mubr.bf16.gmra.mxu0 %v1018
        %v1484 = vpop.f32.mrf.mxu0
        %v1485 = vadd.f32 %v948, %v1484
        %v1486 = vpop.f32.mrf.mxu0
        %v1487 = vpop.f32.mrf.mxu0
        %v1488 = vadd.f32 %v948, %v1487
        %v1489 = vpop.f32.mrf.mxu0
        %1490 = vmatprep.mubr.bf16.mxu0 %v1027
        %1491 = vmatmul.mubr.bf16.gmra.mxu0 %v1026
        %v1492 = vpop.f32.mrf.mxu0
        %v1493 = vadd.f32 %v948, %v1492
        %v1494 = vpop.f32.mrf.mxu0
        %v1495 = vpop.f32.mrf.mxu0
        %v1496 = vpop.f32.mrf.mxu0
        %1497 = vdwg.mxu0
        %1498 = vmatprep.subr.bf16.mxu0 0
        %1499 = vmatpush1.bf16.msra.mxu0 %v1337
        %1500 = vmatprep.subr.bf16.mxu0 0
        %1501 = vmatpush1.bf16.msra.mxu0 %v1336
        %1502 = vmatprep.subr.bf16.mxu0 0
        %1503 = vmatpush1.bf16.msra.mxu0 %v1335
        %1504 = vmatprep.subr.bf16.mxu0 0
        %1505 = vmatpush1.bf16.msra.mxu0 %v1334
        %1506 = vmatprep.subr.bf16.mxu0 0
        %1507 = vmatpush1.bf16.msra.mxu0 %v1333
        %1508 = vmatprep.subr.bf16.mxu0 0
        %1509 = vmatpush1.bf16.msra.mxu0 %v1332
        %1510 = vmatprep.subr.bf16.mxu0 0
        %1511 = vmatpush1.bf16.msra.mxu0 %v1331
        %1512 = vmatprep.subr.bf16.mxu0 0
        %1513 = vmatpush1.bf16.msra.mxu0 %v1330
        %1514 = vmatprep.subr.bf16.mxu0 0
        %1515 = vmatpush2.bf16.msra.mxu0 %v1345
        %1516 = vmatprep.subr.bf16.mxu0 0
        %1517 = vmatpush2.bf16.msra.mxu0 %v1344
        %1518 = vmatprep.subr.bf16.mxu0 0
        %1519 = vmatpush2.bf16.msra.mxu0 %v1343
        %1520 = vmatprep.subr.bf16.mxu0 0
        %1521 = vmatpush2.bf16.msra.mxu0 %v1342
        %1522 = vmatprep.subr.bf16.mxu0 0
        %1523 = vmatpush2.bf16.msra.mxu0 %v1341
        %1524 = vmatprep.subr.bf16.mxu0 0
        %1525 = vmatpush2.bf16.msra.mxu0 %v1340
        %1526 = vmatprep.subr.bf16.mxu0 0
        %1527 = vmatpush2.bf16.msra.mxu0 %v1339
        %1528 = vmatprep.subr.bf16.mxu0 0
        %1529 = vmatpush2.bf16.msra.mxu0 %v1338
        %1530 = vmatprep.mubr.bf16.mxu0 %v1013
        %1531 = vmatmul.mubr.bf16.gmra.mxu0 %v1012
        %v1532 = vpop.f32.mrf.mxu0
        %v1533 = vadd.f32 %v1477, %v1532
        %v1534 = vpop.f32.mrf.mxu0
        %v1535 = vpop.f32.mrf.mxu0
        %v1536 = vadd.f32 %v1480, %v1535
        %v1537 = vpop.f32.mrf.mxu0
        %1538 = vmatprep.mubr.bf16.mxu0 %v1021
        %1539 = vmatmul.mubr.bf16.gmra.mxu0 %v1020
        %v1540 = vpop.f32.mrf.mxu0
        %v1541 = vadd.f32 %v1485, %v1540
        %v1542 = vpop.f32.mrf.mxu0
        %v1543 = vpop.f32.mrf.mxu0
        %v1544 = vadd.f32 %v1488, %v1543
        %v1545 = vpop.f32.mrf.mxu0
        %1546 = vmatprep.mubr.bf16.mxu0 %v1029
        %1547 = vmatmul.mubr.bf16.gmra.mxu0 %v1028
        %v1548 = vpop.f32.mrf.mxu0
        %v1549 = vadd.f32 %v1493, %v1548
        %v1550 = vpop.f32.mrf.mxu0
        %v1551 = vpop.f32.mrf.mxu0
        %v1552 = vpop.f32.mrf.mxu0
        %1553 = vdwg.mxu0
        %1554 = vmatprep.subr.bf16.mxu0 0
        %1555 = vmatpush1.bf16.msra.mxu0 %v1353
        %1556 = vmatprep.subr.bf16.mxu0 0
        %1557 = vmatpush1.bf16.msra.mxu0 %v1352
        %1558 = vmatprep.subr.bf16.mxu0 0
        %1559 = vmatpush1.bf16.msra.mxu0 %v1351
        %1560 = vmatprep.subr.bf16.mxu0 0
        %1561 = vmatpush1.bf16.msra.mxu0 %v1350
        %1562 = vmatprep.subr.bf16.mxu0 0
        %1563 = vmatpush1.bf16.msra.mxu0 %v1349
        %1564 = vmatprep.subr.bf16.mxu0 0
        %1565 = vmatpush1.bf16.msra.mxu0 %v1348
        %1566 = vmatprep.subr.bf16.mxu0 0
        %1567 = vmatpush1.bf16.msra.mxu0 %v1347
        %1568 = vmatprep.subr.bf16.mxu0 0
        %1569 = vmatpush1.bf16.msra.mxu0 %v1346
        %1570 = vmatprep.subr.bf16.mxu0 0
        %1571 = vmatpush2.bf16.msra.mxu0 %v1361
        %1572 = vmatprep.subr.bf16.mxu0 0
        %1573 = vmatpush2.bf16.msra.mxu0 %v1360
        %1574 = vmatprep.subr.bf16.mxu0 0
        %1575 = vmatpush2.bf16.msra.mxu0 %v1359
        %1576 = vmatprep.subr.bf16.mxu0 0
        %1577 = vmatpush2.bf16.msra.mxu0 %v1358
        %1578 = vmatprep.subr.bf16.mxu0 0
        %1579 = vmatpush2.bf16.msra.mxu0 %v1357
        %1580 = vmatprep.subr.bf16.mxu0 0
        %1581 = vmatpush2.bf16.msra.mxu0 %v1356
        %1582 = vmatprep.subr.bf16.mxu0 0
        %1583 = vmatpush2.bf16.msra.mxu0 %v1355
        %1584 = vmatprep.subr.bf16.mxu0 0
        %1585 = vmatpush2.bf16.msra.mxu0 %v1354
        %1586 = vmatprep.mubr.bf16.mxu0 %v1015
        %1587 = vmatmul.mubr.bf16.gmra.mxu0 %v1014
        %v1588 = vpop.f32.mrf.mxu0
        %v1589 = vadd.f32 %v1533, %v1588
        %v1590 = vpop.f32.mrf.mxu0
        %v1591 = vpop.f32.mrf.mxu0
        %v1592 = vadd.f32 %v1536, %v1591
        %v1593 = vpop.f32.mrf.mxu0
        %1594 = vmatprep.mubr.bf16.mxu0 %v1023
        %1595 = vmatmul.mubr.bf16.gmra.mxu0 %v1022
        %v1596 = vpop.f32.mrf.mxu0
        %v1597 = vadd.f32 %v1541, %v1596
        %v1598 = vpop.f32.mrf.mxu0
        %v1599 = vpop.f32.mrf.mxu0
        %v1600 = vadd.f32 %v1544, %v1599
        %v1601 = vpop.f32.mrf.mxu0
        %1602 = vmatprep.mubr.bf16.mxu0 %v1031
        %1603 = vmatmul.mubr.bf16.gmra.mxu0 %v1030
        %v1604 = vpop.f32.mrf.mxu0
        %v1605 = vadd.f32 %v1549, %v1604
        %v1606 = vpop.f32.mrf.mxu0
        %v1607 = vpop.f32.mrf.mxu0
        %v1608 = vpop.f32.mrf.mxu0
        %1609 = vdwg.mxu0
        %1610 = vmatprep.subr.bf16.mxu0 0
        %1611 = vmatpush1.bf16.msra.mxu0 %v1369
        %1612 = vmatprep.subr.bf16.mxu0 0
        %1613 = vmatpush1.bf16.msra.mxu0 %v1368
        %1614 = vmatprep.subr.bf16.mxu0 0
        %1615 = vmatpush1.bf16.msra.mxu0 %v1367
        %1616 = vmatprep.subr.bf16.mxu0 0
        %1617 = vmatpush1.bf16.msra.mxu0 %v1366
        %1618 = vmatprep.subr.bf16.mxu0 0
        %1619 = vmatpush1.bf16.msra.mxu0 %v1365
        %1620 = vmatprep.subr.bf16.mxu0 0
        %1621 = vmatpush1.bf16.msra.mxu0 %v1364
        %1622 = vmatprep.subr.bf16.mxu0 0
        %1623 = vmatpush1.bf16.msra.mxu0 %v1363
        %1624 = vmatprep.subr.bf16.mxu0 0
        %1625 = vmatpush1.bf16.msra.mxu0 %v1362
        %1626 = vmatprep.subr.bf16.mxu0 0
        %1627 = vmatpush2.bf16.msra.mxu0 %v1377
        %1628 = vmatprep.subr.bf16.mxu0 0
        %1629 = vmatpush2.bf16.msra.mxu0 %v1376
        %1630 = vmatprep.subr.bf16.mxu0 0
        %1631 = vmatpush2.bf16.msra.mxu0 %v1375
        %1632 = vmatprep.subr.bf16.mxu0 0
        %1633 = vmatpush2.bf16.msra.mxu0 %v1374
        %1634 = vmatprep.subr.bf16.mxu0 0
        %1635 = vmatpush2.bf16.msra.mxu0 %v1373
        %1636 = vmatprep.subr.bf16.mxu0 0
        %1637 = vmatpush2.bf16.msra.mxu0 %v1372
        %1638 = vmatprep.subr.bf16.mxu0 0
        %1639 = vmatpush2.bf16.msra.mxu0 %v1371
        %1640 = vmatprep.subr.bf16.mxu0 0
        %1641 = vmatpush2.bf16.msra.mxu0 %v1370
        %1642 = vmatprep.mubr.bf16.mxu0 %v1017
        %1643 = vmatmul.mubr.bf16.gmra.mxu0 %v1016
        %v1644 = vpop.f32.mrf.mxu0
        %v1645 = vadd.f32 %v1589, %v1644
        %v1646 = vpop.f32.mrf.mxu0
        %v1647 = vpop.f32.mrf.mxu0
        %v1648 = vadd.f32 %v1592, %v1647
        %v1649 = vpop.f32.mrf.mxu0
        %1650 = vmatprep.mubr.bf16.mxu0 %v1025
        %1651 = vmatmul.mubr.bf16.gmra.mxu0 %v1024
        %v1652 = vpop.f32.mrf.mxu0
        %v1653 = vadd.f32 %v1597, %v1652
        %v1654 = vpop.f32.mrf.mxu0
        %v1655 = vpop.f32.mrf.mxu0
        %v1656 = vadd.f32 %v1600, %v1655
        %v1657 = vpop.f32.mrf.mxu0
        %1658 = vmatprep.mubr.bf16.mxu0 %v1033
        %1659 = vmatmul.mubr.bf16.gmra.mxu0 %v1032
        %v1660 = vpop.f32.mrf.mxu0
        %v1661 = vadd.f32 %v1605, %v1660
        %v1662 = vpop.f32.mrf.mxu0
        %v1663 = vpop.f32.mrf.mxu0
        %v1664 = vpop.f32.mrf.mxu0
        %1665 = vdwg.mxu0
        %v1666 = vmax.f32 %v1645, 0.0
        %v1667 = vmax.f32 %v1648, 0.0
        %v1668 = vmax.f32 %v1653, 0.0
        %v1669 = vmax.f32 %v1656, 0.0
        %v1670 = vmax.f32 %v1661, 0.0
        %v1671 = vld [vmem:[%s291] sm:$0x1]
        %v1673 = vlaneseq
        %v1674 = vshrl.u32 %v1673, 7
        %v1675 = vsub.s32 0, %v1674
        %v1676 = vrot.slane %v1671, %v1675
        %v1678 = vmul.f32 %v1666, %v1676
        %v1679 = vmul.f32 %v1667, %v1676
        %v1680 = vmul.f32 %v1668, %v1676
        %v1681 = vmul.f32 %v1669, %v1676
        %v1682 = vmul.f32 %v1670, %v1676
        %v1683 = vld [vmem:[%s299] sm:$0x1]
        %v1685 = vlaneseq
        %v1686 = vshrl.u32 %v1685, 7
        %v1687 = vsub.s32 0, %v1686
        %v1688 = vrot.slane %v1683, %v1687
        %v1690 = vadd.f32 %v1678, %v1688
        %v1691 = vadd.f32 %v1679, %v1688
        %v1692 = vadd.f32 %v1680, %v1688
        %v1693 = vadd.f32 %v1681, %v1688
        %v1694 = vadd.f32 %v1682, %v1688
        %v1695 = vpack.c.bf16 %v1691, %v1690
        %v1696 = vpack.c.bf16 %v1693, %v1692
        %v1697 = vpack.c.bf16 %v1694, %v1694
        %v1701 = vunpack.c.l.b16 %v1695
        %v1702 = vunpack.c.h.b16 %v1695
        %v1703 = vunpack.c.l.b16 %v1696
        %v1704 = vunpack.c.h.b16 %v1696
        %v1705 = vunpack.c.l.b16 %v1697
        %v1706 = vpack.c.b16 %v1701, %v1701
        %v1707 = vpack.c.b16 %v1702, %v1702
        %v1708 = vpack.c.b16 %v1703, %v1703
        %v1709 = vpack.c.b16 %v1704, %v1704
        %v1710 = vpack.c.b16 %v1705, %v1705
        %1716 = vst [vmem:[%s336] sm:$0xf] %v1706
        %1717 = vst [vmem:[%s336 + $0x4] sm:$0xf] %v1707
        %1718 = vst [vmem:[%s336 + $0x8] sm:$0xf] %v1708
        %1719 = vst [vmem:[%s336 + $0xc] sm:$0xf] %v1709
        %1720 = vst [vmem:[%s336 + $0x10] sm:$0x3] %v1710
        %s1721 = sand.u32 %s158, 1
        %s1722 = sand.u32 %s158, 1
        %s1723 = smul.addr %s1722, 20
        %s1724 = scalar_lea.vmem [#allocation10], %s1723
        // Predicated region
        $region61: #{rbm_tans_dti_forward.5} parent=39 // pred_check
          %p1725 = pneg %p168
        $region62: #{rbm_tans_dti_forward.5} parent=39 // pred_check_branch
          %1727 = sbr.rel (%p1725) target = $region64
        $region63: #{rbm_tans_dti_forward.5} parent=39 // pred_region
          %s1728 = smul.addr %s25, 4
          %s1729 = scalar_lea.vmem %s5, %s1728
          // Predicated region
          $region65: #{rbm_tans_dti_forward.5} parent=63 // pred_check
            _
          $region66: #{rbm_tans_dti_forward.5} parent=63 // pred_check_branch
            %1731 = sbr.rel (0) target = $region68
          $region67: #{rbm_tans_dti_forward.5} parent=63 // pred_region
            // Predicated region
            $region69: #{rbm_tans_dti_forward.5} parent=67 // pred_check
              _
            $region70: #{rbm_tans_dti_forward.5} parent=67 // pred_check_branch
              %1733 = sbr.rel target = $region72
            $region71: #{rbm_tans_dti_forward.5} parent=67 // pred_region
              // Predicated region
              $region84: #{rbm_tans_dti_forward.5} parent=71 // pred_check
                _
              $region85: #{rbm_tans_dti_forward.5} parent=71 // pred_check_branch
                %1757 = sbr.rel (0) target = $region87
              $region86: #{rbm_tans_dti_forward.5} parent=71 // pred_region
                loop: start=0, step=1, limit=1
                $region88: #{rbm_tans_dti_forward.5} parent=86 // loop_pre_header
                  _
                $region89: #{rbm_tans_dti_forward.5} parent=86 // loop_header
                  %s1759 = sphi 0, %s1763
                  %p1760 = scmp.ge.s32.totalorder %s1759, 1
                  %s1764 = sphi %s1724, %s1724
                  %s1765 = sphi %s1729, %s1729
                $region90: #{rbm_tans_dti_forward.5} parent=86 // loop_header_branch
                  %1762 = sbr.rel (%p1760) target = $region94
                $region91: #{rbm_tans_dti_forward.5} parent=86 // loop_body
                  _
                $region92: #{rbm_tans_dti_forward.5} parent=86 // loop_footer
                  %s1763 = sadd.s32 1, %s1759
                $region93: #{rbm_tans_dti_forward.5} parent=86 // loop_footer_branch
                  %1758 = sbr.rel target = $region89
                $region94: #{rbm_tans_dti_forward.5} parent=86 // loop_exit
                  _
                %s1767 = ssub.s32 16, 1
                loop: start=0, step=1, limit=1
                $region95: #{rbm_tans_dti_forward.5} parent=86 // loop_pre_header
                  _
                $region96: #{rbm_tans_dti_forward.5} parent=86 // loop_header
                  %s1769 = sphi 0, %s1773
                  %p1770 = scmp.ge.s32.totalorder %s1769, 1
                  %s1774 = sphi %s1724, %s1724
                  %s1775 = sphi %s1729, %s1729
                $region97: #{rbm_tans_dti_forward.5} parent=86 // loop_header_branch
                  %1772 = sbr.rel (%p1770) target = $region101
                $region98: #{rbm_tans_dti_forward.5} parent=86 // loop_body
                  %v1776 = vld [vmem:[%s1774] sm:%s1767]
                  %1777 = vst [vmem:[%s1775] sm:%s1767] %v1776
                  %v1778 = vld [vmem:[%s1774 + $0x4] sm:%s1767]
                  %1779 = vst [vmem:[%s1775 + $0x8] sm:%s1767] %v1778
                  %v1780 = vld [vmem:[%s1774 + $0x8] sm:%s1767]
                  %1781 = vst [vmem:[%s1775 + $0x10] sm:%s1767] %v1780
                  %v1782 = vld [vmem:[%s1774 + $0xc] sm:%s1767]
                  %1783 = vst [vmem:[%s1775 + $0x18] sm:%s1767] %v1782
                  %v1784 = vld [vmem:[%s1774 + $0x10] sm:%s1767]
                  %1785 = vst [vmem:[%s1775 + $0x20] sm:%s1767] %v1784
                $region99: #{rbm_tans_dti_forward.5} parent=86 // loop_footer
                  %s1773 = sadd.s32 1, %s1769
                $region100: #{rbm_tans_dti_forward.5} parent=86 // loop_footer_branch
                  %1768 = sbr.rel target = $region96
                $region101: #{rbm_tans_dti_forward.5} parent=86 // loop_exit
                  _
              $region87: #{rbm_tans_dti_forward.5} parent=71 // pred_fallthru
                _
            $region72: #{rbm_tans_dti_forward.5} parent=67 // pred_fallthru
              _
            // Predicated region
            $region73: #{rbm_tans_dti_forward.5} parent=67 // pred_check
              _
            $region74: #{rbm_tans_dti_forward.5} parent=67 // pred_check_branch
              %1735 = sbr.rel (0) target = $region76
            $region75: #{rbm_tans_dti_forward.5} parent=67 // pred_region
              %s1737 = ssub.s32 16, 1
              loop: start=0, step=1, limit=1
              $region77: #{rbm_tans_dti_forward.5} parent=75 // loop_pre_header
                _
              $region78: #{rbm_tans_dti_forward.5} parent=75 // loop_header
                %s1739 = sphi 0, %s1743
                %p1740 = scmp.ge.s32.totalorder %s1739, 1
                %s1744 = sphi %s1724, %s1724
                %s1745 = sphi %s1729, %s1729
              $region79: #{rbm_tans_dti_forward.5} parent=75 // loop_header_branch
                %1742 = sbr.rel (%p1740) target = $region83
              $region80: #{rbm_tans_dti_forward.5} parent=75 // loop_body
                %v1746 = vld [vmem:[%s1744] sm:%s1737]
                %1747 = vst [vmem:[%s1745] sm:%s1737] %v1746
                %v1748 = vld [vmem:[%s1744 + $0x4] sm:%s1737]
                %1749 = vst [vmem:[%s1745 + $0x8] sm:%s1737] %v1748
                %v1750 = vld [vmem:[%s1744 + $0x8] sm:%s1737]
                %1751 = vst [vmem:[%s1745 + $0x10] sm:%s1737] %v1750
                %v1752 = vld [vmem:[%s1744 + $0xc] sm:%s1737]
                %1753 = vst [vmem:[%s1745 + $0x18] sm:%s1737] %v1752
                %v1754 = vld [vmem:[%s1744 + $0x10] sm:%s1737]
                %1755 = vst [vmem:[%s1745 + $0x20] sm:%s1737] %v1754
              $region81: #{rbm_tans_dti_forward.5} parent=75 // loop_footer
                %s1743 = sadd.s32 1, %s1739
              $region82: #{rbm_tans_dti_forward.5} parent=75 // loop_footer_branch
                %1738 = sbr.rel target = $region78
              $region83: #{rbm_tans_dti_forward.5} parent=75 // loop_exit
                _
            $region76: #{rbm_tans_dti_forward.5} parent=67 // pred_fallthru
              _
          $region68: #{rbm_tans_dti_forward.5} parent=63 // pred_fallthru
            _
          %1786 = vnop
        $region64: #{rbm_tans_dti_forward.5} parent=39 // pred_fallthru
          _
      $region40: #{rbm_tans_dti_forward.5} parent=5 // pred_fallthru
        _
      %p1787 = scmp.le.s32.totalorder 2, %s20
      // Predicated region
      $region102: #{rbm_tans_dti_forward.5} parent=5 // pred_check
        %p1788 = pneg %p1787
      $region103: #{rbm_tans_dti_forward.5} parent=5 // pred_check_branch
        %1790 = sbr.rel (%p1788) target = $region105
      $region104: #{rbm_tans_dti_forward.5} parent=5 // pred_region
        %s1791 = ssub.s32 %s20, 2
        // Predicated region
        $region106: #{rbm_tans_dti_forward.5} parent=104 // pred_check
          %p1792 = pneg %p174
        $region107: #{rbm_tans_dti_forward.5} parent=104 // pred_check_branch
          %1794 = sbr.rel (%p1792) target = $region109
        $region108: #{rbm_tans_dti_forward.5} parent=104 // pred_region
          %s1795 = sand.u32 %s159, 1
          %s1796 = sand.u32 %s159, 1
          %s1797 = smul.addr %s1796, 20
          %s1798 = scalar_lea.vmem [#allocation10], %s1797
        $region109: #{rbm_tans_dti_forward.5} parent=104 // pred_fallthru
          _
      $region105: #{rbm_tans_dti_forward.5} parent=5 // pred_fallthru
        _
    $region6: #{rbm_tans_dti_forward.5} parent=1 // loop_footer
      %s24 = sadd.s32 1, %s20
    $region7: #{rbm_tans_dti_forward.5} parent=1 // loop_footer_branch
      %19 = sbr.rel target = $region3
    $region8: #{rbm_tans_dti_forward.5} parent=1 // loop_exit
      _
    %1799 = vsyncpa [#allocation4], 1
    %s1800 = scalar_lea.sflag [#allocation4], 1
    %1801 = vsyncpa %s1800, 1
    %1802 = vsyncpa [#allocation6], 1
    %s1803 = scalar_lea.sflag [#allocation6], 1
    %1804 = vsyncpa %s1803, 1
    %1805 = vsyncpa [#allocation9], 1
    %s1806 = scalar_lea.sflag [#allocation9], 1
    %1807 = vsyncpa %s1806, 1

// kernel: rbm_tans_dti_forward.4
$region0: #{rbm_tans_dti_forward.4}
  #allocation0 [shape = 'u32[]', space=smem, size = 0x4, offset = 0x4, fixed_abs, tag = 'smem constant byte address 0x4 - core index']
  #allocation1 [shape = 'u32[144,128]{1,0:T(1,128)}', space=vmem, size = 0x12000, scoped, tag = 'internal scratch']
  #allocation2 [shape = 'bf16[50,1024]{1,0:T(8,128)(2,1)}', space=vmem, size = 0x1c000, scoped, tag = 'scratch operand']
  %s0 = inlined_call_operand.vmem [shape: bf16[64,128], index: 0, kind: input, shape index: {}]
  %s1 = inlined_call_operand.hbm [shape: bf16[1024,128], index: 1, kind: input, shape index: {}]
  %s2 = inlined_call_operand.hbm [shape: f32[1,128], index: 2, kind: input, shape index: {}]
  %s3 = inlined_call_operand.hbm [shape: f32[1,128], index: 3, kind: input, shape index: {}]
  %s4 = inlined_call_operand.hbm [shape: f32[1,128], index: 4, kind: input, shape index: {}]
  %s5 = inlined_call_operand.vmem [shape: bf16[50,128], index: 5, kind: output, shape index: {}]
  %s6 = sld [smem:[#allocation0]]
  $region50: #{rbm_tans_dti_forward.4} parent=0
    _
  %s8 = ssub.s32 1, %s6
  %s9 = scalar_select 0, %s8, %s6
  $region1: #{rbm_tans_dti_forward.4} parent=0
    #allocation3 [shape = 'u8[262144]{0}', space=vmem, size = 0x40000, scoped, tag = 'input window, operand 1, single buffered']
    #allocation4 [shape = 's32[1]{0}', space=sflag, size = 0x4, scoped, tag = 'scoped memory for rbm_tans_dti_forward.4']
    #allocation5 [shape = 'u8[512]{0}', space=vmem, size = 0x400, scoped, tag = 'input window, operand 2, single buffered']
    #allocation6 [shape = 's32[1]{0}', space=sflag, size = 0x4, scoped, tag = 'scoped memory for rbm_tans_dti_forward.4']
    #allocation7 [shape = 'u8[512]{0}', space=vmem, size = 0x400, scoped, tag = 'input window, operand 3, single buffered']
    #allocation8 [shape = 'u8[512]{0}', space=vmem, size = 0x400, scoped, tag = 'input window, operand 4, single buffered']
    #allocation9 [shape = 's32[1]{0}', space=sflag, size = 0x4, scoped, tag = 'scoped memory for rbm_tans_dti_forward.4']
    %10 = vsyncpa [#allocation4], 0
    %11 = vsyncpa [#allocation6], 0
    %12 = vsyncpa [#allocation9], 0
    // Predicated region
    $region2: #{rbm_tans_dti_forward.4} parent=1 // pred_check
      _
    $region3: #{rbm_tans_dti_forward.4} parent=1 // pred_check_branch
      %14 = sbr.rel (0) target = $region5
    $region4: #{rbm_tans_dti_forward.4} parent=1 // pred_region
      _
    $region5: #{rbm_tans_dti_forward.4} parent=1 // pred_fallthru
      _
    // Predicated region
    $region6: #{rbm_tans_dti_forward.4} parent=1 // pred_check
      _
    $region7: #{rbm_tans_dti_forward.4} parent=1 // pred_check_branch
      %16 = sbr.rel (0) target = $region9
    $region8: #{rbm_tans_dti_forward.4} parent=1 // pred_region
      %s18 = ssub.s32 8192, 8192
      %19 = vsyncadd [#allocation4], %s18
      %s20 = sshll.u32 [#allocation3], 4
      %s21 = int_to_ptr.vmem [resolvable:$true] %s20
      %26 = dma.hbm_to_vmem [thread:$0]  %s1, 8192, %s21, [#allocation4], 64, 64, 4
    $region9: #{rbm_tans_dti_forward.4} parent=1 // pred_fallthru
      _
    // Predicated region
    $region10: #{rbm_tans_dti_forward.4} parent=1 // pred_check
      _
    $region11: #{rbm_tans_dti_forward.4} parent=1 // pred_check_branch
      %28 = sbr.rel (0) target = $region13
    $region12: #{rbm_tans_dti_forward.4} parent=1 // pred_region
      %s30 = ssub.s32 16, 16
      %31 = vsyncadd [#allocation6], %s30
      %s33 = sshll.u32 [#allocation5], 4
      %s34 = int_to_ptr.vmem [resolvable:$true] %s33
      %36 = dma.hbm_to_vmem [thread:$0]  %s2, 16, %s34, [#allocation6]
    $region13: #{rbm_tans_dti_forward.4} parent=1 // pred_fallthru
      _
    // Predicated region
    $region14: #{rbm_tans_dti_forward.4} parent=1 // pred_check
      _
    $region15: #{rbm_tans_dti_forward.4} parent=1 // pred_check_branch
      %38 = sbr.rel (0) target = $region17
    $region16: #{rbm_tans_dti_forward.4} parent=1 // pred_region
      %s40 = ssub.s32 16, 16
      %41 = vsyncadd [#allocation6], %s40
      %s43 = sshll.u32 [#allocation7], 4
      %s44 = int_to_ptr.vmem [resolvable:$true] %s43
      %46 = dma.hbm_to_vmem [thread:$0]  %s3, 16, %s44, [#allocation6]
    $region17: #{rbm_tans_dti_forward.4} parent=1 // pred_fallthru
      _
    // Predicated region
    $region18: #{rbm_tans_dti_forward.4} parent=1 // pred_check
      _
    $region19: #{rbm_tans_dti_forward.4} parent=1 // pred_check_branch
      %48 = sbr.rel (0) target = $region21
    $region20: #{rbm_tans_dti_forward.4} parent=1 // pred_region
      %s50 = ssub.s32 16, 16
      %51 = vsyncadd [#allocation9], %s50
      %s53 = sshll.u32 [#allocation8], 4
      %s54 = int_to_ptr.vmem [resolvable:$true] %s53
      %56 = dma.hbm_to_vmem [thread:$0]  %s4, 16, %s54, [#allocation9]
    $region21: #{rbm_tans_dti_forward.4} parent=1 // pred_fallthru
      _
    // Predicated region
    $region22: #{rbm_tans_dti_forward.4} parent=1 // pred_check
      _
    $region23: #{rbm_tans_dti_forward.4} parent=1 // pred_check_branch
      %58 = sbr.rel (0) target = $region25
    $region24: #{rbm_tans_dti_forward.4} parent=1 // pred_region
      %59 = dma.done [#allocation4], 8192
    $region25: #{rbm_tans_dti_forward.4} parent=1 // pred_fallthru
      _
    // Predicated region
    $region26: #{rbm_tans_dti_forward.4} parent=1 // pred_check
      _
    $region27: #{rbm_tans_dti_forward.4} parent=1 // pred_check_branch
      %61 = sbr.rel (0) target = $region29
    $region28: #{rbm_tans_dti_forward.4} parent=1 // pred_region
      %62 = dma.done [#allocation6], 16
    $region29: #{rbm_tans_dti_forward.4} parent=1 // pred_fallthru
      _
    // Predicated region
    $region30: #{rbm_tans_dti_forward.4} parent=1 // pred_check
      _
    $region31: #{rbm_tans_dti_forward.4} parent=1 // pred_check_branch
      %64 = sbr.rel (0) target = $region33
    $region32: #{rbm_tans_dti_forward.4} parent=1 // pred_region
      %65 = dma.done [#allocation6], 16
    $region33: #{rbm_tans_dti_forward.4} parent=1 // pred_fallthru
      _
    // Predicated region
    $region34: #{rbm_tans_dti_forward.4} parent=1 // pred_check
      _
    $region35: #{rbm_tans_dti_forward.4} parent=1 // pred_check_branch
      %67 = sbr.rel (0) target = $region37
    $region36: #{rbm_tans_dti_forward.4} parent=1 // pred_region
      %68 = dma.done [#allocation9], 16
    $region37: #{rbm_tans_dti_forward.4} parent=1 // pred_fallthru
      _
    %p70 = scmp.eq.s32.totalorder 0, 0
    // Predicated region
    $region38: #{rbm_tans_dti_forward.4} parent=1 // pred_check
      %p71 = pneg %p70
    $region39: #{rbm_tans_dti_forward.4} parent=1 // pred_check_branch
      %73 = sbr.rel (%p71) target = $region41
    $region40: #{rbm_tans_dti_forward.4} parent=1 // pred_region
      %v74 = vld [vmem:[%s0] sm:$0xf]
      %v75 = vld [vmem:[%s0 + $0x4] sm:$0xf]
      %v76 = vld [vmem:[%s0 + $0x8] sm:$0xf]
      %v77 = vld [vmem:[%s0 + $0xc] sm:$0x1]
      %78 = vst [vmem:[#allocation2] sm:$0xf] %v74
      %79 = vst [vmem:[#allocation2 + $0x20] sm:$0xf] %v75
      %80 = vst [vmem:[#allocation2 + $0x40] sm:$0xf] %v76
      %vm81 = vcmask 1040384
      %vm82 = vsmask.f32 256
      %vm83 = vmand %vm81, %vm82
      %v84 = vld [vmem:[#allocation2 + $0x60] sm:$0x1]
      %v85 = vsel %vm83, %v77, %v84
      %86 = vst [vmem:[#allocation2 + $0x60] sm:$0x1] %v85
      %v87 = vld [vmem:[%s0] sm:$0xf]
      %v88 = vld [vmem:[%s0 + $0x4] sm:$0xf]
      %v89 = vld [vmem:[%s0 + $0x8] sm:$0xf]
      %v90 = vld [vmem:[%s0 + $0xc] sm:$0x1]
      %vm91 = vsmask.f32 3328
      %vm92 = vsmask.f32 7440
      %vm93 = vmor %vm91, %vm92
      %v95 = vshrl.u32 %v87, 16
      %v97 = vrot.slane %v95, 4
      %v98 = vshll.u32 %v87, 16
      %v100 = vrot.slane %v98, 5
      %v101 = vor.u32 %v97, %v100
      %v102 = vrot.slane %v101, 4
      %v104 = vshll.u32 %v88, 16
      %v106 = vrot.slane %v104, 5
      %v107 = vsel %vm93, %v102, %v106
      %v108 = vshrl.u32 %v88, 16
      %v110 = vrot.slane %v108, 4
      %v111 = vor.u32 %v110, %v106
      %v112 = vrot.slane %v111, 4
      %v114 = vshll.u32 %v89, 16
      %v116 = vrot.slane %v114, 5
      %v117 = vsel %vm93, %v112, %v116
      %v118 = vshrl.u32 %v89, 16
      %v120 = vrot.slane %v118, 4
      %v121 = vor.u32 %v120, %v116
      %v122 = vrot.slane %v121, 4
      %v124 = vshll.u32 %v90, 16
      %v126 = vrot.slane %v124, 5
      %v127 = vsel %vm93, %v122, %v126
      %v128 = vshrl.u32 %v90, 16
      %v130 = vrot.slane %v128, 4
      %v131 = vrot.slane %v130, 4
      %136 = vst [vmem:[#allocation2 + $0x4] sm:$0xf] %v107
      %137 = vst [vmem:[#allocation2 + $0x24] sm:$0xf] %v117
      %138 = vst [vmem:[#allocation2 + $0x44] sm:$0xf] %v127
      %v139 = vld [vmem:[#allocation2 + $0x64] sm:$0x1]
      %v140 = vsel %vm83, %v131, %v139
      %141 = vst [vmem:[#allocation2 + $0x64] sm:$0x1] %v140
      %v142 = vld [vmem:[%s0] sm:$0xe]
      %v143 = vld [vmem:[%s0 + $0x4] sm:$0xf]
      %v144 = vld [vmem:[%s0 + $0x8] sm:$0xf]
      %v145 = vld [vmem:[%s0 + $0xc] sm:$0x3]
      %vm150 = vcmask 1042432
      %vm151 = vcmask 1046532
      %vm152 = vmor %vm150, %vm151
      %v153 = vrot.slane %v142, 5
      %v154 = vrot.slane %v153, 4
      %v155 = vrot.slane %v143, 5
      %v156 = vsel %vm152, %v154, %v155
      %v157 = vrot.slane %v155, 4
      %v158 = vrot.slane %v144, 5
      %v159 = vsel %vm152, %v157, %v158
      %v160 = vrot.slane %v158, 4
      %v161 = vrot.slane %v145, 5
      %v162 = vsel %vm152, %v160, %v161
      %v163 = vrot.slane %v161, 4
      %168 = vst [vmem:[#allocation2 + $0x8] sm:$0xf] %v156
      %169 = vst [vmem:[#allocation2 + $0x28] sm:$0xf] %v159
      %170 = vst [vmem:[#allocation2 + $0x48] sm:$0xf] %v162
      %v171 = vld [vmem:[#allocation2 + $0x68] sm:$0x1]
      %v172 = vsel %vm83, %v163, %v171
      %173 = vst [vmem:[#allocation2 + $0x68] sm:$0x1] %v172
      %v174 = vld [vmem:[%s0] sm:$0xe]
      %v175 = vld [vmem:[%s0 + $0x4] sm:$0xf]
      %v176 = vld [vmem:[%s0 + $0x8] sm:$0xf]
      %v177 = vld [vmem:[%s0 + $0xc] sm:$0x3]
      %vm178 = vsmask.f32 2304
      %vm179 = vsmask.f32 6416
      %vm180 = vmor %vm178, %vm179
      %v182 = vshrl.u32 %v174, 16
      %v184 = vrot.slane %v182, 5
      %v185 = vshll.u32 %v174, 16
      %v187 = vrot.slane %v185, 6
      %v188 = vor.u32 %v184, %v187
      %v189 = vrot.slane %v188, 4
      %v191 = vshrl.u32 %v175, 16
      %v193 = vrot.slane %v191, 5
      %v194 = vshll.u32 %v175, 16
      %v196 = vrot.slane %v194, 6
      %v197 = vor.u32 %v193, %v196
      %v198 = vsel %vm180, %v189, %v197
      %v199 = vrot.slane %v197, 4
      %v201 = vshrl.u32 %v176, 16
      %v203 = vrot.slane %v201, 5
      %v204 = vshll.u32 %v176, 16
      %v206 = vrot.slane %v204, 6
      %v207 = vor.u32 %v203, %v206
      %v208 = vsel %vm180, %v199, %v207
      %v209 = vrot.slane %v207, 4
      %v211 = vshrl.u32 %v177, 16
      %v213 = vrot.slane %v211, 5
      %v214 = vshll.u32 %v177, 16
      %v216 = vrot.slane %v214, 6
      %v217 = vor.u32 %v213, %v216
      %v218 = vsel %vm180, %v209, %v217
      %v219 = vrot.slane %v213, 4
      %224 = vst [vmem:[#allocation2 + $0xc] sm:$0xf] %v198
      %225 = vst [vmem:[#allocation2 + $0x2c] sm:$0xf] %v208
      %226 = vst [vmem:[#allocation2 + $0x4c] sm:$0xf] %v218
      %v227 = vld [vmem:[#allocation2 + $0x6c] sm:$0x1]
      %v228 = vsel %vm83, %v219, %v227
      %229 = vst [vmem:[#allocation2 + $0x6c] sm:$0x1] %v228
      %v230 = vld [vmem:[%s0] sm:$0xc]
      %v231 = vld [vmem:[%s0 + $0x4] sm:$0xf]
      %v232 = vld [vmem:[%s0 + $0x8] sm:$0xf]
      %v233 = vld [vmem:[%s0 + $0xc] sm:$0x7]
      %vm238 = vcmask 1041408
      %vm239 = vcmask 1045508
      %vm240 = vmor %vm238, %vm239
      %v241 = vrot.slane %v230, 6
      %v242 = vrot.slane %v241, 4
      %v243 = vrot.slane %v231, 6
      %v244 = vsel %vm240, %v242, %v243
      %v245 = vrot.slane %v243, 4
      %v246 = vrot.slane %v232, 6
      %v247 = vsel %vm240, %v245, %v246
      %v248 = vrot.slane %v246, 4
      %v249 = vrot.slane %v233, 6
      %v250 = vsel %vm240, %v248, %v249
      %v251 = vrot.slane %v249, 4
      %256 = vst [vmem:[#allocation2 + $0x10] sm:$0xf] %v244
      %257 = vst [vmem:[#allocation2 + $0x30] sm:$0xf] %v247
      %258 = vst [vmem:[#allocation2 + $0x50] sm:$0xf] %v250
      %v259 = vld [vmem:[#allocation2 + $0x70] sm:$0x1]
      %v260 = vsel %vm83, %v251, %v259
      %261 = vst [vmem:[#allocation2 + $0x70] sm:$0x1] %v260
      %v262 = vld [vmem:[%s0] sm:$0xc]
      %v263 = vld [vmem:[%s0 + $0x4] sm:$0xf]
      %v264 = vld [vmem:[%s0 + $0x8] sm:$0xf]
      %v265 = vld [vmem:[%s0 + $0xc] sm:$0x7]
      %vm266 = vsmask.f32 1280
      %vm267 = vsmask.f32 5392
      %vm268 = vmor %vm266, %vm267
      %v270 = vshrl.u32 %v262, 16
      %v272 = vrot.slane %v270, 6
      %v273 = vshll.u32 %v262, 16
      %v275 = vrot.slane %v273, 7
      %v276 = vor.u32 %v272, %v275
      %v277 = vrot.slane %v276, 4
      %v279 = vshrl.u32 %v263, 16
      %v281 = vrot.slane %v279, 6
      %v282 = vshll.u32 %v263, 16
      %v284 = vrot.slane %v282, 7
      %v285 = vor.u32 %v281, %v284
      %v286 = vsel %vm268, %v277, %v285
      %v287 = vrot.slane %v285, 4
      %v289 = vshrl.u32 %v264, 16
      %v291 = vrot.slane %v289, 6
      %v292 = vshll.u32 %v264, 16
      %v294 = vrot.slane %v292, 7
      %v295 = vor.u32 %v291, %v294
      %v296 = vsel %vm268, %v287, %v295
      %v297 = vrot.slane %v295, 4
      %v299 = vshrl.u32 %v265, 16
      %v301 = vrot.slane %v299, 6
      %v302 = vshll.u32 %v265, 16
      %v304 = vrot.slane %v302, 7
      %v305 = vor.u32 %v301, %v304
      %v306 = vsel %vm268, %v297, %v305
      %v307 = vrot.slane %v301, 4
      %312 = vst [vmem:[#allocation2 + $0x14] sm:$0xf] %v286
      %313 = vst [vmem:[#allocation2 + $0x34] sm:$0xf] %v296
      %314 = vst [vmem:[#allocation2 + $0x54] sm:$0xf] %v306
      %v315 = vld [vmem:[#allocation2 + $0x74] sm:$0x1]
      %v316 = vsel %vm83, %v307, %v315
      %317 = vst [vmem:[#allocation2 + $0x74] sm:$0x1] %v316
      %v318 = vld [vmem:[%s0] sm:$0x8]
      %v319 = vld [vmem:[%s0 + $0x4] sm:$0xf]
      %v320 = vld [vmem:[%s0 + $0x8] sm:$0xf]
      %v321 = vld [vmem:[%s0 + $0xc] sm:$0xf]
      %vm326 = vcmask 1044484
      %vm327 = vmor %vm81, %vm326
      %v328 = vrot.slane %v318, 7
      %v329 = vrot.slane %v328, 4
      %v330 = vrot.slane %v319, 7
      %v331 = vsel %vm327, %v329, %v330
      %v332 = vrot.slane %v330, 4
      %v333 = vrot.slane %v320, 7
      %v334 = vsel %vm327, %v332, %v333
      %v335 = vrot.slane %v333, 4
      %v336 = vrot.slane %v321, 7
      %v337 = vsel %vm327, %v335, %v336
      %v338 = vrot.slane %v336, 4
      %343 = vst [vmem:[#allocation2 + $0x18] sm:$0xf] %v331
      %344 = vst [vmem:[#allocation2 + $0x38] sm:$0xf] %v334
      %345 = vst [vmem:[#allocation2 + $0x58] sm:$0xf] %v337
      %v346 = vld [vmem:[#allocation2 + $0x78] sm:$0x1]
      %v347 = vsel %vm83, %v338, %v346
      %348 = vst [vmem:[#allocation2 + $0x78] sm:$0x1] %v347
      %v349 = vld [vmem:[%s0] sm:$0x8]
      %v350 = vld [vmem:[%s0 + $0x4] sm:$0xf]
      %v351 = vld [vmem:[%s0 + $0x8] sm:$0xf]
      %v352 = vld [vmem:[%s0 + $0xc] sm:$0xf]
      %vm353 = vsmask.f32 4368
      %vm354 = vmor %vm82, %vm353
      %v356 = vshrl.u32 %v349, 16
      %v358 = vrot.slane %v356, 7
      %v359 = vrot.slane %v358, 4
      %v361 = vshrl.u32 %v350, 16
      %v363 = vrot.slane %v361, 7
      %v364 = vshll.u32 %v350, 16
      %v366 = vor.u32 %v363, %v364
      %v367 = vsel %vm354, %v359, %v366
      %v368 = vrot.slane %v363, 4
      %v370 = vshrl.u32 %v351, 16
      %v372 = vrot.slane %v370, 7
      %v373 = vshll.u32 %v351, 16
      %v375 = vor.u32 %v372, %v373
      %v376 = vsel %vm354, %v368, %v375
      %v377 = vrot.slane %v372, 4
      %v379 = vshrl.u32 %v352, 16
      %v381 = vrot.slane %v379, 7
      %v382 = vshll.u32 %v352, 16
      %v384 = vor.u32 %v381, %v382
      %v385 = vsel %vm354, %v377, %v384
      %v386 = vrot.slane %v381, 4
      %391 = vst [vmem:[#allocation2 + $0x1c] sm:$0xf] %v367
      %392 = vst [vmem:[#allocation2 + $0x3c] sm:$0xf] %v376
      %393 = vst [vmem:[#allocation2 + $0x5c] sm:$0xf] %v385
      %v394 = vld [vmem:[#allocation2 + $0x7c] sm:$0x1]
      %v395 = vsel %vm83, %v386, %v394
      %396 = vst [vmem:[#allocation2 + $0x7c] sm:$0x1] %v395
      %v397 = vld [vmem:[%s0 + $0x10] sm:$0xf]
      %v398 = vld [vmem:[%s0 + $0x14] sm:$0xf]
      %v399 = vld [vmem:[%s0 + $0x18] sm:$0xf]
      %v400 = vld [vmem:[%s0 + $0x1c] sm:$0x1]
      %v402 = vshrl.u32 %v397, 16
      %v404 = vrot.slane %v402, 7
      %v405 = vshll.u32 %v397, 16
      %v407 = vor.u32 %v404, %v405
      %v408 = vrot.slane %v404, 4
      %v410 = vshrl.u32 %v398, 16
      %v412 = vrot.slane %v410, 7
      %v413 = vshll.u32 %v398, 16
      %v415 = vor.u32 %v412, %v413
      %v416 = vsel %vm354, %v408, %v415
      %v417 = vrot.slane %v412, 4
      %v419 = vshrl.u32 %v399, 16
      %v421 = vrot.slane %v419, 7
      %v422 = vshll.u32 %v399, 16
      %v424 = vor.u32 %v421, %v422
      %v425 = vsel %vm354, %v417, %v424
      %v426 = vrot.slane %v421, 4
      %v428 = vshll.u32 %v400, 16
      %v430 = vsel %vm354, %v426, %v428
      %vm435 = vcmask 1043456
      %vm436 = vsmask.f32 7938
      %vm437 = vmand %vm435, %vm436
      %v438 = vld [vmem:[#allocation2 + $0x60] sm:$0xf]
      %v439 = vsel %vm437, %v407, %v438
      %440 = vst [vmem:[#allocation2 + $0x60] sm:$0xf] %v439
      %441 = vst [vmem:[#allocation2 + $0x80] sm:$0xf] %v416
      %442 = vst [vmem:[#allocation2 + $0xa0] sm:$0xf] %v425
      %443 = vst [vmem:[#allocation2 + $0xc0] sm:$0x1] %v430
      %v444 = vld [vmem:[%s0 + $0x10] sm:$0xf]
      %v445 = vld [vmem:[%s0 + $0x14] sm:$0xf]
      %v446 = vld [vmem:[%s0 + $0x18] sm:$0xf]
      %v447 = vld [vmem:[%s0 + $0x1c] sm:$0x1]
      %v448 = vld [vmem:[#allocation2 + $0x64] sm:$0xf]
      %v449 = vsel %vm437, %v444, %v448
      %450 = vst [vmem:[#allocation2 + $0x64] sm:$0xf] %v449
      %451 = vst [vmem:[#allocation2 + $0x84] sm:$0xf] %v445
      %452 = vst [vmem:[#allocation2 + $0xa4] sm:$0xf] %v446
      %453 = vst [vmem:[#allocation2 + $0xc4] sm:$0x1] %v447
      %v454 = vld [vmem:[%s0 + $0x10] sm:$0xe]
      %v455 = vld [vmem:[%s0 + $0x14] sm:$0xf]
      %v456 = vld [vmem:[%s0 + $0x18] sm:$0xf]
      %v457 = vld [vmem:[%s0 + $0x1c] sm:$0x3]
      %v459 = vshrl.u32 %v454, 16
      %v461 = vrot.slane %v459, 4
      %v462 = vshll.u32 %v454, 16
      %v464 = vrot.slane %v462, 5
      %v465 = vor.u32 %v461, %v464
      %v466 = vrot.slane %v465, 4
      %v468 = vshll.u32 %v455, 16
      %v470 = vrot.slane %v468, 5
      %v471 = vsel %vm93, %v466, %v470
      %v472 = vshrl.u32 %v455, 16
      %v474 = vrot.slane %v472, 4
      %v475 = vor.u32 %v474, %v470
      %v476 = vrot.slane %v475, 4
      %v478 = vshll.u32 %v456, 16
      %v480 = vrot.slane %v478, 5
      %v481 = vsel %vm93, %v476, %v480
      %v482 = vshrl.u32 %v456, 16
      %v484 = vrot.slane %v482, 4
      %v485 = vor.u32 %v484, %v480
      %v486 = vrot.slane %v485, 4
      %v488 = vshll.u32 %v457, 16
      %v490 = vrot.slane %v488, 5
      %v491 = vsel %vm93, %v486, %v490
      %v492 = vshrl.u32 %v457, 16
      %v494 = vrot.slane %v492, 4
      %v495 = vor.u32 %v494, %v490
      %v496 = vrot.slane %v495, 4
      %v501 = vld [vmem:[#allocation2 + $0x68] sm:$0xf]
      %v502 = vsel %vm437, %v471, %v501
      %503 = vst [vmem:[#allocation2 + $0x68] sm:$0xf] %v502
      %504 = vst [vmem:[#allocation2 + $0x88] sm:$0xf] %v481
      %505 = vst [vmem:[#allocation2 + $0xa8] sm:$0xf] %v491
      %506 = vst [vmem:[#allocation2 + $0xc8] sm:$0x1] %v496
      %v507 = vld [vmem:[%s0 + $0x10] sm:$0xe]
      %v508 = vld [vmem:[%s0 + $0x14] sm:$0xf]
      %v509 = vld [vmem:[%s0 + $0x18] sm:$0xf]
      %v510 = vld [vmem:[%s0 + $0x1c] sm:$0x3]
      %v515 = vrot.slane %v507, 5
      %v516 = vrot.slane %v515, 4
      %v517 = vrot.slane %v508, 5
      %v518 = vsel %vm152, %v516, %v517
      %v519 = vrot.slane %v517, 4
      %v520 = vrot.slane %v509, 5
      %v521 = vsel %vm152, %v519, %v520
      %v522 = vrot.slane %v520, 4
      %v523 = vrot.slane %v510, 5
      %v524 = vsel %vm152, %v522, %v523
      %v525 = vrot.slane %v523, 4
      %v530 = vld [vmem:[#allocation2 + $0x6c] sm:$0xf]
      %v531 = vsel %vm437, %v518, %v530
      %532 = vst [vmem:[#allocation2 + $0x6c] sm:$0xf] %v531
      %533 = vst [vmem:[#allocation2 + $0x8c] sm:$0xf] %v521
      %534 = vst [vmem:[#allocation2 + $0xac] sm:$0xf] %v524
      %535 = vst [vmem:[#allocation2 + $0xcc] sm:$0x1] %v525
      %v536 = vld [vmem:[%s0 + $0x10] sm:$0xc]
      %v537 = vld [vmem:[%s0 + $0x14] sm:$0xf]
      %v538 = vld [vmem:[%s0 + $0x18] sm:$0xf]
      %v539 = vld [vmem:[%s0 + $0x1c] sm:$0x7]
      %v541 = vshrl.u32 %v536, 16
      %v543 = vrot.slane %v541, 5
      %v544 = vshll.u32 %v536, 16
      %v546 = vrot.slane %v544, 6
      %v547 = vor.u32 %v543, %v546
      %v548 = vrot.slane %v547, 4
      %v550 = vshrl.u32 %v537, 16
      %v552 = vrot.slane %v550, 5
      %v553 = vshll.u32 %v537, 16
      %v555 = vrot.slane %v553, 6
      %v556 = vor.u32 %v552, %v555
      %v557 = vsel %vm180, %v548, %v556
      %v558 = vrot.slane %v556, 4
      %v560 = vshrl.u32 %v538, 16
      %v562 = vrot.slane %v560, 5
      %v563 = vshll.u32 %v538, 16
      %v565 = vrot.slane %v563, 6
      %v566 = vor.u32 %v562, %v565
      %v567 = vsel %vm180, %v558, %v566
      %v568 = vrot.slane %v566, 4
      %v570 = vshrl.u32 %v539, 16
      %v572 = vrot.slane %v570, 5
      %v573 = vshll.u32 %v539, 16
      %v575 = vrot.slane %v573, 6
      %v576 = vor.u32 %v572, %v575
      %v577 = vsel %vm180, %v568, %v576
      %v578 = vrot.slane %v576, 4
      %v583 = vld [vmem:[#allocation2 + $0x70] sm:$0xf]
      %v584 = vsel %vm437, %v557, %v583
      %585 = vst [vmem:[#allocation2 + $0x70] sm:$0xf] %v584
      %586 = vst [vmem:[#allocation2 + $0x90] sm:$0xf] %v567
      %587 = vst [vmem:[#allocation2 + $0xb0] sm:$0xf] %v577
      %588 = vst [vmem:[#allocation2 + $0xd0] sm:$0x1] %v578
      %v589 = vld [vmem:[%s0 + $0x10] sm:$0xc]
      %v590 = vld [vmem:[%s0 + $0x14] sm:$0xf]
      %v591 = vld [vmem:[%s0 + $0x18] sm:$0xf]
      %v592 = vld [vmem:[%s0 + $0x1c] sm:$0x7]
      %v597 = vrot.slane %v589, 6
      %v598 = vrot.slane %v597, 4
      %v599 = vrot.slane %v590, 6
      %v600 = vsel %vm240, %v598, %v599
      %v601 = vrot.slane %v599, 4
      %v602 = vrot.slane %v591, 6
      %v603 = vsel %vm240, %v601, %v602
      %v604 = vrot.slane %v602, 4
      %v605 = vrot.slane %v592, 6
      %v606 = vsel %vm240, %v604, %v605
      %v607 = vrot.slane %v605, 4
      %v612 = vld [vmem:[#allocation2 + $0x74] sm:$0xf]
      %v613 = vsel %vm437, %v600, %v612
      %614 = vst [vmem:[#allocation2 + $0x74] sm:$0xf] %v613
      %615 = vst [vmem:[#allocation2 + $0x94] sm:$0xf] %v603
      %616 = vst [vmem:[#allocation2 + $0xb4] sm:$0xf] %v606
      %617 = vst [vmem:[#allocation2 + $0xd4] sm:$0x1] %v607
      %v618 = vld [vmem:[%s0 + $0x10] sm:$0x8]
      %v619 = vld [vmem:[%s0 + $0x14] sm:$0xf]
      %v620 = vld [vmem:[%s0 + $0x18] sm:$0xf]
      %v621 = vld [vmem:[%s0 + $0x1c] sm:$0xf]
      %v623 = vshrl.u32 %v618, 16
      %v625 = vrot.slane %v623, 6
      %v626 = vshll.u32 %v618, 16
      %v628 = vrot.slane %v626, 7
      %v629 = vor.u32 %v625, %v628
      %v630 = vrot.slane %v629, 4
      %v632 = vshrl.u32 %v619, 16
      %v634 = vrot.slane %v632, 6
      %v635 = vshll.u32 %v619, 16
      %v637 = vrot.slane %v635, 7
      %v638 = vor.u32 %v634, %v637
      %v639 = vsel %vm268, %v630, %v638
      %v640 = vrot.slane %v638, 4
      %v642 = vshrl.u32 %v620, 16
      %v644 = vrot.slane %v642, 6
      %v645 = vshll.u32 %v620, 16
      %v647 = vrot.slane %v645, 7
      %v648 = vor.u32 %v644, %v647
      %v649 = vsel %vm268, %v640, %v648
      %v650 = vrot.slane %v648, 4
      %v652 = vshrl.u32 %v621, 16
      %v654 = vrot.slane %v652, 6
      %v655 = vshll.u32 %v621, 16
      %v657 = vrot.slane %v655, 7
      %v658 = vor.u32 %v654, %v657
      %v659 = vsel %vm268, %v650, %v658
      %v660 = vrot.slane %v658, 4
      %v665 = vld [vmem:[#allocation2 + $0x78] sm:$0xf]
      %v666 = vsel %vm437, %v639, %v665
      %667 = vst [vmem:[#allocation2 + $0x78] sm:$0xf] %v666
      %668 = vst [vmem:[#allocation2 + $0x98] sm:$0xf] %v649
      %669 = vst [vmem:[#allocation2 + $0xb8] sm:$0xf] %v659
      %670 = vst [vmem:[#allocation2 + $0xd8] sm:$0x1] %v660
      %v671 = vld [vmem:[%s0 + $0x10] sm:$0x8]
      %v672 = vld [vmem:[%s0 + $0x14] sm:$0xf]
      %v673 = vld [vmem:[%s0 + $0x18] sm:$0xf]
      %v674 = vld [vmem:[%s0 + $0x1c] sm:$0xf]
      %v679 = vrot.slane %v671, 7
      %v680 = vrot.slane %v679, 4
      %v681 = vrot.slane %v672, 7
      %v682 = vsel %vm327, %v680, %v681
      %v683 = vrot.slane %v681, 4
      %v684 = vrot.slane %v673, 7
      %v685 = vsel %vm327, %v683, %v684
      %v686 = vrot.slane %v684, 4
      %v687 = vrot.slane %v674, 7
      %v688 = vsel %vm327, %v686, %v687
      %v689 = vrot.slane %v687, 4
      %v694 = vld [vmem:[#allocation2 + $0x7c] sm:$0xf]
      %v695 = vsel %vm437, %v682, %v694
      %696 = vst [vmem:[#allocation2 + $0x7c] sm:$0xf] %v695
      %697 = vst [vmem:[#allocation2 + $0x9c] sm:$0xf] %v685
      %698 = vst [vmem:[#allocation2 + $0xbc] sm:$0xf] %v688
      %699 = vst [vmem:[#allocation2 + $0xdc] sm:$0x1] %v689
    $region41: #{rbm_tans_dti_forward.4} parent=1 // pred_fallthru
      _
    %v700 = vld [vmem:[#allocation2] sm:$0xff]
    %v701 = vld [vmem:[#allocation2 + $0x8] sm:$0xff]
    %v702 = vld [vmem:[#allocation2 + $0x10] sm:$0xff]
    %v703 = vld [vmem:[#allocation2 + $0x18] sm:$0xff]
    %v704 = vld [vmem:[#allocation2 + $0x20] sm:$0xff]
    %v705 = vld [vmem:[#allocation2 + $0x28] sm:$0xff]
    %v706 = vld [vmem:[#allocation2 + $0x30] sm:$0xff]
    %v707 = vld [vmem:[#allocation2 + $0x38] sm:$0xff]
    %v708 = vld [vmem:[#allocation2 + $0x40] sm:$0xff]
    %v709 = vld [vmem:[#allocation2 + $0x48] sm:$0xff]
    %v710 = vld [vmem:[#allocation2 + $0x50] sm:$0xff]
    %v711 = vld [vmem:[#allocation2 + $0x58] sm:$0xff]
    %v712 = vld [vmem:[#allocation2 + $0x60] sm:$0xff]
    %v713 = vld [vmem:[#allocation2 + $0x68] sm:$0xff]
    %v714 = vld [vmem:[#allocation2 + $0x70] sm:$0xff]
    %v715 = vld [vmem:[#allocation2 + $0x78] sm:$0xff]
    %v716 = vld [vmem:[#allocation2 + $0x80] sm:$0xff]
    %v717 = vld [vmem:[#allocation2 + $0x88] sm:$0xff]
    %v718 = vld [vmem:[#allocation2 + $0x90] sm:$0xff]
    %v719 = vld [vmem:[#allocation2 + $0x98] sm:$0xff]
    %v720 = vld [vmem:[#allocation2 + $0xa0] sm:$0xff]
    %v721 = vld [vmem:[#allocation2 + $0xa8] sm:$0xff]
    %v722 = vld [vmem:[#allocation2 + $0xb0] sm:$0xff]
    %v723 = vld [vmem:[#allocation2 + $0xb8] sm:$0xff]
    %v724 = vld [vmem:[#allocation2 + $0xc0] sm:$0x11]
    %v725 = vld [vmem:[#allocation2 + $0xc8] sm:$0x11]
    %v726 = vld [vmem:[#allocation2 + $0xd0] sm:$0x11]
    %v727 = vld [vmem:[#allocation2 + $0xd8] sm:$0x11]
    %v728 = vld [vmem:[#allocation3] sm:$0xf]
    %v729 = vld [vmem:[#allocation3 + $0x4] sm:$0xf]
    %v730 = vld [vmem:[#allocation3 + $0x8] sm:$0xf]
    %v731 = vld [vmem:[#allocation3 + $0xc] sm:$0xf]
    %v732 = vld [vmem:[#allocation3 + $0x10] sm:$0xf]
    %v733 = vld [vmem:[#allocation3 + $0x14] sm:$0xf]
    %v734 = vld [vmem:[#allocation3 + $0x18] sm:$0xf]
    %v735 = vld [vmem:[#allocation3 + $0x1c] sm:$0xf]
    %v736 = vld [vmem:[#allocation3 + $0x20] sm:$0xf]
    %v737 = vld [vmem:[#allocation3 + $0x24] sm:$0xf]
    %v738 = vld [vmem:[#allocation3 + $0x28] sm:$0xf]
    %v739 = vld [vmem:[#allocation3 + $0x2c] sm:$0xf]
    %v740 = vld [vmem:[#allocation3 + $0x30] sm:$0xf]
    %v741 = vld [vmem:[#allocation3 + $0x34] sm:$0xf]
    %v742 = vld [vmem:[#allocation3 + $0x38] sm:$0xf]
    %v743 = vld [vmem:[#allocation3 + $0x3c] sm:$0xf]
    %v744 = vld [vmem:[#allocation3 + $0x40] sm:$0xf]
    %v745 = vld [vmem:[#allocation3 + $0x44] sm:$0xf]
    %v746 = vld [vmem:[#allocation3 + $0x48] sm:$0xf]
    %v747 = vld [vmem:[#allocation3 + $0x4c] sm:$0xf]
    %v748 = vld [vmem:[#allocation3 + $0x50] sm:$0xf]
    %v749 = vld [vmem:[#allocation3 + $0x54] sm:$0xf]
    %v750 = vld [vmem:[#allocation3 + $0x58] sm:$0xf]
    %v751 = vld [vmem:[#allocation3 + $0x5c] sm:$0xf]
    %v752 = vld [vmem:[#allocation3 + $0x60] sm:$0xf]
    %v753 = vld [vmem:[#allocation3 + $0x64] sm:$0xf]
    %v754 = vld [vmem:[#allocation3 + $0x68] sm:$0xf]
    %v755 = vld [vmem:[#allocation3 + $0x6c] sm:$0xf]
    %v756 = vld [vmem:[#allocation3 + $0x70] sm:$0xf]
    %v757 = vld [vmem:[#allocation3 + $0x74] sm:$0xf]
    %v758 = vld [vmem:[#allocation3 + $0x78] sm:$0xf]
    %v759 = vld [vmem:[#allocation3 + $0x7c] sm:$0xf]
    %v760 = vld [vmem:[#allocation3 + $0x80] sm:$0xf]
    %v761 = vld [vmem:[#allocation3 + $0x84] sm:$0xf]
    %v762 = vld [vmem:[#allocation3 + $0x88] sm:$0xf]
    %v763 = vld [vmem:[#allocation3 + $0x8c] sm:$0xf]
    %v764 = vld [vmem:[#allocation3 + $0x90] sm:$0xf]
    %v765 = vld [vmem:[#allocation3 + $0x94] sm:$0xf]
    %v766 = vld [vmem:[#allocation3 + $0x98] sm:$0xf]
    %v767 = vld [vmem:[#allocation3 + $0x9c] sm:$0xf]
    %v768 = vld [vmem:[#allocation3 + $0xa0] sm:$0xf]
    %v769 = vld [vmem:[#allocation3 + $0xa4] sm:$0xf]
    %v770 = vld [vmem:[#allocation3 + $0xa8] sm:$0xf]
    %v771 = vld [vmem:[#allocation3 + $0xac] sm:$0xf]
    %v772 = vld [vmem:[#allocation3 + $0xb0] sm:$0xf]
    %v773 = vld [vmem:[#allocation3 + $0xb4] sm:$0xf]
    %v774 = vld [vmem:[#allocation3 + $0xb8] sm:$0xf]
    %v775 = vld [vmem:[#allocation3 + $0xbc] sm:$0xf]
    %v776 = vld [vmem:[#allocation3 + $0xc0] sm:$0xf]
    %v777 = vld [vmem:[#allocation3 + $0xc4] sm:$0xf]
    %v778 = vld [vmem:[#allocation3 + $0xc8] sm:$0xf]
    %v779 = vld [vmem:[#allocation3 + $0xcc] sm:$0xf]
    %v780 = vld [vmem:[#allocation3 + $0xd0] sm:$0xf]
    %v781 = vld [vmem:[#allocation3 + $0xd4] sm:$0xf]
    %v782 = vld [vmem:[#allocation3 + $0xd8] sm:$0xf]
    %v783 = vld [vmem:[#allocation3 + $0xdc] sm:$0xf]
    %v784 = vld [vmem:[#allocation3 + $0xe0] sm:$0xf]
    %v785 = vld [vmem:[#allocation3 + $0xe4] sm:$0xf]
    %v786 = vld [vmem:[#allocation3 + $0xe8] sm:$0xf]
    %v787 = vld [vmem:[#allocation3 + $0xec] sm:$0xf]
    %v788 = vld [vmem:[#allocation3 + $0xf0] sm:$0xf]
    %v789 = vld [vmem:[#allocation3 + $0xf4] sm:$0xf]
    %v790 = vld [vmem:[#allocation3 + $0xf8] sm:$0xf]
    %v791 = vld [vmem:[#allocation3 + $0xfc] sm:$0xf]
    %v792 = vld [vmem:[#allocation3 + $0x100] sm:$0xf]
    %v793 = vld [vmem:[#allocation3 + $0x104] sm:$0xf]
    %v794 = vld [vmem:[#allocation3 + $0x108] sm:$0xf]
    %v795 = vld [vmem:[#allocation3 + $0x10c] sm:$0xf]
    %v796 = vld [vmem:[#allocation3 + $0x110] sm:$0xf]
    %v797 = vld [vmem:[#allocation3 + $0x114] sm:$0xf]
    %v798 = vld [vmem:[#allocation3 + $0x118] sm:$0xf]
    %v799 = vld [vmem:[#allocation3 + $0x11c] sm:$0xf]
    %v800 = vld [vmem:[#allocation3 + $0x120] sm:$0xf]
    %v801 = vld [vmem:[#allocation3 + $0x124] sm:$0xf]
    %v802 = vld [vmem:[#allocation3 + $0x128] sm:$0xf]
    %v803 = vld [vmem:[#allocation3 + $0x12c] sm:$0xf]
    %v804 = vld [vmem:[#allocation3 + $0x130] sm:$0xf]
    %v805 = vld [vmem:[#allocation3 + $0x134] sm:$0xf]
    %v806 = vld [vmem:[#allocation3 + $0x138] sm:$0xf]
    %v807 = vld [vmem:[#allocation3 + $0x13c] sm:$0xf]
    %v808 = vld [vmem:[#allocation3 + $0x140] sm:$0xf]
    %v809 = vld [vmem:[#allocation3 + $0x144] sm:$0xf]
    %v810 = vld [vmem:[#allocation3 + $0x148] sm:$0xf]
    %v811 = vld [vmem:[#allocation3 + $0x14c] sm:$0xf]
    %v812 = vld [vmem:[#allocation3 + $0x150] sm:$0xf]
    %v813 = vld [vmem:[#allocation3 + $0x154] sm:$0xf]
    %v814 = vld [vmem:[#allocation3 + $0x158] sm:$0xf]
    %v815 = vld [vmem:[#allocation3 + $0x15c] sm:$0xf]
    %v816 = vld [vmem:[#allocation3 + $0x160] sm:$0xf]
    %v817 = vld [vmem:[#allocation3 + $0x164] sm:$0xf]
    %v818 = vld [vmem:[#allocation3 + $0x168] sm:$0xf]
    %v819 = vld [vmem:[#allocation3 + $0x16c] sm:$0xf]
    %v820 = vld [vmem:[#allocation3 + $0x170] sm:$0xf]
    %v821 = vld [vmem:[#allocation3 + $0x174] sm:$0xf]
    %v822 = vld [vmem:[#allocation3 + $0x178] sm:$0xf]
    %v823 = vld [vmem:[#allocation3 + $0x17c] sm:$0xf]
    %v824 = vld [vmem:[#allocation3 + $0x180] sm:$0xf]
    %v825 = vld [vmem:[#allocation3 + $0x184] sm:$0xf]
    %v826 = vld [vmem:[#allocation3 + $0x188] sm:$0xf]
    %v827 = vld [vmem:[#allocation3 + $0x18c] sm:$0xf]
    %v828 = vld [vmem:[#allocation3 + $0x190] sm:$0xf]
    %v829 = vld [vmem:[#allocation3 + $0x194] sm:$0xf]
    %v830 = vld [vmem:[#allocation3 + $0x198] sm:$0xf]
    %v831 = vld [vmem:[#allocation3 + $0x19c] sm:$0xf]
    %v832 = vld [vmem:[#allocation3 + $0x1a0] sm:$0xf]
    %v833 = vld [vmem:[#allocation3 + $0x1a4] sm:$0xf]
    %v834 = vld [vmem:[#allocation3 + $0x1a8] sm:$0xf]
    %v835 = vld [vmem:[#allocation3 + $0x1ac] sm:$0xf]
    %v836 = vld [vmem:[#allocation3 + $0x1b0] sm:$0xf]
    %v837 = vld [vmem:[#allocation3 + $0x1b4] sm:$0xf]
    %v838 = vld [vmem:[#allocation3 + $0x1b8] sm:$0xf]
    %v839 = vld [vmem:[#allocation3 + $0x1bc] sm:$0xf]
    %v840 = vld [vmem:[#allocation3 + $0x1c0] sm:$0xf]
    %v841 = vld [vmem:[#allocation3 + $0x1c4] sm:$0xf]
    %v842 = vld [vmem:[#allocation3 + $0x1c8] sm:$0xf]
    %v843 = vld [vmem:[#allocation3 + $0x1cc] sm:$0xf]
    %v844 = vld [vmem:[#allocation3 + $0x1d0] sm:$0xf]
    %v845 = vld [vmem:[#allocation3 + $0x1d4] sm:$0xf]
    %v846 = vld [vmem:[#allocation3 + $0x1d8] sm:$0xf]
    %v847 = vld [vmem:[#allocation3 + $0x1dc] sm:$0xf]
    %v848 = vld [vmem:[#allocation3 + $0x1e0] sm:$0xf]
    %v849 = vld [vmem:[#allocation3 + $0x1e4] sm:$0xf]
    %v850 = vld [vmem:[#allocation3 + $0x1e8] sm:$0xf]
    %v851 = vld [vmem:[#allocation3 + $0x1ec] sm:$0xf]
    %v852 = vld [vmem:[#allocation3 + $0x1f0] sm:$0xf]
    %v853 = vld [vmem:[#allocation3 + $0x1f4] sm:$0xf]
    %v854 = vld [vmem:[#allocation3 + $0x1f8] sm:$0xf]
    %v855 = vld [vmem:[#allocation3 + $0x1fc] sm:$0xf]
    %v856 = vld [vmem:[#allocation5] sm:$0x1]
    %v858 = vlaneseq
    %v859 = vshrl.u32 %v858, 7
    %v860 = vsub.s32 0, %v859
    %v861 = vrot.slane %v856, %v860
    %v891 = vunpack.c.l.b16 %v700
    %v892 = vunpack.c.h.b16 %v700
    %v893 = vunpack.c.l.b16 %v701
    %v894 = vunpack.c.h.b16 %v701
    %v895 = vunpack.c.l.b16 %v702
    %v896 = vunpack.c.h.b16 %v702
    %v897 = vunpack.c.l.b16 %v703
    %v898 = vunpack.c.h.b16 %v703
    %v899 = vunpack.c.l.b16 %v704
    %v900 = vunpack.c.h.b16 %v704
    %v901 = vunpack.c.l.b16 %v705
    %v902 = vunpack.c.h.b16 %v705
    %v903 = vunpack.c.l.b16 %v706
    %v904 = vunpack.c.h.b16 %v706
    %v905 = vunpack.c.l.b16 %v707
    %v906 = vunpack.c.h.b16 %v707
    %v907 = vunpack.c.l.b16 %v708
    %v908 = vunpack.c.h.b16 %v708
    %v909 = vunpack.c.l.b16 %v709
    %v910 = vunpack.c.h.b16 %v709
    %v911 = vunpack.c.l.b16 %v710
    %v912 = vunpack.c.h.b16 %v710
    %v913 = vunpack.c.l.b16 %v711
    %v914 = vunpack.c.h.b16 %v711
    %v915 = vunpack.c.l.b16 %v712
    %v916 = vunpack.c.h.b16 %v712
    %v917 = vunpack.c.l.b16 %v713
    %v918 = vunpack.c.h.b16 %v713
    %v919 = vunpack.c.l.b16 %v714
    %v920 = vunpack.c.h.b16 %v714
    %v921 = vunpack.c.l.b16 %v715
    %v922 = vunpack.c.h.b16 %v715
    %v923 = vunpack.c.l.b16 %v716
    %v924 = vunpack.c.h.b16 %v716
    %v925 = vunpack.c.l.b16 %v717
    %v926 = vunpack.c.h.b16 %v717
    %v927 = vunpack.c.l.b16 %v718
    %v928 = vunpack.c.h.b16 %v718
    %v929 = vunpack.c.l.b16 %v719
    %v930 = vunpack.c.h.b16 %v719
    %v931 = vunpack.c.l.b16 %v720
    %v932 = vunpack.c.h.b16 %v720
    %v933 = vunpack.c.l.b16 %v721
    %v934 = vunpack.c.h.b16 %v721
    %v935 = vunpack.c.l.b16 %v722
    %v936 = vunpack.c.h.b16 %v722
    %v937 = vunpack.c.l.b16 %v723
    %v938 = vunpack.c.h.b16 %v723
    %v939 = vunpack.c.l.b16 %v724
    %v940 = vunpack.c.h.b16 %v724
    %v941 = vunpack.c.l.b16 %v725
    %v942 = vunpack.c.h.b16 %v725
    %v943 = vunpack.c.l.b16 %v726
    %v944 = vunpack.c.h.b16 %v726
    %v945 = vunpack.c.l.b16 %v727
    %v946 = vunpack.c.h.b16 %v727
    %v947 = vpack.c.b16 %v899, %v891
    %v948 = vpack.c.b16 %v900, %v892
    %v949 = vpack.c.b16 %v901, %v893
    %v950 = vpack.c.b16 %v902, %v894
    %v951 = vpack.c.b16 %v903, %v895
    %v952 = vpack.c.b16 %v904, %v896
    %v953 = vpack.c.b16 %v905, %v897
    %v954 = vpack.c.b16 %v906, %v898
    %v955 = vpack.c.b16 %v915, %v907
    %v956 = vpack.c.b16 %v916, %v908
    %v957 = vpack.c.b16 %v917, %v909
    %v958 = vpack.c.b16 %v918, %v910
    %v959 = vpack.c.b16 %v919, %v911
    %v960 = vpack.c.b16 %v920, %v912
    %v961 = vpack.c.b16 %v921, %v913
    %v962 = vpack.c.b16 %v922, %v914
    %v963 = vpack.c.b16 %v931, %v923
    %v964 = vpack.c.b16 %v932, %v924
    %v965 = vpack.c.b16 %v933, %v925
    %v966 = vpack.c.b16 %v934, %v926
    %v967 = vpack.c.b16 %v935, %v927
    %v968 = vpack.c.b16 %v936, %v928
    %v969 = vpack.c.b16 %v937, %v929
    %v970 = vpack.c.b16 %v938, %v930
    %v971 = vpack.c.b16 %v939, %v939
    %v972 = vpack.c.b16 %v940, %v940
    %v973 = vpack.c.b16 %v941, %v941
    %v974 = vpack.c.b16 %v942, %v942
    %v975 = vpack.c.b16 %v943, %v943
    %v976 = vpack.c.b16 %v944, %v944
    %v977 = vpack.c.b16 %v945, %v945
    %v978 = vpack.c.b16 %v946, %v946
    %v1139 = vunpack.c.l.b16 %v728
    %v1140 = vunpack.c.l.b16 %v729
    %v1141 = vunpack.c.l.b16 %v730
    %v1142 = vunpack.c.l.b16 %v731
    %v1143 = vunpack.c.l.b16 %v732
    %v1144 = vunpack.c.l.b16 %v733
    %v1145 = vunpack.c.l.b16 %v734
    %v1146 = vunpack.c.l.b16 %v735
    %v1147 = vunpack.c.l.b16 %v736
    %v1148 = vunpack.c.l.b16 %v737
    %v1149 = vunpack.c.l.b16 %v738
    %v1150 = vunpack.c.l.b16 %v739
    %v1151 = vunpack.c.l.b16 %v740
    %v1152 = vunpack.c.l.b16 %v741
    %v1153 = vunpack.c.l.b16 %v742
    %v1154 = vunpack.c.l.b16 %v743
    %v1155 = vunpack.c.l.b16 %v744
    %v1156 = vunpack.c.l.b16 %v745
    %v1157 = vunpack.c.l.b16 %v746
    %v1158 = vunpack.c.l.b16 %v747
    %v1159 = vunpack.c.l.b16 %v748
    %v1160 = vunpack.c.l.b16 %v749
    %v1161 = vunpack.c.l.b16 %v750
    %v1162 = vunpack.c.l.b16 %v751
    %v1163 = vunpack.c.l.b16 %v752
    %v1164 = vunpack.c.l.b16 %v753
    %v1165 = vunpack.c.l.b16 %v754
    %v1166 = vunpack.c.l.b16 %v755
    %v1167 = vunpack.c.l.b16 %v756
    %v1168 = vunpack.c.l.b16 %v757
    %v1169 = vunpack.c.l.b16 %v758
    %v1170 = vunpack.c.l.b16 %v759
    %v1171 = vunpack.c.l.b16 %v760
    %v1172 = vunpack.c.l.b16 %v761
    %v1173 = vunpack.c.l.b16 %v762
    %v1174 = vunpack.c.l.b16 %v763
    %v1175 = vunpack.c.l.b16 %v764
    %v1176 = vunpack.c.l.b16 %v765
    %v1177 = vunpack.c.l.b16 %v766
    %v1178 = vunpack.c.l.b16 %v767
    %v1179 = vunpack.c.l.b16 %v768
    %v1180 = vunpack.c.l.b16 %v769
    %v1181 = vunpack.c.l.b16 %v770
    %v1182 = vunpack.c.l.b16 %v771
    %v1183 = vunpack.c.l.b16 %v772
    %v1184 = vunpack.c.l.b16 %v773
    %v1185 = vunpack.c.l.b16 %v774
    %v1186 = vunpack.c.l.b16 %v775
    %v1187 = vunpack.c.l.b16 %v776
    %v1188 = vunpack.c.l.b16 %v777
    %v1189 = vunpack.c.l.b16 %v778
    %v1190 = vunpack.c.l.b16 %v779
    %v1191 = vunpack.c.l.b16 %v780
    %v1192 = vunpack.c.l.b16 %v781
    %v1193 = vunpack.c.l.b16 %v782
    %v1194 = vunpack.c.l.b16 %v783
    %v1195 = vunpack.c.l.b16 %v784
    %v1196 = vunpack.c.l.b16 %v785
    %v1197 = vunpack.c.l.b16 %v786
    %v1198 = vunpack.c.l.b16 %v787
    %v1199 = vunpack.c.l.b16 %v788
    %v1200 = vunpack.c.l.b16 %v789
    %v1201 = vunpack.c.l.b16 %v790
    %v1202 = vunpack.c.l.b16 %v791
    %v1203 = vunpack.c.l.b16 %v792
    %v1204 = vunpack.c.l.b16 %v793
    %v1205 = vunpack.c.l.b16 %v794
    %v1206 = vunpack.c.l.b16 %v795
    %v1207 = vunpack.c.l.b16 %v796
    %v1208 = vunpack.c.l.b16 %v797
    %v1209 = vunpack.c.l.b16 %v798
    %v1210 = vunpack.c.l.b16 %v799
    %v1211 = vunpack.c.l.b16 %v800
    %v1212 = vunpack.c.l.b16 %v801
    %v1213 = vunpack.c.l.b16 %v802
    %v1214 = vunpack.c.l.b16 %v803
    %v1215 = vunpack.c.l.b16 %v804
    %v1216 = vunpack.c.l.b16 %v805
    %v1217 = vunpack.c.l.b16 %v806
    %v1218 = vunpack.c.l.b16 %v807
    %v1219 = vunpack.c.l.b16 %v808
    %v1220 = vunpack.c.l.b16 %v809
    %v1221 = vunpack.c.l.b16 %v810
    %v1222 = vunpack.c.l.b16 %v811
    %v1223 = vunpack.c.l.b16 %v812
    %v1224 = vunpack.c.l.b16 %v813
    %v1225 = vunpack.c.l.b16 %v814
    %v1226 = vunpack.c.l.b16 %v815
    %v1227 = vunpack.c.l.b16 %v816
    %v1228 = vunpack.c.l.b16 %v817
    %v1229 = vunpack.c.l.b16 %v818
    %v1230 = vunpack.c.l.b16 %v819
    %v1231 = vunpack.c.l.b16 %v820
    %v1232 = vunpack.c.l.b16 %v821
    %v1233 = vunpack.c.l.b16 %v822
    %v1234 = vunpack.c.l.b16 %v823
    %v1235 = vunpack.c.l.b16 %v824
    %v1236 = vunpack.c.l.b16 %v825
    %v1237 = vunpack.c.l.b16 %v826
    %v1238 = vunpack.c.l.b16 %v827
    %v1239 = vunpack.c.l.b16 %v828
    %v1240 = vunpack.c.l.b16 %v829
    %v1241 = vunpack.c.l.b16 %v830
    %v1242 = vunpack.c.l.b16 %v831
    %v1243 = vunpack.c.l.b16 %v832
    %v1244 = vunpack.c.l.b16 %v833
    %v1245 = vunpack.c.l.b16 %v834
    %v1246 = vunpack.c.l.b16 %v835
    %v1247 = vunpack.c.l.b16 %v836
    %v1248 = vunpack.c.l.b16 %v837
    %v1249 = vunpack.c.l.b16 %v838
    %v1250 = vunpack.c.l.b16 %v839
    %v1251 = vunpack.c.l.b16 %v840
    %v1252 = vunpack.c.l.b16 %v841
    %v1253 = vunpack.c.l.b16 %v842
    %v1254 = vunpack.c.l.b16 %v843
    %v1255 = vunpack.c.l.b16 %v844
    %v1256 = vunpack.c.l.b16 %v845
    %v1257 = vunpack.c.l.b16 %v846
    %v1258 = vunpack.c.l.b16 %v847
    %v1259 = vunpack.c.l.b16 %v848
    %v1260 = vunpack.c.l.b16 %v849
    %v1261 = vunpack.c.l.b16 %v850
    %v1262 = vunpack.c.l.b16 %v851
    %v1263 = vunpack.c.l.b16 %v852
    %v1264 = vunpack.c.l.b16 %v853
    %v1265 = vunpack.c.l.b16 %v854
    %v1266 = vunpack.c.l.b16 %v855
    %v1267 = vpack.c.b16 %v1140, %v1139
    %v1268 = vpack.c.b16 %v1142, %v1141
    %v1269 = vpack.c.b16 %v1144, %v1143
    %v1270 = vpack.c.b16 %v1146, %v1145
    %v1271 = vpack.c.b16 %v1148, %v1147
    %v1272 = vpack.c.b16 %v1150, %v1149
    %v1273 = vpack.c.b16 %v1152, %v1151
    %v1274 = vpack.c.b16 %v1154, %v1153
    %v1275 = vpack.c.b16 %v1156, %v1155
    %v1276 = vpack.c.b16 %v1158, %v1157
    %v1277 = vpack.c.b16 %v1160, %v1159
    %v1278 = vpack.c.b16 %v1162, %v1161
    %v1279 = vpack.c.b16 %v1164, %v1163
    %v1280 = vpack.c.b16 %v1166, %v1165
    %v1281 = vpack.c.b16 %v1168, %v1167
    %v1282 = vpack.c.b16 %v1170, %v1169
    %v1283 = vpack.c.b16 %v1172, %v1171
    %v1284 = vpack.c.b16 %v1174, %v1173
    %v1285 = vpack.c.b16 %v1176, %v1175
    %v1286 = vpack.c.b16 %v1178, %v1177
    %v1287 = vpack.c.b16 %v1180, %v1179
    %v1288 = vpack.c.b16 %v1182, %v1181
    %v1289 = vpack.c.b16 %v1184, %v1183
    %v1290 = vpack.c.b16 %v1186, %v1185
    %v1291 = vpack.c.b16 %v1188, %v1187
    %v1292 = vpack.c.b16 %v1190, %v1189
    %v1293 = vpack.c.b16 %v1192, %v1191
    %v1294 = vpack.c.b16 %v1194, %v1193
    %v1295 = vpack.c.b16 %v1196, %v1195
    %v1296 = vpack.c.b16 %v1198, %v1197
    %v1297 = vpack.c.b16 %v1200, %v1199
    %v1298 = vpack.c.b16 %v1202, %v1201
    %v1299 = vpack.c.b16 %v1204, %v1203
    %v1300 = vpack.c.b16 %v1206, %v1205
    %v1301 = vpack.c.b16 %v1208, %v1207
    %v1302 = vpack.c.b16 %v1210, %v1209
    %v1303 = vpack.c.b16 %v1212, %v1211
    %v1304 = vpack.c.b16 %v1214, %v1213
    %v1305 = vpack.c.b16 %v1216, %v1215
    %v1306 = vpack.c.b16 %v1218, %v1217
    %v1307 = vpack.c.b16 %v1220, %v1219
    %v1308 = vpack.c.b16 %v1222, %v1221
    %v1309 = vpack.c.b16 %v1224, %v1223
    %v1310 = vpack.c.b16 %v1226, %v1225
    %v1311 = vpack.c.b16 %v1228, %v1227
    %v1312 = vpack.c.b16 %v1230, %v1229
    %v1313 = vpack.c.b16 %v1232, %v1231
    %v1314 = vpack.c.b16 %v1234, %v1233
    %v1315 = vpack.c.b16 %v1236, %v1235
    %v1316 = vpack.c.b16 %v1238, %v1237
    %v1317 = vpack.c.b16 %v1240, %v1239
    %v1318 = vpack.c.b16 %v1242, %v1241
    %v1319 = vpack.c.b16 %v1244, %v1243
    %v1320 = vpack.c.b16 %v1246, %v1245
    %v1321 = vpack.c.b16 %v1248, %v1247
    %v1322 = vpack.c.b16 %v1250, %v1249
    %v1323 = vpack.c.b16 %v1252, %v1251
    %v1324 = vpack.c.b16 %v1254, %v1253
    %v1325 = vpack.c.b16 %v1256, %v1255
    %v1326 = vpack.c.b16 %v1258, %v1257
    %v1327 = vpack.c.b16 %v1260, %v1259
    %v1328 = vpack.c.b16 %v1262, %v1261
    %v1329 = vpack.c.b16 %v1264, %v1263
    %v1330 = vpack.c.b16 %v1266, %v1265
    %1395 = vmatprep.subr.bf16.mxu0 0
    %1396 = vmatpush1.bf16.msra.mxu0 %v1274
    %1397 = vmatprep.subr.bf16.mxu0 0
    %1398 = vmatpush1.bf16.msra.mxu0 %v1273
    %1399 = vmatprep.subr.bf16.mxu0 0
    %1400 = vmatpush1.bf16.msra.mxu0 %v1272
    %1401 = vmatprep.subr.bf16.mxu0 0
    %1402 = vmatpush1.bf16.msra.mxu0 %v1271
    %1403 = vmatprep.subr.bf16.mxu0 0
    %1404 = vmatpush1.bf16.msra.mxu0 %v1270
    %1405 = vmatprep.subr.bf16.mxu0 0
    %1406 = vmatpush1.bf16.msra.mxu0 %v1269
    %1407 = vmatprep.subr.bf16.mxu0 0
    %1408 = vmatpush1.bf16.msra.mxu0 %v1268
    %1409 = vmatprep.subr.bf16.mxu0 0
    %1410 = vmatpush1.bf16.msra.mxu0 %v1267
    %1411 = vmatprep.subr.bf16.mxu0 0
    %1412 = vmatpush2.bf16.msra.mxu0 %v1282
    %1413 = vmatprep.subr.bf16.mxu0 0
    %1414 = vmatpush2.bf16.msra.mxu0 %v1281
    %1415 = vmatprep.subr.bf16.mxu0 0
    %1416 = vmatpush2.bf16.msra.mxu0 %v1280
    %1417 = vmatprep.subr.bf16.mxu0 0
    %1418 = vmatpush2.bf16.msra.mxu0 %v1279
    %1419 = vmatprep.subr.bf16.mxu0 0
    %1420 = vmatpush2.bf16.msra.mxu0 %v1278
    %1421 = vmatprep.subr.bf16.mxu0 0
    %1422 = vmatpush2.bf16.msra.mxu0 %v1277
    %1423 = vmatprep.subr.bf16.mxu0 0
    %1424 = vmatpush2.bf16.msra.mxu0 %v1276
    %1425 = vmatprep.subr.bf16.mxu0 0
    %1426 = vmatpush2.bf16.msra.mxu0 %v1275
    %1427 = vmatprep.mubr.bf16.mxu0 %v948
    %1428 = vmatmul.mubr.bf16.gmra.mxu0 %v947
    %v1429 = vpop.f32.mrf.mxu0
    %v1430 = vadd.f32 %v861, %v1429
    %v1431 = vpop.f32.mrf.mxu0
    %v1432 = vpop.f32.mrf.mxu0
    %v1433 = vadd.f32 %v861, %v1432
    %v1434 = vpop.f32.mrf.mxu0
    %1435 = vmatprep.mubr.bf16.mxu0 %v956
    %1436 = vmatmul.mubr.bf16.gmra.mxu0 %v955
    %v1437 = vpop.f32.mrf.mxu0
    %v1438 = vadd.f32 %v861, %v1437
    %v1439 = vpop.f32.mrf.mxu0
    %v1440 = vpop.f32.mrf.mxu0
    %v1441 = vadd.f32 %v861, %v1440
    %v1442 = vpop.f32.mrf.mxu0
    %1443 = vmatprep.mubr.bf16.mxu0 %v964
    %1444 = vmatmul.mubr.bf16.gmra.mxu0 %v963
    %v1445 = vpop.f32.mrf.mxu0
    %v1446 = vadd.f32 %v861, %v1445
    %v1447 = vpop.f32.mrf.mxu0
    %v1448 = vpop.f32.mrf.mxu0
    %v1449 = vadd.f32 %v861, %v1448
    %v1450 = vpop.f32.mrf.mxu0
    %1451 = vmatprep.mubr.bf16.mxu0 %v972
    %1452 = vmatmul.mubr.bf16.gmra.mxu0 %v971
    %v1453 = vpop.f32.mrf.mxu0
    %v1454 = vadd.f32 %v861, %v1453
    %v1455 = vpop.f32.mrf.mxu0
    %v1456 = vpop.f32.mrf.mxu0
    %v1457 = vpop.f32.mrf.mxu0
    %1458 = vdwg.mxu0
    %1459 = vmatprep.subr.bf16.mxu0 0
    %1460 = vmatpush1.bf16.msra.mxu0 %v1290
    %1461 = vmatprep.subr.bf16.mxu0 0
    %1462 = vmatpush1.bf16.msra.mxu0 %v1289
    %1463 = vmatprep.subr.bf16.mxu0 0
    %1464 = vmatpush1.bf16.msra.mxu0 %v1288
    %1465 = vmatprep.subr.bf16.mxu0 0
    %1466 = vmatpush1.bf16.msra.mxu0 %v1287
    %1467 = vmatprep.subr.bf16.mxu0 0
    %1468 = vmatpush1.bf16.msra.mxu0 %v1286
    %1469 = vmatprep.subr.bf16.mxu0 0
    %1470 = vmatpush1.bf16.msra.mxu0 %v1285
    %1471 = vmatprep.subr.bf16.mxu0 0
    %1472 = vmatpush1.bf16.msra.mxu0 %v1284
    %1473 = vmatprep.subr.bf16.mxu0 0
    %1474 = vmatpush1.bf16.msra.mxu0 %v1283
    %1475 = vmatprep.subr.bf16.mxu0 0
    %1476 = vmatpush2.bf16.msra.mxu0 %v1298
    %1477 = vmatprep.subr.bf16.mxu0 0
    %1478 = vmatpush2.bf16.msra.mxu0 %v1297
    %1479 = vmatprep.subr.bf16.mxu0 0
    %1480 = vmatpush2.bf16.msra.mxu0 %v1296
    %1481 = vmatprep.subr.bf16.mxu0 0
    %1482 = vmatpush2.bf16.msra.mxu0 %v1295
    %1483 = vmatprep.subr.bf16.mxu0 0
    %1484 = vmatpush2.bf16.msra.mxu0 %v1294
    %1485 = vmatprep.subr.bf16.mxu0 0
    %1486 = vmatpush2.bf16.msra.mxu0 %v1293
    %1487 = vmatprep.subr.bf16.mxu0 0
    %1488 = vmatpush2.bf16.msra.mxu0 %v1292
    %1489 = vmatprep.subr.bf16.mxu0 0
    %1490 = vmatpush2.bf16.msra.mxu0 %v1291
    %1491 = vmatprep.mubr.bf16.mxu0 %v950
    %1492 = vmatmul.mubr.bf16.gmra.mxu0 %v949
    %v1493 = vpop.f32.mrf.mxu0
    %v1494 = vadd.f32 %v1430, %v1493
    %v1495 = vpop.f32.mrf.mxu0
    %v1496 = vpop.f32.mrf.mxu0
    %v1497 = vadd.f32 %v1433, %v1496
    %v1498 = vpop.f32.mrf.mxu0
    %1499 = vmatprep.mubr.bf16.mxu0 %v958
    %1500 = vmatmul.mubr.bf16.gmra.mxu0 %v957
    %v1501 = vpop.f32.mrf.mxu0
    %v1502 = vadd.f32 %v1438, %v1501
    %v1503 = vpop.f32.mrf.mxu0
    %v1504 = vpop.f32.mrf.mxu0
    %v1505 = vadd.f32 %v1441, %v1504
    %v1506 = vpop.f32.mrf.mxu0
    %1507 = vmatprep.mubr.bf16.mxu0 %v966
    %1508 = vmatmul.mubr.bf16.gmra.mxu0 %v965
    %v1509 = vpop.f32.mrf.mxu0
    %v1510 = vadd.f32 %v1446, %v1509
    %v1511 = vpop.f32.mrf.mxu0
    %v1512 = vpop.f32.mrf.mxu0
    %v1513 = vadd.f32 %v1449, %v1512
    %v1514 = vpop.f32.mrf.mxu0
    %1515 = vmatprep.mubr.bf16.mxu0 %v974
    %1516 = vmatmul.mubr.bf16.gmra.mxu0 %v973
    %v1517 = vpop.f32.mrf.mxu0
    %v1518 = vadd.f32 %v1454, %v1517
    %v1519 = vpop.f32.mrf.mxu0
    %v1520 = vpop.f32.mrf.mxu0
    %v1521 = vpop.f32.mrf.mxu0
    %1522 = vdwg.mxu0
    %1523 = vmatprep.subr.bf16.mxu0 0
    %1524 = vmatpush1.bf16.msra.mxu0 %v1306
    %1525 = vmatprep.subr.bf16.mxu0 0
    %1526 = vmatpush1.bf16.msra.mxu0 %v1305
    %1527 = vmatprep.subr.bf16.mxu0 0
    %1528 = vmatpush1.bf16.msra.mxu0 %v1304
    %1529 = vmatprep.subr.bf16.mxu0 0
    %1530 = vmatpush1.bf16.msra.mxu0 %v1303
    %1531 = vmatprep.subr.bf16.mxu0 0
    %1532 = vmatpush1.bf16.msra.mxu0 %v1302
    %1533 = vmatprep.subr.bf16.mxu0 0
    %1534 = vmatpush1.bf16.msra.mxu0 %v1301
    %1535 = vmatprep.subr.bf16.mxu0 0
    %1536 = vmatpush1.bf16.msra.mxu0 %v1300
    %1537 = vmatprep.subr.bf16.mxu0 0
    %1538 = vmatpush1.bf16.msra.mxu0 %v1299
    %1539 = vmatprep.subr.bf16.mxu0 0
    %1540 = vmatpush2.bf16.msra.mxu0 %v1314
    %1541 = vmatprep.subr.bf16.mxu0 0
    %1542 = vmatpush2.bf16.msra.mxu0 %v1313
    %1543 = vmatprep.subr.bf16.mxu0 0
    %1544 = vmatpush2.bf16.msra.mxu0 %v1312
    %1545 = vmatprep.subr.bf16.mxu0 0
    %1546 = vmatpush2.bf16.msra.mxu0 %v1311
    %1547 = vmatprep.subr.bf16.mxu0 0
    %1548 = vmatpush2.bf16.msra.mxu0 %v1310
    %1549 = vmatprep.subr.bf16.mxu0 0
    %1550 = vmatpush2.bf16.msra.mxu0 %v1309
    %1551 = vmatprep.subr.bf16.mxu0 0
    %1552 = vmatpush2.bf16.msra.mxu0 %v1308
    %1553 = vmatprep.subr.bf16.mxu0 0
    %1554 = vmatpush2.bf16.msra.mxu0 %v1307
    %1555 = vmatprep.mubr.bf16.mxu0 %v952
    %1556 = vmatmul.mubr.bf16.gmra.mxu0 %v951
    %v1557 = vpop.f32.mrf.mxu0
    %v1558 = vadd.f32 %v1494, %v1557
    %v1559 = vpop.f32.mrf.mxu0
    %v1560 = vpop.f32.mrf.mxu0
    %v1561 = vadd.f32 %v1497, %v1560
    %v1562 = vpop.f32.mrf.mxu0
    %1563 = vmatprep.mubr.bf16.mxu0 %v960
    %1564 = vmatmul.mubr.bf16.gmra.mxu0 %v959
    %v1565 = vpop.f32.mrf.mxu0
    %v1566 = vadd.f32 %v1502, %v1565
    %v1567 = vpop.f32.mrf.mxu0
    %v1568 = vpop.f32.mrf.mxu0
    %v1569 = vadd.f32 %v1505, %v1568
    %v1570 = vpop.f32.mrf.mxu0
    %1571 = vmatprep.mubr.bf16.mxu0 %v968
    %1572 = vmatmul.mubr.bf16.gmra.mxu0 %v967
    %v1573 = vpop.f32.mrf.mxu0
    %v1574 = vadd.f32 %v1510, %v1573
    %v1575 = vpop.f32.mrf.mxu0
    %v1576 = vpop.f32.mrf.mxu0
    %v1577 = vadd.f32 %v1513, %v1576
    %v1578 = vpop.f32.mrf.mxu0
    %1579 = vmatprep.mubr.bf16.mxu0 %v976
    %1580 = vmatmul.mubr.bf16.gmra.mxu0 %v975
    %v1581 = vpop.f32.mrf.mxu0
    %v1582 = vadd.f32 %v1518, %v1581
    %v1583 = vpop.f32.mrf.mxu0
    %v1584 = vpop.f32.mrf.mxu0
    %v1585 = vpop.f32.mrf.mxu0
    %1586 = vdwg.mxu0
    %1587 = vmatprep.subr.bf16.mxu0 0
    %1588 = vmatpush1.bf16.msra.mxu0 %v1322
    %1589 = vmatprep.subr.bf16.mxu0 0
    %1590 = vmatpush1.bf16.msra.mxu0 %v1321
    %1591 = vmatprep.subr.bf16.mxu0 0
    %1592 = vmatpush1.bf16.msra.mxu0 %v1320
    %1593 = vmatprep.subr.bf16.mxu0 0
    %1594 = vmatpush1.bf16.msra.mxu0 %v1319
    %1595 = vmatprep.subr.bf16.mxu0 0
    %1596 = vmatpush1.bf16.msra.mxu0 %v1318
    %1597 = vmatprep.subr.bf16.mxu0 0
    %1598 = vmatpush1.bf16.msra.mxu0 %v1317
    %1599 = vmatprep.subr.bf16.mxu0 0
    %1600 = vmatpush1.bf16.msra.mxu0 %v1316
    %1601 = vmatprep.subr.bf16.mxu0 0
    %1602 = vmatpush1.bf16.msra.mxu0 %v1315
    %1603 = vmatprep.subr.bf16.mxu0 0
    %1604 = vmatpush2.bf16.msra.mxu0 %v1330
    %1605 = vmatprep.subr.bf16.mxu0 0
    %1606 = vmatpush2.bf16.msra.mxu0 %v1329
    %1607 = vmatprep.subr.bf16.mxu0 0
    %1608 = vmatpush2.bf16.msra.mxu0 %v1328
    %1609 = vmatprep.subr.bf16.mxu0 0
    %1610 = vmatpush2.bf16.msra.mxu0 %v1327
    %1611 = vmatprep.subr.bf16.mxu0 0
    %1612 = vmatpush2.bf16.msra.mxu0 %v1326
    %1613 = vmatprep.subr.bf16.mxu0 0
    %1614 = vmatpush2.bf16.msra.mxu0 %v1325
    %1615 = vmatprep.subr.bf16.mxu0 0
    %1616 = vmatpush2.bf16.msra.mxu0 %v1324
    %1617 = vmatprep.subr.bf16.mxu0 0
    %1618 = vmatpush2.bf16.msra.mxu0 %v1323
    %1619 = vmatprep.mubr.bf16.mxu0 %v954
    %1620 = vmatmul.mubr.bf16.gmra.mxu0 %v953
    %v1621 = vpop.f32.mrf.mxu0
    %v1622 = vadd.f32 %v1558, %v1621
    %v1623 = vpop.f32.mrf.mxu0
    %v1624 = vpop.f32.mrf.mxu0
    %v1625 = vadd.f32 %v1561, %v1624
    %v1626 = vpop.f32.mrf.mxu0
    %1627 = vmatprep.mubr.bf16.mxu0 %v962
    %1628 = vmatmul.mubr.bf16.gmra.mxu0 %v961
    %v1629 = vpop.f32.mrf.mxu0
    %v1630 = vadd.f32 %v1566, %v1629
    %v1631 = vpop.f32.mrf.mxu0
    %v1632 = vpop.f32.mrf.mxu0
    %v1633 = vadd.f32 %v1569, %v1632
    %v1634 = vpop.f32.mrf.mxu0
    %1635 = vmatprep.mubr.bf16.mxu0 %v970
    %1636 = vmatmul.mubr.bf16.gmra.mxu0 %v969
    %v1637 = vpop.f32.mrf.mxu0
    %v1638 = vadd.f32 %v1574, %v1637
    %v1639 = vpop.f32.mrf.mxu0
    %v1640 = vpop.f32.mrf.mxu0
    %v1641 = vadd.f32 %v1577, %v1640
    %v1642 = vpop.f32.mrf.mxu0
    %1643 = vmatprep.mubr.bf16.mxu0 %v978
    %1644 = vmatmul.mubr.bf16.gmra.mxu0 %v977
    %v1645 = vpop.f32.mrf.mxu0
    %v1646 = vadd.f32 %v1582, %v1645
    %v1647 = vpop.f32.mrf.mxu0
    %v1648 = vpop.f32.mrf.mxu0
    %v1649 = vpop.f32.mrf.mxu0
    %1650 = vdwg.mxu0
    %v1651 = vmax.f32 %v1622, 0.0
    %v1652 = vmax.f32 %v1625, 0.0
    %v1653 = vmax.f32 %v1630, 0.0
    %v1654 = vmax.f32 %v1633, 0.0
    %v1655 = vmax.f32 %v1638, 0.0
    %v1656 = vmax.f32 %v1641, 0.0
    %v1657 = vmax.f32 %v1646, 0.0
    %v1658 = vld [vmem:[#allocation7] sm:$0x1]
    %v1660 = vlaneseq
    %v1661 = vshrl.u32 %v1660, 7
    %v1662 = vsub.s32 0, %v1661
    %v1663 = vrot.slane %v1658, %v1662
    %v1665 = vmul.f32 %v1651, %v1663
    %v1666 = vmul.f32 %v1652, %v1663
    %v1667 = vmul.f32 %v1653, %v1663
    %v1668 = vmul.f32 %v1654, %v1663
    %v1669 = vmul.f32 %v1655, %v1663
    %v1670 = vmul.f32 %v1656, %v1663
    %v1671 = vmul.f32 %v1657, %v1663
    %v1672 = vld [vmem:[#allocation8] sm:$0x1]
    %v1674 = vlaneseq
    %v1675 = vshrl.u32 %v1674, 7
    %v1676 = vsub.s32 0, %v1675
    %v1677 = vrot.slane %v1672, %v1676
    %v1679 = vadd.f32 %v1665, %v1677
    %v1680 = vadd.f32 %v1666, %v1677
    %v1681 = vadd.f32 %v1667, %v1677
    %v1682 = vadd.f32 %v1668, %v1677
    %v1683 = vadd.f32 %v1669, %v1677
    %v1684 = vadd.f32 %v1670, %v1677
    %v1685 = vadd.f32 %v1671, %v1677
    %v1686 = vpack.c.bf16 %v1680, %v1679
    %v1687 = vpack.c.bf16 %v1682, %v1681
    %v1688 = vpack.c.bf16 %v1684, %v1683
    %v1689 = vpack.c.bf16 %v1685, %v1685
    %v1694 = vunpack.c.l.b16 %v1686
    %v1695 = vunpack.c.h.b16 %v1686
    %v1696 = vunpack.c.l.b16 %v1687
    %v1697 = vunpack.c.h.b16 %v1687
    %v1698 = vunpack.c.l.b16 %v1688
    %v1699 = vunpack.c.h.b16 %v1688
    %v1700 = vunpack.c.l.b16 %v1689
    %v1701 = vpack.c.b16 %v1694, %v1694
    %v1702 = vpack.c.b16 %v1695, %v1695
    %v1703 = vpack.c.b16 %v1696, %v1696
    %v1704 = vpack.c.b16 %v1697, %v1697
    %v1705 = vpack.c.b16 %v1698, %v1698
    %v1706 = vpack.c.b16 %v1699, %v1699
    %v1707 = vpack.c.b16 %v1700, %v1700
    %1715 = vst [vmem:[%s5] sm:$0xf] %v1701
    %1716 = vst [vmem:[%s5 + $0x4] sm:$0xf] %v1702
    %1717 = vst [vmem:[%s5 + $0x8] sm:$0xf] %v1703
    %1718 = vst [vmem:[%s5 + $0xc] sm:$0xf] %v1704
    %1719 = vst [vmem:[%s5 + $0x10] sm:$0xf] %v1705
    %1720 = vst [vmem:[%s5 + $0x14] sm:$0xf] %v1706
    %1721 = vst [vmem:[%s5 + $0x18] sm:$0x1] %v1707
    // Predicated region
    $region42: #{rbm_tans_dti_forward.4} parent=1 // pred_check
      _
    $region43: #{rbm_tans_dti_forward.4} parent=1 // pred_check_branch
      %1723 = sbr.rel (0) target = $region45
    $region44: #{rbm_tans_dti_forward.4} parent=1 // pred_region
      _
    $region45: #{rbm_tans_dti_forward.4} parent=1 // pred_fallthru
      _
    // Predicated region
    $region46: #{rbm_tans_dti_forward.4} parent=1 // pred_check
      _
    $region47: #{rbm_tans_dti_forward.4} parent=1 // pred_check_branch
      %1725 = sbr.rel (0) target = $region49
    $region48: #{rbm_tans_dti_forward.4} parent=1 // pred_region
      _
    $region49: #{rbm_tans_dti_forward.4} parent=1 // pred_fallthru
      _
    %1726 = vsyncpa [#allocation4], 1
    %1727 = vsyncpa [#allocation6], 1
    %1728 = vsyncpa [#allocation9], 1

// kernel: rbm_tans_dti_forward.6
$region0: #{rbm_tans_dti_forward.6}
  #allocation0 [shape = 'u32[]', space=smem, size = 0x4, offset = 0x4, fixed_abs, tag = 'smem constant byte address 0x4 - core index']
  #allocation1 [shape = 'u32[144,128]{1,0:T(1,128)}', space=vmem, size = 0x12000, scoped, tag = 'internal scratch']
  #allocation2 [shape = 'bf16[22,2048]{1,0:T(8,128)(2,1)}', space=vmem, size = 0x18000, scoped, tag = 'scratch operand']
  %s0 = inlined_call_operand.vmem [shape: bf16[36,256], index: 0, kind: input, shape index: {}]
  %s1 = inlined_call_operand.hbm [shape: bf16[2048,384], index: 1, kind: input, shape index: {}]
  %s2 = inlined_call_operand.hbm [shape: f32[1,384], index: 2, kind: input, shape index: {}]
  %s3 = inlined_call_operand.hbm [shape: f32[1,384], index: 3, kind: input, shape index: {}]
  %s4 = inlined_call_operand.hbm [shape: f32[1,384], index: 4, kind: input, shape index: {}]
  %s5 = inlined_call_operand.vmem [shape: bf16[2,384], index: 5, kind: output, shape index: {}]
  %s6 = sld [smem:[#allocation0]]
  $region73: #{rbm_tans_dti_forward.6} parent=0
    _
  %s8 = ssub.s32 1, %s6
  %s9 = scalar_select 0, %s8, %s6
  $region1: #{rbm_tans_dti_forward.6} parent=0
    #allocation3 [shape = 'u8[1048576]{0}', space=vmem, size = 0x100000, scoped, tag = 'input window, operand 1']
    #allocation4 [shape = 's32[2]{0}', space=sflag, size = 0x8, scoped, tag = 'scoped memory for rbm_tans_dti_forward.6']
    #allocation5 [shape = 'u8[1024]{0}', space=vmem, size = 0x400, scoped, tag = 'input window, operand 2']
    #allocation6 [shape = 's32[2]{0}', space=sflag, size = 0x8, scoped, tag = 'scoped memory for rbm_tans_dti_forward.6']
    #allocation7 [shape = 'u8[1024]{0}', space=vmem, size = 0x400, scoped, tag = 'input window, operand 3']
    #allocation8 [shape = 'u8[1024]{0}', space=vmem, size = 0x400, scoped, tag = 'input window, operand 4']
    #allocation9 [shape = 's32[2]{0}', space=sflag, size = 0x8, scoped, tag = 'scoped memory for rbm_tans_dti_forward.6']
    %10 = vsyncpa [#allocation4], 0
    %s11 = scalar_lea.sflag [#allocation4], 1
    %12 = vsyncpa %s11, 0
    %13 = vsyncpa [#allocation6], 0
    %s14 = scalar_lea.sflag [#allocation6], 1
    %15 = vsyncpa %s14, 0
    %16 = vsyncpa [#allocation9], 0
    %s17 = scalar_lea.sflag [#allocation9], 1
    %18 = vsyncpa %s17, 0
    loop: start=0, step=1, limit=5
    $region2: #{rbm_tans_dti_forward.6} parent=1 // loop_pre_header
      _
    $region3: #{rbm_tans_dti_forward.6} parent=1 // loop_header
      %s20 = sphi 0, %s24
      %p21 = scmp.ge.s32.totalorder %s20, 5
      %s28 = sphi 0, %s28
      %s30 = sphi 0, %s28
      %s31 = sphi 0, %s30
      %s45 = sphi 0, %s31
      %s51 = sphi 0, %s53
      %s54 = sphi 0, %s51
      %s55 = sphi 0, %s54
      %s71 = sphi 0, %s55
      %s77 = sphi 0, %s79
      %s80 = sphi 0, %s77
      %s81 = sphi 0, %s80
      %s97 = sphi 0, %s81
      %s103 = sphi 0, %s105
      %s106 = sphi 0, %s103
      %s107 = sphi 0, %s106
      %s123 = sphi 0, %s107
      %s129 = sphi 0, %s131
      %s132 = sphi 0, %s129
      %s133 = sphi 0, %s132
      %s149 = sphi 0, %s133
      %s155 = sphi 0, %s157
      %s158 = sphi 0, %s155
      %s159 = sphi 0, %s158
      %s175 = sphi 0, %s159
    $region4: #{rbm_tans_dti_forward.6} parent=1 // loop_header_branch
      %23 = sbr.rel (%p21) target = $region8
    $region5: #{rbm_tans_dti_forward.6} parent=1 // loop_body
      %s25 = ssub.s32 %s20, 1
      %s26 = ssub.s32 %s20, 2
      %s27 = sadd.s32 %s20, 1
      %s29 = sadd.s32 %s28, 1
      %p32 = scmp.eq.s32.totalorder %s20, 2
      %p33 = scmp.ne.s32.totalorder %s28, %s30
      %p34 = scmp.eq.s32.totalorder %s20, 0
      %p35 = por %p33, %p34
      %p36 = scmp.ne.s32.totalorder %s28, %s30
      %p37 = scmp.eq.s32.totalorder %s25, 2
      %p38 = por %p36, %p37
      %p39 = scmp.ne.s32.totalorder %s30, %s31
      %p40 = scmp.eq.s32.totalorder %s25, 0
      %p41 = por %p39, %p40
      %p42 = scmp.ne.s32.totalorder %s30, %s31
      %p43 = scmp.eq.s32.totalorder %s26, 2
      %p44 = por %p42, %p43
      %p46 = scmp.ne.s32.totalorder %s31, %s45
      %p47 = scmp.eq.s32.totalorder %s26, 0
      %p48 = por %p46, %p47
      %s49 = ssub.s32 %s20, %s27
      %p50 = scmp.eq.s32.totalorder %s49, 0
      %s52 = sadd.s32 %s51, 1
      %s53 = scalar_select %p50, %s51, %s52
      %p56 = pneg %p50
      %p57 = scmp.eq.s32.totalorder %s20, 2
      %p58 = por %p56, %p57
      %p59 = scmp.ne.s32.totalorder %s51, %s54
      %p60 = scmp.eq.s32.totalorder %s20, 0
      %p61 = por %p59, %p60
      %p62 = scmp.ne.s32.totalorder %s51, %s54
      %p63 = scmp.eq.s32.totalorder %s25, 2
      %p64 = por %p62, %p63
      %p65 = scmp.ne.s32.totalorder %s54, %s55
      %p66 = scmp.eq.s32.totalorder %s25, 0
      %p67 = por %p65, %p66
      %p68 = scmp.ne.s32.totalorder %s54, %s55
      %p69 = scmp.eq.s32.totalorder %s26, 2
      %p70 = por %p68, %p69
      %p72 = scmp.ne.s32.totalorder %s55, %s71
      %p73 = scmp.eq.s32.totalorder %s26, 0
      %p74 = por %p72, %p73
      %s75 = ssub.s32 %s20, %s27
      %p76 = scmp.eq.s32.totalorder %s75, 0
      %s78 = sadd.s32 %s77, 1
      %s79 = scalar_select %p76, %s77, %s78
      %p82 = pneg %p76
      %p83 = scmp.eq.s32.totalorder %s20, 2
      %p84 = por %p82, %p83
      %p85 = scmp.ne.s32.totalorder %s77, %s80
      %p86 = scmp.eq.s32.totalorder %s20, 0
      %p87 = por %p85, %p86
      %p88 = scmp.ne.s32.totalorder %s77, %s80
      %p89 = scmp.eq.s32.totalorder %s25, 2
      %p90 = por %p88, %p89
      %p91 = scmp.ne.s32.totalorder %s80, %s81
      %p92 = scmp.eq.s32.totalorder %s25, 0
      %p93 = por %p91, %p92
      %p94 = scmp.ne.s32.totalorder %s80, %s81
      %p95 = scmp.eq.s32.totalorder %s26, 2
      %p96 = por %p94, %p95
      %p98 = scmp.ne.s32.totalorder %s81, %s97
      %p99 = scmp.eq.s32.totalorder %s26, 0
      %p100 = por %p98, %p99
      %s101 = ssub.s32 %s20, %s27
      %p102 = scmp.eq.s32.totalorder %s101, 0
      %s104 = sadd.s32 %s103, 1
      %s105 = scalar_select %p102, %s103, %s104
      %p108 = pneg %p102
      %p109 = scmp.eq.s32.totalorder %s20, 2
      %p110 = por %p108, %p109
      %p111 = scmp.ne.s32.totalorder %s103, %s106
      %p112 = scmp.eq.s32.totalorder %s20, 0
      %p113 = por %p111, %p112
      %p114 = scmp.ne.s32.totalorder %s103, %s106
      %p115 = scmp.eq.s32.totalorder %s25, 2
      %p116 = por %p114, %p115
      %p117 = scmp.ne.s32.totalorder %s106, %s107
      %p118 = scmp.eq.s32.totalorder %s25, 0
      %p119 = por %p117, %p118
      %p120 = scmp.ne.s32.totalorder %s106, %s107
      %p121 = scmp.eq.s32.totalorder %s26, 2
      %p122 = por %p120, %p121
      %p124 = scmp.ne.s32.totalorder %s107, %s123
      %p125 = scmp.eq.s32.totalorder %s26, 0
      %p126 = por %p124, %p125
      %s127 = ssub.s32 %s20, %s27
      %p128 = scmp.eq.s32.totalorder %s127, 0
      %s130 = sadd.s32 %s129, 1
      %s131 = scalar_select %p128, %s129, %s130
      %p134 = pneg %p128
      %p135 = scmp.eq.s32.totalorder %s20, 2
      %p136 = por %p134, %p135
      %p137 = scmp.ne.s32.totalorder %s129, %s132
      %p138 = scmp.eq.s32.totalorder %s20, 0
      %p139 = por %p137, %p138
      %p140 = scmp.ne.s32.totalorder %s129, %s132
      %p141 = scmp.eq.s32.totalorder %s25, 2
      %p142 = por %p140, %p141
      %p143 = scmp.ne.s32.totalorder %s132, %s133
      %p144 = scmp.eq.s32.totalorder %s25, 0
      %p145 = por %p143, %p144
      %p146 = scmp.ne.s32.totalorder %s132, %s133
      %p147 = scmp.eq.s32.totalorder %s26, 2
      %p148 = por %p146, %p147
      %p150 = scmp.ne.s32.totalorder %s133, %s149
      %p151 = scmp.eq.s32.totalorder %s26, 0
      %p152 = por %p150, %p151
      %s153 = ssub.s32 %s20, %s27
      %p154 = scmp.eq.s32.totalorder %s153, 0
      %s156 = sadd.s32 %s155, 1
      %s157 = scalar_select %p154, %s155, %s156
      %p160 = pneg %p154
      %p161 = scmp.eq.s32.totalorder %s20, 2
      %p162 = por %p160, %p161
      %p163 = scmp.ne.s32.totalorder %s155, %s158
      %p164 = scmp.eq.s32.totalorder %s20, 0
      %p165 = por %p163, %p164
      %p166 = scmp.ne.s32.totalorder %s155, %s158
      %p167 = scmp.eq.s32.totalorder %s25, 2
      %p168 = por %p166, %p167
      %p169 = scmp.ne.s32.totalorder %s158, %s159
      %p170 = scmp.eq.s32.totalorder %s25, 0
      %p171 = por %p169, %p170
      %p172 = scmp.ne.s32.totalorder %s158, %s159
      %p173 = scmp.eq.s32.totalorder %s26, 2
      %p174 = por %p172, %p173
      %p176 = scmp.ne.s32.totalorder %s159, %s175
      %p177 = scmp.eq.s32.totalorder %s26, 0
      %p178 = por %p176, %p177
      %p179 = scmp.le.s32.totalorder 1, %s20
      %p180 = scmp.lt.s32.totalorder %s20, 4
      %p181 = pnand %p179, %p180
      %p182 = pneg %p181
      // Predicated region
      $region9: #{rbm_tans_dti_forward.6} parent=5 // pred_check
        _
      $region10: #{rbm_tans_dti_forward.6} parent=5 // pred_check_branch
        %184 = sbr.rel (%p181) target = $region12
      $region11: #{rbm_tans_dti_forward.6} parent=5 // pred_region
        %s185 = ssub.s32 %s20, 1
        // Predicated region
        $region13: #{rbm_tans_dti_forward.6} parent=11 // pred_check
          %p186 = pneg %p41
        $region14: #{rbm_tans_dti_forward.6} parent=11 // pred_check_branch
          %188 = sbr.rel (%p186) target = $region16
        $region15: #{rbm_tans_dti_forward.6} parent=11 // pred_region
          _
        $region16: #{rbm_tans_dti_forward.6} parent=11 // pred_fallthru
          _
      $region12: #{rbm_tans_dti_forward.6} parent=5 // pred_fallthru
        _
      %p189 = scmp.lt.s32.totalorder %s20, 3
      // Predicated region
      $region17: #{rbm_tans_dti_forward.6} parent=5 // pred_check
        %p190 = pneg %p189
      $region18: #{rbm_tans_dti_forward.6} parent=5 // pred_check_branch
        %192 = sbr.rel (%p190) target = $region20
      $region19: #{rbm_tans_dti_forward.6} parent=5 // pred_region
        // Predicated region
        $region21: #{rbm_tans_dti_forward.6} parent=19 // pred_check
          %p193 = pneg %p61
        $region22: #{rbm_tans_dti_forward.6} parent=19 // pred_check_branch
          %195 = sbr.rel (%p193) target = $region24
        $region23: #{rbm_tans_dti_forward.6} parent=19 // pred_region
          %s196 = sand.u32 %s51, 1
          %s197 = scalar_lea.sflag [#allocation4], %s196
          %s198 = sand.u32 %s51, 1
          %s199 = smul.addr %s198, 1024
          %s200 = scalar_lea.vmem [#allocation3], %s199
          %s202 = ssub.s32 16384, 16384
          %203 = vsyncadd %s197, %s202
          %s204 = smul.addr %s20, 64
          %s205 = scalar_lea.hbm %s1, %s204
          %s206 = sshll.u32 %s200, 4
          %s207 = int_to_ptr.vmem [resolvable:$true] %s206
          %212 = dma.hbm_to_vmem [thread:$0]  %s205, 16384, %s207, %s197, 192, 64, 4
        $region24: #{rbm_tans_dti_forward.6} parent=19 // pred_fallthru
          _
        // Predicated region
        $region25: #{rbm_tans_dti_forward.6} parent=19 // pred_check
          %p213 = pneg %p87
        $region26: #{rbm_tans_dti_forward.6} parent=19 // pred_check_branch
          %215 = sbr.rel (%p213) target = $region28
        $region27: #{rbm_tans_dti_forward.6} parent=19 // pred_region
          %s216 = sand.u32 %s20, 1
          %s217 = scalar_lea.sflag [#allocation6], %s216
          %s218 = sand.u32 %s77, 1
          %s219 = scalar_lea.vmem [#allocation5], %s218
          %s221 = ssub.s32 16, 16
          %222 = vsyncadd %s217, %s221
          %s223 = smul.addr %s20, 16
          %s224 = scalar_lea.hbm %s2, %s223
          %s226 = sshll.u32 %s219, 4
          %s227 = int_to_ptr.vmem [resolvable:$true] %s226
          %229 = dma.hbm_to_vmem [thread:$0]  %s224, 16, %s227, %s217
        $region28: #{rbm_tans_dti_forward.6} parent=19 // pred_fallthru
          _
        // Predicated region
        $region29: #{rbm_tans_dti_forward.6} parent=19 // pred_check
          %p230 = pneg %p113
        $region30: #{rbm_tans_dti_forward.6} parent=19 // pred_check_branch
          %232 = sbr.rel (%p230) target = $region32
        $region31: #{rbm_tans_dti_forward.6} parent=19 // pred_region
          %s233 = sand.u32 %s20, 1
          %s234 = scalar_lea.sflag [#allocation6], %s233
          %s235 = sand.u32 %s103, 1
          %s236 = scalar_lea.vmem [#allocation7], %s235
          %s238 = ssub.s32 16, 16
          %239 = vsyncadd %s234, %s238
          %s240 = smul.addr %s20, 16
          %s241 = scalar_lea.hbm %s3, %s240
          %s243 = sshll.u32 %s236, 4
          %s244 = int_to_ptr.vmem [resolvable:$true] %s243
          %246 = dma.hbm_to_vmem [thread:$0]  %s241, 16, %s244, %s234
        $region32: #{rbm_tans_dti_forward.6} parent=19 // pred_fallthru
          _
        // Predicated region
        $region33: #{rbm_tans_dti_forward.6} parent=19 // pred_check
          %p247 = pneg %p139
        $region34: #{rbm_tans_dti_forward.6} parent=19 // pred_check_branch
          %249 = sbr.rel (%p247) target = $region36
        $region35: #{rbm_tans_dti_forward.6} parent=19 // pred_region
          %s250 = sand.u32 %s129, 1
          %s251 = scalar_lea.sflag [#allocation9], %s250
          %s252 = sand.u32 %s129, 1
          %s253 = scalar_lea.vmem [#allocation8], %s252
          %s255 = ssub.s32 16, 16
          %256 = vsyncadd %s251, %s255
          %s257 = smul.addr %s20, 16
          %s258 = scalar_lea.hbm %s4, %s257
          %s260 = sshll.u32 %s253, 4
          %s261 = int_to_ptr.vmem [resolvable:$true] %s260
          %263 = dma.hbm_to_vmem [thread:$0]  %s258, 16, %s261, %s251
        $region36: #{rbm_tans_dti_forward.6} parent=19 // pred_fallthru
          _
      $region20: #{rbm_tans_dti_forward.6} parent=5 // pred_fallthru
        _
      %p264 = scmp.le.s32.totalorder 1, %s20
      %p265 = scmp.lt.s32.totalorder %s20, 4
      %p266 = pnand %p264, %p265
      %p267 = pneg %p266
      // Predicated region
      $region37: #{rbm_tans_dti_forward.6} parent=5 // pred_check
        _
      $region38: #{rbm_tans_dti_forward.6} parent=5 // pred_check_branch
        %269 = sbr.rel (%p266) target = $region40
      $region39: #{rbm_tans_dti_forward.6} parent=5 // pred_region
        %s270 = ssub.s32 %s20, 1
        %s271 = sand.u32 %s54, 1
        %s272 = scalar_lea.sflag [#allocation4], %s271
        %s273 = sand.u32 %s54, 1
        %s274 = smul.addr %s273, 1024
        %s275 = scalar_lea.vmem [#allocation3], %s274
        // Predicated region
        $region41: #{rbm_tans_dti_forward.6} parent=39 // pred_check
          %p276 = pneg %p67
        $region42: #{rbm_tans_dti_forward.6} parent=39 // pred_check_branch
          %278 = sbr.rel (%p276) target = $region44
        $region43: #{rbm_tans_dti_forward.6} parent=39 // pred_region
          %279 = dma.done %s272, 16384
        $region44: #{rbm_tans_dti_forward.6} parent=39 // pred_fallthru
          _
        %s280 = sand.u32 %s25, 1
        %s281 = scalar_lea.sflag [#allocation6], %s280
        %s282 = sand.u32 %s80, 1
        %s283 = scalar_lea.vmem [#allocation5], %s282
        // Predicated region
        $region45: #{rbm_tans_dti_forward.6} parent=39 // pred_check
          %p284 = pneg %p93
        $region46: #{rbm_tans_dti_forward.6} parent=39 // pred_check_branch
          %286 = sbr.rel (%p284) target = $region48
        $region47: #{rbm_tans_dti_forward.6} parent=39 // pred_region
          %287 = dma.done %s281, 16
        $region48: #{rbm_tans_dti_forward.6} parent=39 // pred_fallthru
          _
        %s288 = sand.u32 %s25, 1
        %s289 = scalar_lea.sflag [#allocation6], %s288
        %s290 = sand.u32 %s106, 1
        %s291 = scalar_lea.vmem [#allocation7], %s290
        // Predicated region
        $region49: #{rbm_tans_dti_forward.6} parent=39 // pred_check
          %p292 = pneg %p119
        $region50: #{rbm_tans_dti_forward.6} parent=39 // pred_check_branch
          %294 = sbr.rel (%p292) target = $region52
        $region51: #{rbm_tans_dti_forward.6} parent=39 // pred_region
          %295 = dma.done %s289, 16
        $region52: #{rbm_tans_dti_forward.6} parent=39 // pred_fallthru
          _
        %s296 = sand.u32 %s132, 1
        %s297 = scalar_lea.sflag [#allocation9], %s296
        %s298 = sand.u32 %s132, 1
        %s299 = scalar_lea.vmem [#allocation8], %s298
        // Predicated region
        $region53: #{rbm_tans_dti_forward.6} parent=39 // pred_check
          %p300 = pneg %p145
        $region54: #{rbm_tans_dti_forward.6} parent=39 // pred_check_branch
          %302 = sbr.rel (%p300) target = $region56
        $region55: #{rbm_tans_dti_forward.6} parent=39 // pred_region
          %303 = dma.done %s297, 16
        $region56: #{rbm_tans_dti_forward.6} parent=39 // pred_fallthru
          _
        %p304 = pneg %p41
        %p305 = pneg %p38
        %s306 = sand.u32 %s54, 1
        %s307 = scalar_lea.sflag [#allocation4], %s306
        %s308 = sand.u32 %s54, 1
        %s309 = smul.addr %s308, 1024
        %s310 = scalar_lea.vmem [#allocation3], %s309
        %p311 = pneg %p67
        %p312 = pneg %p64
        %s313 = sand.u32 %s25, 1
        %s314 = scalar_lea.sflag [#allocation6], %s313
        %s315 = sand.u32 %s80, 1
        %s316 = scalar_lea.vmem [#allocation5], %s315
        %p317 = pneg %p93
        %p318 = pneg %p90
        %s319 = sand.u32 %s25, 1
        %s320 = scalar_lea.sflag [#allocation6], %s319
        %s321 = sand.u32 %s106, 1
        %s322 = scalar_lea.vmem [#allocation7], %s321
        %p323 = pneg %p119
        %p324 = pneg %p116
        %s325 = sand.u32 %s132, 1
        %s326 = scalar_lea.sflag [#allocation9], %s325
        %s327 = sand.u32 %s132, 1
        %s328 = scalar_lea.vmem [#allocation8], %s327
        %p329 = pneg %p145
        %p330 = pneg %p142
        %p331 = pneg %p171
        %p332 = pneg %p168
        %p333 = scmp.lt.s32.totalorder %s25, 2
        %s334 = scalar_select %p333, %s25, 2
        %s335 = scalar_lea.vmem %s5, %s334
        %p336 = scmp.lt.s32.totalorder %s25, 2
        %s337 = scalar_select %p336, %s25, 2
        %s338 = scalar_lea.vmem %s5, %s337
        %p340 = scmp.eq.s32.totalorder %s25, 0
        // Predicated region
        $region57: #{rbm_tans_dti_forward.6} parent=39 // pred_check
          %p341 = pneg %p340
        $region58: #{rbm_tans_dti_forward.6} parent=39 // pred_check_branch
          %343 = sbr.rel (%p341) target = $region60
        $region59: #{rbm_tans_dti_forward.6} parent=39 // pred_region
          %v344 = vld [vmem:[%s0] sm:$0xff]
          %v345 = vld [vmem:[%s0 + $0x8] sm:$0x33]
          %346 = vst [vmem:[#allocation2] sm:$0xff] %v344
          %vm347 = vcmask 1041408
          %vm348 = vsmask.f32 1280
          %vm349 = vmand %vm347, %vm348
          %vm350 = vcmask 1045508
          %vm351 = vsmask.f32 5376
          %vm352 = vmand %vm350, %vm351
          %vm353 = vmor %vm352, %vm349
          %v354 = vld [vmem:[#allocation2 + $0x40] sm:$0x33]
          %v355 = vsel %vm353, %v345, %v354
          %356 = vst [vmem:[#allocation2 + $0x40] sm:$0x33] %v355
          %v357 = vld [vmem:[%s0] sm:$0xff]
          %v358 = vld [vmem:[%s0 + $0x8] sm:$0x33]
          %vm359 = vsmask.f32 3328
          %vm360 = vsmask.f32 7440
          %vm361 = vmor %vm359, %vm360
          %v363 = vshrl.u32 %v357, 16
          %v365 = vrot.slane %v363, 4
          %v366 = vshll.u32 %v357, 16
          %v368 = vrot.slane %v366, 5
          %v369 = vor.u32 %v365, %v368
          %v370 = vrot.slane %v369, 4
          %v372 = vshll.u32 %v358, 16
          %v374 = vrot.slane %v372, 5
          %v375 = vsel %vm361, %v370, %v374
          %v376 = vshrl.u32 %v358, 16
          %v378 = vrot.slane %v376, 4
          %v379 = vor.u32 %v378, %v374
          %v380 = vrot.slane %v379, 4
          %383 = vst [vmem:[#allocation2 + $0x8] sm:$0xff] %v375
          %v384 = vld [vmem:[#allocation2 + $0x48] sm:$0x33]
          %v385 = vsel %vm353, %v380, %v384
          %386 = vst [vmem:[#allocation2 + $0x48] sm:$0x33] %v385
          %v387 = vld [vmem:[%s0] sm:$0xee]
          %v388 = vld [vmem:[%s0 + $0x8] sm:$0x77]
          %vm391 = vcmask 1042432
          %vm392 = vcmask 1046532
          %vm393 = vmor %vm391, %vm392
          %v394 = vrot.slane %v387, 5
          %v395 = vrot.slane %v394, 4
          %v396 = vrot.slane %v388, 5
          %v397 = vsel %vm393, %v395, %v396
          %v398 = vrot.slane %v396, 4
          %401 = vst [vmem:[#allocation2 + $0x10] sm:$0xff] %v397
          %v402 = vld [vmem:[#allocation2 + $0x50] sm:$0x33]
          %v403 = vsel %vm353, %v398, %v402
          %404 = vst [vmem:[#allocation2 + $0x50] sm:$0x33] %v403
          %v405 = vld [vmem:[%s0] sm:$0xee]
          %v406 = vld [vmem:[%s0 + $0x8] sm:$0x77]
          %vm407 = vsmask.f32 2304
          %vm408 = vsmask.f32 6416
          %vm409 = vmor %vm407, %vm408
          %v411 = vshrl.u32 %v405, 16
          %v413 = vrot.slane %v411, 5
          %v414 = vshll.u32 %v405, 16
          %v416 = vrot.slane %v414, 6
          %v417 = vor.u32 %v413, %v416
          %v418 = vrot.slane %v417, 4
          %v420 = vshrl.u32 %v406, 16
          %v422 = vrot.slane %v420, 5
          %v423 = vshll.u32 %v406, 16
          %v425 = vrot.slane %v423, 6
          %v426 = vor.u32 %v422, %v425
          %v427 = vsel %vm409, %v418, %v426
          %v428 = vrot.slane %v426, 4
          %431 = vst [vmem:[#allocation2 + $0x18] sm:$0xff] %v427
          %v432 = vld [vmem:[#allocation2 + $0x58] sm:$0x33]
          %v433 = vsel %vm353, %v428, %v432
          %434 = vst [vmem:[#allocation2 + $0x58] sm:$0x33] %v433
          %v435 = vld [vmem:[%s0] sm:$0xcc]
          %v436 = vld [vmem:[%s0 + $0x8] sm:$0xff]
          %vm439 = vmor %vm347, %vm350
          %v440 = vrot.slane %v435, 6
          %v441 = vrot.slane %v440, 4
          %v442 = vrot.slane %v436, 6
          %v443 = vsel %vm439, %v441, %v442
          %v444 = vrot.slane %v442, 4
          %447 = vst [vmem:[#allocation2 + $0x20] sm:$0xff] %v443
          %v448 = vld [vmem:[#allocation2 + $0x60] sm:$0x33]
          %v449 = vsel %vm353, %v444, %v448
          %450 = vst [vmem:[#allocation2 + $0x60] sm:$0x33] %v449
          %v451 = vld [vmem:[%s0] sm:$0xcc]
          %v452 = vld [vmem:[%s0 + $0x8] sm:$0xff]
          %vm453 = vsmask.f32 5392
          %vm454 = vmor %vm348, %vm453
          %v456 = vshrl.u32 %v451, 16
          %v458 = vrot.slane %v456, 6
          %v459 = vshll.u32 %v451, 16
          %v461 = vrot.slane %v459, 7
          %v462 = vor.u32 %v458, %v461
          %v463 = vrot.slane %v462, 4
          %v465 = vshrl.u32 %v452, 16
          %v467 = vrot.slane %v465, 6
          %v468 = vshll.u32 %v452, 16
          %v470 = vrot.slane %v468, 7
          %v471 = vor.u32 %v467, %v470
          %v472 = vsel %vm454, %v463, %v471
          %v473 = vrot.slane %v471, 4
          %476 = vst [vmem:[#allocation2 + $0x28] sm:$0xff] %v472
          %v477 = vld [vmem:[#allocation2 + $0x68] sm:$0x33]
          %v478 = vsel %vm353, %v473, %v477
          %479 = vst [vmem:[#allocation2 + $0x68] sm:$0x33] %v478
          %v480 = vld [vmem:[%s0] sm:$0x88]
          %v481 = vld [vmem:[%s0 + $0x8] sm:$0xff]
          %v482 = vld [vmem:[%s0 + $0x10] sm:$0x11]
          %vm486 = vcmask 1040384
          %vm487 = vcmask 1044484
          %vm488 = vmor %vm486, %vm487
          %v489 = vrot.slane %v480, 7
          %v490 = vrot.slane %v489, 4
          %v491 = vrot.slane %v481, 7
          %v492 = vsel %vm488, %v490, %v491
          %v493 = vrot.slane %v491, 4
          %v494 = vrot.slane %v482, 7
          %v495 = vsel %vm488, %v493, %v494
          %498 = vst [vmem:[#allocation2 + $0x30] sm:$0xff] %v492
          %v499 = vld [vmem:[#allocation2 + $0x70] sm:$0x33]
          %v500 = vsel %vm353, %v495, %v499
          %501 = vst [vmem:[#allocation2 + $0x70] sm:$0x33] %v500
          %v502 = vld [vmem:[%s0] sm:$0x88]
          %v503 = vld [vmem:[%s0 + $0x8] sm:$0xff]
          %v504 = vld [vmem:[%s0 + $0x10] sm:$0x11]
          %vm505 = vsmask.f32 256
          %vm506 = vsmask.f32 4368
          %vm507 = vmor %vm505, %vm506
          %v509 = vshrl.u32 %v502, 16
          %v511 = vrot.slane %v509, 7
          %v512 = vrot.slane %v511, 4
          %v514 = vshrl.u32 %v503, 16
          %v516 = vrot.slane %v514, 7
          %v517 = vshll.u32 %v503, 16
          %v519 = vor.u32 %v516, %v517
          %v520 = vsel %vm507, %v512, %v519
          %v521 = vrot.slane %v516, 4
          %v523 = vshrl.u32 %v504, 16
          %v525 = vrot.slane %v523, 7
          %v526 = vshll.u32 %v504, 16
          %v528 = vor.u32 %v525, %v526
          %v529 = vsel %vm507, %v521, %v528
          %532 = vst [vmem:[#allocation2 + $0x38] sm:$0xff] %v520
          %v533 = vld [vmem:[#allocation2 + $0x78] sm:$0x33]
          %v534 = vsel %vm353, %v529, %v533
          %535 = vst [vmem:[#allocation2 + $0x78] sm:$0x33] %v534
          %v536 = vld [vmem:[%s0 + $0x10] sm:$0xee]
          %v537 = vld [vmem:[%s0 + $0x18] sm:$0x77]
          %v539 = vshrl.u32 %v536, 16
          %v541 = vrot.slane %v539, 7
          %v542 = vshll.u32 %v536, 16
          %v544 = vor.u32 %v541, %v542
          %v545 = vrot.slane %v541, 4
          %v547 = vshrl.u32 %v537, 16
          %v549 = vrot.slane %v547, 7
          %v550 = vshll.u32 %v537, 16
          %v552 = vor.u32 %v549, %v550
          %v553 = vsel %vm507, %v545, %v552
          %vm556 = vcmask 1043457
          %vm557 = vsmask.f32 7942
          %vm558 = vmand %vm556, %vm557
          %vm559 = vcmask 1047557
          %vm560 = vsmask.f32 7958
          %vm561 = vmand %vm559, %vm560
          %vm562 = vmor %vm561, %vm558
          %v563 = vld [vmem:[#allocation2 + $0x40] sm:$0xee]
          %v564 = vsel %vm562, %v544, %v563
          %565 = vst [vmem:[#allocation2 + $0x40] sm:$0xee] %v564
          %566 = vst [vmem:[#allocation2 + $0x80] sm:$0x77] %v553
          %v567 = vld [vmem:[%s0 + $0x10] sm:$0xee]
          %v568 = vld [vmem:[%s0 + $0x18] sm:$0x77]
          %v569 = vld [vmem:[#allocation2 + $0x48] sm:$0xee]
          %v570 = vsel %vm562, %v567, %v569
          %571 = vst [vmem:[#allocation2 + $0x48] sm:$0xee] %v570
          %572 = vst [vmem:[#allocation2 + $0x88] sm:$0x77] %v568
          %v573 = vld [vmem:[%s0 + $0x10] sm:$0xcc]
          %v574 = vld [vmem:[%s0 + $0x18] sm:$0xff]
          %v576 = vshrl.u32 %v573, 16
          %v578 = vrot.slane %v576, 4
          %v579 = vshll.u32 %v573, 16
          %v581 = vrot.slane %v579, 5
          %v582 = vor.u32 %v578, %v581
          %v583 = vrot.slane %v582, 4
          %v585 = vshll.u32 %v574, 16
          %v587 = vrot.slane %v585, 5
          %v588 = vsel %vm361, %v583, %v587
          %v589 = vshrl.u32 %v574, 16
          %v591 = vrot.slane %v589, 4
          %v592 = vor.u32 %v591, %v587
          %v593 = vrot.slane %v592, 4
          %v596 = vld [vmem:[#allocation2 + $0x50] sm:$0xee]
          %v597 = vsel %vm562, %v588, %v596
          %598 = vst [vmem:[#allocation2 + $0x50] sm:$0xee] %v597
          %599 = vst [vmem:[#allocation2 + $0x90] sm:$0x77] %v593
          %v600 = vld [vmem:[%s0 + $0x10] sm:$0xcc]
          %v601 = vld [vmem:[%s0 + $0x18] sm:$0xff]
          %v604 = vrot.slane %v600, 5
          %v605 = vrot.slane %v604, 4
          %v606 = vrot.slane %v601, 5
          %v607 = vsel %vm393, %v605, %v606
          %v608 = vrot.slane %v606, 4
          %v611 = vld [vmem:[#allocation2 + $0x58] sm:$0xee]
          %v612 = vsel %vm562, %v607, %v611
          %613 = vst [vmem:[#allocation2 + $0x58] sm:$0xee] %v612
          %614 = vst [vmem:[#allocation2 + $0x98] sm:$0x77] %v608
          %v615 = vld [vmem:[%s0 + $0x10] sm:$0x88]
          %v616 = vld [vmem:[%s0 + $0x18] sm:$0xff]
          %v617 = vld [vmem:[%s0 + $0x20] sm:$0x11]
          %v619 = vshrl.u32 %v615, 16
          %v621 = vrot.slane %v619, 5
          %v622 = vshll.u32 %v615, 16
          %v624 = vrot.slane %v622, 6
          %v625 = vor.u32 %v621, %v624
          %v626 = vrot.slane %v625, 4
          %v628 = vshrl.u32 %v616, 16
          %v630 = vrot.slane %v628, 5
          %v631 = vshll.u32 %v616, 16
          %v633 = vrot.slane %v631, 6
          %v634 = vor.u32 %v630, %v633
          %v635 = vsel %vm409, %v626, %v634
          %v636 = vrot.slane %v634, 4
          %v638 = vshll.u32 %v617, 16
          %v640 = vrot.slane %v638, 6
          %v641 = vsel %vm409, %v636, %v640
          %v644 = vld [vmem:[#allocation2 + $0x60] sm:$0xee]
          %v645 = vsel %vm562, %v635, %v644
          %646 = vst [vmem:[#allocation2 + $0x60] sm:$0xee] %v645
          %647 = vst [vmem:[#allocation2 + $0xa0] sm:$0x77] %v641
          %v648 = vld [vmem:[%s0 + $0x10] sm:$0x88]
          %v649 = vld [vmem:[%s0 + $0x18] sm:$0xff]
          %v650 = vld [vmem:[%s0 + $0x20] sm:$0x11]
          %v654 = vrot.slane %v648, 6
          %v655 = vrot.slane %v654, 4
          %v656 = vrot.slane %v649, 6
          %v657 = vsel %vm439, %v655, %v656
          %v658 = vrot.slane %v656, 4
          %v659 = vrot.slane %v650, 6
          %v660 = vsel %vm439, %v658, %v659
          %v663 = vld [vmem:[#allocation2 + $0x68] sm:$0xee]
          %v664 = vsel %vm562, %v657, %v663
          %665 = vst [vmem:[#allocation2 + $0x68] sm:$0xee] %v664
          %666 = vst [vmem:[#allocation2 + $0xa8] sm:$0x77] %v660
          %v667 = vld [vmem:[%s0 + $0x18] sm:$0xff]
          %v668 = vld [vmem:[%s0 + $0x20] sm:$0x33]
          %v670 = vshrl.u32 %v667, 16
          %v672 = vrot.slane %v670, 6
          %v673 = vshll.u32 %v667, 16
          %v675 = vrot.slane %v673, 7
          %v676 = vor.u32 %v672, %v675
          %v677 = vrot.slane %v676, 4
          %v679 = vshrl.u32 %v668, 16
          %v681 = vrot.slane %v679, 6
          %v682 = vshll.u32 %v668, 16
          %v684 = vrot.slane %v682, 7
          %v685 = vor.u32 %v681, %v684
          %v686 = vsel %vm454, %v677, %v685
          %v689 = vld [vmem:[#allocation2 + $0x70] sm:$0xee]
          %v690 = vsel %vm562, %v676, %v689
          %691 = vst [vmem:[#allocation2 + $0x70] sm:$0xee] %v690
          %692 = vst [vmem:[#allocation2 + $0xb0] sm:$0x77] %v686
          %v693 = vld [vmem:[%s0 + $0x18] sm:$0xff]
          %v694 = vld [vmem:[%s0 + $0x20] sm:$0x33]
          %v697 = vrot.slane %v693, 7
          %v698 = vrot.slane %v697, 4
          %v699 = vrot.slane %v694, 7
          %v700 = vsel %vm488, %v698, %v699
          %v703 = vld [vmem:[#allocation2 + $0x78] sm:$0xee]
          %v704 = vsel %vm562, %v697, %v703
          %705 = vst [vmem:[#allocation2 + $0x78] sm:$0xee] %v704
          %706 = vst [vmem:[#allocation2 + $0xb8] sm:$0x77] %v700
        $region60: #{rbm_tans_dti_forward.6} parent=39 // pred_fallthru
          _
        %v707 = vld [vmem:[#allocation2] sm:$0xff]
        %v708 = vld [vmem:[#allocation2 + $0x8] sm:$0xff]
        %v709 = vld [vmem:[#allocation2 + $0x10] sm:$0xff]
        %v710 = vld [vmem:[#allocation2 + $0x18] sm:$0xff]
        %v711 = vld [vmem:[#allocation2 + $0x20] sm:$0xff]
        %v712 = vld [vmem:[#allocation2 + $0x28] sm:$0xff]
        %v713 = vld [vmem:[#allocation2 + $0x30] sm:$0xff]
        %v714 = vld [vmem:[#allocation2 + $0x38] sm:$0xff]
        %v715 = vld [vmem:[#allocation2 + $0x40] sm:$0xff]
        %v716 = vld [vmem:[#allocation2 + $0x48] sm:$0xff]
        %v717 = vld [vmem:[#allocation2 + $0x50] sm:$0xff]
        %v718 = vld [vmem:[#allocation2 + $0x58] sm:$0xff]
        %v719 = vld [vmem:[#allocation2 + $0x60] sm:$0xff]
        %v720 = vld [vmem:[#allocation2 + $0x68] sm:$0xff]
        %v721 = vld [vmem:[#allocation2 + $0x70] sm:$0xff]
        %v722 = vld [vmem:[#allocation2 + $0x78] sm:$0xff]
        %v723 = vld [vmem:[#allocation2 + $0x80] sm:$0x77]
        %v724 = vld [vmem:[#allocation2 + $0x88] sm:$0x77]
        %v725 = vld [vmem:[#allocation2 + $0x90] sm:$0x77]
        %v726 = vld [vmem:[#allocation2 + $0x98] sm:$0x77]
        %v727 = vld [vmem:[#allocation2 + $0xa0] sm:$0x77]
        %v728 = vld [vmem:[#allocation2 + $0xa8] sm:$0x77]
        %v729 = vld [vmem:[#allocation2 + $0xb0] sm:$0x77]
        %v730 = vld [vmem:[#allocation2 + $0xb8] sm:$0x77]
        %v731 = vld [vmem:[%s275] sm:$0xf]
        %v732 = vld [vmem:[%s275 + $0x4] sm:$0xf]
        %v733 = vld [vmem:[%s275 + $0x8] sm:$0xf]
        %v734 = vld [vmem:[%s275 + $0xc] sm:$0xf]
        %v735 = vld [vmem:[%s275 + $0x10] sm:$0xf]
        %v736 = vld [vmem:[%s275 + $0x14] sm:$0xf]
        %v737 = vld [vmem:[%s275 + $0x18] sm:$0xf]
        %v738 = vld [vmem:[%s275 + $0x1c] sm:$0xf]
        %v739 = vld [vmem:[%s275 + $0x20] sm:$0xf]
        %v740 = vld [vmem:[%s275 + $0x24] sm:$0xf]
        %v741 = vld [vmem:[%s275 + $0x28] sm:$0xf]
        %v742 = vld [vmem:[%s275 + $0x2c] sm:$0xf]
        %v743 = vld [vmem:[%s275 + $0x30] sm:$0xf]
        %v744 = vld [vmem:[%s275 + $0x34] sm:$0xf]
        %v745 = vld [vmem:[%s275 + $0x38] sm:$0xf]
        %v746 = vld [vmem:[%s275 + $0x3c] sm:$0xf]
        %v747 = vld [vmem:[%s275 + $0x40] sm:$0xf]
        %v748 = vld [vmem:[%s275 + $0x44] sm:$0xf]
        %v749 = vld [vmem:[%s275 + $0x48] sm:$0xf]
        %v750 = vld [vmem:[%s275 + $0x4c] sm:$0xf]
        %v751 = vld [vmem:[%s275 + $0x50] sm:$0xf]
        %v752 = vld [vmem:[%s275 + $0x54] sm:$0xf]
        %v753 = vld [vmem:[%s275 + $0x58] sm:$0xf]
        %v754 = vld [vmem:[%s275 + $0x5c] sm:$0xf]
        %v755 = vld [vmem:[%s275 + $0x60] sm:$0xf]
        %v756 = vld [vmem:[%s275 + $0x64] sm:$0xf]
        %v757 = vld [vmem:[%s275 + $0x68] sm:$0xf]
        %v758 = vld [vmem:[%s275 + $0x6c] sm:$0xf]
        %v759 = vld [vmem:[%s275 + $0x70] sm:$0xf]
        %v760 = vld [vmem:[%s275 + $0x74] sm:$0xf]
        %v761 = vld [vmem:[%s275 + $0x78] sm:$0xf]
        %v762 = vld [vmem:[%s275 + $0x7c] sm:$0xf]
        %v763 = vld [vmem:[%s275 + $0x80] sm:$0xf]
        %v764 = vld [vmem:[%s275 + $0x84] sm:$0xf]
        %v765 = vld [vmem:[%s275 + $0x88] sm:$0xf]
        %v766 = vld [vmem:[%s275 + $0x8c] sm:$0xf]
        %v767 = vld [vmem:[%s275 + $0x90] sm:$0xf]
        %v768 = vld [vmem:[%s275 + $0x94] sm:$0xf]
        %v769 = vld [vmem:[%s275 + $0x98] sm:$0xf]
        %v770 = vld [vmem:[%s275 + $0x9c] sm:$0xf]
        %v771 = vld [vmem:[%s275 + $0xa0] sm:$0xf]
        %v772 = vld [vmem:[%s275 + $0xa4] sm:$0xf]
        %v773 = vld [vmem:[%s275 + $0xa8] sm:$0xf]
        %v774 = vld [vmem:[%s275 + $0xac] sm:$0xf]
        %v775 = vld [vmem:[%s275 + $0xb0] sm:$0xf]
        %v776 = vld [vmem:[%s275 + $0xb4] sm:$0xf]
        %v777 = vld [vmem:[%s275 + $0xb8] sm:$0xf]
        %v778 = vld [vmem:[%s275 + $0xbc] sm:$0xf]
        %v779 = vld [vmem:[%s275 + $0xc0] sm:$0xf]
        %v780 = vld [vmem:[%s275 + $0xc4] sm:$0xf]
        %v781 = vld [vmem:[%s275 + $0xc8] sm:$0xf]
        %v782 = vld [vmem:[%s275 + $0xcc] sm:$0xf]
        %v783 = vld [vmem:[%s275 + $0xd0] sm:$0xf]
        %v784 = vld [vmem:[%s275 + $0xd4] sm:$0xf]
        %v785 = vld [vmem:[%s275 + $0xd8] sm:$0xf]
        %v786 = vld [vmem:[%s275 + $0xdc] sm:$0xf]
        %v787 = vld [vmem:[%s275 + $0xe0] sm:$0xf]
        %v788 = vld [vmem:[%s275 + $0xe4] sm:$0xf]
        %v789 = vld [vmem:[%s275 + $0xe8] sm:$0xf]
        %v790 = vld [vmem:[%s275 + $0xec] sm:$0xf]
        %v791 = vld [vmem:[%s275 + $0xf0] sm:$0xf]
        %v792 = vld [vmem:[%s275 + $0xf4] sm:$0xf]
        %v793 = vld [vmem:[%s275 + $0xf8] sm:$0xf]
        %v794 = vld [vmem:[%s275 + $0xfc] sm:$0xf]
        %v795 = vld [vmem:[%s275 + $0x100] sm:$0xf]
        %v796 = vld [vmem:[%s275 + $0x104] sm:$0xf]
        %v797 = vld [vmem:[%s275 + $0x108] sm:$0xf]
        %v798 = vld [vmem:[%s275 + $0x10c] sm:$0xf]
        %v799 = vld [vmem:[%s275 + $0x110] sm:$0xf]
        %v800 = vld [vmem:[%s275 + $0x114] sm:$0xf]
        %v801 = vld [vmem:[%s275 + $0x118] sm:$0xf]
        %v802 = vld [vmem:[%s275 + $0x11c] sm:$0xf]
        %v803 = vld [vmem:[%s275 + $0x120] sm:$0xf]
        %v804 = vld [vmem:[%s275 + $0x124] sm:$0xf]
        %v805 = vld [vmem:[%s275 + $0x128] sm:$0xf]
        %v806 = vld [vmem:[%s275 + $0x12c] sm:$0xf]
        %v807 = vld [vmem:[%s275 + $0x130] sm:$0xf]
        %v808 = vld [vmem:[%s275 + $0x134] sm:$0xf]
        %v809 = vld [vmem:[%s275 + $0x138] sm:$0xf]
        %v810 = vld [vmem:[%s275 + $0x13c] sm:$0xf]
        %v811 = vld [vmem:[%s275 + $0x140] sm:$0xf]
        %v812 = vld [vmem:[%s275 + $0x144] sm:$0xf]
        %v813 = vld [vmem:[%s275 + $0x148] sm:$0xf]
        %v814 = vld [vmem:[%s275 + $0x14c] sm:$0xf]
        %v815 = vld [vmem:[%s275 + $0x150] sm:$0xf]
        %v816 = vld [vmem:[%s275 + $0x154] sm:$0xf]
        %v817 = vld [vmem:[%s275 + $0x158] sm:$0xf]
        %v818 = vld [vmem:[%s275 + $0x15c] sm:$0xf]
        %v819 = vld [vmem:[%s275 + $0x160] sm:$0xf]
        %v820 = vld [vmem:[%s275 + $0x164] sm:$0xf]
        %v821 = vld [vmem:[%s275 + $0x168] sm:$0xf]
        %v822 = vld [vmem:[%s275 + $0x16c] sm:$0xf]
        %v823 = vld [vmem:[%s275 + $0x170] sm:$0xf]
        %v824 = vld [vmem:[%s275 + $0x174] sm:$0xf]
        %v825 = vld [vmem:[%s275 + $0x178] sm:$0xf]
        %v826 = vld [vmem:[%s275 + $0x17c] sm:$0xf]
        %v827 = vld [vmem:[%s275 + $0x180] sm:$0xf]
        %v828 = vld [vmem:[%s275 + $0x184] sm:$0xf]
        %v829 = vld [vmem:[%s275 + $0x188] sm:$0xf]
        %v830 = vld [vmem:[%s275 + $0x18c] sm:$0xf]
        %v831 = vld [vmem:[%s275 + $0x190] sm:$0xf]
        %v832 = vld [vmem:[%s275 + $0x194] sm:$0xf]
        %v833 = vld [vmem:[%s275 + $0x198] sm:$0xf]
        %v834 = vld [vmem:[%s275 + $0x19c] sm:$0xf]
        %v835 = vld [vmem:[%s275 + $0x1a0] sm:$0xf]
        %v836 = vld [vmem:[%s275 + $0x1a4] sm:$0xf]
        %v837 = vld [vmem:[%s275 + $0x1a8] sm:$0xf]
        %v838 = vld [vmem:[%s275 + $0x1ac] sm:$0xf]
        %v839 = vld [vmem:[%s275 + $0x1b0] sm:$0xf]
        %v840 = vld [vmem:[%s275 + $0x1b4] sm:$0xf]
        %v841 = vld [vmem:[%s275 + $0x1b8] sm:$0xf]
        %v842 = vld [vmem:[%s275 + $0x1bc] sm:$0xf]
        %v843 = vld [vmem:[%s275 + $0x1c0] sm:$0xf]
        %v844 = vld [vmem:[%s275 + $0x1c4] sm:$0xf]
        %v845 = vld [vmem:[%s275 + $0x1c8] sm:$0xf]
        %v846 = vld [vmem:[%s275 + $0x1cc] sm:$0xf]
        %v847 = vld [vmem:[%s275 + $0x1d0] sm:$0xf]
        %v848 = vld [vmem:[%s275 + $0x1d4] sm:$0xf]
        %v849 = vld [vmem:[%s275 + $0x1d8] sm:$0xf]
        %v850 = vld [vmem:[%s275 + $0x1dc] sm:$0xf]
        %v851 = vld [vmem:[%s275 + $0x1e0] sm:$0xf]
        %v852 = vld [vmem:[%s275 + $0x1e4] sm:$0xf]
        %v853 = vld [vmem:[%s275 + $0x1e8] sm:$0xf]
        %v854 = vld [vmem:[%s275 + $0x1ec] sm:$0xf]
        %v855 = vld [vmem:[%s275 + $0x1f0] sm:$0xf]
        %v856 = vld [vmem:[%s275 + $0x1f4] sm:$0xf]
        %v857 = vld [vmem:[%s275 + $0x1f8] sm:$0xf]
        %v858 = vld [vmem:[%s275 + $0x1fc] sm:$0xf]
        %v859 = vld [vmem:[%s275 + $0x200] sm:$0xf]
        %v860 = vld [vmem:[%s275 + $0x204] sm:$0xf]
        %v861 = vld [vmem:[%s275 + $0x208] sm:$0xf]
        %v862 = vld [vmem:[%s275 + $0x20c] sm:$0xf]
        %v863 = vld [vmem:[%s275 + $0x210] sm:$0xf]
        %v864 = vld [vmem:[%s275 + $0x214] sm:$0xf]
        %v865 = vld [vmem:[%s275 + $0x218] sm:$0xf]
        %v866 = vld [vmem:[%s275 + $0x21c] sm:$0xf]
        %v867 = vld [vmem:[%s275 + $0x220] sm:$0xf]
        %v868 = vld [vmem:[%s275 + $0x224] sm:$0xf]
        %v869 = vld [vmem:[%s275 + $0x228] sm:$0xf]
        %v870 = vld [vmem:[%s275 + $0x22c] sm:$0xf]
        %v871 = vld [vmem:[%s275 + $0x230] sm:$0xf]
        %v872 = vld [vmem:[%s275 + $0x234] sm:$0xf]
        %v873 = vld [vmem:[%s275 + $0x238] sm:$0xf]
        %v874 = vld [vmem:[%s275 + $0x23c] sm:$0xf]
        %v875 = vld [vmem:[%s275 + $0x240] sm:$0xf]
        %v876 = vld [vmem:[%s275 + $0x244] sm:$0xf]
        %v877 = vld [vmem:[%s275 + $0x248] sm:$0xf]
        %v878 = vld [vmem:[%s275 + $0x24c] sm:$0xf]
        %v879 = vld [vmem:[%s275 + $0x250] sm:$0xf]
        %v880 = vld [vmem:[%s275 + $0x254] sm:$0xf]
        %v881 = vld [vmem:[%s275 + $0x258] sm:$0xf]
        %v882 = vld [vmem:[%s275 + $0x25c] sm:$0xf]
        %v883 = vld [vmem:[%s275 + $0x260] sm:$0xf]
        %v884 = vld [vmem:[%s275 + $0x264] sm:$0xf]
        %v885 = vld [vmem:[%s275 + $0x268] sm:$0xf]
        %v886 = vld [vmem:[%s275 + $0x26c] sm:$0xf]
        %v887 = vld [vmem:[%s275 + $0x270] sm:$0xf]
        %v888 = vld [vmem:[%s275 + $0x274] sm:$0xf]
        %v889 = vld [vmem:[%s275 + $0x278] sm:$0xf]
        %v890 = vld [vmem:[%s275 + $0x27c] sm:$0xf]
        %v891 = vld [vmem:[%s275 + $0x280] sm:$0xf]
        %v892 = vld [vmem:[%s275 + $0x284] sm:$0xf]
        %v893 = vld [vmem:[%s275 + $0x288] sm:$0xf]
        %v894 = vld [vmem:[%s275 + $0x28c] sm:$0xf]
        %v895 = vld [vmem:[%s275 + $0x290] sm:$0xf]
        %v896 = vld [vmem:[%s275 + $0x294] sm:$0xf]
        %v897 = vld [vmem:[%s275 + $0x298] sm:$0xf]
        %v898 = vld [vmem:[%s275 + $0x29c] sm:$0xf]
        %v899 = vld [vmem:[%s275 + $0x2a0] sm:$0xf]
        %v900 = vld [vmem:[%s275 + $0x2a4] sm:$0xf]
        %v901 = vld [vmem:[%s275 + $0x2a8] sm:$0xf]
        %v902 = vld [vmem:[%s275 + $0x2ac] sm:$0xf]
        %v903 = vld [vmem:[%s275 + $0x2b0] sm:$0xf]
        %v904 = vld [vmem:[%s275 + $0x2b4] sm:$0xf]
        %v905 = vld [vmem:[%s275 + $0x2b8] sm:$0xf]
        %v906 = vld [vmem:[%s275 + $0x2bc] sm:$0xf]
        %v907 = vld [vmem:[%s275 + $0x2c0] sm:$0xf]
        %v908 = vld [vmem:[%s275 + $0x2c4] sm:$0xf]
        %v909 = vld [vmem:[%s275 + $0x2c8] sm:$0xf]
        %v910 = vld [vmem:[%s275 + $0x2cc] sm:$0xf]
        %v911 = vld [vmem:[%s275 + $0x2d0] sm:$0xf]
        %v912 = vld [vmem:[%s275 + $0x2d4] sm:$0xf]
        %v913 = vld [vmem:[%s275 + $0x2d8] sm:$0xf]
        %v914 = vld [vmem:[%s275 + $0x2dc] sm:$0xf]
        %v915 = vld [vmem:[%s275 + $0x2e0] sm:$0xf]
        %v916 = vld [vmem:[%s275 + $0x2e4] sm:$0xf]
        %v917 = vld [vmem:[%s275 + $0x2e8] sm:$0xf]
        %v918 = vld [vmem:[%s275 + $0x2ec] sm:$0xf]
        %v919 = vld [vmem:[%s275 + $0x2f0] sm:$0xf]
        %v920 = vld [vmem:[%s275 + $0x2f4] sm:$0xf]
        %v921 = vld [vmem:[%s275 + $0x2f8] sm:$0xf]
        %v922 = vld [vmem:[%s275 + $0x2fc] sm:$0xf]
        %v923 = vld [vmem:[%s275 + $0x300] sm:$0xf]
        %v924 = vld [vmem:[%s275 + $0x304] sm:$0xf]
        %v925 = vld [vmem:[%s275 + $0x308] sm:$0xf]
        %v926 = vld [vmem:[%s275 + $0x30c] sm:$0xf]
        %v927 = vld [vmem:[%s275 + $0x310] sm:$0xf]
        %v928 = vld [vmem:[%s275 + $0x314] sm:$0xf]
        %v929 = vld [vmem:[%s275 + $0x318] sm:$0xf]
        %v930 = vld [vmem:[%s275 + $0x31c] sm:$0xf]
        %v931 = vld [vmem:[%s275 + $0x320] sm:$0xf]
        %v932 = vld [vmem:[%s275 + $0x324] sm:$0xf]
        %v933 = vld [vmem:[%s275 + $0x328] sm:$0xf]
        %v934 = vld [vmem:[%s275 + $0x32c] sm:$0xf]
        %v935 = vld [vmem:[%s275 + $0x330] sm:$0xf]
        %v936 = vld [vmem:[%s275 + $0x334] sm:$0xf]
        %v937 = vld [vmem:[%s275 + $0x338] sm:$0xf]
        %v938 = vld [vmem:[%s275 + $0x33c] sm:$0xf]
        %v939 = vld [vmem:[%s275 + $0x340] sm:$0xf]
        %v940 = vld [vmem:[%s275 + $0x344] sm:$0xf]
        %v941 = vld [vmem:[%s275 + $0x348] sm:$0xf]
        %v942 = vld [vmem:[%s275 + $0x34c] sm:$0xf]
        %v943 = vld [vmem:[%s275 + $0x350] sm:$0xf]
        %v944 = vld [vmem:[%s275 + $0x354] sm:$0xf]
        %v945 = vld [vmem:[%s275 + $0x358] sm:$0xf]
        %v946 = vld [vmem:[%s275 + $0x35c] sm:$0xf]
        %v947 = vld [vmem:[%s275 + $0x360] sm:$0xf]
        %v948 = vld [vmem:[%s275 + $0x364] sm:$0xf]
        %v949 = vld [vmem:[%s275 + $0x368] sm:$0xf]
        %v950 = vld [vmem:[%s275 + $0x36c] sm:$0xf]
        %v951 = vld [vmem:[%s275 + $0x370] sm:$0xf]
        %v952 = vld [vmem:[%s275 + $0x374] sm:$0xf]
        %v953 = vld [vmem:[%s275 + $0x378] sm:$0xf]
        %v954 = vld [vmem:[%s275 + $0x37c] sm:$0xf]
        %v955 = vld [vmem:[%s275 + $0x380] sm:$0xf]
        %v956 = vld [vmem:[%s275 + $0x384] sm:$0xf]
        %v957 = vld [vmem:[%s275 + $0x388] sm:$0xf]
        %v958 = vld [vmem:[%s275 + $0x38c] sm:$0xf]
        %v959 = vld [vmem:[%s275 + $0x390] sm:$0xf]
        %v960 = vld [vmem:[%s275 + $0x394] sm:$0xf]
        %v961 = vld [vmem:[%s275 + $0x398] sm:$0xf]
        %v962 = vld [vmem:[%s275 + $0x39c] sm:$0xf]
        %v963 = vld [vmem:[%s275 + $0x3a0] sm:$0xf]
        %v964 = vld [vmem:[%s275 + $0x3a4] sm:$0xf]
        %v965 = vld [vmem:[%s275 + $0x3a8] sm:$0xf]
        %v966 = vld [vmem:[%s275 + $0x3ac] sm:$0xf]
        %v967 = vld [vmem:[%s275 + $0x3b0] sm:$0xf]
        %v968 = vld [vmem:[%s275 + $0x3b4] sm:$0xf]
        %v969 = vld [vmem:[%s275 + $0x3b8] sm:$0xf]
        %v970 = vld [vmem:[%s275 + $0x3bc] sm:$0xf]
        %v971 = vld [vmem:[%s275 + $0x3c0] sm:$0xf]
        %v972 = vld [vmem:[%s275 + $0x3c4] sm:$0xf]
        %v973 = vld [vmem:[%s275 + $0x3c8] sm:$0xf]
        %v974 = vld [vmem:[%s275 + $0x3cc] sm:$0xf]
        %v975 = vld [vmem:[%s275 + $0x3d0] sm:$0xf]
        %v976 = vld [vmem:[%s275 + $0x3d4] sm:$0xf]
        %v977 = vld [vmem:[%s275 + $0x3d8] sm:$0xf]
        %v978 = vld [vmem:[%s275 + $0x3dc] sm:$0xf]
        %v979 = vld [vmem:[%s275 + $0x3e0] sm:$0xf]
        %v980 = vld [vmem:[%s275 + $0x3e4] sm:$0xf]
        %v981 = vld [vmem:[%s275 + $0x3e8] sm:$0xf]
        %v982 = vld [vmem:[%s275 + $0x3ec] sm:$0xf]
        %v983 = vld [vmem:[%s275 + $0x3f0] sm:$0xf]
        %v984 = vld [vmem:[%s275 + $0x3f4] sm:$0xf]
        %v985 = vld [vmem:[%s275 + $0x3f8] sm:$0xf]
        %v986 = vld [vmem:[%s275 + $0x3fc] sm:$0xf]
        %v987 = vld [vmem:[%s283] sm:$0x1]
        %v989 = vlaneseq
        %v990 = vshrl.u32 %v989, 7
        %v991 = vsub.s32 0, %v990
        %v992 = vrot.slane %v987, %v991
        %v1018 = vunpack.c.l.b16 %v707
        %v1019 = vunpack.c.h.b16 %v707
        %v1020 = vunpack.c.l.b16 %v708
        %v1021 = vunpack.c.h.b16 %v708
        %v1022 = vunpack.c.l.b16 %v709
        %v1023 = vunpack.c.h.b16 %v709
        %v1024 = vunpack.c.l.b16 %v710
        %v1025 = vunpack.c.h.b16 %v710
        %v1026 = vunpack.c.l.b16 %v711
        %v1027 = vunpack.c.h.b16 %v711
        %v1028 = vunpack.c.l.b16 %v712
        %v1029 = vunpack.c.h.b16 %v712
        %v1030 = vunpack.c.l.b16 %v713
        %v1031 = vunpack.c.h.b16 %v713
        %v1032 = vunpack.c.l.b16 %v714
        %v1033 = vunpack.c.h.b16 %v714
        %v1034 = vunpack.c.l.b16 %v715
        %v1035 = vunpack.c.h.b16 %v715
        %v1036 = vunpack.c.l.b16 %v716
        %v1037 = vunpack.c.h.b16 %v716
        %v1038 = vunpack.c.l.b16 %v717
        %v1039 = vunpack.c.h.b16 %v717
        %v1040 = vunpack.c.l.b16 %v718
        %v1041 = vunpack.c.h.b16 %v718
        %v1042 = vunpack.c.l.b16 %v719
        %v1043 = vunpack.c.h.b16 %v719
        %v1044 = vunpack.c.l.b16 %v720
        %v1045 = vunpack.c.h.b16 %v720
        %v1046 = vunpack.c.l.b16 %v721
        %v1047 = vunpack.c.h.b16 %v721
        %v1048 = vunpack.c.l.b16 %v722
        %v1049 = vunpack.c.h.b16 %v722
        %v1050 = vunpack.c.l.b16 %v723
        %v1051 = vunpack.c.h.b16 %v723
        %v1052 = vunpack.c.l.b16 %v724
        %v1053 = vunpack.c.h.b16 %v724
        %v1054 = vunpack.c.l.b16 %v725
        %v1055 = vunpack.c.h.b16 %v725
        %v1056 = vunpack.c.l.b16 %v726
        %v1057 = vunpack.c.h.b16 %v726
        %v1058 = vunpack.c.l.b16 %v727
        %v1059 = vunpack.c.h.b16 %v727
        %v1060 = vunpack.c.l.b16 %v728
        %v1061 = vunpack.c.h.b16 %v728
        %v1062 = vunpack.c.l.b16 %v729
        %v1063 = vunpack.c.h.b16 %v729
        %v1064 = vunpack.c.l.b16 %v730
        %v1065 = vunpack.c.h.b16 %v730
        %v1066 = vpack.c.b16 %v1034, %v1018
        %v1067 = vpack.c.b16 %v1035, %v1019
        %v1068 = vpack.c.b16 %v1036, %v1020
        %v1069 = vpack.c.b16 %v1037, %v1021
        %v1070 = vpack.c.b16 %v1038, %v1022
        %v1071 = vpack.c.b16 %v1039, %v1023
        %v1072 = vpack.c.b16 %v1040, %v1024
        %v1073 = vpack.c.b16 %v1041, %v1025
        %v1074 = vpack.c.b16 %v1042, %v1026
        %v1075 = vpack.c.b16 %v1043, %v1027
        %v1076 = vpack.c.b16 %v1044, %v1028
        %v1077 = vpack.c.b16 %v1045, %v1029
        %v1078 = vpack.c.b16 %v1046, %v1030
        %v1079 = vpack.c.b16 %v1047, %v1031
        %v1080 = vpack.c.b16 %v1048, %v1032
        %v1081 = vpack.c.b16 %v1049, %v1033
        %v1082 = vpack.c.b16 %v1050, %v1050
        %v1083 = vpack.c.b16 %v1051, %v1051
        %v1084 = vpack.c.b16 %v1052, %v1052
        %v1085 = vpack.c.b16 %v1053, %v1053
        %v1086 = vpack.c.b16 %v1054, %v1054
        %v1087 = vpack.c.b16 %v1055, %v1055
        %v1088 = vpack.c.b16 %v1056, %v1056
        %v1089 = vpack.c.b16 %v1057, %v1057
        %v1090 = vpack.c.b16 %v1058, %v1058
        %v1091 = vpack.c.b16 %v1059, %v1059
        %v1092 = vpack.c.b16 %v1060, %v1060
        %v1093 = vpack.c.b16 %v1061, %v1061
        %v1094 = vpack.c.b16 %v1062, %v1062
        %v1095 = vpack.c.b16 %v1063, %v1063
        %v1096 = vpack.c.b16 %v1064, %v1064
        %v1097 = vpack.c.b16 %v1065, %v1065
        %v1386 = vunpack.c.l.b16 %v731
        %v1387 = vunpack.c.l.b16 %v732
        %v1388 = vunpack.c.l.b16 %v733
        %v1389 = vunpack.c.l.b16 %v734
        %v1390 = vunpack.c.l.b16 %v735
        %v1391 = vunpack.c.l.b16 %v736
        %v1392 = vunpack.c.l.b16 %v737
        %v1393 = vunpack.c.l.b16 %v738
        %v1394 = vunpack.c.l.b16 %v739
        %v1395 = vunpack.c.l.b16 %v740
        %v1396 = vunpack.c.l.b16 %v741
        %v1397 = vunpack.c.l.b16 %v742
        %v1398 = vunpack.c.l.b16 %v743
        %v1399 = vunpack.c.l.b16 %v744
        %v1400 = vunpack.c.l.b16 %v745
        %v1401 = vunpack.c.l.b16 %v746
        %v1402 = vunpack.c.l.b16 %v747
        %v1403 = vunpack.c.l.b16 %v748
        %v1404 = vunpack.c.l.b16 %v749
        %v1405 = vunpack.c.l.b16 %v750
        %v1406 = vunpack.c.l.b16 %v751
        %v1407 = vunpack.c.l.b16 %v752
        %v1408 = vunpack.c.l.b16 %v753
        %v1409 = vunpack.c.l.b16 %v754
        %v1410 = vunpack.c.l.b16 %v755
        %v1411 = vunpack.c.l.b16 %v756
        %v1412 = vunpack.c.l.b16 %v757
        %v1413 = vunpack.c.l.b16 %v758
        %v1414 = vunpack.c.l.b16 %v759
        %v1415 = vunpack.c.l.b16 %v760
        %v1416 = vunpack.c.l.b16 %v761
        %v1417 = vunpack.c.l.b16 %v762
        %v1418 = vunpack.c.l.b16 %v763
        %v1419 = vunpack.c.l.b16 %v764
        %v1420 = vunpack.c.l.b16 %v765
        %v1421 = vunpack.c.l.b16 %v766
        %v1422 = vunpack.c.l.b16 %v767
        %v1423 = vunpack.c.l.b16 %v768
        %v1424 = vunpack.c.l.b16 %v769
        %v1425 = vunpack.c.l.b16 %v770
        %v1426 = vunpack.c.l.b16 %v771
        %v1427 = vunpack.c.l.b16 %v772
        %v1428 = vunpack.c.l.b16 %v773
        %v1429 = vunpack.c.l.b16 %v774
        %v1430 = vunpack.c.l.b16 %v775
        %v1431 = vunpack.c.l.b16 %v776
        %v1432 = vunpack.c.l.b16 %v777
        %v1433 = vunpack.c.l.b16 %v778
        %v1434 = vunpack.c.l.b16 %v779
        %v1435 = vunpack.c.l.b16 %v780
        %v1436 = vunpack.c.l.b16 %v781
        %v1437 = vunpack.c.l.b16 %v782
        %v1438 = vunpack.c.l.b16 %v783
        %v1439 = vunpack.c.l.b16 %v784
        %v1440 = vunpack.c.l.b16 %v785
        %v1441 = vunpack.c.l.b16 %v786
        %v1442 = vunpack.c.l.b16 %v787
        %v1443 = vunpack.c.l.b16 %v788
        %v1444 = vunpack.c.l.b16 %v789
        %v1445 = vunpack.c.l.b16 %v790
        %v1446 = vunpack.c.l.b16 %v791
        %v1447 = vunpack.c.l.b16 %v792
        %v1448 = vunpack.c.l.b16 %v793
        %v1449 = vunpack.c.l.b16 %v794
        %v1450 = vunpack.c.l.b16 %v795
        %v1451 = vunpack.c.l.b16 %v796
        %v1452 = vunpack.c.l.b16 %v797
        %v1453 = vunpack.c.l.b16 %v798
        %v1454 = vunpack.c.l.b16 %v799
        %v1455 = vunpack.c.l.b16 %v800
        %v1456 = vunpack.c.l.b16 %v801
        %v1457 = vunpack.c.l.b16 %v802
        %v1458 = vunpack.c.l.b16 %v803
        %v1459 = vunpack.c.l.b16 %v804
        %v1460 = vunpack.c.l.b16 %v805
        %v1461 = vunpack.c.l.b16 %v806
        %v1462 = vunpack.c.l.b16 %v807
        %v1463 = vunpack.c.l.b16 %v808
        %v1464 = vunpack.c.l.b16 %v809
        %v1465 = vunpack.c.l.b16 %v810
        %v1466 = vunpack.c.l.b16 %v811
        %v1467 = vunpack.c.l.b16 %v812
        %v1468 = vunpack.c.l.b16 %v813
        %v1469 = vunpack.c.l.b16 %v814
        %v1470 = vunpack.c.l.b16 %v815
        %v1471 = vunpack.c.l.b16 %v816
        %v1472 = vunpack.c.l.b16 %v817
        %v1473 = vunpack.c.l.b16 %v818
        %v1474 = vunpack.c.l.b16 %v819
        %v1475 = vunpack.c.l.b16 %v820
        %v1476 = vunpack.c.l.b16 %v821
        %v1477 = vunpack.c.l.b16 %v822
        %v1478 = vunpack.c.l.b16 %v823
        %v1479 = vunpack.c.l.b16 %v824
        %v1480 = vunpack.c.l.b16 %v825
        %v1481 = vunpack.c.l.b16 %v826
        %v1482 = vunpack.c.l.b16 %v827
        %v1483 = vunpack.c.l.b16 %v828
        %v1484 = vunpack.c.l.b16 %v829
        %v1485 = vunpack.c.l.b16 %v830
        %v1486 = vunpack.c.l.b16 %v831
        %v1487 = vunpack.c.l.b16 %v832
        %v1488 = vunpack.c.l.b16 %v833
        %v1489 = vunpack.c.l.b16 %v834
        %v1490 = vunpack.c.l.b16 %v835
        %v1491 = vunpack.c.l.b16 %v836
        %v1492 = vunpack.c.l.b16 %v837
        %v1493 = vunpack.c.l.b16 %v838
        %v1494 = vunpack.c.l.b16 %v839
        %v1495 = vunpack.c.l.b16 %v840
        %v1496 = vunpack.c.l.b16 %v841
        %v1497 = vunpack.c.l.b16 %v842
        %v1498 = vunpack.c.l.b16 %v843
        %v1499 = vunpack.c.l.b16 %v844
        %v1500 = vunpack.c.l.b16 %v845
        %v1501 = vunpack.c.l.b16 %v846
        %v1502 = vunpack.c.l.b16 %v847
        %v1503 = vunpack.c.l.b16 %v848
        %v1504 = vunpack.c.l.b16 %v849
        %v1505 = vunpack.c.l.b16 %v850
        %v1506 = vunpack.c.l.b16 %v851
        %v1507 = vunpack.c.l.b16 %v852
        %v1508 = vunpack.c.l.b16 %v853
        %v1509 = vunpack.c.l.b16 %v854
        %v1510 = vunpack.c.l.b16 %v855
        %v1511 = vunpack.c.l.b16 %v856
        %v1512 = vunpack.c.l.b16 %v857
        %v1513 = vunpack.c.l.b16 %v858
        %v1514 = vunpack.c.l.b16 %v859
        %v1515 = vunpack.c.l.b16 %v860
        %v1516 = vunpack.c.l.b16 %v861
        %v1517 = vunpack.c.l.b16 %v862
        %v1518 = vunpack.c.l.b16 %v863
        %v1519 = vunpack.c.l.b16 %v864
        %v1520 = vunpack.c.l.b16 %v865
        %v1521 = vunpack.c.l.b16 %v866
        %v1522 = vunpack.c.l.b16 %v867
        %v1523 = vunpack.c.l.b16 %v868
        %v1524 = vunpack.c.l.b16 %v869
        %v1525 = vunpack.c.l.b16 %v870
        %v1526 = vunpack.c.l.b16 %v871
        %v1527 = vunpack.c.l.b16 %v872
        %v1528 = vunpack.c.l.b16 %v873
        %v1529 = vunpack.c.l.b16 %v874
        %v1530 = vunpack.c.l.b16 %v875
        %v1531 = vunpack.c.l.b16 %v876
        %v1532 = vunpack.c.l.b16 %v877
        %v1533 = vunpack.c.l.b16 %v878
        %v1534 = vunpack.c.l.b16 %v879
        %v1535 = vunpack.c.l.b16 %v880
        %v1536 = vunpack.c.l.b16 %v881
        %v1537 = vunpack.c.l.b16 %v882
        %v1538 = vunpack.c.l.b16 %v883
        %v1539 = vunpack.c.l.b16 %v884
        %v1540 = vunpack.c.l.b16 %v885
        %v1541 = vunpack.c.l.b16 %v886
        %v1542 = vunpack.c.l.b16 %v887
        %v1543 = vunpack.c.l.b16 %v888
        %v1544 = vunpack.c.l.b16 %v889
        %v1545 = vunpack.c.l.b16 %v890
        %v1546 = vunpack.c.l.b16 %v891
        %v1547 = vunpack.c.l.b16 %v892
        %v1548 = vunpack.c.l.b16 %v893
        %v1549 = vunpack.c.l.b16 %v894
        %v1550 = vunpack.c.l.b16 %v895
        %v1551 = vunpack.c.l.b16 %v896
        %v1552 = vunpack.c.l.b16 %v897
        %v1553 = vunpack.c.l.b16 %v898
        %v1554 = vunpack.c.l.b16 %v899
        %v1555 = vunpack.c.l.b16 %v900
        %v1556 = vunpack.c.l.b16 %v901
        %v1557 = vunpack.c.l.b16 %v902
        %v1558 = vunpack.c.l.b16 %v903
        %v1559 = vunpack.c.l.b16 %v904
        %v1560 = vunpack.c.l.b16 %v905
        %v1561 = vunpack.c.l.b16 %v906
        %v1562 = vunpack.c.l.b16 %v907
        %v1563 = vunpack.c.l.b16 %v908
        %v1564 = vunpack.c.l.b16 %v909
        %v1565 = vunpack.c.l.b16 %v910
        %v1566 = vunpack.c.l.b16 %v911
        %v1567 = vunpack.c.l.b16 %v912
        %v1568 = vunpack.c.l.b16 %v913
        %v1569 = vunpack.c.l.b16 %v914
        %v1570 = vunpack.c.l.b16 %v915
        %v1571 = vunpack.c.l.b16 %v916
        %v1572 = vunpack.c.l.b16 %v917
        %v1573 = vunpack.c.l.b16 %v918
        %v1574 = vunpack.c.l.b16 %v919
        %v1575 = vunpack.c.l.b16 %v920
        %v1576 = vunpack.c.l.b16 %v921
        %v1577 = vunpack.c.l.b16 %v922
        %v1578 = vunpack.c.l.b16 %v923
        %v1579 = vunpack.c.l.b16 %v924
        %v1580 = vunpack.c.l.b16 %v925
        %v1581 = vunpack.c.l.b16 %v926
        %v1582 = vunpack.c.l.b16 %v927
        %v1583 = vunpack.c.l.b16 %v928
        %v1584 = vunpack.c.l.b16 %v929
        %v1585 = vunpack.c.l.b16 %v930
        %v1586 = vunpack.c.l.b16 %v931
        %v1587 = vunpack.c.l.b16 %v932
        %v1588 = vunpack.c.l.b16 %v933
        %v1589 = vunpack.c.l.b16 %v934
        %v1590 = vunpack.c.l.b16 %v935
        %v1591 = vunpack.c.l.b16 %v936
        %v1592 = vunpack.c.l.b16 %v937
        %v1593 = vunpack.c.l.b16 %v938
        %v1594 = vunpack.c.l.b16 %v939
        %v1595 = vunpack.c.l.b16 %v940
        %v1596 = vunpack.c.l.b16 %v941
        %v1597 = vunpack.c.l.b16 %v942
        %v1598 = vunpack.c.l.b16 %v943
        %v1599 = vunpack.c.l.b16 %v944
        %v1600 = vunpack.c.l.b16 %v945
        %v1601 = vunpack.c.l.b16 %v946
        %v1602 = vunpack.c.l.b16 %v947
        %v1603 = vunpack.c.l.b16 %v948
        %v1604 = vunpack.c.l.b16 %v949
        %v1605 = vunpack.c.l.b16 %v950
        %v1606 = vunpack.c.l.b16 %v951
        %v1607 = vunpack.c.l.b16 %v952
        %v1608 = vunpack.c.l.b16 %v953
        %v1609 = vunpack.c.l.b16 %v954
        %v1610 = vunpack.c.l.b16 %v955
        %v1611 = vunpack.c.l.b16 %v956
        %v1612 = vunpack.c.l.b16 %v957
        %v1613 = vunpack.c.l.b16 %v958
        %v1614 = vunpack.c.l.b16 %v959
        %v1615 = vunpack.c.l.b16 %v960
        %v1616 = vunpack.c.l.b16 %v961
        %v1617 = vunpack.c.l.b16 %v962
        %v1618 = vunpack.c.l.b16 %v963
        %v1619 = vunpack.c.l.b16 %v964
        %v1620 = vunpack.c.l.b16 %v965
        %v1621 = vunpack.c.l.b16 %v966
        %v1622 = vunpack.c.l.b16 %v967
        %v1623 = vunpack.c.l.b16 %v968
        %v1624 = vunpack.c.l.b16 %v969
        %v1625 = vunpack.c.l.b16 %v970
        %v1626 = vunpack.c.l.b16 %v971
        %v1627 = vunpack.c.l.b16 %v972
        %v1628 = vunpack.c.l.b16 %v973
        %v1629 = vunpack.c.l.b16 %v974
        %v1630 = vunpack.c.l.b16 %v975
        %v1631 = vunpack.c.l.b16 %v976
        %v1632 = vunpack.c.l.b16 %v977
        %v1633 = vunpack.c.l.b16 %v978
        %v1634 = vunpack.c.l.b16 %v979
        %v1635 = vunpack.c.l.b16 %v980
        %v1636 = vunpack.c.l.b16 %v981
        %v1637 = vunpack.c.l.b16 %v982
        %v1638 = vunpack.c.l.b16 %v983
        %v1639 = vunpack.c.l.b16 %v984
        %v1640 = vunpack.c.l.b16 %v985
        %v1641 = vunpack.c.l.b16 %v986
        %v1642 = vpack.c.b16 %v1387, %v1386
        %v1643 = vpack.c.b16 %v1389, %v1388
        %v1644 = vpack.c.b16 %v1391, %v1390
        %v1645 = vpack.c.b16 %v1393, %v1392
        %v1646 = vpack.c.b16 %v1395, %v1394
        %v1647 = vpack.c.b16 %v1397, %v1396
        %v1648 = vpack.c.b16 %v1399, %v1398
        %v1649 = vpack.c.b16 %v1401, %v1400
        %v1650 = vpack.c.b16 %v1403, %v1402
        %v1651 = vpack.c.b16 %v1405, %v1404
        %v1652 = vpack.c.b16 %v1407, %v1406
        %v1653 = vpack.c.b16 %v1409, %v1408
        %v1654 = vpack.c.b16 %v1411, %v1410
        %v1655 = vpack.c.b16 %v1413, %v1412
        %v1656 = vpack.c.b16 %v1415, %v1414
        %v1657 = vpack.c.b16 %v1417, %v1416
        %v1658 = vpack.c.b16 %v1419, %v1418
        %v1659 = vpack.c.b16 %v1421, %v1420
        %v1660 = vpack.c.b16 %v1423, %v1422
        %v1661 = vpack.c.b16 %v1425, %v1424
        %v1662 = vpack.c.b16 %v1427, %v1426
        %v1663 = vpack.c.b16 %v1429, %v1428
        %v1664 = vpack.c.b16 %v1431, %v1430
        %v1665 = vpack.c.b16 %v1433, %v1432
        %v1666 = vpack.c.b16 %v1435, %v1434
        %v1667 = vpack.c.b16 %v1437, %v1436
        %v1668 = vpack.c.b16 %v1439, %v1438
        %v1669 = vpack.c.b16 %v1441, %v1440
        %v1670 = vpack.c.b16 %v1443, %v1442
        %v1671 = vpack.c.b16 %v1445, %v1444
        %v1672 = vpack.c.b16 %v1447, %v1446
        %v1673 = vpack.c.b16 %v1449, %v1448
        %v1674 = vpack.c.b16 %v1451, %v1450
        %v1675 = vpack.c.b16 %v1453, %v1452
        %v1676 = vpack.c.b16 %v1455, %v1454
        %v1677 = vpack.c.b16 %v1457, %v1456
        %v1678 = vpack.c.b16 %v1459, %v1458
        %v1679 = vpack.c.b16 %v1461, %v1460
        %v1680 = vpack.c.b16 %v1463, %v1462
        %v1681 = vpack.c.b16 %v1465, %v1464
        %v1682 = vpack.c.b16 %v1467, %v1466
        %v1683 = vpack.c.b16 %v1469, %v1468
        %v1684 = vpack.c.b16 %v1471, %v1470
        %v1685 = vpack.c.b16 %v1473, %v1472
        %v1686 = vpack.c.b16 %v1475, %v1474
        %v1687 = vpack.c.b16 %v1477, %v1476
        %v1688 = vpack.c.b16 %v1479, %v1478
        %v1689 = vpack.c.b16 %v1481, %v1480
        %v1690 = vpack.c.b16 %v1483, %v1482
        %v1691 = vpack.c.b16 %v1485, %v1484
        %v1692 = vpack.c.b16 %v1487, %v1486
        %v1693 = vpack.c.b16 %v1489, %v1488
        %v1694 = vpack.c.b16 %v1491, %v1490
        %v1695 = vpack.c.b16 %v1493, %v1492
        %v1696 = vpack.c.b16 %v1495, %v1494
        %v1697 = vpack.c.b16 %v1497, %v1496
        %v1698 = vpack.c.b16 %v1499, %v1498
        %v1699 = vpack.c.b16 %v1501, %v1500
        %v1700 = vpack.c.b16 %v1503, %v1502
        %v1701 = vpack.c.b16 %v1505, %v1504
        %v1702 = vpack.c.b16 %v1507, %v1506
        %v1703 = vpack.c.b16 %v1509, %v1508
        %v1704 = vpack.c.b16 %v1511, %v1510
        %v1705 = vpack.c.b16 %v1513, %v1512
        %v1706 = vpack.c.b16 %v1515, %v1514
        %v1707 = vpack.c.b16 %v1517, %v1516
        %v1708 = vpack.c.b16 %v1519, %v1518
        %v1709 = vpack.c.b16 %v1521, %v1520
        %v1710 = vpack.c.b16 %v1523, %v1522
        %v1711 = vpack.c.b16 %v1525, %v1524
        %v1712 = vpack.c.b16 %v1527, %v1526
        %v1713 = vpack.c.b16 %v1529, %v1528
        %v1714 = vpack.c.b16 %v1531, %v1530
        %v1715 = vpack.c.b16 %v1533, %v1532
        %v1716 = vpack.c.b16 %v1535, %v1534
        %v1717 = vpack.c.b16 %v1537, %v1536
        %v1718 = vpack.c.b16 %v1539, %v1538
        %v1719 = vpack.c.b16 %v1541, %v1540
        %v1720 = vpack.c.b16 %v1543, %v1542
        %v1721 = vpack.c.b16 %v1545, %v1544
        %v1722 = vpack.c.b16 %v1547, %v1546
        %v1723 = vpack.c.b16 %v1549, %v1548
        %v1724 = vpack.c.b16 %v1551, %v1550
        %v1725 = vpack.c.b16 %v1553, %v1552
        %v1726 = vpack.c.b16 %v1555, %v1554
        %v1727 = vpack.c.b16 %v1557, %v1556
        %v1728 = vpack.c.b16 %v1559, %v1558
        %v1729 = vpack.c.b16 %v1561, %v1560
        %v1730 = vpack.c.b16 %v1563, %v1562
        %v1731 = vpack.c.b16 %v1565, %v1564
        %v1732 = vpack.c.b16 %v1567, %v1566
        %v1733 = vpack.c.b16 %v1569, %v1568
        %v1734 = vpack.c.b16 %v1571, %v1570
        %v1735 = vpack.c.b16 %v1573, %v1572
        %v1736 = vpack.c.b16 %v1575, %v1574
        %v1737 = vpack.c.b16 %v1577, %v1576
        %v1738 = vpack.c.b16 %v1579, %v1578
        %v1739 = vpack.c.b16 %v1581, %v1580
        %v1740 = vpack.c.b16 %v1583, %v1582
        %v1741 = vpack.c.b16 %v1585, %v1584
        %v1742 = vpack.c.b16 %v1587, %v1586
        %v1743 = vpack.c.b16 %v1589, %v1588
        %v1744 = vpack.c.b16 %v1591, %v1590
        %v1745 = vpack.c.b16 %v1593, %v1592
        %v1746 = vpack.c.b16 %v1595, %v1594
        %v1747 = vpack.c.b16 %v1597, %v1596
        %v1748 = vpack.c.b16 %v1599, %v1598
        %v1749 = vpack.c.b16 %v1601, %v1600
        %v1750 = vpack.c.b16 %v1603, %v1602
        %v1751 = vpack.c.b16 %v1605, %v1604
        %v1752 = vpack.c.b16 %v1607, %v1606
        %v1753 = vpack.c.b16 %v1609, %v1608
        %v1754 = vpack.c.b16 %v1611, %v1610
        %v1755 = vpack.c.b16 %v1613, %v1612
        %v1756 = vpack.c.b16 %v1615, %v1614
        %v1757 = vpack.c.b16 %v1617, %v1616
        %v1758 = vpack.c.b16 %v1619, %v1618
        %v1759 = vpack.c.b16 %v1621, %v1620
        %v1760 = vpack.c.b16 %v1623, %v1622
        %v1761 = vpack.c.b16 %v1625, %v1624
        %v1762 = vpack.c.b16 %v1627, %v1626
        %v1763 = vpack.c.b16 %v1629, %v1628
        %v1764 = vpack.c.b16 %v1631, %v1630
        %v1765 = vpack.c.b16 %v1633, %v1632
        %v1766 = vpack.c.b16 %v1635, %v1634
        %v1767 = vpack.c.b16 %v1637, %v1636
        %v1768 = vpack.c.b16 %v1639, %v1638
        %v1769 = vpack.c.b16 %v1641, %v1640
        %1898 = vmatprep.subr.bf16.mxu0 0
        %1899 = vmatpush1.bf16.msra.mxu0 %v1649
        %1900 = vmatprep.subr.bf16.mxu0 0
        %1901 = vmatpush1.bf16.msra.mxu0 %v1648
        %1902 = vmatprep.subr.bf16.mxu0 0
        %1903 = vmatpush1.bf16.msra.mxu0 %v1647
        %1904 = vmatprep.subr.bf16.mxu0 0
        %1905 = vmatpush1.bf16.msra.mxu0 %v1646
        %1906 = vmatprep.subr.bf16.mxu0 0
        %1907 = vmatpush1.bf16.msra.mxu0 %v1645
        %1908 = vmatprep.subr.bf16.mxu0 0
        %1909 = vmatpush1.bf16.msra.mxu0 %v1644
        %1910 = vmatprep.subr.bf16.mxu0 0
        %1911 = vmatpush1.bf16.msra.mxu0 %v1643
        %1912 = vmatprep.subr.bf16.mxu0 0
        %1913 = vmatpush1.bf16.msra.mxu0 %v1642
        %1914 = vmatprep.subr.bf16.mxu0 0
        %1915 = vmatpush2.bf16.msra.mxu0 %v1657
        %1916 = vmatprep.subr.bf16.mxu0 0
        %1917 = vmatpush2.bf16.msra.mxu0 %v1656
        %1918 = vmatprep.subr.bf16.mxu0 0
        %1919 = vmatpush2.bf16.msra.mxu0 %v1655
        %1920 = vmatprep.subr.bf16.mxu0 0
        %1921 = vmatpush2.bf16.msra.mxu0 %v1654
        %1922 = vmatprep.subr.bf16.mxu0 0
        %1923 = vmatpush2.bf16.msra.mxu0 %v1653
        %1924 = vmatprep.subr.bf16.mxu0 0
        %1925 = vmatpush2.bf16.msra.mxu0 %v1652
        %1926 = vmatprep.subr.bf16.mxu0 0
        %1927 = vmatpush2.bf16.msra.mxu0 %v1651
        %1928 = vmatprep.subr.bf16.mxu0 0
        %1929 = vmatpush2.bf16.msra.mxu0 %v1650
        %1930 = vmatprep.mubr.bf16.mxu0 %v1067
        %1931 = vmatmul.mubr.bf16.gmra.mxu0 %v1066
        %v1932 = vpop.f32.mrf.mxu0
        %v1933 = vadd.f32 %v992, %v1932
        %v1934 = vpop.f32.mrf.mxu0
        %v1935 = vpop.f32.mrf.mxu0
        %v1936 = vadd.f32 %v992, %v1935
        %v1937 = vpop.f32.mrf.mxu0
        %1938 = vmatprep.mubr.bf16.mxu0 %v1083
        %1939 = vmatmul.mubr.bf16.gmra.mxu0 %v1082
        %v1940 = vpop.f32.mrf.mxu0
        %v1941 = vadd.f32 %v992, %v1940
        %v1942 = vpop.f32.mrf.mxu0
        %v1943 = vpop.f32.mrf.mxu0
        %v1944 = vpop.f32.mrf.mxu0
        %1945 = vdwg.mxu0
        %1946 = vmatprep.subr.bf16.mxu0 0
        %1947 = vmatpush1.bf16.msra.mxu0 %v1665
        %1948 = vmatprep.subr.bf16.mxu0 0
        %1949 = vmatpush1.bf16.msra.mxu0 %v1664
        %1950 = vmatprep.subr.bf16.mxu0 0
        %1951 = vmatpush1.bf16.msra.mxu0 %v1663
        %1952 = vmatprep.subr.bf16.mxu0 0
        %1953 = vmatpush1.bf16.msra.mxu0 %v1662
        %1954 = vmatprep.subr.bf16.mxu0 0
        %1955 = vmatpush1.bf16.msra.mxu0 %v1661
        %1956 = vmatprep.subr.bf16.mxu0 0
        %1957 = vmatpush1.bf16.msra.mxu0 %v1660
        %1958 = vmatprep.subr.bf16.mxu0 0
        %1959 = vmatpush1.bf16.msra.mxu0 %v1659
        %1960 = vmatprep.subr.bf16.mxu0 0
        %1961 = vmatpush1.bf16.msra.mxu0 %v1658
        %1962 = vmatprep.subr.bf16.mxu0 0
        %1963 = vmatpush2.bf16.msra.mxu0 %v1673
        %1964 = vmatprep.subr.bf16.mxu0 0
        %1965 = vmatpush2.bf16.msra.mxu0 %v1672
        %1966 = vmatprep.subr.bf16.mxu0 0
        %1967 = vmatpush2.bf16.msra.mxu0 %v1671
        %1968 = vmatprep.subr.bf16.mxu0 0
        %1969 = vmatpush2.bf16.msra.mxu0 %v1670
        %1970 = vmatprep.subr.bf16.mxu0 0
        %1971 = vmatpush2.bf16.msra.mxu0 %v1669
        %1972 = vmatprep.subr.bf16.mxu0 0
        %1973 = vmatpush2.bf16.msra.mxu0 %v1668
        %1974 = vmatprep.subr.bf16.mxu0 0
        %1975 = vmatpush2.bf16.msra.mxu0 %v1667
        %1976 = vmatprep.subr.bf16.mxu0 0
        %1977 = vmatpush2.bf16.msra.mxu0 %v1666
        %1978 = vmatprep.mubr.bf16.mxu0 %v1069
        %1979 = vmatmul.mubr.bf16.gmra.mxu0 %v1068
        %v1980 = vpop.f32.mrf.mxu0
        %v1981 = vadd.f32 %v1933, %v1980
        %v1982 = vpop.f32.mrf.mxu0
        %v1983 = vpop.f32.mrf.mxu0
        %v1984 = vadd.f32 %v1936, %v1983
        %v1985 = vpop.f32.mrf.mxu0
        %1986 = vmatprep.mubr.bf16.mxu0 %v1085
        %1987 = vmatmul.mubr.bf16.gmra.mxu0 %v1084
        %v1988 = vpop.f32.mrf.mxu0
        %v1989 = vadd.f32 %v1941, %v1988
        %v1990 = vpop.f32.mrf.mxu0
        %v1991 = vpop.f32.mrf.mxu0
        %v1992 = vpop.f32.mrf.mxu0
        %1993 = vdwg.mxu0
        %1994 = vmatprep.subr.bf16.mxu0 0
        %1995 = vmatpush1.bf16.msra.mxu0 %v1681
        %1996 = vmatprep.subr.bf16.mxu0 0
        %1997 = vmatpush1.bf16.msra.mxu0 %v1680
        %1998 = vmatprep.subr.bf16.mxu0 0
        %1999 = vmatpush1.bf16.msra.mxu0 %v1679
        %2000 = vmatprep.subr.bf16.mxu0 0
        %2001 = vmatpush1.bf16.msra.mxu0 %v1678
        %2002 = vmatprep.subr.bf16.mxu0 0
        %2003 = vmatpush1.bf16.msra.mxu0 %v1677
        %2004 = vmatprep.subr.bf16.mxu0 0
        %2005 = vmatpush1.bf16.msra.mxu0 %v1676
        %2006 = vmatprep.subr.bf16.mxu0 0
        %2007 = vmatpush1.bf16.msra.mxu0 %v1675
        %2008 = vmatprep.subr.bf16.mxu0 0
        %2009 = vmatpush1.bf16.msra.mxu0 %v1674
        %2010 = vmatprep.subr.bf16.mxu0 0
        %2011 = vmatpush2.bf16.msra.mxu0 %v1689
        %2012 = vmatprep.subr.bf16.mxu0 0
        %2013 = vmatpush2.bf16.msra.mxu0 %v1688
        %2014 = vmatprep.subr.bf16.mxu0 0
        %2015 = vmatpush2.bf16.msra.mxu0 %v1687
        %2016 = vmatprep.subr.bf16.mxu0 0
        %2017 = vmatpush2.bf16.msra.mxu0 %v1686
        %2018 = vmatprep.subr.bf16.mxu0 0
        %2019 = vmatpush2.bf16.msra.mxu0 %v1685
        %2020 = vmatprep.subr.bf16.mxu0 0
        %2021 = vmatpush2.bf16.msra.mxu0 %v1684
        %2022 = vmatprep.subr.bf16.mxu0 0
        %2023 = vmatpush2.bf16.msra.mxu0 %v1683
        %2024 = vmatprep.subr.bf16.mxu0 0
        %2025 = vmatpush2.bf16.msra.mxu0 %v1682
        %2026 = vmatprep.mubr.bf16.mxu0 %v1071
        %2027 = vmatmul.mubr.bf16.gmra.mxu0 %v1070
        %v2028 = vpop.f32.mrf.mxu0
        %v2029 = vadd.f32 %v1981, %v2028
        %v2030 = vpop.f32.mrf.mxu0
        %v2031 = vpop.f32.mrf.mxu0
        %v2032 = vadd.f32 %v1984, %v2031
        %v2033 = vpop.f32.mrf.mxu0
        %2034 = vmatprep.mubr.bf16.mxu0 %v1087
        %2035 = vmatmul.mubr.bf16.gmra.mxu0 %v1086
        %v2036 = vpop.f32.mrf.mxu0
        %v2037 = vadd.f32 %v1989, %v2036
        %v2038 = vpop.f32.mrf.mxu0
        %v2039 = vpop.f32.mrf.mxu0
        %v2040 = vpop.f32.mrf.mxu0
        %2041 = vdwg.mxu0
        %2042 = vmatprep.subr.bf16.mxu0 0
        %2043 = vmatpush1.bf16.msra.mxu0 %v1697
        %2044 = vmatprep.subr.bf16.mxu0 0
        %2045 = vmatpush1.bf16.msra.mxu0 %v1696
        %2046 = vmatprep.subr.bf16.mxu0 0
        %2047 = vmatpush1.bf16.msra.mxu0 %v1695
        %2048 = vmatprep.subr.bf16.mxu0 0
        %2049 = vmatpush1.bf16.msra.mxu0 %v1694
        %2050 = vmatprep.subr.bf16.mxu0 0
        %2051 = vmatpush1.bf16.msra.mxu0 %v1693
        %2052 = vmatprep.subr.bf16.mxu0 0
        %2053 = vmatpush1.bf16.msra.mxu0 %v1692
        %2054 = vmatprep.subr.bf16.mxu0 0
        %2055 = vmatpush1.bf16.msra.mxu0 %v1691
        %2056 = vmatprep.subr.bf16.mxu0 0
        %2057 = vmatpush1.bf16.msra.mxu0 %v1690
        %2058 = vmatprep.subr.bf16.mxu0 0
        %2059 = vmatpush2.bf16.msra.mxu0 %v1705
        %2060 = vmatprep.subr.bf16.mxu0 0
        %2061 = vmatpush2.bf16.msra.mxu0 %v1704
        %2062 = vmatprep.subr.bf16.mxu0 0
        %2063 = vmatpush2.bf16.msra.mxu0 %v1703
        %2064 = vmatprep.subr.bf16.mxu0 0
        %2065 = vmatpush2.bf16.msra.mxu0 %v1702
        %2066 = vmatprep.subr.bf16.mxu0 0
        %2067 = vmatpush2.bf16.msra.mxu0 %v1701
        %2068 = vmatprep.subr.bf16.mxu0 0
        %2069 = vmatpush2.bf16.msra.mxu0 %v1700
        %2070 = vmatprep.subr.bf16.mxu0 0
        %2071 = vmatpush2.bf16.msra.mxu0 %v1699
        %2072 = vmatprep.subr.bf16.mxu0 0
        %2073 = vmatpush2.bf16.msra.mxu0 %v1698
        %2074 = vmatprep.mubr.bf16.mxu0 %v1073
        %2075 = vmatmul.mubr.bf16.gmra.mxu0 %v1072
        %v2076 = vpop.f32.mrf.mxu0
        %v2077 = vadd.f32 %v2029, %v2076
        %v2078 = vpop.f32.mrf.mxu0
        %v2079 = vpop.f32.mrf.mxu0
        %v2080 = vadd.f32 %v2032, %v2079
        %v2081 = vpop.f32.mrf.mxu0
        %2082 = vmatprep.mubr.bf16.mxu0 %v1089
        %2083 = vmatmul.mubr.bf16.gmra.mxu0 %v1088
        %v2084 = vpop.f32.mrf.mxu0
        %v2085 = vadd.f32 %v2037, %v2084
        %v2086 = vpop.f32.mrf.mxu0
        %v2087 = vpop.f32.mrf.mxu0
        %v2088 = vpop.f32.mrf.mxu0
        %2089 = vdwg.mxu0
        %2090 = vmatprep.subr.bf16.mxu0 0
        %2091 = vmatpush1.bf16.msra.mxu0 %v1713
        %2092 = vmatprep.subr.bf16.mxu0 0
        %2093 = vmatpush1.bf16.msra.mxu0 %v1712
        %2094 = vmatprep.subr.bf16.mxu0 0
        %2095 = vmatpush1.bf16.msra.mxu0 %v1711
        %2096 = vmatprep.subr.bf16.mxu0 0
        %2097 = vmatpush1.bf16.msra.mxu0 %v1710
        %2098 = vmatprep.subr.bf16.mxu0 0
        %2099 = vmatpush1.bf16.msra.mxu0 %v1709
        %2100 = vmatprep.subr.bf16.mxu0 0
        %2101 = vmatpush1.bf16.msra.mxu0 %v1708
        %2102 = vmatprep.subr.bf16.mxu0 0
        %2103 = vmatpush1.bf16.msra.mxu0 %v1707
        %2104 = vmatprep.subr.bf16.mxu0 0
        %2105 = vmatpush1.bf16.msra.mxu0 %v1706
        %2106 = vmatprep.subr.bf16.mxu0 0
        %2107 = vmatpush2.bf16.msra.mxu0 %v1721
        %2108 = vmatprep.subr.bf16.mxu0 0
        %2109 = vmatpush2.bf16.msra.mxu0 %v1720
        %2110 = vmatprep.subr.bf16.mxu0 0
        %2111 = vmatpush2.bf16.msra.mxu0 %v1719
        %2112 = vmatprep.subr.bf16.mxu0 0
        %2113 = vmatpush2.bf16.msra.mxu0 %v1718
        %2114 = vmatprep.subr.bf16.mxu0 0
        %2115 = vmatpush2.bf16.msra.mxu0 %v1717
        %2116 = vmatprep.subr.bf16.mxu0 0
        %2117 = vmatpush2.bf16.msra.mxu0 %v1716
        %2118 = vmatprep.subr.bf16.mxu0 0
        %2119 = vmatpush2.bf16.msra.mxu0 %v1715
        %2120 = vmatprep.subr.bf16.mxu0 0
        %2121 = vmatpush2.bf16.msra.mxu0 %v1714
        %2122 = vmatprep.mubr.bf16.mxu0 %v1075
        %2123 = vmatmul.mubr.bf16.gmra.mxu0 %v1074
        %v2124 = vpop.f32.mrf.mxu0
        %v2125 = vadd.f32 %v2077, %v2124
        %v2126 = vpop.f32.mrf.mxu0
        %v2127 = vpop.f32.mrf.mxu0
        %v2128 = vadd.f32 %v2080, %v2127
        %v2129 = vpop.f32.mrf.mxu0
        %2130 = vmatprep.mubr.bf16.mxu0 %v1091
        %2131 = vmatmul.mubr.bf16.gmra.mxu0 %v1090
        %v2132 = vpop.f32.mrf.mxu0
        %v2133 = vadd.f32 %v2085, %v2132
        %v2134 = vpop.f32.mrf.mxu0
        %v2135 = vpop.f32.mrf.mxu0
        %v2136 = vpop.f32.mrf.mxu0
        %2137 = vdwg.mxu0
        %2138 = vmatprep.subr.bf16.mxu0 0
        %2139 = vmatpush1.bf16.msra.mxu0 %v1729
        %2140 = vmatprep.subr.bf16.mxu0 0
        %2141 = vmatpush1.bf16.msra.mxu0 %v1728
        %2142 = vmatprep.subr.bf16.mxu0 0
        %2143 = vmatpush1.bf16.msra.mxu0 %v1727
        %2144 = vmatprep.subr.bf16.mxu0 0
        %2145 = vmatpush1.bf16.msra.mxu0 %v1726
        %2146 = vmatprep.subr.bf16.mxu0 0
        %2147 = vmatpush1.bf16.msra.mxu0 %v1725
        %2148 = vmatprep.subr.bf16.mxu0 0
        %2149 = vmatpush1.bf16.msra.mxu0 %v1724
        %2150 = vmatprep.subr.bf16.mxu0 0
        %2151 = vmatpush1.bf16.msra.mxu0 %v1723
        %2152 = vmatprep.subr.bf16.mxu0 0
        %2153 = vmatpush1.bf16.msra.mxu0 %v1722
        %2154 = vmatprep.subr.bf16.mxu0 0
        %2155 = vmatpush2.bf16.msra.mxu0 %v1737
        %2156 = vmatprep.subr.bf16.mxu0 0
        %2157 = vmatpush2.bf16.msra.mxu0 %v1736
        %2158 = vmatprep.subr.bf16.mxu0 0
        %2159 = vmatpush2.bf16.msra.mxu0 %v1735
        %2160 = vmatprep.subr.bf16.mxu0 0
        %2161 = vmatpush2.bf16.msra.mxu0 %v1734
        %2162 = vmatprep.subr.bf16.mxu0 0
        %2163 = vmatpush2.bf16.msra.mxu0 %v1733
        %2164 = vmatprep.subr.bf16.mxu0 0
        %2165 = vmatpush2.bf16.msra.mxu0 %v1732
        %2166 = vmatprep.subr.bf16.mxu0 0
        %2167 = vmatpush2.bf16.msra.mxu0 %v1731
        %2168 = vmatprep.subr.bf16.mxu0 0
        %2169 = vmatpush2.bf16.msra.mxu0 %v1730
        %2170 = vmatprep.mubr.bf16.mxu0 %v1077
        %2171 = vmatmul.mubr.bf16.gmra.mxu0 %v1076
        %v2172 = vpop.f32.mrf.mxu0
        %v2173 = vadd.f32 %v2125, %v2172
        %v2174 = vpop.f32.mrf.mxu0
        %v2175 = vpop.f32.mrf.mxu0
        %v2176 = vadd.f32 %v2128, %v2175
        %v2177 = vpop.f32.mrf.mxu0
        %2178 = vmatprep.mubr.bf16.mxu0 %v1093
        %2179 = vmatmul.mubr.bf16.gmra.mxu0 %v1092
        %v2180 = vpop.f32.mrf.mxu0
        %v2181 = vadd.f32 %v2133, %v2180
        %v2182 = vpop.f32.mrf.mxu0
        %v2183 = vpop.f32.mrf.mxu0
        %v2184 = vpop.f32.mrf.mxu0
        %2185 = vdwg.mxu0
        %2186 = vmatprep.subr.bf16.mxu0 0
        %2187 = vmatpush1.bf16.msra.mxu0 %v1745
        %2188 = vmatprep.subr.bf16.mxu0 0
        %2189 = vmatpush1.bf16.msra.mxu0 %v1744
        %2190 = vmatprep.subr.bf16.mxu0 0
        %2191 = vmatpush1.bf16.msra.mxu0 %v1743
        %2192 = vmatprep.subr.bf16.mxu0 0
        %2193 = vmatpush1.bf16.msra.mxu0 %v1742
        %2194 = vmatprep.subr.bf16.mxu0 0
        %2195 = vmatpush1.bf16.msra.mxu0 %v1741
        %2196 = vmatprep.subr.bf16.mxu0 0
        %2197 = vmatpush1.bf16.msra.mxu0 %v1740
        %2198 = vmatprep.subr.bf16.mxu0 0
        %2199 = vmatpush1.bf16.msra.mxu0 %v1739
        %2200 = vmatprep.subr.bf16.mxu0 0
        %2201 = vmatpush1.bf16.msra.mxu0 %v1738
        %2202 = vmatprep.subr.bf16.mxu0 0
        %2203 = vmatpush2.bf16.msra.mxu0 %v1753
        %2204 = vmatprep.subr.bf16.mxu0 0
        %2205 = vmatpush2.bf16.msra.mxu0 %v1752
        %2206 = vmatprep.subr.bf16.mxu0 0
        %2207 = vmatpush2.bf16.msra.mxu0 %v1751
        %2208 = vmatprep.subr.bf16.mxu0 0
        %2209 = vmatpush2.bf16.msra.mxu0 %v1750
        %2210 = vmatprep.subr.bf16.mxu0 0
        %2211 = vmatpush2.bf16.msra.mxu0 %v1749
        %2212 = vmatprep.subr.bf16.mxu0 0
        %2213 = vmatpush2.bf16.msra.mxu0 %v1748
        %2214 = vmatprep.subr.bf16.mxu0 0
        %2215 = vmatpush2.bf16.msra.mxu0 %v1747
        %2216 = vmatprep.subr.bf16.mxu0 0
        %2217 = vmatpush2.bf16.msra.mxu0 %v1746
        %2218 = vmatprep.mubr.bf16.mxu0 %v1079
        %2219 = vmatmul.mubr.bf16.gmra.mxu0 %v1078
        %v2220 = vpop.f32.mrf.mxu0
        %v2221 = vadd.f32 %v2173, %v2220
        %v2222 = vpop.f32.mrf.mxu0
        %v2223 = vpop.f32.mrf.mxu0
        %v2224 = vadd.f32 %v2176, %v2223
        %v2225 = vpop.f32.mrf.mxu0
        %2226 = vmatprep.mubr.bf16.mxu0 %v1095
        %2227 = vmatmul.mubr.bf16.gmra.mxu0 %v1094
        %v2228 = vpop.f32.mrf.mxu0
        %v2229 = vadd.f32 %v2181, %v2228
        %v2230 = vpop.f32.mrf.mxu0
        %v2231 = vpop.f32.mrf.mxu0
        %v2232 = vpop.f32.mrf.mxu0
        %2233 = vdwg.mxu0
        %2234 = vmatprep.subr.bf16.mxu0 0
        %2235 = vmatpush1.bf16.msra.mxu0 %v1761
        %2236 = vmatprep.subr.bf16.mxu0 0
        %2237 = vmatpush1.bf16.msra.mxu0 %v1760
        %2238 = vmatprep.subr.bf16.mxu0 0
        %2239 = vmatpush1.bf16.msra.mxu0 %v1759
        %2240 = vmatprep.subr.bf16.mxu0 0
        %2241 = vmatpush1.bf16.msra.mxu0 %v1758
        %2242 = vmatprep.subr.bf16.mxu0 0
        %2243 = vmatpush1.bf16.msra.mxu0 %v1757
        %2244 = vmatprep.subr.bf16.mxu0 0
        %2245 = vmatpush1.bf16.msra.mxu0 %v1756
        %2246 = vmatprep.subr.bf16.mxu0 0
        %2247 = vmatpush1.bf16.msra.mxu0 %v1755
        %2248 = vmatprep.subr.bf16.mxu0 0
        %2249 = vmatpush1.bf16.msra.mxu0 %v1754
        %2250 = vmatprep.subr.bf16.mxu0 0
        %2251 = vmatpush2.bf16.msra.mxu0 %v1769
        %2252 = vmatprep.subr.bf16.mxu0 0
        %2253 = vmatpush2.bf16.msra.mxu0 %v1768
        %2254 = vmatprep.subr.bf16.mxu0 0
        %2255 = vmatpush2.bf16.msra.mxu0 %v1767
        %2256 = vmatprep.subr.bf16.mxu0 0
        %2257 = vmatpush2.bf16.msra.mxu0 %v1766
        %2258 = vmatprep.subr.bf16.mxu0 0
        %2259 = vmatpush2.bf16.msra.mxu0 %v1765
        %2260 = vmatprep.subr.bf16.mxu0 0
        %2261 = vmatpush2.bf16.msra.mxu0 %v1764
        %2262 = vmatprep.subr.bf16.mxu0 0
        %2263 = vmatpush2.bf16.msra.mxu0 %v1763
        %2264 = vmatprep.subr.bf16.mxu0 0
        %2265 = vmatpush2.bf16.msra.mxu0 %v1762
        %2266 = vmatprep.mubr.bf16.mxu0 %v1081
        %2267 = vmatmul.mubr.bf16.gmra.mxu0 %v1080
        %v2268 = vpop.f32.mrf.mxu0
        %v2269 = vadd.f32 %v2221, %v2268
        %v2270 = vpop.f32.mrf.mxu0
        %v2271 = vpop.f32.mrf.mxu0
        %v2272 = vadd.f32 %v2224, %v2271
        %v2273 = vpop.f32.mrf.mxu0
        %2274 = vmatprep.mubr.bf16.mxu0 %v1097
        %2275 = vmatmul.mubr.bf16.gmra.mxu0 %v1096
        %v2276 = vpop.f32.mrf.mxu0
        %v2277 = vadd.f32 %v2229, %v2276
        %v2278 = vpop.f32.mrf.mxu0
        %v2279 = vpop.f32.mrf.mxu0
        %v2280 = vpop.f32.mrf.mxu0
        %2281 = vdwg.mxu0
        %v2282 = vmax.f32 %v2269, 0.0
        %v2283 = vmax.f32 %v2272, 0.0
        %v2284 = vmax.f32 %v2277, 0.0
        %v2285 = vld [vmem:[%s291] sm:$0x1]
        %v2287 = vlaneseq
        %v2288 = vshrl.u32 %v2287, 7
        %v2289 = vsub.s32 0, %v2288
        %v2290 = vrot.slane %v2285, %v2289
        %v2292 = vmul.f32 %v2282, %v2290
        %v2293 = vmul.f32 %v2283, %v2290
        %v2294 = vmul.f32 %v2284, %v2290
        %v2295 = vld [vmem:[%s299] sm:$0x1]
        %v2297 = vlaneseq
        %v2298 = vshrl.u32 %v2297, 7
        %v2299 = vsub.s32 0, %v2298
        %v2300 = vrot.slane %v2295, %v2299
        %v2302 = vadd.f32 %v2292, %v2300
        %v2303 = vadd.f32 %v2293, %v2300
        %v2304 = vadd.f32 %v2294, %v2300
        %vm2305 = vcmask 1042432
        %v2306 = vsel %vm2305, %v2303, -inf
        %v2307 = vmax.f32 %v2302, %v2306
        %v2308 = vrot.slane %v2307, 4
        %v2309 = vmax.f32 %v2307, %v2308
        %v2310 = vrot.slane %v2309, 2
        %v2311 = vmax.f32 %v2309, %v2310
        %v2312 = vrot.slane %v2311, 1
        %v2313 = vmax.f32 %v2311, %v2312
        %vm2314 = vcmask 1047555
        %v2315 = vsel %vm2314, %v2303, -inf
        %vm2316 = vcmask 1045504
        %v2317 = vsel %vm2316, %v2304, -inf
        %v2318 = vmax.f32 %v2315, %v2317
        %v2319 = vrot.slane %v2318, 4
        %v2320 = vmax.f32 %v2318, %v2319
        %v2321 = vrot.slane %v2320, 2
        %v2322 = vmax.f32 %v2320, %v2321
        %v2323 = vrot.slane %v2322, 1
        %v2324 = vmax.f32 %v2322, %v2323
        %vm2325 = vcmask 1040384
        %v2326 = vsel %vm2325, %v2313, %v2324
        %v2327 = vpack.c.bf16 %v2326, %v2326
        %2328 = vst [vmem:[%s338] sm:$0x1] %v2327
        %p2329 = scmp.lt.s32.totalorder %s25, 2
        %s2330 = scalar_select %p2329, %s25, 2
        %s2331 = scalar_lea.vmem %s5, %s2330
        // Predicated region
        $region61: #{rbm_tans_dti_forward.6} parent=39 // pred_check
          %p2332 = pneg %p168
        $region62: #{rbm_tans_dti_forward.6} parent=39 // pred_check_branch
          %2334 = sbr.rel (%p2332) target = $region64
        $region63: #{rbm_tans_dti_forward.6} parent=39 // pred_region
          _
        $region64: #{rbm_tans_dti_forward.6} parent=39 // pred_fallthru
          _
      $region40: #{rbm_tans_dti_forward.6} parent=5 // pred_fallthru
        _
      %p2335 = scmp.le.s32.totalorder 2, %s20
      // Predicated region
      $region65: #{rbm_tans_dti_forward.6} parent=5 // pred_check
        %p2336 = pneg %p2335
      $region66: #{rbm_tans_dti_forward.6} parent=5 // pred_check_branch
        %2338 = sbr.rel (%p2336) target = $region68
      $region67: #{rbm_tans_dti_forward.6} parent=5 // pred_region
        %s2339 = ssub.s32 %s20, 2
        // Predicated region
        $region69: #{rbm_tans_dti_forward.6} parent=67 // pred_check
          %p2340 = pneg %p174
        $region70: #{rbm_tans_dti_forward.6} parent=67 // pred_check_branch
          %2342 = sbr.rel (%p2340) target = $region72
        $region71: #{rbm_tans_dti_forward.6} parent=67 // pred_region
          %p2343 = scmp.lt.s32.totalorder %s26, 2
          %s2344 = scalar_select %p2343, %s26, 2
          %s2345 = scalar_lea.vmem %s5, %s2344
        $region72: #{rbm_tans_dti_forward.6} parent=67 // pred_fallthru
          _
      $region68: #{rbm_tans_dti_forward.6} parent=5 // pred_fallthru
        _
    $region6: #{rbm_tans_dti_forward.6} parent=1 // loop_footer
      %s24 = sadd.s32 1, %s20
    $region7: #{rbm_tans_dti_forward.6} parent=1 // loop_footer_branch
      %19 = sbr.rel target = $region3
    $region8: #{rbm_tans_dti_forward.6} parent=1 // loop_exit
      _
    %2346 = vsyncpa [#allocation4], 1
    %s2347 = scalar_lea.sflag [#allocation4], 1
    %2348 = vsyncpa %s2347, 1
    %2349 = vsyncpa [#allocation6], 1
    %s2350 = scalar_lea.sflag [#allocation6], 1
    %2351 = vsyncpa %s2350, 1
    %2352 = vsyncpa [#allocation9], 1
    %s2353 = scalar_lea.sflag [#allocation9], 1
    %2354 = vsyncpa %s2353, 1

// kernel: rbm_tans_dti_forward.7
$region0: #{rbm_tans_dti_forward.7}
  #allocation0 [shape = 'u32[]', space=smem, size = 0x4, offset = 0x4, fixed_abs, tag = 'smem constant byte address 0x4 - core index']
  #allocation1 [shape = 'u32[144,128]{1,0:T(1,128)}', space=vmem, size = 0x12000, scoped, tag = 'internal scratch']
  %s0 = inlined_call_operand.vmem [shape: bf16[2,384], index: 0, kind: input, shape index: {}]
  %s1 = inlined_call_operand.vmem [shape: f32[2,64], index: 1, kind: input, shape index: {}]
  %s2 = inlined_call_operand.vmem [shape: bf16[384,384], index: 2, kind: input, shape index: {}]
  %s3 = inlined_call_operand.vmem [shape: f32[1,384], index: 3, kind: input, shape index: {}]
  %s4 = inlined_call_operand.vmem [shape: bf16[64,384], index: 4, kind: input, shape index: {}]
  %s5 = inlined_call_operand.vmem [shape: f32[1,384], index: 5, kind: input, shape index: {}]
  %s6 = inlined_call_operand.vmem [shape: bf16[384,200], index: 6, kind: input, shape index: {}]
  %s7 = inlined_call_operand.vmem [shape: bf16[384,200], index: 7, kind: input, shape index: {}]
  %s8 = inlined_call_operand.vmem [shape: f32[1,200], index: 8, kind: input, shape index: {}]
  %s9 = inlined_call_operand.vmem [shape: bf16[200,10], index: 9, kind: input, shape index: {}]
  %s10 = inlined_call_operand.vmem [shape: f32[1,10], index: 10, kind: input, shape index: {}]
  %s11 = inlined_call_operand.vmem [shape: bf16[10,128], index: 11, kind: input, shape index: {}]
  %s12 = inlined_call_operand.vmem [shape: f32[1,128], index: 12, kind: input, shape index: {}]
  %s13 = inlined_call_operand.hbm [shape: f32[2,128], index: 13, kind: output, shape index: {}]
  %s14 = sld [smem:[#allocation0]]
  $region62: #{rbm_tans_dti_forward.7} parent=0
    _
  %s16 = ssub.s32 1, %s14
  %s17 = scalar_select 0, %s16, %s14
  $region1: #{rbm_tans_dti_forward.7} parent=0
    #allocation2 [shape = 'u8[1024]{0}', space=vmem, size = 0x400, scoped, tag = 'output window, operand 0, single buffered']
    #allocation3 [shape = 's32[1]{0}', space=sflag, size = 0x4, scoped, tag = 'scoped memory for rbm_tans_dti_forward.7']
    %18 = vsyncpa [#allocation3], 0
    // Predicated region
    $region2: #{rbm_tans_dti_forward.7} parent=1 // pred_check
      _
    $region3: #{rbm_tans_dti_forward.7} parent=1 // pred_check_branch
      %20 = sbr.rel (0) target = $region5
    $region4: #{rbm_tans_dti_forward.7} parent=1 // pred_region
      _
    $region5: #{rbm_tans_dti_forward.7} parent=1 // pred_fallthru
      _
    // Predicated region
    $region6: #{rbm_tans_dti_forward.7} parent=1 // pred_check
      _
    $region7: #{rbm_tans_dti_forward.7} parent=1 // pred_check_branch
      %22 = sbr.rel (0) target = $region9
    $region8: #{rbm_tans_dti_forward.7} parent=1 // pred_region
      _
    $region9: #{rbm_tans_dti_forward.7} parent=1 // pred_fallthru
      _
    // Predicated region
    $region10: #{rbm_tans_dti_forward.7} parent=1 // pred_check
      _
    $region11: #{rbm_tans_dti_forward.7} parent=1 // pred_check_branch
      %24 = sbr.rel (0) target = $region13
    $region12: #{rbm_tans_dti_forward.7} parent=1 // pred_region
      _
    $region13: #{rbm_tans_dti_forward.7} parent=1 // pred_fallthru
      _
    // Predicated region
    $region14: #{rbm_tans_dti_forward.7} parent=1 // pred_check
      _
    $region15: #{rbm_tans_dti_forward.7} parent=1 // pred_check_branch
      %26 = sbr.rel (0) target = $region17
    $region16: #{rbm_tans_dti_forward.7} parent=1 // pred_region
      _
    $region17: #{rbm_tans_dti_forward.7} parent=1 // pred_fallthru
      _
    // Predicated region
    $region18: #{rbm_tans_dti_forward.7} parent=1 // pred_check
      _
    $region19: #{rbm_tans_dti_forward.7} parent=1 // pred_check_branch
      %28 = sbr.rel (0) target = $region21
    $region20: #{rbm_tans_dti_forward.7} parent=1 // pred_region
      _
    $region21: #{rbm_tans_dti_forward.7} parent=1 // pred_fallthru
      _
    // Predicated region
    $region22: #{rbm_tans_dti_forward.7} parent=1 // pred_check
      _
    $region23: #{rbm_tans_dti_forward.7} parent=1 // pred_check_branch
      %30 = sbr.rel (0) target = $region25
    $region24: #{rbm_tans_dti_forward.7} parent=1 // pred_region
      _
    $region25: #{rbm_tans_dti_forward.7} parent=1 // pred_fallthru
      _
    // Predicated region
    $region26: #{rbm_tans_dti_forward.7} parent=1 // pred_check
      _
    $region27: #{rbm_tans_dti_forward.7} parent=1 // pred_check_branch
      %32 = sbr.rel (0) target = $region29
    $region28: #{rbm_tans_dti_forward.7} parent=1 // pred_region
      _
    $region29: #{rbm_tans_dti_forward.7} parent=1 // pred_fallthru
      _
    // Predicated region
    $region30: #{rbm_tans_dti_forward.7} parent=1 // pred_check
      _
    $region31: #{rbm_tans_dti_forward.7} parent=1 // pred_check_branch
      %34 = sbr.rel (0) target = $region33
    $region32: #{rbm_tans_dti_forward.7} parent=1 // pred_region
      _
    $region33: #{rbm_tans_dti_forward.7} parent=1 // pred_fallthru
      _
    // Predicated region
    $region34: #{rbm_tans_dti_forward.7} parent=1 // pred_check
      _
    $region35: #{rbm_tans_dti_forward.7} parent=1 // pred_check_branch
      %36 = sbr.rel (0) target = $region37
    $region36: #{rbm_tans_dti_forward.7} parent=1 // pred_region
      _
    $region37: #{rbm_tans_dti_forward.7} parent=1 // pred_fallthru
      _
    // Predicated region
    $region38: #{rbm_tans_dti_forward.7} parent=1 // pred_check
      _
    $region39: #{rbm_tans_dti_forward.7} parent=1 // pred_check_branch
      %38 = sbr.rel (0) target = $region41
    $region40: #{rbm_tans_dti_forward.7} parent=1 // pred_region
      _
    $region41: #{rbm_tans_dti_forward.7} parent=1 // pred_fallthru
      _
    // Predicated region
    $region42: #{rbm_tans_dti_forward.7} parent=1 // pred_check
      _
    $region43: #{rbm_tans_dti_forward.7} parent=1 // pred_check_branch
      %40 = sbr.rel (0) target = $region45
    $region44: #{rbm_tans_dti_forward.7} parent=1 // pred_region
      _
    $region45: #{rbm_tans_dti_forward.7} parent=1 // pred_fallthru
      _
    // Predicated region
    $region46: #{rbm_tans_dti_forward.7} parent=1 // pred_check
      _
    $region47: #{rbm_tans_dti_forward.7} parent=1 // pred_check_branch
      %42 = sbr.rel (0) target = $region49
    $region48: #{rbm_tans_dti_forward.7} parent=1 // pred_region
      _
    $region49: #{rbm_tans_dti_forward.7} parent=1 // pred_fallthru
      _
    // Predicated region
    $region50: #{rbm_tans_dti_forward.7} parent=1 // pred_check
      _
    $region51: #{rbm_tans_dti_forward.7} parent=1 // pred_check_branch
      %44 = sbr.rel (0) target = $region53
    $region52: #{rbm_tans_dti_forward.7} parent=1 // pred_region
      _
    $region53: #{rbm_tans_dti_forward.7} parent=1 // pred_fallthru
      _
    %v46 = vld [vmem:[%s0] sm:$0x7]
    %v47 = vld [vmem:[%s2] sm:$0xff]
    %v48 = vld [vmem:[%s2 + $0x8] sm:$0xf]
    %v49 = vld [vmem:[%s2 + $0xc] sm:$0xff]
    %v50 = vld [vmem:[%s2 + $0x14] sm:$0xf]
    %v51 = vld [vmem:[%s2 + $0x18] sm:$0xff]
    %v52 = vld [vmem:[%s2 + $0x20] sm:$0xf]
    %v53 = vld [vmem:[%s2 + $0x24] sm:$0xff]
    %v54 = vld [vmem:[%s2 + $0x2c] sm:$0xf]
    %v55 = vld [vmem:[%s2 + $0x30] sm:$0xff]
    %v56 = vld [vmem:[%s2 + $0x38] sm:$0xf]
    %v57 = vld [vmem:[%s2 + $0x3c] sm:$0xff]
    %v58 = vld [vmem:[%s2 + $0x44] sm:$0xf]
    %v59 = vld [vmem:[%s2 + $0x48] sm:$0xff]
    %v60 = vld [vmem:[%s2 + $0x50] sm:$0xf]
    %v61 = vld [vmem:[%s2 + $0x54] sm:$0xff]
    %v62 = vld [vmem:[%s2 + $0x5c] sm:$0xf]
    %v63 = vld [vmem:[%s2 + $0x60] sm:$0xff]
    %v64 = vld [vmem:[%s2 + $0x68] sm:$0xf]
    %v65 = vld [vmem:[%s2 + $0x6c] sm:$0xff]
    %v66 = vld [vmem:[%s2 + $0x74] sm:$0xf]
    %v67 = vld [vmem:[%s2 + $0x78] sm:$0xff]
    %v68 = vld [vmem:[%s2 + $0x80] sm:$0xf]
    %v69 = vld [vmem:[%s2 + $0x84] sm:$0xff]
    %v70 = vld [vmem:[%s2 + $0x8c] sm:$0xf]
    %v71 = vld [vmem:[%s2 + $0x90] sm:$0xff]
    %v72 = vld [vmem:[%s2 + $0x98] sm:$0xf]
    %v73 = vld [vmem:[%s2 + $0x9c] sm:$0xff]
    %v74 = vld [vmem:[%s2 + $0xa4] sm:$0xf]
    %v75 = vld [vmem:[%s2 + $0xa8] sm:$0xff]
    %v76 = vld [vmem:[%s2 + $0xb0] sm:$0xf]
    %v77 = vld [vmem:[%s2 + $0xb4] sm:$0xff]
    %v78 = vld [vmem:[%s2 + $0xbc] sm:$0xf]
    %v79 = vld [vmem:[%s2 + $0xc0] sm:$0xff]
    %v80 = vld [vmem:[%s2 + $0xc8] sm:$0xf]
    %v81 = vld [vmem:[%s2 + $0xcc] sm:$0xff]
    %v82 = vld [vmem:[%s2 + $0xd4] sm:$0xf]
    %v83 = vld [vmem:[%s2 + $0xd8] sm:$0xff]
    %v84 = vld [vmem:[%s2 + $0xe0] sm:$0xf]
    %v85 = vld [vmem:[%s2 + $0xe4] sm:$0xff]
    %v86 = vld [vmem:[%s2 + $0xec] sm:$0xf]
    %v87 = vld [vmem:[%s2 + $0xf0] sm:$0xff]
    %v88 = vld [vmem:[%s2 + $0xf8] sm:$0xf]
    %v89 = vld [vmem:[%s2 + $0xfc] sm:$0xff]
    %v90 = vld [vmem:[%s2 + $0x104] sm:$0xf]
    %v91 = vld [vmem:[%s2 + $0x108] sm:$0xff]
    %v92 = vld [vmem:[%s2 + $0x110] sm:$0xf]
    %v93 = vld [vmem:[%s2 + $0x114] sm:$0xff]
    %v94 = vld [vmem:[%s2 + $0x11c] sm:$0xf]
    %v95 = vld [vmem:[%s2 + $0x120] sm:$0xff]
    %v96 = vld [vmem:[%s2 + $0x128] sm:$0xf]
    %v97 = vld [vmem:[%s2 + $0x12c] sm:$0xff]
    %v98 = vld [vmem:[%s2 + $0x134] sm:$0xf]
    %v99 = vld [vmem:[%s2 + $0x138] sm:$0xff]
    %v100 = vld [vmem:[%s2 + $0x140] sm:$0xf]
    %v101 = vld [vmem:[%s2 + $0x144] sm:$0xff]
    %v102 = vld [vmem:[%s2 + $0x14c] sm:$0xf]
    %v103 = vld [vmem:[%s2 + $0x150] sm:$0xff]
    %v104 = vld [vmem:[%s2 + $0x158] sm:$0xf]
    %v105 = vld [vmem:[%s2 + $0x15c] sm:$0xff]
    %v106 = vld [vmem:[%s2 + $0x164] sm:$0xf]
    %v107 = vld [vmem:[%s2 + $0x168] sm:$0xff]
    %v108 = vld [vmem:[%s2 + $0x170] sm:$0xf]
    %v109 = vld [vmem:[%s2 + $0x174] sm:$0xff]
    %v110 = vld [vmem:[%s2 + $0x17c] sm:$0xf]
    %v111 = vld [vmem:[%s2 + $0x180] sm:$0xff]
    %v112 = vld [vmem:[%s2 + $0x188] sm:$0xf]
    %v113 = vld [vmem:[%s2 + $0x18c] sm:$0xff]
    %v114 = vld [vmem:[%s2 + $0x194] sm:$0xf]
    %v115 = vld [vmem:[%s2 + $0x198] sm:$0xff]
    %v116 = vld [vmem:[%s2 + $0x1a0] sm:$0xf]
    %v117 = vld [vmem:[%s2 + $0x1a4] sm:$0xff]
    %v118 = vld [vmem:[%s2 + $0x1ac] sm:$0xf]
    %v119 = vld [vmem:[%s2 + $0x1b0] sm:$0xff]
    %v120 = vld [vmem:[%s2 + $0x1b8] sm:$0xf]
    %v121 = vld [vmem:[%s2 + $0x1bc] sm:$0xff]
    %v122 = vld [vmem:[%s2 + $0x1c4] sm:$0xf]
    %v123 = vld [vmem:[%s2 + $0x1c8] sm:$0xff]
    %v124 = vld [vmem:[%s2 + $0x1d0] sm:$0xf]
    %v125 = vld [vmem:[%s2 + $0x1d4] sm:$0xff]
    %v126 = vld [vmem:[%s2 + $0x1dc] sm:$0xf]
    %v127 = vld [vmem:[%s2 + $0x1e0] sm:$0xff]
    %v128 = vld [vmem:[%s2 + $0x1e8] sm:$0xf]
    %v129 = vld [vmem:[%s2 + $0x1ec] sm:$0xff]
    %v130 = vld [vmem:[%s2 + $0x1f4] sm:$0xf]
    %v131 = vld [vmem:[%s2 + $0x1f8] sm:$0xff]
    %v132 = vld [vmem:[%s2 + $0x200] sm:$0xf]
    %v133 = vld [vmem:[%s2 + $0x204] sm:$0xff]
    %v134 = vld [vmem:[%s2 + $0x20c] sm:$0xf]
    %v135 = vld [vmem:[%s2 + $0x210] sm:$0xff]
    %v136 = vld [vmem:[%s2 + $0x218] sm:$0xf]
    %v137 = vld [vmem:[%s2 + $0x21c] sm:$0xff]
    %v138 = vld [vmem:[%s2 + $0x224] sm:$0xf]
    %v139 = vld [vmem:[%s2 + $0x228] sm:$0xff]
    %v140 = vld [vmem:[%s2 + $0x230] sm:$0xf]
    %v141 = vld [vmem:[%s2 + $0x234] sm:$0xff]
    %v142 = vld [vmem:[%s2 + $0x23c] sm:$0xf]
    %v143 = vld [vmem:[%s3] sm:$0x7]
    %v145 = vlaneseq
    %v146 = vshrl.u32 %v145, 7
    %v147 = vsub.s32 0, %v146
    %v148 = vrot.slane %v143, %v147
    %v149 = vlaneseq
    %v150 = vshrl.u32 %v149, 7
    %v151 = vsub.s32 1, %v150
    %v152 = vrot.slane %v143, %v151
    %v153 = vlaneseq
    %v154 = vshrl.u32 %v153, 7
    %v155 = vsub.s32 2, %v154
    %v156 = vrot.slane %v143, %v155
    %v162 = vunpack.c.l.s4 1966171168
    %v163 = vunpack.c.0.s8 %v162
    %v164 = vlaneseq
    %v165 = vshrl.u32 %v164, 7
    %v166 = vsub.s32 %v163, %v165
    %v167 = vrot.slane %v46, %v166
    %v168 = vcombine.high %v167, %v167
    %v170 = vunpack.c.l.s4 1966171168
    %v171 = vunpack.c.0.s8 %v170
    %v172 = vlaneseq
    %v173 = vshrl.u32 %v172, 7
    %v174 = vsub.s32 %v171, %v173
    %v175 = vrot.slane %v167, %v174
    %v177 = vunpack.c.l.s4 1966171168
    %v178 = vunpack.c.0.s8 %v177
    %v179 = vlaneseq
    %v180 = vshrl.u32 %v179, 7
    %v181 = vsub.s32 %v178, %v180
    %v182 = vrot.slane %v168, %v181
    %v183 = vcombine.high %v175, %v175
    %v283 = vunpack.c.l.b16 %v47
    %v284 = vunpack.c.h.b16 %v47
    %v285 = vunpack.c.l.b16 %v48
    %v286 = vunpack.c.l.b16 %v49
    %v287 = vunpack.c.h.b16 %v49
    %v288 = vunpack.c.l.b16 %v50
    %v289 = vunpack.c.l.b16 %v51
    %v290 = vunpack.c.h.b16 %v51
    %v291 = vunpack.c.l.b16 %v52
    %v292 = vunpack.c.l.b16 %v53
    %v293 = vunpack.c.h.b16 %v53
    %v294 = vunpack.c.l.b16 %v54
    %v295 = vunpack.c.l.b16 %v55
    %v296 = vunpack.c.h.b16 %v55
    %v297 = vunpack.c.l.b16 %v56
    %v298 = vunpack.c.l.b16 %v57
    %v299 = vunpack.c.h.b16 %v57
    %v300 = vunpack.c.l.b16 %v58
    %v301 = vunpack.c.l.b16 %v59
    %v302 = vunpack.c.h.b16 %v59
    %v303 = vunpack.c.l.b16 %v60
    %v304 = vunpack.c.l.b16 %v61
    %v305 = vunpack.c.h.b16 %v61
    %v306 = vunpack.c.l.b16 %v62
    %v307 = vunpack.c.l.b16 %v63
    %v308 = vunpack.c.h.b16 %v63
    %v309 = vunpack.c.l.b16 %v64
    %v310 = vunpack.c.l.b16 %v65
    %v311 = vunpack.c.h.b16 %v65
    %v312 = vunpack.c.l.b16 %v66
    %v313 = vunpack.c.l.b16 %v67
    %v314 = vunpack.c.h.b16 %v67
    %v315 = vunpack.c.l.b16 %v68
    %v316 = vunpack.c.l.b16 %v69
    %v317 = vunpack.c.h.b16 %v69
    %v318 = vunpack.c.l.b16 %v70
    %v319 = vunpack.c.l.b16 %v71
    %v320 = vunpack.c.h.b16 %v71
    %v321 = vunpack.c.l.b16 %v72
    %v322 = vunpack.c.l.b16 %v73
    %v323 = vunpack.c.h.b16 %v73
    %v324 = vunpack.c.l.b16 %v74
    %v325 = vunpack.c.l.b16 %v75
    %v326 = vunpack.c.h.b16 %v75
    %v327 = vunpack.c.l.b16 %v76
    %v328 = vunpack.c.l.b16 %v77
    %v329 = vunpack.c.h.b16 %v77
    %v330 = vunpack.c.l.b16 %v78
    %v331 = vunpack.c.l.b16 %v79
    %v332 = vunpack.c.h.b16 %v79
    %v333 = vunpack.c.l.b16 %v80
    %v334 = vunpack.c.l.b16 %v81
    %v335 = vunpack.c.h.b16 %v81
    %v336 = vunpack.c.l.b16 %v82
    %v337 = vunpack.c.l.b16 %v83
    %v338 = vunpack.c.h.b16 %v83
    %v339 = vunpack.c.l.b16 %v84
    %v340 = vunpack.c.l.b16 %v85
    %v341 = vunpack.c.h.b16 %v85
    %v342 = vunpack.c.l.b16 %v86
    %v343 = vunpack.c.l.b16 %v87
    %v344 = vunpack.c.h.b16 %v87
    %v345 = vunpack.c.l.b16 %v88
    %v346 = vunpack.c.l.b16 %v89
    %v347 = vunpack.c.h.b16 %v89
    %v348 = vunpack.c.l.b16 %v90
    %v349 = vunpack.c.l.b16 %v91
    %v350 = vunpack.c.h.b16 %v91
    %v351 = vunpack.c.l.b16 %v92
    %v352 = vunpack.c.l.b16 %v93
    %v353 = vunpack.c.h.b16 %v93
    %v354 = vunpack.c.l.b16 %v94
    %v355 = vunpack.c.l.b16 %v95
    %v356 = vunpack.c.h.b16 %v95
    %v357 = vunpack.c.l.b16 %v96
    %v358 = vunpack.c.l.b16 %v97
    %v359 = vunpack.c.h.b16 %v97
    %v360 = vunpack.c.l.b16 %v98
    %v361 = vunpack.c.l.b16 %v99
    %v362 = vunpack.c.h.b16 %v99
    %v363 = vunpack.c.l.b16 %v100
    %v364 = vunpack.c.l.b16 %v101
    %v365 = vunpack.c.h.b16 %v101
    %v366 = vunpack.c.l.b16 %v102
    %v367 = vunpack.c.l.b16 %v103
    %v368 = vunpack.c.h.b16 %v103
    %v369 = vunpack.c.l.b16 %v104
    %v370 = vunpack.c.l.b16 %v105
    %v371 = vunpack.c.h.b16 %v105
    %v372 = vunpack.c.l.b16 %v106
    %v373 = vunpack.c.l.b16 %v107
    %v374 = vunpack.c.h.b16 %v107
    %v375 = vunpack.c.l.b16 %v108
    %v376 = vunpack.c.l.b16 %v109
    %v377 = vunpack.c.h.b16 %v109
    %v378 = vunpack.c.l.b16 %v110
    %v379 = vunpack.c.l.b16 %v111
    %v380 = vunpack.c.h.b16 %v111
    %v381 = vunpack.c.l.b16 %v112
    %v382 = vunpack.c.l.b16 %v113
    %v383 = vunpack.c.h.b16 %v113
    %v384 = vunpack.c.l.b16 %v114
    %v385 = vunpack.c.l.b16 %v115
    %v386 = vunpack.c.h.b16 %v115
    %v387 = vunpack.c.l.b16 %v116
    %v388 = vunpack.c.l.b16 %v117
    %v389 = vunpack.c.h.b16 %v117
    %v390 = vunpack.c.l.b16 %v118
    %v391 = vunpack.c.l.b16 %v119
    %v392 = vunpack.c.h.b16 %v119
    %v393 = vunpack.c.l.b16 %v120
    %v394 = vunpack.c.l.b16 %v121
    %v395 = vunpack.c.h.b16 %v121
    %v396 = vunpack.c.l.b16 %v122
    %v397 = vunpack.c.l.b16 %v123
    %v398 = vunpack.c.h.b16 %v123
    %v399 = vunpack.c.l.b16 %v124
    %v400 = vunpack.c.l.b16 %v125
    %v401 = vunpack.c.h.b16 %v125
    %v402 = vunpack.c.l.b16 %v126
    %v403 = vunpack.c.l.b16 %v127
    %v404 = vunpack.c.h.b16 %v127
    %v405 = vunpack.c.l.b16 %v128
    %v406 = vunpack.c.l.b16 %v129
    %v407 = vunpack.c.h.b16 %v129
    %v408 = vunpack.c.l.b16 %v130
    %v409 = vunpack.c.l.b16 %v131
    %v410 = vunpack.c.h.b16 %v131
    %v411 = vunpack.c.l.b16 %v132
    %v412 = vunpack.c.l.b16 %v133
    %v413 = vunpack.c.h.b16 %v133
    %v414 = vunpack.c.l.b16 %v134
    %v415 = vunpack.c.l.b16 %v135
    %v416 = vunpack.c.h.b16 %v135
    %v417 = vunpack.c.l.b16 %v136
    %v418 = vunpack.c.l.b16 %v137
    %v419 = vunpack.c.h.b16 %v137
    %v420 = vunpack.c.l.b16 %v138
    %v421 = vunpack.c.l.b16 %v139
    %v422 = vunpack.c.h.b16 %v139
    %v423 = vunpack.c.l.b16 %v140
    %v424 = vunpack.c.l.b16 %v141
    %v425 = vunpack.c.h.b16 %v141
    %v426 = vunpack.c.l.b16 %v142
    %v427 = vpack.c.b16 %v286, %v283
    %v428 = vpack.c.b16 %v287, %v284
    %v429 = vpack.c.b16 %v288, %v285
    %v430 = vpack.c.b16 %v292, %v289
    %v431 = vpack.c.b16 %v293, %v290
    %v432 = vpack.c.b16 %v294, %v291
    %v433 = vpack.c.b16 %v298, %v295
    %v434 = vpack.c.b16 %v299, %v296
    %v435 = vpack.c.b16 %v300, %v297
    %v436 = vpack.c.b16 %v304, %v301
    %v437 = vpack.c.b16 %v305, %v302
    %v438 = vpack.c.b16 %v306, %v303
    %v439 = vpack.c.b16 %v310, %v307
    %v440 = vpack.c.b16 %v311, %v308
    %v441 = vpack.c.b16 %v312, %v309
    %v442 = vpack.c.b16 %v316, %v313
    %v443 = vpack.c.b16 %v317, %v314
    %v444 = vpack.c.b16 %v318, %v315
    %v445 = vpack.c.b16 %v322, %v319
    %v446 = vpack.c.b16 %v323, %v320
    %v447 = vpack.c.b16 %v324, %v321
    %v448 = vpack.c.b16 %v328, %v325
    %v449 = vpack.c.b16 %v329, %v326
    %v450 = vpack.c.b16 %v330, %v327
    %v451 = vpack.c.b16 %v334, %v331
    %v452 = vpack.c.b16 %v335, %v332
    %v453 = vpack.c.b16 %v336, %v333
    %v454 = vpack.c.b16 %v340, %v337
    %v455 = vpack.c.b16 %v341, %v338
    %v456 = vpack.c.b16 %v342, %v339
    %v457 = vpack.c.b16 %v346, %v343
    %v458 = vpack.c.b16 %v347, %v344
    %v459 = vpack.c.b16 %v348, %v345
    %v460 = vpack.c.b16 %v352, %v349
    %v461 = vpack.c.b16 %v353, %v350
    %v462 = vpack.c.b16 %v354, %v351
    %v463 = vpack.c.b16 %v358, %v355
    %v464 = vpack.c.b16 %v359, %v356
    %v465 = vpack.c.b16 %v360, %v357
    %v466 = vpack.c.b16 %v364, %v361
    %v467 = vpack.c.b16 %v365, %v362
    %v468 = vpack.c.b16 %v366, %v363
    %v469 = vpack.c.b16 %v370, %v367
    %v470 = vpack.c.b16 %v371, %v368
    %v471 = vpack.c.b16 %v372, %v369
    %v472 = vpack.c.b16 %v376, %v373
    %v473 = vpack.c.b16 %v377, %v374
    %v474 = vpack.c.b16 %v378, %v375
    %v475 = vpack.c.b16 %v382, %v379
    %v476 = vpack.c.b16 %v383, %v380
    %v477 = vpack.c.b16 %v384, %v381
    %v478 = vpack.c.b16 %v388, %v385
    %v479 = vpack.c.b16 %v389, %v386
    %v480 = vpack.c.b16 %v390, %v387
    %v481 = vpack.c.b16 %v394, %v391
    %v482 = vpack.c.b16 %v395, %v392
    %v483 = vpack.c.b16 %v396, %v393
    %v484 = vpack.c.b16 %v400, %v397
    %v485 = vpack.c.b16 %v401, %v398
    %v486 = vpack.c.b16 %v402, %v399
    %v487 = vpack.c.b16 %v406, %v403
    %v488 = vpack.c.b16 %v407, %v404
    %v489 = vpack.c.b16 %v408, %v405
    %v490 = vpack.c.b16 %v412, %v409
    %v491 = vpack.c.b16 %v413, %v410
    %v492 = vpack.c.b16 %v414, %v411
    %v493 = vpack.c.b16 %v418, %v415
    %v494 = vpack.c.b16 %v419, %v416
    %v495 = vpack.c.b16 %v420, %v417
    %v496 = vpack.c.b16 %v424, %v421
    %v497 = vpack.c.b16 %v425, %v422
    %v498 = vpack.c.b16 %v426, %v423
    %571 = vmatprep.subr.bf16.mxu0 %v449
    %572 = vmatpush1.bf16.msra.mxu0 %v448
    %573 = vmatprep.subr.bf16.mxu0 %v446
    %574 = vmatpush1.bf16.msra.mxu0 %v445
    %575 = vmatprep.subr.bf16.mxu0 %v443
    %576 = vmatpush1.bf16.msra.mxu0 %v442
    %577 = vmatprep.subr.bf16.mxu0 %v440
    %578 = vmatpush1.bf16.msra.mxu0 %v439
    %579 = vmatprep.subr.bf16.mxu0 %v437
    %580 = vmatpush1.bf16.msra.mxu0 %v436
    %581 = vmatprep.subr.bf16.mxu0 %v434
    %582 = vmatpush1.bf16.msra.mxu0 %v433
    %583 = vmatprep.subr.bf16.mxu0 %v431
    %584 = vmatpush1.bf16.msra.mxu0 %v430
    %585 = vmatprep.subr.bf16.mxu0 %v428
    %586 = vmatpush1.bf16.msra.mxu0 %v427
    %587 = vmatprep.subr.bf16.mxu0 %v473
    %588 = vmatpush2.bf16.msra.mxu0 %v472
    %589 = vmatprep.subr.bf16.mxu0 %v470
    %590 = vmatpush2.bf16.msra.mxu0 %v469
    %591 = vmatprep.subr.bf16.mxu0 %v467
    %592 = vmatpush2.bf16.msra.mxu0 %v466
    %593 = vmatprep.subr.bf16.mxu0 %v464
    %594 = vmatpush2.bf16.msra.mxu0 %v463
    %595 = vmatprep.subr.bf16.mxu0 %v461
    %596 = vmatpush2.bf16.msra.mxu0 %v460
    %597 = vmatprep.subr.bf16.mxu0 %v458
    %598 = vmatpush2.bf16.msra.mxu0 %v457
    %599 = vmatprep.subr.bf16.mxu0 %v455
    %600 = vmatpush2.bf16.msra.mxu0 %v454
    %601 = vmatprep.subr.bf16.mxu0 %v452
    %602 = vmatpush2.bf16.msra.mxu0 %v451
    %603 = vmatprep.mubr.bf16.mxu0 %v182
    %604 = vmatmul.mubr.bf16.gmra.mxu0 %v175
    %v605 = vpop.f32.mrf.mxu0
    %v606 = vadd.f32 %v148, %v605
    %v607 = vpop.f32.mrf.mxu0
    %v608 = vadd.f32 %v152, %v607
    %v609 = vpop.f32.mrf.mxu0
    %v610 = vpop.f32.mrf.mxu0
    %611 = vdwg.mxu0
    %612 = vmatprep.subr.bf16.mxu0 %v497
    %613 = vmatpush1.bf16.msra.mxu0 %v496
    %614 = vmatprep.subr.bf16.mxu0 %v494
    %615 = vmatpush1.bf16.msra.mxu0 %v493
    %616 = vmatprep.subr.bf16.mxu0 %v491
    %617 = vmatpush1.bf16.msra.mxu0 %v490
    %618 = vmatprep.subr.bf16.mxu0 %v488
    %619 = vmatpush1.bf16.msra.mxu0 %v487
    %620 = vmatprep.subr.bf16.mxu0 %v485
    %621 = vmatpush1.bf16.msra.mxu0 %v484
    %622 = vmatprep.subr.bf16.mxu0 %v482
    %623 = vmatpush1.bf16.msra.mxu0 %v481
    %624 = vmatprep.subr.bf16.mxu0 %v479
    %625 = vmatpush1.bf16.msra.mxu0 %v478
    %626 = vmatprep.subr.bf16.mxu0 %v476
    %627 = vmatpush1.bf16.msra.mxu0 %v475
    %628 = vmatprep.subr.bf16.mxu0 0
    %629 = vmatpush2.bf16.msra.mxu0 0
    %630 = vmatprep.subr.bf16.mxu0 0
    %631 = vmatpush2.bf16.msra.mxu0 0
    %632 = vmatprep.subr.bf16.mxu0 0
    %633 = vmatpush2.bf16.msra.mxu0 0
    %634 = vmatprep.subr.bf16.mxu0 0
    %635 = vmatpush2.bf16.msra.mxu0 0
    %636 = vmatprep.subr.bf16.mxu0 0
    %637 = vmatpush2.bf16.msra.mxu0 0
    %638 = vmatprep.subr.bf16.mxu0 0
    %639 = vmatpush2.bf16.msra.mxu0 0
    %640 = vmatprep.subr.bf16.mxu0 0
    %641 = vmatpush2.bf16.msra.mxu0 0
    %642 = vmatprep.subr.bf16.mxu0 0
    %643 = vmatpush2.bf16.msra.mxu0 0
    %644 = vmatprep.mubr.bf16.mxu0 0
    %645 = vmatmul.mubr.bf16.gmra.mxu0 %v183
    %v646 = vpop.f32.mrf.mxu0
    %v647 = vadd.f32 %v606, %v646
    %v648 = vpop.f32.mrf.mxu0
    %v649 = vadd.f32 %v608, %v648
    %v650 = vpop.f32.mrf.mxu0
    %v651 = vpop.f32.mrf.mxu0
    %652 = vdwg.mxu0
    %653 = vmatprep.subr.bf16.mxu0 0
    %654 = vmatpush1.bf16.msra.mxu0 %v450
    %655 = vmatprep.subr.bf16.mxu0 0
    %656 = vmatpush1.bf16.msra.mxu0 %v447
    %657 = vmatprep.subr.bf16.mxu0 0
    %658 = vmatpush1.bf16.msra.mxu0 %v444
    %659 = vmatprep.subr.bf16.mxu0 0
    %660 = vmatpush1.bf16.msra.mxu0 %v441
    %661 = vmatprep.subr.bf16.mxu0 0
    %662 = vmatpush1.bf16.msra.mxu0 %v438
    %663 = vmatprep.subr.bf16.mxu0 0
    %664 = vmatpush1.bf16.msra.mxu0 %v435
    %665 = vmatprep.subr.bf16.mxu0 0
    %666 = vmatpush1.bf16.msra.mxu0 %v432
    %667 = vmatprep.subr.bf16.mxu0 0
    %668 = vmatpush1.bf16.msra.mxu0 %v429
    %669 = vmatprep.subr.bf16.mxu0 0
    %670 = vmatpush2.bf16.msra.mxu0 %v474
    %671 = vmatprep.subr.bf16.mxu0 0
    %672 = vmatpush2.bf16.msra.mxu0 %v471
    %673 = vmatprep.subr.bf16.mxu0 0
    %674 = vmatpush2.bf16.msra.mxu0 %v468
    %675 = vmatprep.subr.bf16.mxu0 0
    %676 = vmatpush2.bf16.msra.mxu0 %v465
    %677 = vmatprep.subr.bf16.mxu0 0
    %678 = vmatpush2.bf16.msra.mxu0 %v462
    %679 = vmatprep.subr.bf16.mxu0 0
    %680 = vmatpush2.bf16.msra.mxu0 %v459
    %681 = vmatprep.subr.bf16.mxu0 0
    %682 = vmatpush2.bf16.msra.mxu0 %v456
    %683 = vmatprep.subr.bf16.mxu0 0
    %684 = vmatpush2.bf16.msra.mxu0 %v453
    %685 = vmatprep.mubr.bf16.mxu0 %v182
    %686 = vmatmul.mubr.bf16.gmra.mxu0 %v175
    %v687 = vpop.f32.mrf.mxu0
    %v688 = vadd.f32 %v156, %v687
    %v689 = vpop.f32.mrf.mxu0
    %v690 = vpop.f32.mrf.mxu0
    %v691 = vpop.f32.mrf.mxu0
    %692 = vdwg.mxu0
    %693 = vmatprep.subr.bf16.mxu0 0
    %694 = vmatpush1.bf16.msra.mxu0 %v498
    %695 = vmatprep.subr.bf16.mxu0 0
    %696 = vmatpush1.bf16.msra.mxu0 %v495
    %697 = vmatprep.subr.bf16.mxu0 0
    %698 = vmatpush1.bf16.msra.mxu0 %v492
    %699 = vmatprep.subr.bf16.mxu0 0
    %700 = vmatpush1.bf16.msra.mxu0 %v489
    %701 = vmatprep.subr.bf16.mxu0 0
    %702 = vmatpush1.bf16.msra.mxu0 %v486
    %703 = vmatprep.subr.bf16.mxu0 0
    %704 = vmatpush1.bf16.msra.mxu0 %v483
    %705 = vmatprep.subr.bf16.mxu0 0
    %706 = vmatpush1.bf16.msra.mxu0 %v480
    %707 = vmatprep.subr.bf16.mxu0 0
    %708 = vmatpush1.bf16.msra.mxu0 %v477
    %709 = vmatprep.subr.bf16.mxu0 0
    %710 = vmatpush2.bf16.msra.mxu0 0
    %711 = vmatprep.subr.bf16.mxu0 0
    %712 = vmatpush2.bf16.msra.mxu0 0
    %713 = vmatprep.subr.bf16.mxu0 0
    %714 = vmatpush2.bf16.msra.mxu0 0
    %715 = vmatprep.subr.bf16.mxu0 0
    %716 = vmatpush2.bf16.msra.mxu0 0
    %717 = vmatprep.subr.bf16.mxu0 0
    %718 = vmatpush2.bf16.msra.mxu0 0
    %719 = vmatprep.subr.bf16.mxu0 0
    %720 = vmatpush2.bf16.msra.mxu0 0
    %721 = vmatprep.subr.bf16.mxu0 0
    %722 = vmatpush2.bf16.msra.mxu0 0
    %723 = vmatprep.subr.bf16.mxu0 0
    %724 = vmatpush2.bf16.msra.mxu0 0
    %725 = vmatprep.mubr.bf16.mxu0 0
    %726 = vmatmul.mubr.bf16.gmra.mxu0 %v183
    %v727 = vpop.f32.mrf.mxu0
    %v728 = vadd.f32 %v688, %v727
    %v729 = vpop.f32.mrf.mxu0
    %v730 = vpop.f32.mrf.mxu0
    %v731 = vpop.f32.mrf.mxu0
    %732 = vdwg.mxu0
    %v733 = vmax.f32 %v647, 0.0
    %v734 = vmax.f32 %v649, 0.0
    %v735 = vmax.f32 %v728, 0.0
    %v736 = vld [vmem:[%s1] sm:$0x3]
    %v737 = vpack.c.bf16 %v736, %v736
    %v738 = vld [vmem:[%s4] sm:$0xff]
    %v739 = vld [vmem:[%s4 + $0x8] sm:$0xf]
    %v740 = vld [vmem:[%s4 + $0xc] sm:$0xff]
    %v741 = vld [vmem:[%s4 + $0x14] sm:$0xf]
    %v742 = vld [vmem:[%s4 + $0x18] sm:$0xff]
    %v743 = vld [vmem:[%s4 + $0x20] sm:$0xf]
    %v744 = vld [vmem:[%s4 + $0x24] sm:$0xff]
    %v745 = vld [vmem:[%s4 + $0x2c] sm:$0xf]
    %v746 = vld [vmem:[%s4 + $0x30] sm:$0xff]
    %v747 = vld [vmem:[%s4 + $0x38] sm:$0xf]
    %v748 = vld [vmem:[%s4 + $0x3c] sm:$0xff]
    %v749 = vld [vmem:[%s4 + $0x44] sm:$0xf]
    %v750 = vld [vmem:[%s4 + $0x48] sm:$0xff]
    %v751 = vld [vmem:[%s4 + $0x50] sm:$0xf]
    %v752 = vld [vmem:[%s4 + $0x54] sm:$0xff]
    %v753 = vld [vmem:[%s4 + $0x5c] sm:$0xf]
    %v754 = vld [vmem:[%s5] sm:$0x7]
    %v756 = vlaneseq
    %v757 = vshrl.u32 %v756, 7
    %v758 = vsub.s32 0, %v757
    %v759 = vrot.slane %v754, %v758
    %v760 = vlaneseq
    %v761 = vshrl.u32 %v760, 7
    %v762 = vsub.s32 1, %v761
    %v763 = vrot.slane %v754, %v762
    %v764 = vlaneseq
    %v765 = vshrl.u32 %v764, 7
    %v766 = vsub.s32 2, %v765
    %v767 = vrot.slane %v754, %v766
    %v787 = vunpack.c.l.b16 %v738
    %v788 = vunpack.c.h.b16 %v738
    %v789 = vunpack.c.l.b16 %v739
    %v790 = vunpack.c.l.b16 %v740
    %v791 = vunpack.c.h.b16 %v740
    %v792 = vunpack.c.l.b16 %v741
    %v793 = vunpack.c.l.b16 %v742
    %v794 = vunpack.c.h.b16 %v742
    %v795 = vunpack.c.l.b16 %v743
    %v796 = vunpack.c.l.b16 %v744
    %v797 = vunpack.c.h.b16 %v744
    %v798 = vunpack.c.l.b16 %v745
    %v799 = vunpack.c.l.b16 %v746
    %v800 = vunpack.c.h.b16 %v746
    %v801 = vunpack.c.l.b16 %v747
    %v802 = vunpack.c.l.b16 %v748
    %v803 = vunpack.c.h.b16 %v748
    %v804 = vunpack.c.l.b16 %v749
    %v805 = vunpack.c.l.b16 %v750
    %v806 = vunpack.c.h.b16 %v750
    %v807 = vunpack.c.l.b16 %v751
    %v808 = vunpack.c.l.b16 %v752
    %v809 = vunpack.c.h.b16 %v752
    %v810 = vunpack.c.l.b16 %v753
    %v811 = vpack.c.b16 %v790, %v787
    %v812 = vpack.c.b16 %v791, %v788
    %v813 = vpack.c.b16 %v792, %v789
    %v814 = vpack.c.b16 %v796, %v793
    %v815 = vpack.c.b16 %v797, %v794
    %v816 = vpack.c.b16 %v798, %v795
    %v817 = vpack.c.b16 %v802, %v799
    %v818 = vpack.c.b16 %v803, %v800
    %v819 = vpack.c.b16 %v804, %v801
    %v820 = vpack.c.b16 %v808, %v805
    %v821 = vpack.c.b16 %v809, %v806
    %v822 = vpack.c.b16 %v810, %v807
    %vm835 = vcmask 523264
    %v837 = vsel %vm835, %v737, 0
    %839 = vmatprep.subr.bf16.mxu0 0
    %840 = vmatpush1.bf16.msra.mxu0 0
    %841 = vmatprep.subr.bf16.mxu0 0
    %842 = vmatpush1.bf16.msra.mxu0 0
    %843 = vmatprep.subr.bf16.mxu0 0
    %844 = vmatpush1.bf16.msra.mxu0 0
    %845 = vmatprep.subr.bf16.mxu0 0
    %846 = vmatpush1.bf16.msra.mxu0 0
    %847 = vmatprep.subr.bf16.mxu0 %v821
    %848 = vmatpush1.bf16.msra.mxu0 %v820
    %849 = vmatprep.subr.bf16.mxu0 %v818
    %850 = vmatpush1.bf16.msra.mxu0 %v817
    %851 = vmatprep.subr.bf16.mxu0 %v815
    %852 = vmatpush1.bf16.msra.mxu0 %v814
    %853 = vmatprep.subr.bf16.mxu0 %v812
    %854 = vmatpush1.bf16.msra.mxu0 %v811
    %855 = vmatprep.subr.bf16.mxu0 0
    %856 = vmatpush2.bf16.msra.mxu0 0
    %857 = vmatprep.subr.bf16.mxu0 0
    %858 = vmatpush2.bf16.msra.mxu0 0
    %859 = vmatprep.subr.bf16.mxu0 0
    %860 = vmatpush2.bf16.msra.mxu0 0
    %861 = vmatprep.subr.bf16.mxu0 0
    %862 = vmatpush2.bf16.msra.mxu0 0
    %863 = vmatprep.subr.bf16.mxu0 0
    %864 = vmatpush2.bf16.msra.mxu0 0
    %865 = vmatprep.subr.bf16.mxu0 0
    %866 = vmatpush2.bf16.msra.mxu0 0
    %867 = vmatprep.subr.bf16.mxu0 0
    %868 = vmatpush2.bf16.msra.mxu0 0
    %869 = vmatprep.subr.bf16.mxu0 0
    %870 = vmatpush2.bf16.msra.mxu0 0
    %871 = vmatprep.mubr.bf16.mxu0 0
    %872 = vmatmul.mubr.bf16.gmra.mxu0 %v837
    %v873 = vpop.f32.mrf.mxu0
    %v874 = vadd.f32 %v759, %v873
    %v875 = vpop.f32.mrf.mxu0
    %v876 = vadd.f32 %v763, %v875
    %v877 = vpop.f32.mrf.mxu0
    %v878 = vpop.f32.mrf.mxu0
    %879 = vdwg.mxu0
    %880 = vmatprep.subr.bf16.mxu0 0
    %881 = vmatpush1.bf16.msra.mxu0 0
    %882 = vmatprep.subr.bf16.mxu0 0
    %883 = vmatpush1.bf16.msra.mxu0 0
    %884 = vmatprep.subr.bf16.mxu0 0
    %885 = vmatpush1.bf16.msra.mxu0 0
    %886 = vmatprep.subr.bf16.mxu0 0
    %887 = vmatpush1.bf16.msra.mxu0 0
    %888 = vmatprep.subr.bf16.mxu0 0
    %889 = vmatpush1.bf16.msra.mxu0 %v822
    %890 = vmatprep.subr.bf16.mxu0 0
    %891 = vmatpush1.bf16.msra.mxu0 %v819
    %892 = vmatprep.subr.bf16.mxu0 0
    %893 = vmatpush1.bf16.msra.mxu0 %v816
    %894 = vmatprep.subr.bf16.mxu0 0
    %895 = vmatpush1.bf16.msra.mxu0 %v813
    %896 = vmatprep.subr.bf16.mxu0 0
    %897 = vmatpush2.bf16.msra.mxu0 0
    %898 = vmatprep.subr.bf16.mxu0 0
    %899 = vmatpush2.bf16.msra.mxu0 0
    %900 = vmatprep.subr.bf16.mxu0 0
    %901 = vmatpush2.bf16.msra.mxu0 0
    %902 = vmatprep.subr.bf16.mxu0 0
    %903 = vmatpush2.bf16.msra.mxu0 0
    %904 = vmatprep.subr.bf16.mxu0 0
    %905 = vmatpush2.bf16.msra.mxu0 0
    %906 = vmatprep.subr.bf16.mxu0 0
    %907 = vmatpush2.bf16.msra.mxu0 0
    %908 = vmatprep.subr.bf16.mxu0 0
    %909 = vmatpush2.bf16.msra.mxu0 0
    %910 = vmatprep.subr.bf16.mxu0 0
    %911 = vmatpush2.bf16.msra.mxu0 0
    %912 = vmatprep.mubr.bf16.mxu0 0
    %913 = vmatmul.mubr.bf16.gmra.mxu0 %v837
    %v914 = vpop.f32.mrf.mxu0
    %v915 = vadd.f32 %v767, %v914
    %v916 = vpop.f32.mrf.mxu0
    %v917 = vpop.f32.mrf.mxu0
    %v918 = vpop.f32.mrf.mxu0
    %919 = vdwg.mxu0
    %v920 = vmax.f32 %v874, 0.0
    %v921 = vmax.f32 %v876, 0.0
    %v922 = vmax.f32 %v915, 0.0
    %v923 = vpack.c.bf16 %v733, %v733
    %v924 = vpack.c.bf16 %v734, %v734
    %v925 = vpack.c.bf16 %v735, %v735
    %v926 = vld [vmem:[%s6] sm:$0xff]
    %v927 = vld [vmem:[%s6 + $0x8] sm:$0xff]
    %v928 = vld [vmem:[%s6 + $0x10] sm:$0xff]
    %v929 = vld [vmem:[%s6 + $0x18] sm:$0xff]
    %v930 = vld [vmem:[%s6 + $0x20] sm:$0xff]
    %v931 = vld [vmem:[%s6 + $0x28] sm:$0xff]
    %v932 = vld [vmem:[%s6 + $0x30] sm:$0xff]
    %v933 = vld [vmem:[%s6 + $0x38] sm:$0xff]
    %v934 = vld [vmem:[%s6 + $0x40] sm:$0xff]
    %v935 = vld [vmem:[%s6 + $0x48] sm:$0xff]
    %v936 = vld [vmem:[%s6 + $0x50] sm:$0xff]
    %v937 = vld [vmem:[%s6 + $0x58] sm:$0xff]
    %v938 = vld [vmem:[%s6 + $0x60] sm:$0xff]
    %v939 = vld [vmem:[%s6 + $0x68] sm:$0xff]
    %v940 = vld [vmem:[%s6 + $0x70] sm:$0xff]
    %v941 = vld [vmem:[%s6 + $0x78] sm:$0xff]
    %v942 = vld [vmem:[%s6 + $0x80] sm:$0xff]
    %v943 = vld [vmem:[%s6 + $0x88] sm:$0xff]
    %v944 = vld [vmem:[%s6 + $0x90] sm:$0xff]
    %v945 = vld [vmem:[%s6 + $0x98] sm:$0xff]
    %v946 = vld [vmem:[%s6 + $0xa0] sm:$0xff]
    %v947 = vld [vmem:[%s6 + $0xa8] sm:$0xff]
    %v948 = vld [vmem:[%s6 + $0xb0] sm:$0xff]
    %v949 = vld [vmem:[%s6 + $0xb8] sm:$0xff]
    %v950 = vld [vmem:[%s6 + $0xc0] sm:$0xff]
    %v951 = vld [vmem:[%s6 + $0xc8] sm:$0xff]
    %v952 = vld [vmem:[%s6 + $0xd0] sm:$0xff]
    %v953 = vld [vmem:[%s6 + $0xd8] sm:$0xff]
    %v954 = vld [vmem:[%s6 + $0xe0] sm:$0xff]
    %v955 = vld [vmem:[%s6 + $0xe8] sm:$0xff]
    %v956 = vld [vmem:[%s6 + $0xf0] sm:$0xff]
    %v957 = vld [vmem:[%s6 + $0xf8] sm:$0xff]
    %v958 = vld [vmem:[%s6 + $0x100] sm:$0xff]
    %v959 = vld [vmem:[%s6 + $0x108] sm:$0xff]
    %v960 = vld [vmem:[%s6 + $0x110] sm:$0xff]
    %v961 = vld [vmem:[%s6 + $0x118] sm:$0xff]
    %v962 = vld [vmem:[%s6 + $0x120] sm:$0xff]
    %v963 = vld [vmem:[%s6 + $0x128] sm:$0xff]
    %v964 = vld [vmem:[%s6 + $0x130] sm:$0xff]
    %v965 = vld [vmem:[%s6 + $0x138] sm:$0xff]
    %v966 = vld [vmem:[%s6 + $0x140] sm:$0xff]
    %v967 = vld [vmem:[%s6 + $0x148] sm:$0xff]
    %v968 = vld [vmem:[%s6 + $0x150] sm:$0xff]
    %v969 = vld [vmem:[%s6 + $0x158] sm:$0xff]
    %v970 = vld [vmem:[%s6 + $0x160] sm:$0xff]
    %v971 = vld [vmem:[%s6 + $0x168] sm:$0xff]
    %v972 = vld [vmem:[%s6 + $0x170] sm:$0xff]
    %v973 = vld [vmem:[%s6 + $0x178] sm:$0xff]
    %v974 = vpack.c.bf16 %v920, %v920
    %v975 = vpack.c.bf16 %v921, %v921
    %v976 = vpack.c.bf16 %v922, %v922
    %v977 = vld [vmem:[%s7] sm:$0xff]
    %v978 = vld [vmem:[%s7 + $0x8] sm:$0xff]
    %v979 = vld [vmem:[%s7 + $0x10] sm:$0xff]
    %v980 = vld [vmem:[%s7 + $0x18] sm:$0xff]
    %v981 = vld [vmem:[%s7 + $0x20] sm:$0xff]
    %v982 = vld [vmem:[%s7 + $0x28] sm:$0xff]
    %v983 = vld [vmem:[%s7 + $0x30] sm:$0xff]
    %v984 = vld [vmem:[%s7 + $0x38] sm:$0xff]
    %v985 = vld [vmem:[%s7 + $0x40] sm:$0xff]
    %v986 = vld [vmem:[%s7 + $0x48] sm:$0xff]
    %v987 = vld [vmem:[%s7 + $0x50] sm:$0xff]
    %v988 = vld [vmem:[%s7 + $0x58] sm:$0xff]
    %v989 = vld [vmem:[%s7 + $0x60] sm:$0xff]
    %v990 = vld [vmem:[%s7 + $0x68] sm:$0xff]
    %v991 = vld [vmem:[%s7 + $0x70] sm:$0xff]
    %v992 = vld [vmem:[%s7 + $0x78] sm:$0xff]
    %v993 = vld [vmem:[%s7 + $0x80] sm:$0xff]
    %v994 = vld [vmem:[%s7 + $0x88] sm:$0xff]
    %v995 = vld [vmem:[%s7 + $0x90] sm:$0xff]
    %v996 = vld [vmem:[%s7 + $0x98] sm:$0xff]
    %v997 = vld [vmem:[%s7 + $0xa0] sm:$0xff]
    %v998 = vld [vmem:[%s7 + $0xa8] sm:$0xff]
    %v999 = vld [vmem:[%s7 + $0xb0] sm:$0xff]
    %v1000 = vld [vmem:[%s7 + $0xb8] sm:$0xff]
    %v1001 = vld [vmem:[%s7 + $0xc0] sm:$0xff]
    %v1002 = vld [vmem:[%s7 + $0xc8] sm:$0xff]
    %v1003 = vld [vmem:[%s7 + $0xd0] sm:$0xff]
    %v1004 = vld [vmem:[%s7 + $0xd8] sm:$0xff]
    %v1005 = vld [vmem:[%s7 + $0xe0] sm:$0xff]
    %v1006 = vld [vmem:[%s7 + $0xe8] sm:$0xff]
    %v1007 = vld [vmem:[%s7 + $0xf0] sm:$0xff]
    %v1008 = vld [vmem:[%s7 + $0xf8] sm:$0xff]
    %v1009 = vld [vmem:[%s7 + $0x100] sm:$0xff]
    %v1010 = vld [vmem:[%s7 + $0x108] sm:$0xff]
    %v1011 = vld [vmem:[%s7 + $0x110] sm:$0xff]
    %v1012 = vld [vmem:[%s7 + $0x118] sm:$0xff]
    %v1013 = vld [vmem:[%s7 + $0x120] sm:$0xff]
    %v1014 = vld [vmem:[%s7 + $0x128] sm:$0xff]
    %v1015 = vld [vmem:[%s7 + $0x130] sm:$0xff]
    %v1016 = vld [vmem:[%s7 + $0x138] sm:$0xff]
    %v1017 = vld [vmem:[%s7 + $0x140] sm:$0xff]
    %v1018 = vld [vmem:[%s7 + $0x148] sm:$0xff]
    %v1019 = vld [vmem:[%s7 + $0x150] sm:$0xff]
    %v1020 = vld [vmem:[%s7 + $0x158] sm:$0xff]
    %v1021 = vld [vmem:[%s7 + $0x160] sm:$0xff]
    %v1022 = vld [vmem:[%s7 + $0x168] sm:$0xff]
    %v1023 = vld [vmem:[%s7 + $0x170] sm:$0xff]
    %v1024 = vld [vmem:[%s7 + $0x178] sm:$0xff]
    %v1073 = vunpack.c.l.b16 %v977
    %v1074 = vunpack.c.h.b16 %v977
    %v1075 = vunpack.c.l.b16 %v978
    %v1076 = vunpack.c.h.b16 %v978
    %v1077 = vunpack.c.l.b16 %v979
    %v1078 = vunpack.c.h.b16 %v979
    %v1079 = vunpack.c.l.b16 %v980
    %v1080 = vunpack.c.h.b16 %v980
    %v1081 = vunpack.c.l.b16 %v981
    %v1082 = vunpack.c.h.b16 %v981
    %v1083 = vunpack.c.l.b16 %v982
    %v1084 = vunpack.c.h.b16 %v982
    %v1085 = vunpack.c.l.b16 %v983
    %v1086 = vunpack.c.h.b16 %v983
    %v1087 = vunpack.c.l.b16 %v984
    %v1088 = vunpack.c.h.b16 %v984
    %v1089 = vunpack.c.l.b16 %v985
    %v1090 = vunpack.c.h.b16 %v985
    %v1091 = vunpack.c.l.b16 %v986
    %v1092 = vunpack.c.h.b16 %v986
    %v1093 = vunpack.c.l.b16 %v987
    %v1094 = vunpack.c.h.b16 %v987
    %v1095 = vunpack.c.l.b16 %v988
    %v1096 = vunpack.c.h.b16 %v988
    %v1097 = vunpack.c.l.b16 %v989
    %v1098 = vunpack.c.h.b16 %v989
    %v1099 = vunpack.c.l.b16 %v990
    %v1100 = vunpack.c.h.b16 %v990
    %v1101 = vunpack.c.l.b16 %v991
    %v1102 = vunpack.c.h.b16 %v991
    %v1103 = vunpack.c.l.b16 %v992
    %v1104 = vunpack.c.h.b16 %v992
    %v1105 = vunpack.c.l.b16 %v993
    %v1106 = vunpack.c.h.b16 %v993
    %v1107 = vunpack.c.l.b16 %v994
    %v1108 = vunpack.c.h.b16 %v994
    %v1109 = vunpack.c.l.b16 %v995
    %v1110 = vunpack.c.h.b16 %v995
    %v1111 = vunpack.c.l.b16 %v996
    %v1112 = vunpack.c.h.b16 %v996
    %v1113 = vunpack.c.l.b16 %v997
    %v1114 = vunpack.c.h.b16 %v997
    %v1115 = vunpack.c.l.b16 %v998
    %v1116 = vunpack.c.h.b16 %v998
    %v1117 = vunpack.c.l.b16 %v999
    %v1118 = vunpack.c.h.b16 %v999
    %v1119 = vunpack.c.l.b16 %v1000
    %v1120 = vunpack.c.h.b16 %v1000
    %v1121 = vunpack.c.l.b16 %v1001
    %v1122 = vunpack.c.h.b16 %v1001
    %v1123 = vunpack.c.l.b16 %v1002
    %v1124 = vunpack.c.h.b16 %v1002
    %v1125 = vunpack.c.l.b16 %v1003
    %v1126 = vunpack.c.h.b16 %v1003
    %v1127 = vunpack.c.l.b16 %v1004
    %v1128 = vunpack.c.h.b16 %v1004
    %v1129 = vunpack.c.l.b16 %v1005
    %v1130 = vunpack.c.h.b16 %v1005
    %v1131 = vunpack.c.l.b16 %v1006
    %v1132 = vunpack.c.h.b16 %v1006
    %v1133 = vunpack.c.l.b16 %v1007
    %v1134 = vunpack.c.h.b16 %v1007
    %v1135 = vunpack.c.l.b16 %v1008
    %v1136 = vunpack.c.h.b16 %v1008
    %v1137 = vunpack.c.l.b16 %v1009
    %v1138 = vunpack.c.h.b16 %v1009
    %v1139 = vunpack.c.l.b16 %v1010
    %v1140 = vunpack.c.h.b16 %v1010
    %v1141 = vunpack.c.l.b16 %v1011
    %v1142 = vunpack.c.h.b16 %v1011
    %v1143 = vunpack.c.l.b16 %v1012
    %v1144 = vunpack.c.h.b16 %v1012
    %v1145 = vunpack.c.l.b16 %v1013
    %v1146 = vunpack.c.h.b16 %v1013
    %v1147 = vunpack.c.l.b16 %v1014
    %v1148 = vunpack.c.h.b16 %v1014
    %v1149 = vunpack.c.l.b16 %v1015
    %v1150 = vunpack.c.h.b16 %v1015
    %v1151 = vunpack.c.l.b16 %v1016
    %v1152 = vunpack.c.h.b16 %v1016
    %v1153 = vunpack.c.l.b16 %v1017
    %v1154 = vunpack.c.h.b16 %v1017
    %v1155 = vunpack.c.l.b16 %v1018
    %v1156 = vunpack.c.h.b16 %v1018
    %v1157 = vunpack.c.l.b16 %v1019
    %v1158 = vunpack.c.h.b16 %v1019
    %v1159 = vunpack.c.l.b16 %v1020
    %v1160 = vunpack.c.h.b16 %v1020
    %v1161 = vunpack.c.l.b16 %v1021
    %v1162 = vunpack.c.h.b16 %v1021
    %v1163 = vunpack.c.l.b16 %v1022
    %v1164 = vunpack.c.h.b16 %v1022
    %v1165 = vunpack.c.l.b16 %v1023
    %v1166 = vunpack.c.h.b16 %v1023
    %v1167 = vunpack.c.l.b16 %v1024
    %v1168 = vunpack.c.h.b16 %v1024
    %v1169 = vpack.c.b16 %v1075, %v1073
    %v1170 = vpack.c.b16 %v1076, %v1074
    %v1171 = vpack.c.b16 %v1079, %v1077
    %v1172 = vpack.c.b16 %v1080, %v1078
    %v1173 = vpack.c.b16 %v1083, %v1081
    %v1174 = vpack.c.b16 %v1084, %v1082
    %v1175 = vpack.c.b16 %v1087, %v1085
    %v1176 = vpack.c.b16 %v1088, %v1086
    %v1177 = vpack.c.b16 %v1091, %v1089
    %v1178 = vpack.c.b16 %v1092, %v1090
    %v1179 = vpack.c.b16 %v1095, %v1093
    %v1180 = vpack.c.b16 %v1096, %v1094
    %v1181 = vpack.c.b16 %v1099, %v1097
    %v1182 = vpack.c.b16 %v1100, %v1098
    %v1183 = vpack.c.b16 %v1103, %v1101
    %v1184 = vpack.c.b16 %v1104, %v1102
    %v1185 = vpack.c.b16 %v1107, %v1105
    %v1186 = vpack.c.b16 %v1108, %v1106
    %v1187 = vpack.c.b16 %v1111, %v1109
    %v1188 = vpack.c.b16 %v1112, %v1110
    %v1189 = vpack.c.b16 %v1115, %v1113
    %v1190 = vpack.c.b16 %v1116, %v1114
    %v1191 = vpack.c.b16 %v1119, %v1117
    %v1192 = vpack.c.b16 %v1120, %v1118
    %v1193 = vpack.c.b16 %v1123, %v1121
    %v1194 = vpack.c.b16 %v1124, %v1122
    %v1195 = vpack.c.b16 %v1127, %v1125
    %v1196 = vpack.c.b16 %v1128, %v1126
    %v1197 = vpack.c.b16 %v1131, %v1129
    %v1198 = vpack.c.b16 %v1132, %v1130
    %v1199 = vpack.c.b16 %v1135, %v1133
    %v1200 = vpack.c.b16 %v1136, %v1134
    %v1201 = vpack.c.b16 %v1139, %v1137
    %v1202 = vpack.c.b16 %v1140, %v1138
    %v1203 = vpack.c.b16 %v1143, %v1141
    %v1204 = vpack.c.b16 %v1144, %v1142
    %v1205 = vpack.c.b16 %v1147, %v1145
    %v1206 = vpack.c.b16 %v1148, %v1146
    %v1207 = vpack.c.b16 %v1151, %v1149
    %v1208 = vpack.c.b16 %v1152, %v1150
    %v1209 = vpack.c.b16 %v1155, %v1153
    %v1210 = vpack.c.b16 %v1156, %v1154
    %v1211 = vpack.c.b16 %v1159, %v1157
    %v1212 = vpack.c.b16 %v1160, %v1158
    %v1213 = vpack.c.b16 %v1163, %v1161
    %v1214 = vpack.c.b16 %v1164, %v1162
    %v1215 = vpack.c.b16 %v1167, %v1165
    %v1216 = vpack.c.b16 %v1168, %v1166
    %1265 = vmatprep.subr.bf16.mxu0 %v1184
    %1266 = vmatpush1.bf16.msra.mxu0 %v1183
    %1267 = vmatprep.subr.bf16.mxu0 %v1182
    %1268 = vmatpush1.bf16.msra.mxu0 %v1181
    %1269 = vmatprep.subr.bf16.mxu0 %v1180
    %1270 = vmatpush1.bf16.msra.mxu0 %v1179
    %1271 = vmatprep.subr.bf16.mxu0 %v1178
    %1272 = vmatpush1.bf16.msra.mxu0 %v1177
    %1273 = vmatprep.subr.bf16.mxu0 %v1176
    %1274 = vmatpush1.bf16.msra.mxu0 %v1175
    %1275 = vmatprep.subr.bf16.mxu0 %v1174
    %1276 = vmatpush1.bf16.msra.mxu0 %v1173
    %1277 = vmatprep.subr.bf16.mxu0 %v1172
    %1278 = vmatpush1.bf16.msra.mxu0 %v1171
    %1279 = vmatprep.subr.bf16.mxu0 %v1170
    %1280 = vmatpush1.bf16.msra.mxu0 %v1169
    %1281 = vmatprep.subr.bf16.mxu0 %v1200
    %1282 = vmatpush2.bf16.msra.mxu0 %v1199
    %1283 = vmatprep.subr.bf16.mxu0 %v1198
    %1284 = vmatpush2.bf16.msra.mxu0 %v1197
    %1285 = vmatprep.subr.bf16.mxu0 %v1196
    %1286 = vmatpush2.bf16.msra.mxu0 %v1195
    %1287 = vmatprep.subr.bf16.mxu0 %v1194
    %1288 = vmatpush2.bf16.msra.mxu0 %v1193
    %1289 = vmatprep.subr.bf16.mxu0 %v1192
    %1290 = vmatpush2.bf16.msra.mxu0 %v1191
    %1291 = vmatprep.subr.bf16.mxu0 %v1190
    %1292 = vmatpush2.bf16.msra.mxu0 %v1189
    %1293 = vmatprep.subr.bf16.mxu0 %v1188
    %1294 = vmatpush2.bf16.msra.mxu0 %v1187
    %1295 = vmatprep.subr.bf16.mxu0 %v1186
    %1296 = vmatpush2.bf16.msra.mxu0 %v1185
    %1297 = vmatprep.mubr.bf16.mxu0 %v975
    %1298 = vmatmul.mubr.bf16.gmra.mxu0 %v974
    %v1299 = vpop.f32.mrf.mxu0
    %v1300 = vadd.f32 0.0, %v1299
    %v1301 = vpop.f32.mrf.mxu0
    %v1302 = vadd.f32 0.0, %v1301
    %v1303 = vpop.f32.mrf.mxu0
    %v1304 = vpop.f32.mrf.mxu0
    %1305 = vdwg.mxu0
    %1306 = vmatprep.subr.bf16.mxu0 %v1216
    %1307 = vmatpush1.bf16.msra.mxu0 %v1215
    %1308 = vmatprep.subr.bf16.mxu0 %v1214
    %1309 = vmatpush1.bf16.msra.mxu0 %v1213
    %1310 = vmatprep.subr.bf16.mxu0 %v1212
    %1311 = vmatpush1.bf16.msra.mxu0 %v1211
    %1312 = vmatprep.subr.bf16.mxu0 %v1210
    %1313 = vmatpush1.bf16.msra.mxu0 %v1209
    %1314 = vmatprep.subr.bf16.mxu0 %v1208
    %1315 = vmatpush1.bf16.msra.mxu0 %v1207
    %1316 = vmatprep.subr.bf16.mxu0 %v1206
    %1317 = vmatpush1.bf16.msra.mxu0 %v1205
    %1318 = vmatprep.subr.bf16.mxu0 %v1204
    %1319 = vmatpush1.bf16.msra.mxu0 %v1203
    %1320 = vmatprep.subr.bf16.mxu0 %v1202
    %1321 = vmatpush1.bf16.msra.mxu0 %v1201
    %1322 = vmatprep.subr.bf16.mxu0 0
    %1323 = vmatpush2.bf16.msra.mxu0 0
    %1324 = vmatprep.subr.bf16.mxu0 0
    %1325 = vmatpush2.bf16.msra.mxu0 0
    %1326 = vmatprep.subr.bf16.mxu0 0
    %1327 = vmatpush2.bf16.msra.mxu0 0
    %1328 = vmatprep.subr.bf16.mxu0 0
    %1329 = vmatpush2.bf16.msra.mxu0 0
    %1330 = vmatprep.subr.bf16.mxu0 0
    %1331 = vmatpush2.bf16.msra.mxu0 0
    %1332 = vmatprep.subr.bf16.mxu0 0
    %1333 = vmatpush2.bf16.msra.mxu0 0
    %1334 = vmatprep.subr.bf16.mxu0 0
    %1335 = vmatpush2.bf16.msra.mxu0 0
    %1336 = vmatprep.subr.bf16.mxu0 0
    %1337 = vmatpush2.bf16.msra.mxu0 0
    %1338 = vmatprep.mubr.bf16.mxu0 0
    %1339 = vmatmul.mubr.bf16.gmra.mxu0 %v976
    %v1340 = vpop.f32.mrf.mxu0
    %v1341 = vadd.f32 %v1300, %v1340
    %v1342 = vpop.f32.mrf.mxu0
    %v1343 = vadd.f32 %v1302, %v1342
    %v1344 = vpop.f32.mrf.mxu0
    %v1345 = vpop.f32.mrf.mxu0
    %1346 = vdwg.mxu0
    %v1395 = vunpack.c.l.b16 %v926
    %v1396 = vunpack.c.h.b16 %v926
    %v1397 = vunpack.c.l.b16 %v927
    %v1398 = vunpack.c.h.b16 %v927
    %v1399 = vunpack.c.l.b16 %v928
    %v1400 = vunpack.c.h.b16 %v928
    %v1401 = vunpack.c.l.b16 %v929
    %v1402 = vunpack.c.h.b16 %v929
    %v1403 = vunpack.c.l.b16 %v930
    %v1404 = vunpack.c.h.b16 %v930
    %v1405 = vunpack.c.l.b16 %v931
    %v1406 = vunpack.c.h.b16 %v931
    %v1407 = vunpack.c.l.b16 %v932
    %v1408 = vunpack.c.h.b16 %v932
    %v1409 = vunpack.c.l.b16 %v933
    %v1410 = vunpack.c.h.b16 %v933
    %v1411 = vunpack.c.l.b16 %v934
    %v1412 = vunpack.c.h.b16 %v934
    %v1413 = vunpack.c.l.b16 %v935
    %v1414 = vunpack.c.h.b16 %v935
    %v1415 = vunpack.c.l.b16 %v936
    %v1416 = vunpack.c.h.b16 %v936
    %v1417 = vunpack.c.l.b16 %v937
    %v1418 = vunpack.c.h.b16 %v937
    %v1419 = vunpack.c.l.b16 %v938
    %v1420 = vunpack.c.h.b16 %v938
    %v1421 = vunpack.c.l.b16 %v939
    %v1422 = vunpack.c.h.b16 %v939
    %v1423 = vunpack.c.l.b16 %v940
    %v1424 = vunpack.c.h.b16 %v940
    %v1425 = vunpack.c.l.b16 %v941
    %v1426 = vunpack.c.h.b16 %v941
    %v1427 = vunpack.c.l.b16 %v942
    %v1428 = vunpack.c.h.b16 %v942
    %v1429 = vunpack.c.l.b16 %v943
    %v1430 = vunpack.c.h.b16 %v943
    %v1431 = vunpack.c.l.b16 %v944
    %v1432 = vunpack.c.h.b16 %v944
    %v1433 = vunpack.c.l.b16 %v945
    %v1434 = vunpack.c.h.b16 %v945
    %v1435 = vunpack.c.l.b16 %v946
    %v1436 = vunpack.c.h.b16 %v946
    %v1437 = vunpack.c.l.b16 %v947
    %v1438 = vunpack.c.h.b16 %v947
    %v1439 = vunpack.c.l.b16 %v948
    %v1440 = vunpack.c.h.b16 %v948
    %v1441 = vunpack.c.l.b16 %v949
    %v1442 = vunpack.c.h.b16 %v949
    %v1443 = vunpack.c.l.b16 %v950
    %v1444 = vunpack.c.h.b16 %v950
    %v1445 = vunpack.c.l.b16 %v951
    %v1446 = vunpack.c.h.b16 %v951
    %v1447 = vunpack.c.l.b16 %v952
    %v1448 = vunpack.c.h.b16 %v952
    %v1449 = vunpack.c.l.b16 %v953
    %v1450 = vunpack.c.h.b16 %v953
    %v1451 = vunpack.c.l.b16 %v954
    %v1452 = vunpack.c.h.b16 %v954
    %v1453 = vunpack.c.l.b16 %v955
    %v1454 = vunpack.c.h.b16 %v955
    %v1455 = vunpack.c.l.b16 %v956
    %v1456 = vunpack.c.h.b16 %v956
    %v1457 = vunpack.c.l.b16 %v957
    %v1458 = vunpack.c.h.b16 %v957
    %v1459 = vunpack.c.l.b16 %v958
    %v1460 = vunpack.c.h.b16 %v958
    %v1461 = vunpack.c.l.b16 %v959
    %v1462 = vunpack.c.h.b16 %v959
    %v1463 = vunpack.c.l.b16 %v960
    %v1464 = vunpack.c.h.b16 %v960
    %v1465 = vunpack.c.l.b16 %v961
    %v1466 = vunpack.c.h.b16 %v961
    %v1467 = vunpack.c.l.b16 %v962
    %v1468 = vunpack.c.h.b16 %v962
    %v1469 = vunpack.c.l.b16 %v963
    %v1470 = vunpack.c.h.b16 %v963
    %v1471 = vunpack.c.l.b16 %v964
    %v1472 = vunpack.c.h.b16 %v964
    %v1473 = vunpack.c.l.b16 %v965
    %v1474 = vunpack.c.h.b16 %v965
    %v1475 = vunpack.c.l.b16 %v966
    %v1476 = vunpack.c.h.b16 %v966
    %v1477 = vunpack.c.l.b16 %v967
    %v1478 = vunpack.c.h.b16 %v967
    %v1479 = vunpack.c.l.b16 %v968
    %v1480 = vunpack.c.h.b16 %v968
    %v1481 = vunpack.c.l.b16 %v969
    %v1482 = vunpack.c.h.b16 %v969
    %v1483 = vunpack.c.l.b16 %v970
    %v1484 = vunpack.c.h.b16 %v970
    %v1485 = vunpack.c.l.b16 %v971
    %v1486 = vunpack.c.h.b16 %v971
    %v1487 = vunpack.c.l.b16 %v972
    %v1488 = vunpack.c.h.b16 %v972
    %v1489 = vunpack.c.l.b16 %v973
    %v1490 = vunpack.c.h.b16 %v973
    %v1491 = vpack.c.b16 %v1397, %v1395
    %v1492 = vpack.c.b16 %v1398, %v1396
    %v1493 = vpack.c.b16 %v1401, %v1399
    %v1494 = vpack.c.b16 %v1402, %v1400
    %v1495 = vpack.c.b16 %v1405, %v1403
    %v1496 = vpack.c.b16 %v1406, %v1404
    %v1497 = vpack.c.b16 %v1409, %v1407
    %v1498 = vpack.c.b16 %v1410, %v1408
    %v1499 = vpack.c.b16 %v1413, %v1411
    %v1500 = vpack.c.b16 %v1414, %v1412
    %v1501 = vpack.c.b16 %v1417, %v1415
    %v1502 = vpack.c.b16 %v1418, %v1416
    %v1503 = vpack.c.b16 %v1421, %v1419
    %v1504 = vpack.c.b16 %v1422, %v1420
    %v1505 = vpack.c.b16 %v1425, %v1423
    %v1506 = vpack.c.b16 %v1426, %v1424
    %v1507 = vpack.c.b16 %v1429, %v1427
    %v1508 = vpack.c.b16 %v1430, %v1428
    %v1509 = vpack.c.b16 %v1433, %v1431
    %v1510 = vpack.c.b16 %v1434, %v1432
    %v1511 = vpack.c.b16 %v1437, %v1435
    %v1512 = vpack.c.b16 %v1438, %v1436
    %v1513 = vpack.c.b16 %v1441, %v1439
    %v1514 = vpack.c.b16 %v1442, %v1440
    %v1515 = vpack.c.b16 %v1445, %v1443
    %v1516 = vpack.c.b16 %v1446, %v1444
    %v1517 = vpack.c.b16 %v1449, %v1447
    %v1518 = vpack.c.b16 %v1450, %v1448
    %v1519 = vpack.c.b16 %v1453, %v1451
    %v1520 = vpack.c.b16 %v1454, %v1452
    %v1521 = vpack.c.b16 %v1457, %v1455
    %v1522 = vpack.c.b16 %v1458, %v1456
    %v1523 = vpack.c.b16 %v1461, %v1459
    %v1524 = vpack.c.b16 %v1462, %v1460
    %v1525 = vpack.c.b16 %v1465, %v1463
    %v1526 = vpack.c.b16 %v1466, %v1464
    %v1527 = vpack.c.b16 %v1469, %v1467
    %v1528 = vpack.c.b16 %v1470, %v1468
    %v1529 = vpack.c.b16 %v1473, %v1471
    %v1530 = vpack.c.b16 %v1474, %v1472
    %v1531 = vpack.c.b16 %v1477, %v1475
    %v1532 = vpack.c.b16 %v1478, %v1476
    %v1533 = vpack.c.b16 %v1481, %v1479
    %v1534 = vpack.c.b16 %v1482, %v1480
    %v1535 = vpack.c.b16 %v1485, %v1483
    %v1536 = vpack.c.b16 %v1486, %v1484
    %v1537 = vpack.c.b16 %v1489, %v1487
    %v1538 = vpack.c.b16 %v1490, %v1488
    %1587 = vmatprep.subr.bf16.mxu0 %v1506
    %1588 = vmatpush1.bf16.msra.mxu0 %v1505
    %1589 = vmatprep.subr.bf16.mxu0 %v1504
    %1590 = vmatpush1.bf16.msra.mxu0 %v1503
    %1591 = vmatprep.subr.bf16.mxu0 %v1502
    %1592 = vmatpush1.bf16.msra.mxu0 %v1501
    %1593 = vmatprep.subr.bf16.mxu0 %v1500
    %1594 = vmatpush1.bf16.msra.mxu0 %v1499
    %1595 = vmatprep.subr.bf16.mxu0 %v1498
    %1596 = vmatpush1.bf16.msra.mxu0 %v1497
    %1597 = vmatprep.subr.bf16.mxu0 %v1496
    %1598 = vmatpush1.bf16.msra.mxu0 %v1495
    %1599 = vmatprep.subr.bf16.mxu0 %v1494
    %1600 = vmatpush1.bf16.msra.mxu0 %v1493
    %1601 = vmatprep.subr.bf16.mxu0 %v1492
    %1602 = vmatpush1.bf16.msra.mxu0 %v1491
    %1603 = vmatprep.subr.bf16.mxu0 %v1522
    %1604 = vmatpush2.bf16.msra.mxu0 %v1521
    %1605 = vmatprep.subr.bf16.mxu0 %v1520
    %1606 = vmatpush2.bf16.msra.mxu0 %v1519
    %1607 = vmatprep.subr.bf16.mxu0 %v1518
    %1608 = vmatpush2.bf16.msra.mxu0 %v1517
    %1609 = vmatprep.subr.bf16.mxu0 %v1516
    %1610 = vmatpush2.bf16.msra.mxu0 %v1515
    %1611 = vmatprep.subr.bf16.mxu0 %v1514
    %1612 = vmatpush2.bf16.msra.mxu0 %v1513
    %1613 = vmatprep.subr.bf16.mxu0 %v1512
    %1614 = vmatpush2.bf16.msra.mxu0 %v1511
    %1615 = vmatprep.subr.bf16.mxu0 %v1510
    %1616 = vmatpush2.bf16.msra.mxu0 %v1509
    %1617 = vmatprep.subr.bf16.mxu0 %v1508
    %1618 = vmatpush2.bf16.msra.mxu0 %v1507
    %1619 = vmatprep.mubr.bf16.mxu0 %v924
    %1620 = vmatmul.mubr.bf16.gmra.mxu0 %v923
    %v1621 = vpop.f32.mrf.mxu0
    %v1622 = vadd.f32 %v1341, %v1621
    %v1623 = vpop.f32.mrf.mxu0
    %v1624 = vadd.f32 %v1343, %v1623
    %v1625 = vpop.f32.mrf.mxu0
    %v1626 = vpop.f32.mrf.mxu0
    %1627 = vdwg.mxu0
    %1628 = vmatprep.subr.bf16.mxu0 %v1538
    %1629 = vmatpush1.bf16.msra.mxu0 %v1537
    %1630 = vmatprep.subr.bf16.mxu0 %v1536
    %1631 = vmatpush1.bf16.msra.mxu0 %v1535
    %1632 = vmatprep.subr.bf16.mxu0 %v1534
    %1633 = vmatpush1.bf16.msra.mxu0 %v1533
    %1634 = vmatprep.subr.bf16.mxu0 %v1532
    %1635 = vmatpush1.bf16.msra.mxu0 %v1531
    %1636 = vmatprep.subr.bf16.mxu0 %v1530
    %1637 = vmatpush1.bf16.msra.mxu0 %v1529
    %1638 = vmatprep.subr.bf16.mxu0 %v1528
    %1639 = vmatpush1.bf16.msra.mxu0 %v1527
    %1640 = vmatprep.subr.bf16.mxu0 %v1526
    %1641 = vmatpush1.bf16.msra.mxu0 %v1525
    %1642 = vmatprep.subr.bf16.mxu0 %v1524
    %1643 = vmatpush1.bf16.msra.mxu0 %v1523
    %1644 = vmatprep.subr.bf16.mxu0 0
    %1645 = vmatpush2.bf16.msra.mxu0 0
    %1646 = vmatprep.subr.bf16.mxu0 0
    %1647 = vmatpush2.bf16.msra.mxu0 0
    %1648 = vmatprep.subr.bf16.mxu0 0
    %1649 = vmatpush2.bf16.msra.mxu0 0
    %1650 = vmatprep.subr.bf16.mxu0 0
    %1651 = vmatpush2.bf16.msra.mxu0 0
    %1652 = vmatprep.subr.bf16.mxu0 0
    %1653 = vmatpush2.bf16.msra.mxu0 0
    %1654 = vmatprep.subr.bf16.mxu0 0
    %1655 = vmatpush2.bf16.msra.mxu0 0
    %1656 = vmatprep.subr.bf16.mxu0 0
    %1657 = vmatpush2.bf16.msra.mxu0 0
    %1658 = vmatprep.subr.bf16.mxu0 0
    %1659 = vmatpush2.bf16.msra.mxu0 0
    %1660 = vmatprep.mubr.bf16.mxu0 0
    %1661 = vmatmul.mubr.bf16.gmra.mxu0 %v925
    %v1662 = vpop.f32.mrf.mxu0
    %v1663 = vadd.f32 %v1622, %v1662
    %v1664 = vpop.f32.mrf.mxu0
    %v1665 = vadd.f32 %v1624, %v1664
    %v1666 = vpop.f32.mrf.mxu0
    %v1667 = vpop.f32.mrf.mxu0
    %1668 = vdwg.mxu0
    %v1669 = vld [vmem:[%s8] sm:$0x3]
    %v1671 = vlaneseq
    %v1672 = vshrl.u32 %v1671, 7
    %v1673 = vsub.s32 0, %v1672
    %v1674 = vrot.slane %v1669, %v1673
    %v1675 = vlaneseq
    %v1676 = vshrl.u32 %v1675, 7
    %v1677 = vsub.s32 1, %v1676
    %v1678 = vrot.slane %v1669, %v1677
    %v1681 = vadd.f32 %v1663, %v1674
    %v1682 = vadd.f32 %v1665, %v1678
    %v1683 = vmax.f32 %v1681, 0.0
    %v1684 = vmax.f32 %v1682, 0.0
    %v1685 = vpack.c.bf16 %v1683, %v1683
    %v1686 = vpack.c.bf16 %v1684, %v1684
    %v1687 = vld [vmem:[%s9] sm:$0xf]
    %v1688 = vld [vmem:[%s9 + $0x4] sm:$0xf]
    %v1689 = vld [vmem:[%s9 + $0x8] sm:$0xf]
    %v1690 = vld [vmem:[%s9 + $0xc] sm:$0xf]
    %v1691 = vld [vmem:[%s9 + $0x10] sm:$0xf]
    %v1692 = vld [vmem:[%s9 + $0x14] sm:$0xf]
    %v1693 = vld [vmem:[%s9 + $0x18] sm:$0xf]
    %v1694 = vld [vmem:[%s9 + $0x1c] sm:$0xf]
    %v1695 = vld [vmem:[%s9 + $0x20] sm:$0xf]
    %v1696 = vld [vmem:[%s9 + $0x24] sm:$0xf]
    %v1697 = vld [vmem:[%s9 + $0x28] sm:$0xf]
    %v1698 = vld [vmem:[%s9 + $0x2c] sm:$0xf]
    %v1699 = vld [vmem:[%s9 + $0x30] sm:$0xf]
    %v1700 = vld [vmem:[%s9 + $0x34] sm:$0xf]
    %v1701 = vld [vmem:[%s9 + $0x38] sm:$0xf]
    %v1702 = vld [vmem:[%s9 + $0x3c] sm:$0xf]
    %v1703 = vld [vmem:[%s9 + $0x40] sm:$0xf]
    %v1704 = vld [vmem:[%s9 + $0x44] sm:$0xf]
    %v1705 = vld [vmem:[%s9 + $0x48] sm:$0xf]
    %v1706 = vld [vmem:[%s9 + $0x4c] sm:$0xf]
    %v1707 = vld [vmem:[%s9 + $0x50] sm:$0xf]
    %v1708 = vld [vmem:[%s9 + $0x54] sm:$0xf]
    %v1709 = vld [vmem:[%s9 + $0x58] sm:$0xf]
    %v1710 = vld [vmem:[%s9 + $0x5c] sm:$0xf]
    %v1711 = vld [vmem:[%s9 + $0x60] sm:$0xf]
    %v1712 = vld [vmem:[%s10] sm:$0x1]
    %v1714 = vlaneseq
    %v1715 = vshrl.u32 %v1714, 7
    %v1716 = vsub.s32 0, %v1715
    %v1717 = vrot.slane %v1712, %v1716
    %v1744 = vunpack.c.l.b16 %v1687
    %v1745 = vunpack.c.l.b16 %v1688
    %v1746 = vunpack.c.l.b16 %v1689
    %v1747 = vunpack.c.l.b16 %v1690
    %v1748 = vunpack.c.l.b16 %v1691
    %v1749 = vunpack.c.l.b16 %v1692
    %v1750 = vunpack.c.l.b16 %v1693
    %v1751 = vunpack.c.l.b16 %v1694
    %v1752 = vunpack.c.l.b16 %v1695
    %v1753 = vunpack.c.l.b16 %v1696
    %v1754 = vunpack.c.l.b16 %v1697
    %v1755 = vunpack.c.l.b16 %v1698
    %v1756 = vunpack.c.l.b16 %v1699
    %v1757 = vunpack.c.l.b16 %v1700
    %v1758 = vunpack.c.l.b16 %v1701
    %v1759 = vunpack.c.l.b16 %v1702
    %v1760 = vunpack.c.l.b16 %v1703
    %v1761 = vunpack.c.l.b16 %v1704
    %v1762 = vunpack.c.l.b16 %v1705
    %v1763 = vunpack.c.l.b16 %v1706
    %v1764 = vunpack.c.l.b16 %v1707
    %v1765 = vunpack.c.l.b16 %v1708
    %v1766 = vunpack.c.l.b16 %v1709
    %v1767 = vunpack.c.l.b16 %v1710
    %v1768 = vunpack.c.l.b16 %v1711
    %v1769 = vpack.c.b16 %v1745, %v1744
    %v1770 = vpack.c.b16 %v1747, %v1746
    %v1771 = vpack.c.b16 %v1749, %v1748
    %v1772 = vpack.c.b16 %v1751, %v1750
    %v1773 = vpack.c.b16 %v1753, %v1752
    %v1774 = vpack.c.b16 %v1755, %v1754
    %v1775 = vpack.c.b16 %v1757, %v1756
    %v1776 = vpack.c.b16 %v1759, %v1758
    %v1777 = vpack.c.b16 %v1761, %v1760
    %v1778 = vpack.c.b16 %v1763, %v1762
    %v1779 = vpack.c.b16 %v1765, %v1764
    %v1780 = vpack.c.b16 %v1767, %v1766
    %v1781 = vpack.c.b16 %v1768, %v1768
    %vm1794 = vcmask 588800
    %v1796 = vsel %vm1794, %v1686, 0
    %vm1798 = vcmask 1043456
    %v1800 = vsel %vm1798, %v1781, 0
    %1802 = vmatprep.subr.bf16.mxu0 0
    %1803 = vmatpush1.bf16.msra.mxu0 %v1776
    %1804 = vmatprep.subr.bf16.mxu0 0
    %1805 = vmatpush1.bf16.msra.mxu0 %v1775
    %1806 = vmatprep.subr.bf16.mxu0 0
    %1807 = vmatpush1.bf16.msra.mxu0 %v1774
    %1808 = vmatprep.subr.bf16.mxu0 0
    %1809 = vmatpush1.bf16.msra.mxu0 %v1773
    %1810 = vmatprep.subr.bf16.mxu0 0
    %1811 = vmatpush1.bf16.msra.mxu0 %v1772
    %1812 = vmatprep.subr.bf16.mxu0 0
    %1813 = vmatpush1.bf16.msra.mxu0 %v1771
    %1814 = vmatprep.subr.bf16.mxu0 0
    %1815 = vmatpush1.bf16.msra.mxu0 %v1770
    %1816 = vmatprep.subr.bf16.mxu0 0
    %1817 = vmatpush1.bf16.msra.mxu0 %v1769
    %1818 = vmatprep.subr.bf16.mxu0 0
    %1819 = vmatpush2.bf16.msra.mxu0 0
    %1820 = vmatprep.subr.bf16.mxu0 0
    %1821 = vmatpush2.bf16.msra.mxu0 0
    %1822 = vmatprep.subr.bf16.mxu0 0
    %1823 = vmatpush2.bf16.msra.mxu0 0
    %1824 = vmatprep.subr.bf16.mxu0 0
    %1825 = vmatpush2.bf16.msra.mxu0 %v1800
    %1826 = vmatprep.subr.bf16.mxu0 0
    %1827 = vmatpush2.bf16.msra.mxu0 %v1780
    %1828 = vmatprep.subr.bf16.mxu0 0
    %1829 = vmatpush2.bf16.msra.mxu0 %v1779
    %1830 = vmatprep.subr.bf16.mxu0 0
    %1831 = vmatpush2.bf16.msra.mxu0 %v1778
    %1832 = vmatprep.subr.bf16.mxu0 0
    %1833 = vmatpush2.bf16.msra.mxu0 %v1777
    %1834 = vmatprep.mubr.bf16.mxu0 %v1796
    %1835 = vmatmul.mubr.bf16.gmra.mxu0 %v1685
    %v1836 = vpop.f32.mrf.mxu0
    %v1837 = vadd.f32 %v1717, %v1836
    %v1838 = vpop.f32.mrf.mxu0
    %v1839 = vpop.f32.mrf.mxu0
    %v1840 = vpop.f32.mrf.mxu0
    %1841 = vdwg.mxu0
    %v1842 = vmax.f32 %v1837, 0.0
    %v1843 = vpack.c.bf16 %v1842, %v1842
    %v1844 = vld [vmem:[%s11] sm:$0xf]
    %v1845 = vld [vmem:[%s11 + $0x4] sm:$0x1]
    %v1846 = vld [vmem:[%s12] sm:$0x1]
    %v1848 = vlaneseq
    %v1849 = vshrl.u32 %v1848, 7
    %v1850 = vsub.s32 0, %v1849
    %v1851 = vrot.slane %v1846, %v1850
    %v1855 = vunpack.c.l.b16 %v1844
    %v1856 = vunpack.c.l.b16 %v1845
    %v1857 = vpack.c.b16 %v1856, %v1855
    %vm1858 = vcmask 80896
    %v1860 = vsel %vm1858, %v1843, 0
    %vm1862 = vcmask 1044480
    %v1864 = vsel %vm1862, %v1857, 0
    %1866 = vmatprep.subr.bf16.mxu0 0
    %1867 = vmatpush1.bf16.msra.mxu0 0
    %1868 = vmatprep.subr.bf16.mxu0 0
    %1869 = vmatpush1.bf16.msra.mxu0 0
    %1870 = vmatprep.subr.bf16.mxu0 0
    %1871 = vmatpush1.bf16.msra.mxu0 0
    %1872 = vmatprep.subr.bf16.mxu0 0
    %1873 = vmatpush1.bf16.msra.mxu0 0
    %1874 = vmatprep.subr.bf16.mxu0 0
    %1875 = vmatpush1.bf16.msra.mxu0 0
    %1876 = vmatprep.subr.bf16.mxu0 0
    %1877 = vmatpush1.bf16.msra.mxu0 0
    %1878 = vmatprep.subr.bf16.mxu0 0
    %1879 = vmatpush1.bf16.msra.mxu0 0
    %1880 = vmatprep.subr.bf16.mxu0 0
    %1881 = vmatpush1.bf16.msra.mxu0 %v1864
    %1882 = vmatprep.subr.bf16.mxu0 0
    %1883 = vmatpush2.bf16.msra.mxu0 0
    %1884 = vmatprep.subr.bf16.mxu0 0
    %1885 = vmatpush2.bf16.msra.mxu0 0
    %1886 = vmatprep.subr.bf16.mxu0 0
    %1887 = vmatpush2.bf16.msra.mxu0 0
    %1888 = vmatprep.subr.bf16.mxu0 0
    %1889 = vmatpush2.bf16.msra.mxu0 0
    %1890 = vmatprep.subr.bf16.mxu0 0
    %1891 = vmatpush2.bf16.msra.mxu0 0
    %1892 = vmatprep.subr.bf16.mxu0 0
    %1893 = vmatpush2.bf16.msra.mxu0 0
    %1894 = vmatprep.subr.bf16.mxu0 0
    %1895 = vmatpush2.bf16.msra.mxu0 0
    %1896 = vmatprep.subr.bf16.mxu0 0
    %1897 = vmatpush2.bf16.msra.mxu0 0
    %1898 = vmatprep.mubr.bf16.mxu0 0
    %1899 = vmatmul.mubr.bf16.gmra.mxu0 %v1860
    %v1900 = vpop.f32.mrf.mxu0
    %v1901 = vadd.f32 %v1851, %v1900
    %v1902 = vpop.f32.mrf.mxu0
    %v1903 = vpop.f32.mrf.mxu0
    %v1904 = vpop.f32.mrf.mxu0
    %1905 = vdwg.mxu0
    %1906 = vst [vmem:[#allocation2] sm:$0x3] %v1901
    // Predicated region
    $region54: #{rbm_tans_dti_forward.7} parent=1 // pred_check
      _
    $region55: #{rbm_tans_dti_forward.7} parent=1 // pred_check_branch
      %1908 = sbr.rel (0) target = $region57
    $region56: #{rbm_tans_dti_forward.7} parent=1 // pred_region
      %s1910 = ssub.s32 32, 32
      %1911 = vsyncadd [#allocation3], %s1910
      %s1913 = sshll.u32 [#allocation2], 4
      %s1914 = int_to_ptr.vmem [resolvable:$true] %s1913
      %1916 = dma.vmem_to_hbm [thread:$0]  %s1914, 32, %s13, [#allocation3]
    $region57: #{rbm_tans_dti_forward.7} parent=1 // pred_fallthru
      _
    // Predicated region
    $region58: #{rbm_tans_dti_forward.7} parent=1 // pred_check
      _
    $region59: #{rbm_tans_dti_forward.7} parent=1 // pred_check_branch
      %1918 = sbr.rel (0) target = $region61
    $region60: #{rbm_tans_dti_forward.7} parent=1 // pred_region
      %1919 = dma.done [#allocation3], 32
    $region61: #{rbm_tans_dti_forward.7} parent=1 // pred_fallthru
      _
    %1920 = vsyncpa [#allocation3], 1

</llo_original>
